<compile_context>
chip_gen: v7x
topology: tpu7x:2x2x1
jax: 0.10.0
libtpu: 0.0.40
codegen_flags: <defaults>
</compile_context>

<pallas_src>
import numpy as np
import jax
import jax.numpy as jnp
from jax import lax
from jax.experimental import pallas as pl

# ---------------- hyper-params (stand-ins for the argparse args) -------------
CHANNELS = 4        # args.channels
IMG_SIZE = 16       # args.img_size  (must be divisible by 16)
LATENT_DIM = 32     # args.latent_dim
BATCH = 2

ENC_CH = [CHANNELS, 32, 64, 128, 256]
DEC_CH = [256, 128, 64, 32, CHANNELS]
FEAT = IMG_SIZE // 16
FLAT_DIM = 256 * FEAT * FEAT


# --------------------- tap selection matrices (numpy, one-time) --------------
def _conv_s2_taps(h_in, w_in):
    """Conv2d(k=3, s=2, p=1): list of (kh, kw, S) with S (HoWo, HW) in {0,1}."""
    h_out, w_out = h_in // 2, w_in // 2
    taps = []
    for kh in range(3):
        for kw in range(3):
            s = np.zeros((h_out * w_out, h_in * w_in), np.float32)
            for ho in range(h_out):
                ih = 2 * ho + kh - 1
                if not 0 <= ih < h_in:
                    continue
                for wo in range(w_out):
                    iw = 2 * wo + kw - 1
                    if not 0 <= iw < w_in:
                        continue
                    s[ho * w_out + wo, ih * w_in + iw] = 1.0
            if s.any():                       # drop statically-dead taps
                taps.append((kh, kw, s))
    return taps


def _convT_s2_taps(h_in, w_in):
    """ConvTranspose2d(k=3, s=2, p=1, op=1): (kh, kw, S) with S (4*HW, HW)."""
    h_out, w_out = 2 * h_in, 2 * w_in
    taps = []
    for kh in range(3):
        for kw in range(3):
            s = np.zeros((h_out * w_out, h_in * w_in), np.float32)
            for oh in range(h_out):
                th = oh + 1 - kh
                if th % 2 != 0:
                    continue
                ih = th // 2
                if not 0 <= ih < h_in:
                    continue
                for ow in range(w_out):
                    tw = ow + 1 - kw
                    if tw % 2 != 0:
                        continue
                    iw = tw // 2
                    if not 0 <= iw < w_in:
                        continue
                    s[oh * w_out + ow, ih * w_in + iw] = 1.0
            if s.any():
                taps.append((kh, kw, s))
    return taps


# ------------------------------- parameters ----------------------------------
def init_params(key):
    """PyTorch-layout parameters (OIHW convs, (in,out,kh,kw) conv-transpose)."""
    params = {}

    def nrm(k, shape, fan_in):
        return jax.random.normal(k, shape, jnp.float32) / jnp.sqrt(fan_in)

    keys = iter(jax.random.split(key, 64))
    for i in range(4):
        cin, cout = ENC_CH[i], ENC_CH[i + 1]
        params[f"enc{i}_w"] = nrm(next(keys), (cout, cin, 3, 3), cin * 9)
        params[f"enc{i}_b"] = nrm(next(keys), (cout,), cin * 9)

    params["fc_mu_w"] = nrm(next(keys), (LATENT_DIM, FLAT_DIM), FLAT_DIM)
    params["fc_mu_b"] = nrm(next(keys), (LATENT_DIM,), FLAT_DIM)
    params["fc_var_w"] = nrm(next(keys), (LATENT_DIM, FLAT_DIM), FLAT_DIM)
    params["fc_var_b"] = nrm(next(keys), (LATENT_DIM,), FLAT_DIM)
    params["dec_in_w"] = nrm(next(keys), (FLAT_DIM, LATENT_DIM), LATENT_DIM)
    params["dec_in_b"] = nrm(next(keys), (FLAT_DIM,), LATENT_DIM)

    for i in range(4):
        cin, cout = DEC_CH[i], DEC_CH[i + 1]
        params[f"dec{i}_w"] = nrm(next(keys), (cin, cout, 3, 3), cout * 9)
        params[f"dec{i}_b"] = nrm(next(keys), (cout,), cout * 9)
    return params


# -------------------- one-time weight pre-transform (numpy) ------------------
def prepare_operands(params, batch):
    """Tap stacking / weight concatenation / folding, done ONCE outside jit.

    The batch size is baked into the block-diagonal selection matrices so the
    whole forward runs as a single grid-less pallas_call at M = batch.
    """
    assert IMG_SIZE % 16 == 0 and FEAT == 1
    # TODO(synk): for FEAT > 1 fold the NCHW flatten permutation into the fc weights.
    assert CHANNELS <= 8
    f32 = np.float32
    eye_b = np.eye(batch, dtype=f32)

    def bf(a):
        return jnp.asarray(np.asarray(a, f32), jnp.bfloat16)

    def fl(a):
        return jnp.asarray(np.asarray(a, f32), jnp.float32)

    ops = []

    # encoder L0: im2col weight, rows ordered (kh, kw, cin)
    w0 = np.asarray(params["enc0_w"], f32)                        # (32, C, 3, 3)
    ops += [bf(w0.transpose(2, 3, 1, 0).reshape(9 * CHANNELS, 32)),
            fl(np.asarray(params["enc0_b"], f32).reshape(1, 32))]

    # encoder L1 / L2: stacked block-diag gather + per-tap channel weights
    for i, h_in in ((1, 8), (2, 4)):
        taps = _conv_s2_taps(h_in, h_in)
        w = np.asarray(params[f"enc{i}_w"], f32)                  # (Cout, Cin, 3, 3)
        s_stack = np.concatenate([np.kron(eye_b, s) for _, _, s in taps], axis=0)
        w_taps = np.stack([w[:, :, kh, kw].T for kh, kw, _ in taps])
        ops += [bf(s_stack), bf(w_taps),
                fl(np.asarray(params[f"enc{i}_b"], f32).reshape(1, -1))]

    # encoder L3 (2x2 -> 1x1): tap weights concatenated along N (lane-dense)
    taps = _conv_s2_taps(2, 2)                                    # 4 live taps
    w = np.asarray(params["enc3_w"], f32)                         # (256, 128, 3, 3)
    w3_cat = np.concatenate([w[:, :, kh, kw].T for kh, kw, _ in taps], axis=1)
    s3_bd = np.stack([np.kron(eye_b, s) for _, _, s in taps])     # (4, B, B*4)
    ops += [bf(w3_cat), bf(s3_bd),
            fl(np.asarray(params["enc3_b"], f32).reshape(1, -1))]

    # fc_mu + fc_var fused into one (256, 2*latent) matmul
    wmv = np.concatenate([np.asarray(params["fc_mu_w"], f32).T,
                          np.asarray(params["fc_var_w"], f32).T], axis=1)
    bmv = np.concatenate([np.asarray(params["fc_mu_b"], f32),
                          np.asarray(params["fc_var_b"], f32)]).reshape(1, -1)
    ops += [bf(wmv), fl(bmv)]

    # decoder L0 (1x1 -> 2x2): decoder_input folded into tap weights and bias
    taps = _convT_s2_taps(1, 1)                                   # 4 live taps
    wdi = np.asarray(params["dec_in_w"], f32).T                   # (LAT, 256)
    bdi = np.asarray(params["dec_in_b"], f32).reshape(1, -1)      # (1, 256)
    w = np.asarray(params["dec0_w"], f32)                         # (256, 128, 3, 3)
    wd0_cat = np.concatenate([wdi @ w[:, :, kh, kw] for kh, kw, _ in taps], axis=1)
    s0_bd = np.stack([np.kron(eye_b, s) for _, _, s in taps])     # (4, B*4, B)
    bias0 = np.tile(np.asarray(params["dec0_b"], f32).reshape(1, -1), (4, 1))
    for kh, kw, s in taps:
        bias0 += s @ (bdi @ w[:, :, kh, kw])                      # decoder_input bias term
    bias0 = np.tile(bias0, (batch, 1))                            # (B*4, 128)
    ops += [bf(wd0_cat), bf(s0_bd), fl(bias0)]

    # decoder L1 (2x2 -> 4x4): stacked block-diag scatter + per-tap weights
    taps = _convT_s2_taps(2, 2)
    w = np.asarray(params["dec1_w"], f32)                         # (128, 64, 3, 3)
    sd1 = np.concatenate([np.kron(eye_b, s) for _, _, s in taps], axis=0)
    wd1 = np.stack([w[:, :, kh, kw] for kh, kw, _ in taps])       # (9, 128, 64)
    ops += [bf(sd1), bf(wd1),
            fl(np.asarray(params["dec1_b"], f32).reshape(1, -1))]

    # decoder L2 (4x4 -> 8x8): channel-major ("transposed") per-tap form
    taps = _convT_s2_taps(4, 4)
    w = np.asarray(params["dec2_w"], f32)                         # (64, 32, 3, 3)
    wd2t = np.concatenate([w[:, :, kh, kw].T for kh, kw, _ in taps], axis=0)
    sd2t = np.stack([np.kron(eye_b, s.T) for _, _, s in taps])    # (9, B*16, B*64)
    bd2t = np.broadcast_to(np.asarray(params["dec2_b"], f32).reshape(-1, 1),
                           (32, batch * 64)).copy()
    ops += [bf(wd2t), bf(sd2t), fl(bd2t)]

    # decoder L3 (8x8 -> 16x16): channel-major, C_out padded 4 -> 8 for aligned slices
    taps = _convT_s2_taps(8, 8)
    w = np.asarray(params["dec3_w"], f32)                         # (32, 4, 3, 3)
    blocks = []
    for kh, kw, _ in taps:
        blk = np.zeros((8, 32), f32)
        blk[:CHANNELS] = w[:, :, kh, kw].T
        blocks.append(blk)
    wd3t = np.concatenate(blocks, axis=0)                         # (9*8, 32)
    sd3t = np.stack([np.kron(eye_b, s.T) for _, _, s in taps])    # (9, B*64, B*256)
    bd3t = np.zeros((8, batch * IMG_SIZE * IMG_SIZE), f32)
    bd3t[:CHANNELS] = np.asarray(params["dec3_b"], f32).reshape(-1, 1)
    ops += [bf(wd3t), bf(sd3t), fl(bd3t)]

    return ops


# ------------------------------ Pallas kernel ---------------------------------
def _vae_kernel(patches_ref, eps_ref,
                w0_ref, b0_ref,
                s1_ref, w1_ref, b1_ref,
                s2_ref, w2_ref, b2_ref,
                w3_ref, s3_ref, b3_ref,
                wmv_ref, bmv_ref,
                wd0_ref, s0d_ref, bd0_ref,
                sd1_ref, wd1_ref, bd1_ref,
                wd2t_ref, sd2t_ref, bd2t_ref,
                wd3t_ref, sd3t_ref, bd3t_ref,
                recon_ref, mv_ref):
    f32, bf16 = jnp.float32, jnp.bfloat16
    lat = eps_ref.shape[1]

    def mm(a, b):
        return jnp.dot(a, b, preferred_element_type=f32)

    def gather_conv(x_bf, s_ref, w_ref, b_ref):
        # relu(sum_t S_t @ x @ W_t + b): all taps' gathers run as ONE stacked
        # MXU op (exact 0/1 selection), then one channel matmul per tap.
        n_taps = w_ref.shape[0]
        rows = s_ref.shape[0] // n_taps
        g = mm(s_ref[...], x_bf).astype(bf16)
        acc = jnp.zeros((rows, w_ref.shape[2]), f32)
        for t in range(n_taps):
            acc = acc + mm(g[t * rows:(t + 1) * rows, :], w_ref[t])
        return jnp.maximum(acc + b_ref[...], 0.0)

    def weightcat_conv(x_bf, w_ref, s_ref, b_ref):
        # relu(sum_t S_t @ (x @ W_t) + b): tap weights concatenated along N
        # (one lane-dense matmul), then tiny per-tap selection matmuls.
        n_taps = s_ref.shape[0]
        cout = w_ref.shape[1] // n_taps
        y = mm(x_bf, w_ref[...]).astype(bf16)
        acc = jnp.zeros((s_ref.shape[1], cout), f32)
        for t in range(n_taps):
            acc = acc + mm(s_ref[t], y[:, t * cout:(t + 1) * cout])
        return jnp.maximum(acc + b_ref[...], 0.0)

    def scatter_convT_cm(xt_bf, wt_ref, st_ref, b_ref):
        # channel-major convT: out^T = sum_t W_t^T @ x^T @ S_t^T  (Cout, B*Mout)
        n_taps = st_ref.shape[0]
        cblk = wt_ref.shape[0] // n_taps
        zt = mm(wt_ref[...], xt_bf).astype(bf16)
        acc = jnp.zeros((cblk, st_ref.shape[2]), f32)
        for t in range(n_taps):
            acc = acc + mm(zt[t * cblk:(t + 1) * cblk, :], st_ref[t])
        return acc + b_ref[...]

    # -------- encoder: conv0 (im2col'd in wrapper) + 3 tap-collapsed convs ----
    h = jnp.maximum(mm(patches_ref[...], w0_ref[...]) + b0_ref[...], 0.0)   # (B*64, 32)
    h = gather_conv(h.astype(bf16), s1_ref, w1_ref, b1_ref)                 # (B*16, 64)
    h = gather_conv(h.astype(bf16), s2_ref, w2_ref, b2_ref)                 # (B*4, 128)
    h = weightcat_conv(h.astype(bf16), w3_ref, s3_ref, b3_ref)              # (B, 256)

    # -------- fused fc_mu/fc_var + reparameterize ------------------------------
    mv = mm(h.astype(bf16), wmv_ref[...]) + bmv_ref[...]                    # (B, 2*lat)
    mv_ref[...] = mv
    mu = mv[:, :lat]
    log_var = mv[:, lat:]
    z = mu + eps_ref[...] * jnp.exp(0.5 * log_var)                          # (B, lat)

    # -------- decoder: L0 (decoder_input folded), L1, then channel-major L2/L3 -
    h = weightcat_conv(z.astype(bf16), wd0_ref, s0d_ref, bd0_ref)           # (B*4, 128)
    h = gather_conv(h.astype(bf16), sd1_ref, wd1_ref, bd1_ref)              # (B*16, 64)
    h = jnp.maximum(
        scatter_convT_cm(h.astype(bf16).T, wd2t_ref, sd2t_ref, bd2t_ref),
        0.0)                                                                # (32, B*64)
    out = scatter_convT_cm(h.astype(bf16), wd3t_ref, sd3t_ref, bd3t_ref)    # (8, B*256)
    recon_ref[...] = jnp.tanh(out[0:recon_ref.shape[0], :])                 # lane-dense (C, B*H*W)


# ------------------------------- forward --------------------------------------
def vae_forward(operands, x_nchw, eps):
    n, c, hh, _ = x_nchw.shape          # n must equal the batch baked into operands
    h_out = hh // 2

    # wrapper-side im2col for the first stride-2 conv (tiny XLA glue):
    # patches rows = (b, ho, wo), cols = (kh, kw, cin)
    xp = jnp.pad(x_nchw, ((0, 0), (0, 0), (1, 1), (1, 1)))
    cols = []
    for kh in range(3):
        for kw in range(3):
            cols.append(xp[:, :, kh:kh + 2 * h_out:2, kw:kw + 2 * h_out:2])
    p = jnp.stack(cols, axis=1)                                  # (N, 9, C, 8, 8)
    patches = jnp.transpose(p, (0, 3, 4, 1, 2)).reshape(n * h_out * h_out, 9 * c)
    patches = patches.astype(jnp.bfloat16)

    out_shape = (
        jax.ShapeDtypeStruct((c, n * IMG_SIZE * IMG_SIZE), jnp.float32),   # recon^T
        jax.ShapeDtypeStruct((n, 2 * LATENT_DIM), jnp.float32),            # [mu | log_var]
    )
    # no grid: whole problem (weights ~2 MiB + activations) lives in VMEM for
    # one invocation; weights are DMA'd once and batch rides the matmul M dim.
    recon_t, mv = pl.pallas_call(_vae_kernel, out_shape=out_shape)(
        patches, eps, *operands)

    recon = jnp.transpose(recon_t.reshape(c, n, IMG_SIZE, IMG_SIZE), (1, 0, 2, 3))
    mu = mv[:, :LATENT_DIM]
    log_var = mv[:, LATENT_DIM:]
    return recon, mu, log_var


# --------------------------- pure-JAX f32 reference ----------------------------
def vae_reference(params, x_nchw, eps):
    h = x_nchw
    for i in range(4):
        w, b = params[f"enc{i}_w"], params[f"enc{i}_b"]
        h = lax.conv_general_dilated(h, w, (2, 2), ((1, 1), (1, 1)),
                                     dimension_numbers=("NCHW", "OIHW", "NCHW"))
        h = jnp.maximum(h + b[None, :, None, None], 0.0)
    flat = h.reshape(h.shape[0], -1)
    mu = flat @ params["fc_mu_w"].T + params["fc_mu_b"]
    log_var = flat @ params["fc_var_w"].T + params["fc_var_b"]
    z = mu + eps * jnp.exp(0.5 * log_var)
    d = z @ params["dec_in_w"].T + params["dec_in_b"]
    h = d.reshape(-1, 256, FEAT, FEAT)
    for i in range(4):
        w, b = params[f"dec{i}_w"], params[f"dec{i}_b"]
        w_conv = jnp.transpose(w, (1, 0, 2, 3))[:, :, ::-1, ::-1]     # OIHW, flipped
        h = lax.conv_general_dilated(h, w_conv, (1, 1), ((1, 2), (1, 2)),
                                     lhs_dilation=(2, 2),
                                     dimension_numbers=("NCHW", "OIHW", "NCHW"))
        h = h + b[None, :, None, None]
        h = jnp.maximum(h, 0.0) if i < 3 else jnp.tanh(h)
    return h, mu, log_var


# ----------------------------------- main --------------------------------------
if __name__ == "__main__":
    key = jax.random.PRNGKey(0)
    k_param, k_x, k_eps = jax.random.split(key, 3)

    params = init_params(k_param)
    x = jax.random.normal(k_x, (BATCH, CHANNELS, IMG_SIZE, IMG_SIZE), jnp.float32)
    # eps = torch.randn_like(std); generated deterministically and passed in
    eps = jax.random.normal(k_eps, (BATCH, LATENT_DIM), jnp.float32)

    operands = prepare_operands(params, BATCH)   # one-time weight pre-transform

    fwd = jax.jit(vae_forward)
    recon, mu, log_var = fwd(operands, x, eps)
    jax.block_until_ready((recon, mu, log_var))

    assert recon.shape == (BATCH, CHANNELS, IMG_SIZE, IMG_SIZE)
    assert mu.shape == (BATCH, LATENT_DIM)
    assert log_var.shape == (BATCH, LATENT_DIM)

    # numerical check vs. a pure-JAX f32 reference (kernel uses bf16 MXU operands)
    r_want, mu_want, lv_want = vae_reference(params, x, eps)
    errs = (float(jnp.max(jnp.abs(recon - r_want))),
            float(jnp.max(jnp.abs(mu - mu_want))),
            float(jnp.max(jnp.abs(log_var - lv_want))))
    assert all(e < 1e-1 for e in errs), f"mismatch vs reference: {errs}"

    print("KERNEL_OK")
</pallas_src>

<mosaic_0001>
module attributes {stable_mosaic.version = 11 : i64} {
  func.func @_vae_kernel(%arg0: memref<128x36xbf16, #tpu.memory_space<vmem>>, %arg1: memref<2x32xf32, #tpu.memory_space<vmem>>, %arg2: memref<36x32xbf16, #tpu.memory_space<vmem>>, %arg3: memref<1x32xf32, #tpu.memory_space<vmem>>, %arg4: memref<288x128xbf16, #tpu.memory_space<vmem>>, %arg5: memref<9x32x64xbf16, #tpu.memory_space<vmem>>, %arg6: memref<1x64xf32, #tpu.memory_space<vmem>>, %arg7: memref<72x32xbf16, #tpu.memory_space<vmem>>, %arg8: memref<9x64x128xbf16, #tpu.memory_space<vmem>>, %arg9: memref<1x128xf32, #tpu.memory_space<vmem>>, %arg10: memref<128x1024xbf16, #tpu.memory_space<vmem>>, %arg11: memref<4x2x8xbf16, #tpu.memory_space<vmem>>, %arg12: memref<1x256xf32, #tpu.memory_space<vmem>>, %arg13: memref<256x64xbf16, #tpu.memory_space<vmem>>, %arg14: memref<1x64xf32, #tpu.memory_space<vmem>>, %arg15: memref<32x512xbf16, #tpu.memory_space<vmem>>, %arg16: memref<4x8x2xbf16, #tpu.memory_space<vmem>>, %arg17: memref<8x128xf32, #tpu.memory_space<vmem>>, %arg18: memref<288x8xbf16, #tpu.memory_space<vmem>>, %arg19: memref<9x128x64xbf16, #tpu.memory_space<vmem>>, %arg20: memref<1x64xf32, #tpu.memory_space<vmem>>, %arg21: memref<288x64xbf16, #tpu.memory_space<vmem>>, %arg22: memref<9x32x128xbf16, #tpu.memory_space<vmem>>, %arg23: memref<32x128xf32, #tpu.memory_space<vmem>>, %arg24: memref<72x32xbf16, #tpu.memory_space<vmem>>, %arg25: memref<9x128x512xbf16, #tpu.memory_space<vmem>>, %arg26: memref<8x512xf32, #tpu.memory_space<vmem>>, %arg27: memref<4x512xf32, #tpu.memory_space<vmem>>, %arg28: memref<2x64xf32, #tpu.memory_space<vmem>>) attributes {dimension_semantics = [], scalar_prefetch = 0 : i64, scratch_operands = 0 : i64, tpu.core_type = #tpu.core_type<tc>} {
    %c0 = arith.constant 0 : index
    %c0_0 = arith.constant 0 : index
    %0 = vector.load %arg0[%c0, %c0_0] : memref<128x36xbf16, #tpu.memory_space<vmem>>, vector<128x36xbf16>
    %c0_1 = arith.constant 0 : index
    %c0_2 = arith.constant 0 : index
    %1 = vector.load %arg2[%c0_1, %c0_2] : memref<36x32xbf16, #tpu.memory_space<vmem>>, vector<36x32xbf16>
    %cst = arith.constant dense<0.000000e+00> : vector<128x32xf32>
    %2 = tpu.matmul %0, %1, %cst {dimension_numbers = #tpu.dot_dimension_numbers<[1], [0], [0], [1], [0, 0, 1, 1], [], []>} : vector<128x36xbf16>, vector<36x32xbf16>, vector<128x32xf32> -> vector<128x32xf32>
    %c0_3 = arith.constant 0 : index
    %c0_4 = arith.constant 0 : index
    %3 = vector.load %arg3[%c0_3, %c0_4] : memref<1x32xf32, #tpu.memory_space<vmem>>, vector<1x32xf32>
    %4 = vector.broadcast %3 : vector<1x32xf32> to vector<128x32xf32>
    %5 = arith.addf %2, %4 : vector<128x32xf32>
    %cst_5 = arith.constant 0.000000e+00 : f32
    %6 = vector.broadcast %cst_5 : f32 to vector<128x32xf32>
    %7 = arith.maximumf %5, %6 : vector<128x32xf32>
    %8 = arith.truncf %7 : vector<128x32xf32> to vector<128x32xbf16>
    %c0_6 = arith.constant 0 : index
    %c0_7 = arith.constant 0 : index
    %9 = vector.load %arg4[%c0_6, %c0_7] : memref<288x128xbf16, #tpu.memory_space<vmem>>, vector<288x128xbf16>
    %cst_8 = arith.constant dense<0.000000e+00> : vector<288x32xf32>
    %10 = tpu.matmul %9, %8, %cst_8 {dimension_numbers = #tpu.dot_dimension_numbers<[1], [0], [0], [1], [0, 0, 1, 1], [], []>} : vector<288x128xbf16>, vector<128x32xbf16>, vector<288x32xf32> -> vector<288x32xf32>
    %11 = arith.truncf %10 : vector<288x32xf32> to vector<288x32xbf16>
    %cst_9 = arith.constant 0.000000e+00 : f32
    %12 = vector.broadcast %cst_9 : f32 to vector<32x64xf32>
    %13 = vector.extract_strided_slice %11 {offsets = [0, 0], sizes = [32, 32], strides = [1, 1]} : vector<288x32xbf16> to vector<32x32xbf16>
    %c0_10 = arith.constant 0 : index
    %c0_11 = arith.constant 0 : index
    %c0_12 = arith.constant 0 : index
    %14 = vector.load %arg5[%c0_10, %c0_11, %c0_12] : memref<9x32x64xbf16, #tpu.memory_space<vmem>>, vector<1x32x64xbf16>
    %15 = vector.shape_cast %14 : vector<1x32x64xbf16> to vector<32x64xbf16>
    %cst_13 = arith.constant dense<0.000000e+00> : vector<32x64xf32>
    %16 = tpu.matmul %13, %15, %cst_13 {dimension_numbers = #tpu.dot_dimension_numbers<[1], [0], [0], [1], [0, 0, 1, 1], [], []>} : vector<32x32xbf16>, vector<32x64xbf16>, vector<32x64xf32> -> vector<32x64xf32>
    %17 = arith.addf %12, %16 : vector<32x64xf32>
    %18 = vector.extract_strided_slice %11 {offsets = [32, 0], sizes = [32, 32], strides = [1, 1]} : vector<288x32xbf16> to vector<32x32xbf16>
    %c1 = arith.constant 1 : index
    %c0_14 = arith.constant 0 : index
    %c0_15 = arith.constant 0 : index
    %19 = vector.load %arg5[%c1, %c0_14, %c0_15] : memref<9x32x64xbf16, #tpu.memory_space<vmem>>, vector<1x32x64xbf16>
    %20 = vector.shape_cast %19 : vector<1x32x64xbf16> to vector<32x64xbf16>
    %cst_16 = arith.constant dense<0.000000e+00> : vector<32x64xf32>
    %21 = tpu.matmul %18, %20, %cst_16 {dimension_numbers = #tpu.dot_dimension_numbers<[1], [0], [0], [1], [0, 0, 1, 1], [], []>} : vector<32x32xbf16>, vector<32x64xbf16>, vector<32x64xf32> -> vector<32x64xf32>
    %22 = arith.addf %17, %21 : vector<32x64xf32>
    %23 = vector.extract_strided_slice %11 {offsets = [64, 0], sizes = [32, 32], strides = [1, 1]} : vector<288x32xbf16> to vector<32x32xbf16>
    %c2 = arith.constant 2 : index
    %c0_17 = arith.constant 0 : index
    %c0_18 = arith.constant 0 : index
    %24 = vector.load %arg5[%c2, %c0_17, %c0_18] : memref<9x32x64xbf16, #tpu.memory_space<vmem>>, vector<1x32x64xbf16>
    %25 = vector.shape_cast %24 : vector<1x32x64xbf16> to vector<32x64xbf16>
    %cst_19 = arith.constant dense<0.000000e+00> : vector<32x64xf32>
    %26 = tpu.matmul %23, %25, %cst_19 {dimension_numbers = #tpu.dot_dimension_numbers<[1], [0], [0], [1], [0, 0, 1, 1], [], []>} : vector<32x32xbf16>, vector<32x64xbf16>, vector<32x64xf32> -> vector<32x64xf32>
    %27 = arith.addf %22, %26 : vector<32x64xf32>
    %28 = vector.extract_strided_slice %11 {offsets = [96, 0], sizes = [32, 32], strides = [1, 1]} : vector<288x32xbf16> to vector<32x32xbf16>
    %c3 = arith.constant 3 : index
    %c0_20 = arith.constant 0 : index
    %c0_21 = arith.constant 0 : index
    %29 = vector.load %arg5[%c3, %c0_20, %c0_21] : memref<9x32x64xbf16, #tpu.memory_space<vmem>>, vector<1x32x64xbf16>
    %30 = vector.shape_cast %29 : vector<1x32x64xbf16> to vector<32x64xbf16>
    %cst_22 = arith.constant dense<0.000000e+00> : vector<32x64xf32>
    %31 = tpu.matmul %28, %30, %cst_22 {dimension_numbers = #tpu.dot_dimension_numbers<[1], [0], [0], [1], [0, 0, 1, 1], [], []>} : vector<32x32xbf16>, vector<32x64xbf16>, vector<32x64xf32> -> vector<32x64xf32>
    %32 = arith.addf %27, %31 : vector<32x64xf32>
    %33 = vector.extract_strided_slice %11 {offsets = [128, 0], sizes = [32, 32], strides = [1, 1]} : vector<288x32xbf16> to vector<32x32xbf16>
    %c4 = arith.constant 4 : index
    %c0_23 = arith.constant 0 : index
    %c0_24 = arith.constant 0 : index
    %34 = vector.load %arg5[%c4, %c0_23, %c0_24] : memref<9x32x64xbf16, #tpu.memory_space<vmem>>, vector<1x32x64xbf16>
    %35 = vector.shape_cast %34 : vector<1x32x64xbf16> to vector<32x64xbf16>
    %cst_25 = arith.constant dense<0.000000e+00> : vector<32x64xf32>
    %36 = tpu.matmul %33, %35, %cst_25 {dimension_numbers = #tpu.dot_dimension_numbers<[1], [0], [0], [1], [0, 0, 1, 1], [], []>} : vector<32x32xbf16>, vector<32x64xbf16>, vector<32x64xf32> -> vector<32x64xf32>
    %37 = arith.addf %32, %36 : vector<32x64xf32>
    %38 = vector.extract_strided_slice %11 {offsets = [160, 0], sizes = [32, 32], strides = [1, 1]} : vector<288x32xbf16> to vector<32x32xbf16>
    %c5 = arith.constant 5 : index
    %c0_26 = arith.constant 0 : index
    %c0_27 = arith.constant 0 : index
    %39 = vector.load %arg5[%c5, %c0_26, %c0_27] : memref<9x32x64xbf16, #tpu.memory_space<vmem>>, vector<1x32x64xbf16>
    %40 = vector.shape_cast %39 : vector<1x32x64xbf16> to vector<32x64xbf16>
    %cst_28 = arith.constant dense<0.000000e+00> : vector<32x64xf32>
    %41 = tpu.matmul %38, %40, %cst_28 {dimension_numbers = #tpu.dot_dimension_numbers<[1], [0], [0], [1], [0, 0, 1, 1], [], []>} : vector<32x32xbf16>, vector<32x64xbf16>, vector<32x64xf32> -> vector<32x64xf32>
    %42 = arith.addf %37, %41 : vector<32x64xf32>
    %43 = vector.extract_strided_slice %11 {offsets = [192, 0], sizes = [32, 32], strides = [1, 1]} : vector<288x32xbf16> to vector<32x32xbf16>
    %c6 = arith.constant 6 : index
    %c0_29 = arith.constant 0 : index
    %c0_30 = arith.constant 0 : index
    %44 = vector.load %arg5[%c6, %c0_29, %c0_30] : memref<9x32x64xbf16, #tpu.memory_space<vmem>>, vector<1x32x64xbf16>
    %45 = vector.shape_cast %44 : vector<1x32x64xbf16> to vector<32x64xbf16>
    %cst_31 = arith.constant dense<0.000000e+00> : vector<32x64xf32>
    %46 = tpu.matmul %43, %45, %cst_31 {dimension_numbers = #tpu.dot_dimension_numbers<[1], [0], [0], [1], [0, 0, 1, 1], [], []>} : vector<32x32xbf16>, vector<32x64xbf16>, vector<32x64xf32> -> vector<32x64xf32>
    %47 = arith.addf %42, %46 : vector<32x64xf32>
    %48 = vector.extract_strided_slice %11 {offsets = [224, 0], sizes = [32, 32], strides = [1, 1]} : vector<288x32xbf16> to vector<32x32xbf16>
    %c7 = arith.constant 7 : index
    %c0_32 = arith.constant 0 : index
    %c0_33 = arith.constant 0 : index
    %49 = vector.load %arg5[%c7, %c0_32, %c0_33] : memref<9x32x64xbf16, #tpu.memory_space<vmem>>, vector<1x32x64xbf16>
    %50 = vector.shape_cast %49 : vector<1x32x64xbf16> to vector<32x64xbf16>
    %cst_34 = arith.constant dense<0.000000e+00> : vector<32x64xf32>
    %51 = tpu.matmul %48, %50, %cst_34 {dimension_numbers = #tpu.dot_dimension_numbers<[1], [0], [0], [1], [0, 0, 1, 1], [], []>} : vector<32x32xbf16>, vector<32x64xbf16>, vector<32x64xf32> -> vector<32x64xf32>
    %52 = arith.addf %47, %51 : vector<32x64xf32>
    %53 = vector.extract_strided_slice %11 {offsets = [256, 0], sizes = [32, 32], strides = [1, 1]} : vector<288x32xbf16> to vector<32x32xbf16>
    %c8 = arith.constant 8 : index
    %c0_35 = arith.constant 0 : index
    %c0_36 = arith.constant 0 : index
    %54 = vector.load %arg5[%c8, %c0_35, %c0_36] : memref<9x32x64xbf16, #tpu.memory_space<vmem>>, vector<1x32x64xbf16>
    %55 = vector.shape_cast %54 : vector<1x32x64xbf16> to vector<32x64xbf16>
    %cst_37 = arith.constant dense<0.000000e+00> : vector<32x64xf32>
    %56 = tpu.matmul %53, %55, %cst_37 {dimension_numbers = #tpu.dot_dimension_numbers<[1], [0], [0], [1], [0, 0, 1, 1], [], []>} : vector<32x32xbf16>, vector<32x64xbf16>, vector<32x64xf32> -> vector<32x64xf32>
    %57 = arith.addf %52, %56 : vector<32x64xf32>
    %c0_38 = arith.constant 0 : index
    %c0_39 = arith.constant 0 : index
    %58 = vector.load %arg6[%c0_38, %c0_39] : memref<1x64xf32, #tpu.memory_space<vmem>>, vector<1x64xf32>
    %59 = vector.broadcast %58 : vector<1x64xf32> to vector<32x64xf32>
    %60 = arith.addf %57, %59 : vector<32x64xf32>
    %cst_40 = arith.constant 0.000000e+00 : f32
    %61 = vector.broadcast %cst_40 : f32 to vector<32x64xf32>
    %62 = arith.maximumf %60, %61 : vector<32x64xf32>
    %63 = arith.truncf %62 : vector<32x64xf32> to vector<32x64xbf16>
    %c0_41 = arith.constant 0 : index
    %c0_42 = arith.constant 0 : index
    %64 = vector.load %arg7[%c0_41, %c0_42] : memref<72x32xbf16, #tpu.memory_space<vmem>>, vector<72x32xbf16>
    %cst_43 = arith.constant dense<0.000000e+00> : vector<72x64xf32>
    %65 = tpu.matmul %64, %63, %cst_43 {dimension_numbers = #tpu.dot_dimension_numbers<[1], [0], [0], [1], [0, 0, 1, 1], [], []>} : vector<72x32xbf16>, vector<32x64xbf16>, vector<72x64xf32> -> vector<72x64xf32>
    %66 = arith.truncf %65 : vector<72x64xf32> to vector<72x64xbf16>
    %cst_44 = arith.constant 0.000000e+00 : f32
    %67 = vector.broadcast %cst_44 : f32 to vector<8x128xf32>
    %68 = vector.extract_strided_slice %66 {offsets = [0, 0], sizes = [8, 64], strides = [1, 1]} : vector<72x64xbf16> to vector<8x64xbf16>
    %c0_45 = arith.constant 0 : index
    %c0_46 = arith.constant 0 : index
    %c0_47 = arith.constant 0 : index
    %69 = vector.load %arg8[%c0_45, %c0_46, %c0_47] : memref<9x64x128xbf16, #tpu.memory_space<vmem>>, vector<1x64x128xbf16>
    %70 = vector.shape_cast %69 : vector<1x64x128xbf16> to vector<64x128xbf16>
    %cst_48 = arith.constant dense<0.000000e+00> : vector<8x128xf32>
    %71 = tpu.matmul %68, %70, %cst_48 {dimension_numbers = #tpu.dot_dimension_numbers<[1], [0], [0], [1], [0, 0, 1, 1], [], []>} : vector<8x64xbf16>, vector<64x128xbf16>, vector<8x128xf32> -> vector<8x128xf32>
    %72 = arith.addf %67, %71 : vector<8x128xf32>
    %73 = vector.extract_strided_slice %66 {offsets = [8, 0], sizes = [8, 64], strides = [1, 1]} : vector<72x64xbf16> to vector<8x64xbf16>
    %c1_49 = arith.constant 1 : index
    %c0_50 = arith.constant 0 : index
    %c0_51 = arith.constant 0 : index
    %74 = vector.load %arg8[%c1_49, %c0_50, %c0_51] : memref<9x64x128xbf16, #tpu.memory_space<vmem>>, vector<1x64x128xbf16>
    %75 = vector.shape_cast %74 : vector<1x64x128xbf16> to vector<64x128xbf16>
    %cst_52 = arith.constant dense<0.000000e+00> : vector<8x128xf32>
    %76 = tpu.matmul %73, %75, %cst_52 {dimension_numbers = #tpu.dot_dimension_numbers<[1], [0], [0], [1], [0, 0, 1, 1], [], []>} : vector<8x64xbf16>, vector<64x128xbf16>, vector<8x128xf32> -> vector<8x128xf32>
    %77 = arith.addf %72, %76 : vector<8x128xf32>
    %78 = vector.extract_strided_slice %66 {offsets = [16, 0], sizes = [8, 64], strides = [1, 1]} : vector<72x64xbf16> to vector<8x64xbf16>
    %c2_53 = arith.constant 2 : index
    %c0_54 = arith.constant 0 : index
    %c0_55 = arith.constant 0 : index
    %79 = vector.load %arg8[%c2_53, %c0_54, %c0_55] : memref<9x64x128xbf16, #tpu.memory_space<vmem>>, vector<1x64x128xbf16>
    %80 = vector.shape_cast %79 : vector<1x64x128xbf16> to vector<64x128xbf16>
    %cst_56 = arith.constant dense<0.000000e+00> : vector<8x128xf32>
    %81 = tpu.matmul %78, %80, %cst_56 {dimension_numbers = #tpu.dot_dimension_numbers<[1], [0], [0], [1], [0, 0, 1, 1], [], []>} : vector<8x64xbf16>, vector<64x128xbf16>, vector<8x128xf32> -> vector<8x128xf32>
    %82 = arith.addf %77, %81 : vector<8x128xf32>
    %83 = vector.extract_strided_slice %66 {offsets = [24, 0], sizes = [8, 64], strides = [1, 1]} : vector<72x64xbf16> to vector<8x64xbf16>
    %c3_57 = arith.constant 3 : index
    %c0_58 = arith.constant 0 : index
    %c0_59 = arith.constant 0 : index
    %84 = vector.load %arg8[%c3_57, %c0_58, %c0_59] : memref<9x64x128xbf16, #tpu.memory_space<vmem>>, vector<1x64x128xbf16>
    %85 = vector.shape_cast %84 : vector<1x64x128xbf16> to vector<64x128xbf16>
    %cst_60 = arith.constant dense<0.000000e+00> : vector<8x128xf32>
    %86 = tpu.matmul %83, %85, %cst_60 {dimension_numbers = #tpu.dot_dimension_numbers<[1], [0], [0], [1], [0, 0, 1, 1], [], []>} : vector<8x64xbf16>, vector<64x128xbf16>, vector<8x128xf32> -> vector<8x128xf32>
    %87 = arith.addf %82, %86 : vector<8x128xf32>
    %88 = vector.extract_strided_slice %66 {offsets = [32, 0], sizes = [8, 64], strides = [1, 1]} : vector<72x64xbf16> to vector<8x64xbf16>
    %c4_61 = arith.constant 4 : index
    %c0_62 = arith.constant 0 : index
    %c0_63 = arith.constant 0 : index
    %89 = vector.load %arg8[%c4_61, %c0_62, %c0_63] : memref<9x64x128xbf16, #tpu.memory_space<vmem>>, vector<1x64x128xbf16>
    %90 = vector.shape_cast %89 : vector<1x64x128xbf16> to vector<64x128xbf16>
    %cst_64 = arith.constant dense<0.000000e+00> : vector<8x128xf32>
    %91 = tpu.matmul %88, %90, %cst_64 {dimension_numbers = #tpu.dot_dimension_numbers<[1], [0], [0], [1], [0, 0, 1, 1], [], []>} : vector<8x64xbf16>, vector<64x128xbf16>, vector<8x128xf32> -> vector<8x128xf32>
    %92 = arith.addf %87, %91 : vector<8x128xf32>
    %93 = vector.extract_strided_slice %66 {offsets = [40, 0], sizes = [8, 64], strides = [1, 1]} : vector<72x64xbf16> to vector<8x64xbf16>
    %c5_65 = arith.constant 5 : index
    %c0_66 = arith.constant 0 : index
    %c0_67 = arith.constant 0 : index
    %94 = vector.load %arg8[%c5_65, %c0_66, %c0_67] : memref<9x64x128xbf16, #tpu.memory_space<vmem>>, vector<1x64x128xbf16>
    %95 = vector.shape_cast %94 : vector<1x64x128xbf16> to vector<64x128xbf16>
    %cst_68 = arith.constant dense<0.000000e+00> : vector<8x128xf32>
    %96 = tpu.matmul %93, %95, %cst_68 {dimension_numbers = #tpu.dot_dimension_numbers<[1], [0], [0], [1], [0, 0, 1, 1], [], []>} : vector<8x64xbf16>, vector<64x128xbf16>, vector<8x128xf32> -> vector<8x128xf32>
    %97 = arith.addf %92, %96 : vector<8x128xf32>
    %98 = vector.extract_strided_slice %66 {offsets = [48, 0], sizes = [8, 64], strides = [1, 1]} : vector<72x64xbf16> to vector<8x64xbf16>
    %c6_69 = arith.constant 6 : index
    %c0_70 = arith.constant 0 : index
    %c0_71 = arith.constant 0 : index
    %99 = vector.load %arg8[%c6_69, %c0_70, %c0_71] : memref<9x64x128xbf16, #tpu.memory_space<vmem>>, vector<1x64x128xbf16>
    %100 = vector.shape_cast %99 : vector<1x64x128xbf16> to vector<64x128xbf16>
    %cst_72 = arith.constant dense<0.000000e+00> : vector<8x128xf32>
    %101 = tpu.matmul %98, %100, %cst_72 {dimension_numbers = #tpu.dot_dimension_numbers<[1], [0], [0], [1], [0, 0, 1, 1], [], []>} : vector<8x64xbf16>, vector<64x128xbf16>, vector<8x128xf32> -> vector<8x128xf32>
    %102 = arith.addf %97, %101 : vector<8x128xf32>
    %103 = vector.extract_strided_slice %66 {offsets = [56, 0], sizes = [8, 64], strides = [1, 1]} : vector<72x64xbf16> to vector<8x64xbf16>
    %c7_73 = arith.constant 7 : index
    %c0_74 = arith.constant 0 : index
    %c0_75 = arith.constant 0 : index
    %104 = vector.load %arg8[%c7_73, %c0_74, %c0_75] : memref<9x64x128xbf16, #tpu.memory_space<vmem>>, vector<1x64x128xbf16>
    %105 = vector.shape_cast %104 : vector<1x64x128xbf16> to vector<64x128xbf16>
    %cst_76 = arith.constant dense<0.000000e+00> : vector<8x128xf32>
    %106 = tpu.matmul %103, %105, %cst_76 {dimension_numbers = #tpu.dot_dimension_numbers<[1], [0], [0], [1], [0, 0, 1, 1], [], []>} : vector<8x64xbf16>, vector<64x128xbf16>, vector<8x128xf32> -> vector<8x128xf32>
    %107 = arith.addf %102, %106 : vector<8x128xf32>
    %108 = vector.extract_strided_slice %66 {offsets = [64, 0], sizes = [8, 64], strides = [1, 1]} : vector<72x64xbf16> to vector<8x64xbf16>
    %c8_77 = arith.constant 8 : index
    %c0_78 = arith.constant 0 : index
    %c0_79 = arith.constant 0 : index
    %109 = vector.load %arg8[%c8_77, %c0_78, %c0_79] : memref<9x64x128xbf16, #tpu.memory_space<vmem>>, vector<1x64x128xbf16>
    %110 = vector.shape_cast %109 : vector<1x64x128xbf16> to vector<64x128xbf16>
    %cst_80 = arith.constant dense<0.000000e+00> : vector<8x128xf32>
    %111 = tpu.matmul %108, %110, %cst_80 {dimension_numbers = #tpu.dot_dimension_numbers<[1], [0], [0], [1], [0, 0, 1, 1], [], []>} : vector<8x64xbf16>, vector<64x128xbf16>, vector<8x128xf32> -> vector<8x128xf32>
    %112 = arith.addf %107, %111 : vector<8x128xf32>
    %c0_81 = arith.constant 0 : index
    %c0_82 = arith.constant 0 : index
    %113 = vector.load %arg9[%c0_81, %c0_82] : memref<1x128xf32, #tpu.memory_space<vmem>>, vector<1x128xf32>
    %114 = vector.broadcast %113 : vector<1x128xf32> to vector<8x128xf32>
    %115 = arith.addf %112, %114 : vector<8x128xf32>
    %cst_83 = arith.constant 0.000000e+00 : f32
    %116 = vector.broadcast %cst_83 : f32 to vector<8x128xf32>
    %117 = arith.maximumf %115, %116 : vector<8x128xf32>
    %118 = arith.truncf %117 : vector<8x128xf32> to vector<8x128xbf16>
    %c0_84 = arith.constant 0 : index
    %c0_85 = arith.constant 0 : index
    %119 = vector.load %arg10[%c0_84, %c0_85] : memref<128x1024xbf16, #tpu.memory_space<vmem>>, vector<128x1024xbf16>
    %cst_86 = arith.constant dense<0.000000e+00> : vector<8x1024xf32>
    %120 = tpu.matmul %118, %119, %cst_86 {dimension_numbers = #tpu.dot_dimension_numbers<[1], [0], [0], [1], [0, 0, 1, 1], [], []>} : vector<8x128xbf16>, vector<128x1024xbf16>, vector<8x1024xf32> -> vector<8x1024xf32>
    %121 = arith.truncf %120 : vector<8x1024xf32> to vector<8x1024xbf16>
    %cst_87 = arith.constant 0.000000e+00 : f32
    %122 = vector.broadcast %cst_87 : f32 to vector<2x256xf32>
    %c0_88 = arith.constant 0 : index
    %c0_89 = arith.constant 0 : index
    %c0_90 = arith.constant 0 : index
    %123 = vector.load %arg11[%c0_88, %c0_89, %c0_90] : memref<4x2x8xbf16, #tpu.memory_space<vmem>>, vector<1x2x8xbf16>
    %124 = vector.shape_cast %123 : vector<1x2x8xbf16> to vector<2x8xbf16>
    %125 = vector.extract_strided_slice %121 {offsets = [0, 0], sizes = [8, 256], strides = [1, 1]} : vector<8x1024xbf16> to vector<8x256xbf16>
    %cst_91 = arith.constant dense<0.000000e+00> : vector<2x256xf32>
    %126 = tpu.matmul %124, %125, %cst_91 {dimension_numbers = #tpu.dot_dimension_numbers<[1], [0], [0], [1], [0, 0, 1, 1], [], []>} : vector<2x8xbf16>, vector<8x256xbf16>, vector<2x256xf32> -> vector<2x256xf32>
    %127 = arith.addf %122, %126 : vector<2x256xf32>
    %c1_92 = arith.constant 1 : index
    %c0_93 = arith.constant 0 : index
    %c0_94 = arith.constant 0 : index
    %128 = vector.load %arg11[%c1_92, %c0_93, %c0_94] : memref<4x2x8xbf16, #tpu.memory_space<vmem>>, vector<1x2x8xbf16>
    %129 = vector.shape_cast %128 : vector<1x2x8xbf16> to vector<2x8xbf16>
    %130 = vector.extract_strided_slice %121 {offsets = [0, 256], sizes = [8, 256], strides = [1, 1]} : vector<8x1024xbf16> to vector<8x256xbf16>
    %cst_95 = arith.constant dense<0.000000e+00> : vector<2x256xf32>
    %131 = tpu.matmul %129, %130, %cst_95 {dimension_numbers = #tpu.dot_dimension_numbers<[1], [0], [0], [1], [0, 0, 1, 1], [], []>} : vector<2x8xbf16>, vector<8x256xbf16>, vector<2x256xf32> -> vector<2x256xf32>
    %132 = arith.addf %127, %131 : vector<2x256xf32>
    %c2_96 = arith.constant 2 : index
    %c0_97 = arith.constant 0 : index
    %c0_98 = arith.constant 0 : index
    %133 = vector.load %arg11[%c2_96, %c0_97, %c0_98] : memref<4x2x8xbf16, #tpu.memory_space<vmem>>, vector<1x2x8xbf16>
    %134 = vector.shape_cast %133 : vector<1x2x8xbf16> to vector<2x8xbf16>
    %135 = vector.extract_strided_slice %121 {offsets = [0, 512], sizes = [8, 256], strides = [1, 1]} : vector<8x1024xbf16> to vector<8x256xbf16>
    %cst_99 = arith.constant dense<0.000000e+00> : vector<2x256xf32>
    %136 = tpu.matmul %134, %135, %cst_99 {dimension_numbers = #tpu.dot_dimension_numbers<[1], [0], [0], [1], [0, 0, 1, 1], [], []>} : vector<2x8xbf16>, vector<8x256xbf16>, vector<2x256xf32> -> vector<2x256xf32>
    %137 = arith.addf %132, %136 : vector<2x256xf32>
    %c3_100 = arith.constant 3 : index
    %c0_101 = arith.constant 0 : index
    %c0_102 = arith.constant 0 : index
    %138 = vector.load %arg11[%c3_100, %c0_101, %c0_102] : memref<4x2x8xbf16, #tpu.memory_space<vmem>>, vector<1x2x8xbf16>
    %139 = vector.shape_cast %138 : vector<1x2x8xbf16> to vector<2x8xbf16>
    %140 = vector.extract_strided_slice %121 {offsets = [0, 768], sizes = [8, 256], strides = [1, 1]} : vector<8x1024xbf16> to vector<8x256xbf16>
    %cst_103 = arith.constant dense<0.000000e+00> : vector<2x256xf32>
    %141 = tpu.matmul %139, %140, %cst_103 {dimension_numbers = #tpu.dot_dimension_numbers<[1], [0], [0], [1], [0, 0, 1, 1], [], []>} : vector<2x8xbf16>, vector<8x256xbf16>, vector<2x256xf32> -> vector<2x256xf32>
    %142 = arith.addf %137, %141 : vector<2x256xf32>
    %c0_104 = arith.constant 0 : index
    %c0_105 = arith.constant 0 : index
    %143 = vector.load %arg12[%c0_104, %c0_105] : memref<1x256xf32, #tpu.memory_space<vmem>>, vector<1x256xf32>
    %144 = vector.broadcast %143 : vector<1x256xf32> to vector<2x256xf32>
    %145 = arith.addf %142, %144 : vector<2x256xf32>
    %cst_106 = arith.constant 0.000000e+00 : f32
    %146 = vector.broadcast %cst_106 : f32 to vector<2x256xf32>
    %147 = arith.maximumf %145, %146 : vector<2x256xf32>
    %148 = arith.truncf %147 : vector<2x256xf32> to vector<2x256xbf16>
    %c0_107 = arith.constant 0 : index
    %c0_108 = arith.constant 0 : index
    %149 = vector.load %arg13[%c0_107, %c0_108] : memref<256x64xbf16, #tpu.memory_space<vmem>>, vector<256x64xbf16>
    %cst_109 = arith.constant dense<0.000000e+00> : vector<2x64xf32>
    %150 = tpu.matmul %148, %149, %cst_109 {dimension_numbers = #tpu.dot_dimension_numbers<[1], [0], [0], [1], [0, 0, 1, 1], [], []>} : vector<2x256xbf16>, vector<256x64xbf16>, vector<2x64xf32> -> vector<2x64xf32>
    %c0_110 = arith.constant 0 : index
    %c0_111 = arith.constant 0 : index
    %151 = vector.load %arg14[%c0_110, %c0_111] : memref<1x64xf32, #tpu.memory_space<vmem>>, vector<1x64xf32>
    %152 = vector.broadcast %151 : vector<1x64xf32> to vector<2x64xf32>
    %153 = arith.addf %150, %152 : vector<2x64xf32>
    %c0_112 = arith.constant 0 : index
    %c0_113 = arith.constant 0 : index
    %154 = vector.load %arg28[%c0_112, %c0_113] : memref<2x64xf32, #tpu.memory_space<vmem>>, vector<2x64xf32>
    tpu.vector_store %arg28[%c0_112, %c0_113], %153 {strides = array<i32>} : memref<2x64xf32, #tpu.memory_space<vmem>>, vector<2x64xf32>,
    %155 = vector.extract_strided_slice %153 {offsets = [0, 0], sizes = [2, 32], strides = [1, 1]} : vector<2x64xf32> to vector<2x32xf32>
    %156 = vector.extract_strided_slice %153 {offsets = [0, 32], sizes = [2, 32], strides = [1, 1]} : vector<2x64xf32> to vector<2x32xf32>
    %c0_114 = arith.constant 0 : index
    %c0_115 = arith.constant 0 : index
    %157 = vector.load %arg1[%c0_114, %c0_115] : memref<2x32xf32, #tpu.memory_space<vmem>>, vector<2x32xf32>
    %cst_116 = arith.constant 5.000000e-01 : f32
    %158 = vector.broadcast %cst_116 : f32 to vector<2x32xf32>
    %159 = arith.mulf %158, %156 : vector<2x32xf32>
    %160 = math.exp %159 : vector<2x32xf32>
    %161 = arith.mulf %157, %160 : vector<2x32xf32>
    %162 = arith.addf %155, %161 : vector<2x32xf32>
    %163 = arith.truncf %162 : vector<2x32xf32> to vector<2x32xbf16>
    %c0_117 = arith.constant 0 : index
    %c0_118 = arith.constant 0 : index
    %164 = vector.load %arg15[%c0_117, %c0_118] : memref<32x512xbf16, #tpu.memory_space<vmem>>, vector<32x512xbf16>
    %cst_119 = arith.constant dense<0.000000e+00> : vector<2x512xf32>
    %165 = tpu.matmul %163, %164, %cst_119 {dimension_numbers = #tpu.dot_dimension_numbers<[1], [0], [0], [1], [0, 0, 1, 1], [], []>} : vector<2x32xbf16>, vector<32x512xbf16>, vector<2x512xf32> -> vector<2x512xf32>
    %166 = arith.truncf %165 : vector<2x512xf32> to vector<2x512xbf16>
    %cst_120 = arith.constant 0.000000e+00 : f32
    %167 = vector.broadcast %cst_120 : f32 to vector<8x128xf32>
    %c0_121 = arith.constant 0 : index
    %c0_122 = arith.constant 0 : index
    %c0_123 = arith.constant 0 : index
    %168 = vector.load %arg16[%c0_121, %c0_122, %c0_123] : memref<4x8x2xbf16, #tpu.memory_space<vmem>>, vector<1x8x2xbf16>
    %169 = vector.shape_cast %168 : vector<1x8x2xbf16> to vector<8x2xbf16>
    %170 = vector.extract_strided_slice %166 {offsets = [0, 0], sizes = [2, 128], strides = [1, 1]} : vector<2x512xbf16> to vector<2x128xbf16>
    %cst_124 = arith.constant dense<0.000000e+00> : vector<8x128xf32>
    %171 = tpu.matmul %169, %170, %cst_124 {dimension_numbers = #tpu.dot_dimension_numbers<[1], [0], [0], [1], [0, 0, 1, 1], [], []>} : vector<8x2xbf16>, vector<2x128xbf16>, vector<8x128xf32> -> vector<8x128xf32>
    %172 = arith.addf %167, %171 : vector<8x128xf32>
    %c1_125 = arith.constant 1 : index
    %c0_126 = arith.constant 0 : index
    %c0_127 = arith.constant 0 : index
    %173 = vector.load %arg16[%c1_125, %c0_126, %c0_127] : memref<4x8x2xbf16, #tpu.memory_space<vmem>>, vector<1x8x2xbf16>
    %174 = vector.shape_cast %173 : vector<1x8x2xbf16> to vector<8x2xbf16>
    %175 = vector.extract_strided_slice %166 {offsets = [0, 128], sizes = [2, 128], strides = [1, 1]} : vector<2x512xbf16> to vector<2x128xbf16>
    %cst_128 = arith.constant dense<0.000000e+00> : vector<8x128xf32>
    %176 = tpu.matmul %174, %175, %cst_128 {dimension_numbers = #tpu.dot_dimension_numbers<[1], [0], [0], [1], [0, 0, 1, 1], [], []>} : vector<8x2xbf16>, vector<2x128xbf16>, vector<8x128xf32> -> vector<8x128xf32>
    %177 = arith.addf %172, %176 : vector<8x128xf32>
    %c2_129 = arith.constant 2 : index
    %c0_130 = arith.constant 0 : index
    %c0_131 = arith.constant 0 : index
    %178 = vector.load %arg16[%c2_129, %c0_130, %c0_131] : memref<4x8x2xbf16, #tpu.memory_space<vmem>>, vector<1x8x2xbf16>
    %179 = vector.shape_cast %178 : vector<1x8x2xbf16> to vector<8x2xbf16>
    %180 = vector.extract_strided_slice %166 {offsets = [0, 256], sizes = [2, 128], strides = [1, 1]} : vector<2x512xbf16> to vector<2x128xbf16>
    %cst_132 = arith.constant dense<0.000000e+00> : vector<8x128xf32>
    %181 = tpu.matmul %179, %180, %cst_132 {dimension_numbers = #tpu.dot_dimension_numbers<[1], [0], [0], [1], [0, 0, 1, 1], [], []>} : vector<8x2xbf16>, vector<2x128xbf16>, vector<8x128xf32> -> vector<8x128xf32>
    %182 = arith.addf %177, %181 : vector<8x128xf32>
    %c3_133 = arith.constant 3 : index
    %c0_134 = arith.constant 0 : index
    %c0_135 = arith.constant 0 : index
    %183 = vector.load %arg16[%c3_133, %c0_134, %c0_135] : memref<4x8x2xbf16, #tpu.memory_space<vmem>>, vector<1x8x2xbf16>
    %184 = vector.shape_cast %183 : vector<1x8x2xbf16> to vector<8x2xbf16>
    %185 = vector.extract_strided_slice %166 {offsets = [0, 384], sizes = [2, 128], strides = [1, 1]} : vector<2x512xbf16> to vector<2x128xbf16>
    %cst_136 = arith.constant dense<0.000000e+00> : vector<8x128xf32>
    %186 = tpu.matmul %184, %185, %cst_136 {dimension_numbers = #tpu.dot_dimension_numbers<[1], [0], [0], [1], [0, 0, 1, 1], [], []>} : vector<8x2xbf16>, vector<2x128xbf16>, vector<8x128xf32> -> vector<8x128xf32>
    %187 = arith.addf %182, %186 : vector<8x128xf32>
    %c0_137 = arith.constant 0 : index
    %c0_138 = arith.constant 0 : index
    %188 = vector.load %arg17[%c0_137, %c0_138] : memref<8x128xf32, #tpu.memory_space<vmem>>, vector<8x128xf32>
    %189 = arith.addf %187, %188 : vector<8x128xf32>
    %cst_139 = arith.constant 0.000000e+00 : f32
    %190 = vector.broadcast %cst_139 : f32 to vector<8x128xf32>
    %191 = arith.maximumf %189, %190 : vector<8x128xf32>
    %192 = arith.truncf %191 : vector<8x128xf32> to vector<8x128xbf16>
    %c0_140 = arith.constant 0 : index
    %c0_141 = arith.constant 0 : index
    %193 = vector.load %arg18[%c0_140, %c0_141] : memref<288x8xbf16, #tpu.memory_space<vmem>>, vector<288x8xbf16>
    %cst_142 = arith.constant dense<0.000000e+00> : vector<288x128xf32>
    %194 = tpu.matmul %193, %192, %cst_142 {dimension_numbers = #tpu.dot_dimension_numbers<[1], [0], [0], [1], [0, 0, 1, 1], [], []>} : vector<288x8xbf16>, vector<8x128xbf16>, vector<288x128xf32> -> vector<288x128xf32>
    %195 = arith.truncf %194 : vector<288x128xf32> to vector<288x128xbf16>
    %cst_143 = arith.constant 0.000000e+00 : f32
    %196 = vector.broadcast %cst_143 : f32 to vector<32x64xf32>
    %197 = vector.extract_strided_slice %195 {offsets = [0, 0], sizes = [32, 128], strides = [1, 1]} : vector<288x128xbf16> to vector<32x128xbf16>
    %c0_144 = arith.constant 0 : index
    %c0_145 = arith.constant 0 : index
    %c0_146 = arith.constant 0 : index
    %198 = vector.load %arg19[%c0_144, %c0_145, %c0_146] : memref<9x128x64xbf16, #tpu.memory_space<vmem>>, vector<1x128x64xbf16>
    %199 = vector.shape_cast %198 : vector<1x128x64xbf16> to vector<128x64xbf16>
    %cst_147 = arith.constant dense<0.000000e+00> : vector<32x64xf32>
    %200 = tpu.matmul %197, %199, %cst_147 {dimension_numbers = #tpu.dot_dimension_numbers<[1], [0], [0], [1], [0, 0, 1, 1], [], []>} : vector<32x128xbf16>, vector<128x64xbf16>, vector<32x64xf32> -> vector<32x64xf32>
    %201 = arith.addf %196, %200 : vector<32x64xf32>
    %202 = vector.extract_strided_slice %195 {offsets = [32, 0], sizes = [32, 128], strides = [1, 1]} : vector<288x128xbf16> to vector<32x128xbf16>
    %c1_148 = arith.constant 1 : index
    %c0_149 = arith.constant 0 : index
    %c0_150 = arith.constant 0 : index
    %203 = vector.load %arg19[%c1_148, %c0_149, %c0_150] : memref<9x128x64xbf16, #tpu.memory_space<vmem>>, vector<1x128x64xbf16>
    %204 = vector.shape_cast %203 : vector<1x128x64xbf16> to vector<128x64xbf16>
    %cst_151 = arith.constant dense<0.000000e+00> : vector<32x64xf32>
    %205 = tpu.matmul %202, %204, %cst_151 {dimension_numbers = #tpu.dot_dimension_numbers<[1], [0], [0], [1], [0, 0, 1, 1], [], []>} : vector<32x128xbf16>, vector<128x64xbf16>, vector<32x64xf32> -> vector<32x64xf32>
    %206 = arith.addf %201, %205 : vector<32x64xf32>
    %207 = vector.extract_strided_slice %195 {offsets = [64, 0], sizes = [32, 128], strides = [1, 1]} : vector<288x128xbf16> to vector<32x128xbf16>
    %c2_152 = arith.constant 2 : index
    %c0_153 = arith.constant 0 : index
    %c0_154 = arith.constant 0 : index
    %208 = vector.load %arg19[%c2_152, %c0_153, %c0_154] : memref<9x128x64xbf16, #tpu.memory_space<vmem>>, vector<1x128x64xbf16>
    %209 = vector.shape_cast %208 : vector<1x128x64xbf16> to vector<128x64xbf16>
    %cst_155 = arith.constant dense<0.000000e+00> : vector<32x64xf32>
    %210 = tpu.matmul %207, %209, %cst_155 {dimension_numbers = #tpu.dot_dimension_numbers<[1], [0], [0], [1], [0, 0, 1, 1], [], []>} : vector<32x128xbf16>, vector<128x64xbf16>, vector<32x64xf32> -> vector<32x64xf32>
    %211 = arith.addf %206, %210 : vector<32x64xf32>
    %212 = vector.extract_strided_slice %195 {offsets = [96, 0], sizes = [32, 128], strides = [1, 1]} : vector<288x128xbf16> to vector<32x128xbf16>
    %c3_156 = arith.constant 3 : index
    %c0_157 = arith.constant 0 : index
    %c0_158 = arith.constant 0 : index
    %213 = vector.load %arg19[%c3_156, %c0_157, %c0_158] : memref<9x128x64xbf16, #tpu.memory_space<vmem>>, vector<1x128x64xbf16>
    %214 = vector.shape_cast %213 : vector<1x128x64xbf16> to vector<128x64xbf16>
    %cst_159 = arith.constant dense<0.000000e+00> : vector<32x64xf32>
    %215 = tpu.matmul %212, %214, %cst_159 {dimension_numbers = #tpu.dot_dimension_numbers<[1], [0], [0], [1], [0, 0, 1, 1], [], []>} : vector<32x128xbf16>, vector<128x64xbf16>, vector<32x64xf32> -> vector<32x64xf32>
    %216 = arith.addf %211, %215 : vector<32x64xf32>
    %217 = vector.extract_strided_slice %195 {offsets = [128, 0], sizes = [32, 128], strides = [1, 1]} : vector<288x128xbf16> to vector<32x128xbf16>
    %c4_160 = arith.constant 4 : index
    %c0_161 = arith.constant 0 : index
    %c0_162 = arith.constant 0 : index
    %218 = vector.load %arg19[%c4_160, %c0_161, %c0_162] : memref<9x128x64xbf16, #tpu.memory_space<vmem>>, vector<1x128x64xbf16>
    %219 = vector.shape_cast %218 : vector<1x128x64xbf16> to vector<128x64xbf16>
    %cst_163 = arith.constant dense<0.000000e+00> : vector<32x64xf32>
    %220 = tpu.matmul %217, %219, %cst_163 {dimension_numbers = #tpu.dot_dimension_numbers<[1], [0], [0], [1], [0, 0, 1, 1], [], []>} : vector<32x128xbf16>, vector<128x64xbf16>, vector<32x64xf32> -> vector<32x64xf32>
    %221 = arith.addf %216, %220 : vector<32x64xf32>
    %222 = vector.extract_strided_slice %195 {offsets = [160, 0], sizes = [32, 128], strides = [1, 1]} : vector<288x128xbf16> to vector<32x128xbf16>
    %c5_164 = arith.constant 5 : index
    %c0_165 = arith.constant 0 : index
    %c0_166 = arith.constant 0 : index
    %223 = vector.load %arg19[%c5_164, %c0_165, %c0_166] : memref<9x128x64xbf16, #tpu.memory_space<vmem>>, vector<1x128x64xbf16>
    %224 = vector.shape_cast %223 : vector<1x128x64xbf16> to vector<128x64xbf16>
    %cst_167 = arith.constant dense<0.000000e+00> : vector<32x64xf32>
    %225 = tpu.matmul %222, %224, %cst_167 {dimension_numbers = #tpu.dot_dimension_numbers<[1], [0], [0], [1], [0, 0, 1, 1], [], []>} : vector<32x128xbf16>, vector<128x64xbf16>, vector<32x64xf32> -> vector<32x64xf32>
    %226 = arith.addf %221, %225 : vector<32x64xf32>
    %227 = vector.extract_strided_slice %195 {offsets = [192, 0], sizes = [32, 128], strides = [1, 1]} : vector<288x128xbf16> to vector<32x128xbf16>
    %c6_168 = arith.constant 6 : index
    %c0_169 = arith.constant 0 : index
    %c0_170 = arith.constant 0 : index
    %228 = vector.load %arg19[%c6_168, %c0_169, %c0_170] : memref<9x128x64xbf16, #tpu.memory_space<vmem>>, vector<1x128x64xbf16>
    %229 = vector.shape_cast %228 : vector<1x128x64xbf16> to vector<128x64xbf16>
    %cst_171 = arith.constant dense<0.000000e+00> : vector<32x64xf32>
    %230 = tpu.matmul %227, %229, %cst_171 {dimension_numbers = #tpu.dot_dimension_numbers<[1], [0], [0], [1], [0, 0, 1, 1], [], []>} : vector<32x128xbf16>, vector<128x64xbf16>, vector<32x64xf32> -> vector<32x64xf32>
    %231 = arith.addf %226, %230 : vector<32x64xf32>
    %232 = vector.extract_strided_slice %195 {offsets = [224, 0], sizes = [32, 128], strides = [1, 1]} : vector<288x128xbf16> to vector<32x128xbf16>
    %c7_172 = arith.constant 7 : index
    %c0_173 = arith.constant 0 : index
    %c0_174 = arith.constant 0 : index
    %233 = vector.load %arg19[%c7_172, %c0_173, %c0_174] : memref<9x128x64xbf16, #tpu.memory_space<vmem>>, vector<1x128x64xbf16>
    %234 = vector.shape_cast %233 : vector<1x128x64xbf16> to vector<128x64xbf16>
    %cst_175 = arith.constant dense<0.000000e+00> : vector<32x64xf32>
    %235 = tpu.matmul %232, %234, %cst_175 {dimension_numbers = #tpu.dot_dimension_numbers<[1], [0], [0], [1], [0, 0, 1, 1], [], []>} : vector<32x128xbf16>, vector<128x64xbf16>, vector<32x64xf32> -> vector<32x64xf32>
    %236 = arith.addf %231, %235 : vector<32x64xf32>
    %237 = vector.extract_strided_slice %195 {offsets = [256, 0], sizes = [32, 128], strides = [1, 1]} : vector<288x128xbf16> to vector<32x128xbf16>
    %c8_176 = arith.constant 8 : index
    %c0_177 = arith.constant 0 : index
    %c0_178 = arith.constant 0 : index
    %238 = vector.load %arg19[%c8_176, %c0_177, %c0_178] : memref<9x128x64xbf16, #tpu.memory_space<vmem>>, vector<1x128x64xbf16>
    %239 = vector.shape_cast %238 : vector<1x128x64xbf16> to vector<128x64xbf16>
    %cst_179 = arith.constant dense<0.000000e+00> : vector<32x64xf32>
    %240 = tpu.matmul %237, %239, %cst_179 {dimension_numbers = #tpu.dot_dimension_numbers<[1], [0], [0], [1], [0, 0, 1, 1], [], []>} : vector<32x128xbf16>, vector<128x64xbf16>, vector<32x64xf32> -> vector<32x64xf32>
    %241 = arith.addf %236, %240 : vector<32x64xf32>
    %c0_180 = arith.constant 0 : index
    %c0_181 = arith.constant 0 : index
    %242 = vector.load %arg20[%c0_180, %c0_181] : memref<1x64xf32, #tpu.memory_space<vmem>>, vector<1x64xf32>
    %243 = vector.broadcast %242 : vector<1x64xf32> to vector<32x64xf32>
    %244 = arith.addf %241, %243 : vector<32x64xf32>
    %cst_182 = arith.constant 0.000000e+00 : f32
    %245 = vector.broadcast %cst_182 : f32 to vector<32x64xf32>
    %246 = arith.maximumf %244, %245 : vector<32x64xf32>
    %247 = arith.truncf %246 : vector<32x64xf32> to vector<32x64xbf16>
    %248 = tpu.transpose %247, [1, 0] : vector<32x64xbf16> -> vector<64x32xbf16>
    %c0_183 = arith.constant 0 : index
    %c0_184 = arith.constant 0 : index
    %249 = vector.load %arg21[%c0_183, %c0_184] : memref<288x64xbf16, #tpu.memory_space<vmem>>, vector<288x64xbf16>
    %cst_185 = arith.constant dense<0.000000e+00> : vector<288x32xf32>
    %250 = tpu.matmul %249, %248, %cst_185 {dimension_numbers = #tpu.dot_dimension_numbers<[1], [0], [0], [1], [0, 0, 1, 1], [], []>} : vector<288x64xbf16>, vector<64x32xbf16>, vector<288x32xf32> -> vector<288x32xf32>
    %251 = arith.truncf %250 : vector<288x32xf32> to vector<288x32xbf16>
    %cst_186 = arith.constant 0.000000e+00 : f32
    %252 = vector.broadcast %cst_186 : f32 to vector<32x128xf32>
    %253 = vector.extract_strided_slice %251 {offsets = [0, 0], sizes = [32, 32], strides = [1, 1]} : vector<288x32xbf16> to vector<32x32xbf16>
    %c0_187 = arith.constant 0 : index
    %c0_188 = arith.constant 0 : index
    %c0_189 = arith.constant 0 : index
    %254 = vector.load %arg22[%c0_187, %c0_188, %c0_189] : memref<9x32x128xbf16, #tpu.memory_space<vmem>>, vector<1x32x128xbf16>
    %255 = vector.shape_cast %254 : vector<1x32x128xbf16> to vector<32x128xbf16>
    %cst_190 = arith.constant dense<0.000000e+00> : vector<32x128xf32>
    %256 = tpu.matmul %253, %255, %cst_190 {dimension_numbers = #tpu.dot_dimension_numbers<[1], [0], [0], [1], [0, 0, 1, 1], [], []>} : vector<32x32xbf16>, vector<32x128xbf16>, vector<32x128xf32> -> vector<32x128xf32>
    %257 = arith.addf %252, %256 : vector<32x128xf32>
    %258 = vector.extract_strided_slice %251 {offsets = [32, 0], sizes = [32, 32], strides = [1, 1]} : vector<288x32xbf16> to vector<32x32xbf16>
    %c1_191 = arith.constant 1 : index
    %c0_192 = arith.constant 0 : index
    %c0_193 = arith.constant 0 : index
    %259 = vector.load %arg22[%c1_191, %c0_192, %c0_193] : memref<9x32x128xbf16, #tpu.memory_space<vmem>>, vector<1x32x128xbf16>
    %260 = vector.shape_cast %259 : vector<1x32x128xbf16> to vector<32x128xbf16>
    %cst_194 = arith.constant dense<0.000000e+00> : vector<32x128xf32>
    %261 = tpu.matmul %258, %260, %cst_194 {dimension_numbers = #tpu.dot_dimension_numbers<[1], [0], [0], [1], [0, 0, 1, 1], [], []>} : vector<32x32xbf16>, vector<32x128xbf16>, vector<32x128xf32> -> vector<32x128xf32>
    %262 = arith.addf %257, %261 : vector<32x128xf32>
    %263 = vector.extract_strided_slice %251 {offsets = [64, 0], sizes = [32, 32], strides = [1, 1]} : vector<288x32xbf16> to vector<32x32xbf16>
    %c2_195 = arith.constant 2 : index
    %c0_196 = arith.constant 0 : index
    %c0_197 = arith.constant 0 : index
    %264 = vector.load %arg22[%c2_195, %c0_196, %c0_197] : memref<9x32x128xbf16, #tpu.memory_space<vmem>>, vector<1x32x128xbf16>
    %265 = vector.shape_cast %264 : vector<1x32x128xbf16> to vector<32x128xbf16>
    %cst_198 = arith.constant dense<0.000000e+00> : vector<32x128xf32>
    %266 = tpu.matmul %263, %265, %cst_198 {dimension_numbers = #tpu.dot_dimension_numbers<[1], [0], [0], [1], [0, 0, 1, 1], [], []>} : vector<32x32xbf16>, vector<32x128xbf16>, vector<32x128xf32> -> vector<32x128xf32>
    %267 = arith.addf %262, %266 : vector<32x128xf32>
    %268 = vector.extract_strided_slice %251 {offsets = [96, 0], sizes = [32, 32], strides = [1, 1]} : vector<288x32xbf16> to vector<32x32xbf16>
    %c3_199 = arith.constant 3 : index
    %c0_200 = arith.constant 0 : index
    %c0_201 = arith.constant 0 : index
    %269 = vector.load %arg22[%c3_199, %c0_200, %c0_201] : memref<9x32x128xbf16, #tpu.memory_space<vmem>>, vector<1x32x128xbf16>
    %270 = vector.shape_cast %269 : vector<1x32x128xbf16> to vector<32x128xbf16>
    %cst_202 = arith.constant dense<0.000000e+00> : vector<32x128xf32>
    %271 = tpu.matmul %268, %270, %cst_202 {dimension_numbers = #tpu.dot_dimension_numbers<[1], [0], [0], [1], [0, 0, 1, 1], [], []>} : vector<32x32xbf16>, vector<32x128xbf16>, vector<32x128xf32> -> vector<32x128xf32>
    %272 = arith.addf %267, %271 : vector<32x128xf32>
    %273 = vector.extract_strided_slice %251 {offsets = [128, 0], sizes = [32, 32], strides = [1, 1]} : vector<288x32xbf16> to vector<32x32xbf16>
    %c4_203 = arith.constant 4 : index
    %c0_204 = arith.constant 0 : index
    %c0_205 = arith.constant 0 : index
    %274 = vector.load %arg22[%c4_203, %c0_204, %c0_205] : memref<9x32x128xbf16, #tpu.memory_space<vmem>>, vector<1x32x128xbf16>
    %275 = vector.shape_cast %274 : vector<1x32x128xbf16> to vector<32x128xbf16>
    %cst_206 = arith.constant dense<0.000000e+00> : vector<32x128xf32>
    %276 = tpu.matmul %273, %275, %cst_206 {dimension_numbers = #tpu.dot_dimension_numbers<[1], [0], [0], [1], [0, 0, 1, 1], [], []>} : vector<32x32xbf16>, vector<32x128xbf16>, vector<32x128xf32> -> vector<32x128xf32>
    %277 = arith.addf %272, %276 : vector<32x128xf32>
    %278 = vector.extract_strided_slice %251 {offsets = [160, 0], sizes = [32, 32], strides = [1, 1]} : vector<288x32xbf16> to vector<32x32xbf16>
    %c5_207 = arith.constant 5 : index
    %c0_208 = arith.constant 0 : index
    %c0_209 = arith.constant 0 : index
    %279 = vector.load %arg22[%c5_207, %c0_208, %c0_209] : memref<9x32x128xbf16, #tpu.memory_space<vmem>>, vector<1x32x128xbf16>
    %280 = vector.shape_cast %279 : vector<1x32x128xbf16> to vector<32x128xbf16>
    %cst_210 = arith.constant dense<0.000000e+00> : vector<32x128xf32>
    %281 = tpu.matmul %278, %280, %cst_210 {dimension_numbers = #tpu.dot_dimension_numbers<[1], [0], [0], [1], [0, 0, 1, 1], [], []>} : vector<32x32xbf16>, vector<32x128xbf16>, vector<32x128xf32> -> vector<32x128xf32>
    %282 = arith.addf %277, %281 : vector<32x128xf32>
    %283 = vector.extract_strided_slice %251 {offsets = [192, 0], sizes = [32, 32], strides = [1, 1]} : vector<288x32xbf16> to vector<32x32xbf16>
    %c6_211 = arith.constant 6 : index
    %c0_212 = arith.constant 0 : index
    %c0_213 = arith.constant 0 : index
    %284 = vector.load %arg22[%c6_211, %c0_212, %c0_213] : memref<9x32x128xbf16, #tpu.memory_space<vmem>>, vector<1x32x128xbf16>
    %285 = vector.shape_cast %284 : vector<1x32x128xbf16> to vector<32x128xbf16>
    %cst_214 = arith.constant dense<0.000000e+00> : vector<32x128xf32>
    %286 = tpu.matmul %283, %285, %cst_214 {dimension_numbers = #tpu.dot_dimension_numbers<[1], [0], [0], [1], [0, 0, 1, 1], [], []>} : vector<32x32xbf16>, vector<32x128xbf16>, vector<32x128xf32> -> vector<32x128xf32>
    %287 = arith.addf %282, %286 : vector<32x128xf32>
    %288 = vector.extract_strided_slice %251 {offsets = [224, 0], sizes = [32, 32], strides = [1, 1]} : vector<288x32xbf16> to vector<32x32xbf16>
    %c7_215 = arith.constant 7 : index
    %c0_216 = arith.constant 0 : index
    %c0_217 = arith.constant 0 : index
    %289 = vector.load %arg22[%c7_215, %c0_216, %c0_217] : memref<9x32x128xbf16, #tpu.memory_space<vmem>>, vector<1x32x128xbf16>
    %290 = vector.shape_cast %289 : vector<1x32x128xbf16> to vector<32x128xbf16>
    %cst_218 = arith.constant dense<0.000000e+00> : vector<32x128xf32>
    %291 = tpu.matmul %288, %290, %cst_218 {dimension_numbers = #tpu.dot_dimension_numbers<[1], [0], [0], [1], [0, 0, 1, 1], [], []>} : vector<32x32xbf16>, vector<32x128xbf16>, vector<32x128xf32> -> vector<32x128xf32>
    %292 = arith.addf %287, %291 : vector<32x128xf32>
    %293 = vector.extract_strided_slice %251 {offsets = [256, 0], sizes = [32, 32], strides = [1, 1]} : vector<288x32xbf16> to vector<32x32xbf16>
    %c8_219 = arith.constant 8 : index
    %c0_220 = arith.constant 0 : index
    %c0_221 = arith.constant 0 : index
    %294 = vector.load %arg22[%c8_219, %c0_220, %c0_221] : memref<9x32x128xbf16, #tpu.memory_space<vmem>>, vector<1x32x128xbf16>
    %295 = vector.shape_cast %294 : vector<1x32x128xbf16> to vector<32x128xbf16>
    %cst_222 = arith.constant dense<0.000000e+00> : vector<32x128xf32>
    %296 = tpu.matmul %293, %295, %cst_222 {dimension_numbers = #tpu.dot_dimension_numbers<[1], [0], [0], [1], [0, 0, 1, 1], [], []>} : vector<32x32xbf16>, vector<32x128xbf16>, vector<32x128xf32> -> vector<32x128xf32>
    %297 = arith.addf %292, %296 : vector<32x128xf32>
    %c0_223 = arith.constant 0 : index
    %c0_224 = arith.constant 0 : index
    %298 = vector.load %arg23[%c0_223, %c0_224] : memref<32x128xf32, #tpu.memory_space<vmem>>, vector<32x128xf32>
    %299 = arith.addf %297, %298 : vector<32x128xf32>
    %cst_225 = arith.constant 0.000000e+00 : f32
    %300 = vector.broadcast %cst_225 : f32 to vector<32x128xf32>
    %301 = arith.maximumf %299, %300 : vector<32x128xf32>
    %302 = arith.truncf %301 : vector<32x128xf32> to vector<32x128xbf16>
    %c0_226 = arith.constant 0 : index
    %c0_227 = arith.constant 0 : index
    %303 = vector.load %arg24[%c0_226, %c0_227] : memref<72x32xbf16, #tpu.memory_space<vmem>>, vector<72x32xbf16>
    %cst_228 = arith.constant dense<0.000000e+00> : vector<72x128xf32>
    %304 = tpu.matmul %303, %302, %cst_228 {dimension_numbers = #tpu.dot_dimension_numbers<[1], [0], [0], [1], [0, 0, 1, 1], [], []>} : vector<72x32xbf16>, vector<32x128xbf16>, vector<72x128xf32> -> vector<72x128xf32>
    %305 = arith.truncf %304 : vector<72x128xf32> to vector<72x128xbf16>
    %cst_229 = arith.constant 0.000000e+00 : f32
    %306 = vector.broadcast %cst_229 : f32 to vector<8x512xf32>
    %307 = vector.extract_strided_slice %305 {offsets = [0, 0], sizes = [8, 128], strides = [1, 1]} : vector<72x128xbf16> to vector<8x128xbf16>
    %c0_230 = arith.constant 0 : index
    %c0_231 = arith.constant 0 : index
    %c0_232 = arith.constant 0 : index
    %308 = vector.load %arg25[%c0_230, %c0_231, %c0_232] : memref<9x128x512xbf16, #tpu.memory_space<vmem>>, vector<1x128x512xbf16>
    %309 = vector.shape_cast %308 : vector<1x128x512xbf16> to vector<128x512xbf16>
    %cst_233 = arith.constant dense<0.000000e+00> : vector<8x512xf32>
    %310 = tpu.matmul %307, %309, %cst_233 {dimension_numbers = #tpu.dot_dimension_numbers<[1], [0], [0], [1], [0, 0, 1, 1], [], []>} : vector<8x128xbf16>, vector<128x512xbf16>, vector<8x512xf32> -> vector<8x512xf32>
    %311 = arith.addf %306, %310 : vector<8x512xf32>
    %312 = vector.extract_strided_slice %305 {offsets = [8, 0], sizes = [8, 128], strides = [1, 1]} : vector<72x128xbf16> to vector<8x128xbf16>
    %c1_234 = arith.constant 1 : index
    %c0_235 = arith.constant 0 : index
    %c0_236 = arith.constant 0 : index
    %313 = vector.load %arg25[%c1_234, %c0_235, %c0_236] : memref<9x128x512xbf16, #tpu.memory_space<vmem>>, vector<1x128x512xbf16>
    %314 = vector.shape_cast %313 : vector<1x128x512xbf16> to vector<128x512xbf16>
    %cst_237 = arith.constant dense<0.000000e+00> : vector<8x512xf32>
    %315 = tpu.matmul %312, %314, %cst_237 {dimension_numbers = #tpu.dot_dimension_numbers<[1], [0], [0], [1], [0, 0, 1, 1], [], []>} : vector<8x128xbf16>, vector<128x512xbf16>, vector<8x512xf32> -> vector<8x512xf32>
    %316 = arith.addf %311, %315 : vector<8x512xf32>
    %317 = vector.extract_strided_slice %305 {offsets = [16, 0], sizes = [8, 128], strides = [1, 1]} : vector<72x128xbf16> to vector<8x128xbf16>
    %c2_238 = arith.constant 2 : index
    %c0_239 = arith.constant 0 : index
    %c0_240 = arith.constant 0 : index
    %318 = vector.load %arg25[%c2_238, %c0_239, %c0_240] : memref<9x128x512xbf16, #tpu.memory_space<vmem>>, vector<1x128x512xbf16>
    %319 = vector.shape_cast %318 : vector<1x128x512xbf16> to vector<128x512xbf16>
    %cst_241 = arith.constant dense<0.000000e+00> : vector<8x512xf32>
    %320 = tpu.matmul %317, %319, %cst_241 {dimension_numbers = #tpu.dot_dimension_numbers<[1], [0], [0], [1], [0, 0, 1, 1], [], []>} : vector<8x128xbf16>, vector<128x512xbf16>, vector<8x512xf32> -> vector<8x512xf32>
    %321 = arith.addf %316, %320 : vector<8x512xf32>
    %322 = vector.extract_strided_slice %305 {offsets = [24, 0], sizes = [8, 128], strides = [1, 1]} : vector<72x128xbf16> to vector<8x128xbf16>
    %c3_242 = arith.constant 3 : index
    %c0_243 = arith.constant 0 : index
    %c0_244 = arith.constant 0 : index
    %323 = vector.load %arg25[%c3_242, %c0_243, %c0_244] : memref<9x128x512xbf16, #tpu.memory_space<vmem>>, vector<1x128x512xbf16>
    %324 = vector.shape_cast %323 : vector<1x128x512xbf16> to vector<128x512xbf16>
    %cst_245 = arith.constant dense<0.000000e+00> : vector<8x512xf32>
    %325 = tpu.matmul %322, %324, %cst_245 {dimension_numbers = #tpu.dot_dimension_numbers<[1], [0], [0], [1], [0, 0, 1, 1], [], []>} : vector<8x128xbf16>, vector<128x512xbf16>, vector<8x512xf32> -> vector<8x512xf32>
    %326 = arith.addf %321, %325 : vector<8x512xf32>
    %327 = vector.extract_strided_slice %305 {offsets = [32, 0], sizes = [8, 128], strides = [1, 1]} : vector<72x128xbf16> to vector<8x128xbf16>
    %c4_246 = arith.constant 4 : index
    %c0_247 = arith.constant 0 : index
    %c0_248 = arith.constant 0 : index
    %328 = vector.load %arg25[%c4_246, %c0_247, %c0_248] : memref<9x128x512xbf16, #tpu.memory_space<vmem>>, vector<1x128x512xbf16>
    %329 = vector.shape_cast %328 : vector<1x128x512xbf16> to vector<128x512xbf16>
    %cst_249 = arith.constant dense<0.000000e+00> : vector<8x512xf32>
    %330 = tpu.matmul %327, %329, %cst_249 {dimension_numbers = #tpu.dot_dimension_numbers<[1], [0], [0], [1], [0, 0, 1, 1], [], []>} : vector<8x128xbf16>, vector<128x512xbf16>, vector<8x512xf32> -> vector<8x512xf32>
    %331 = arith.addf %326, %330 : vector<8x512xf32>
    %332 = vector.extract_strided_slice %305 {offsets = [40, 0], sizes = [8, 128], strides = [1, 1]} : vector<72x128xbf16> to vector<8x128xbf16>
    %c5_250 = arith.constant 5 : index
    %c0_251 = arith.constant 0 : index
    %c0_252 = arith.constant 0 : index
    %333 = vector.load %arg25[%c5_250, %c0_251, %c0_252] : memref<9x128x512xbf16, #tpu.memory_space<vmem>>, vector<1x128x512xbf16>
    %334 = vector.shape_cast %333 : vector<1x128x512xbf16> to vector<128x512xbf16>
    %cst_253 = arith.constant dense<0.000000e+00> : vector<8x512xf32>
    %335 = tpu.matmul %332, %334, %cst_253 {dimension_numbers = #tpu.dot_dimension_numbers<[1], [0], [0], [1], [0, 0, 1, 1], [], []>} : vector<8x128xbf16>, vector<128x512xbf16>, vector<8x512xf32> -> vector<8x512xf32>
    %336 = arith.addf %331, %335 : vector<8x512xf32>
    %337 = vector.extract_strided_slice %305 {offsets = [48, 0], sizes = [8, 128], strides = [1, 1]} : vector<72x128xbf16> to vector<8x128xbf16>
    %c6_254 = arith.constant 6 : index
    %c0_255 = arith.constant 0 : index
    %c0_256 = arith.constant 0 : index
    %338 = vector.load %arg25[%c6_254, %c0_255, %c0_256] : memref<9x128x512xbf16, #tpu.memory_space<vmem>>, vector<1x128x512xbf16>
    %339 = vector.shape_cast %338 : vector<1x128x512xbf16> to vector<128x512xbf16>
    %cst_257 = arith.constant dense<0.000000e+00> : vector<8x512xf32>
    %340 = tpu.matmul %337, %339, %cst_257 {dimension_numbers = #tpu.dot_dimension_numbers<[1], [0], [0], [1], [0, 0, 1, 1], [], []>} : vector<8x128xbf16>, vector<128x512xbf16>, vector<8x512xf32> -> vector<8x512xf32>
    %341 = arith.addf %336, %340 : vector<8x512xf32>
    %342 = vector.extract_strided_slice %305 {offsets = [56, 0], sizes = [8, 128], strides = [1, 1]} : vector<72x128xbf16> to vector<8x128xbf16>
    %c7_258 = arith.constant 7 : index
    %c0_259 = arith.constant 0 : index
    %c0_260 = arith.constant 0 : index
    %343 = vector.load %arg25[%c7_258, %c0_259, %c0_260] : memref<9x128x512xbf16, #tpu.memory_space<vmem>>, vector<1x128x512xbf16>
    %344 = vector.shape_cast %343 : vector<1x128x512xbf16> to vector<128x512xbf16>
    %cst_261 = arith.constant dense<0.000000e+00> : vector<8x512xf32>
    %345 = tpu.matmul %342, %344, %cst_261 {dimension_numbers = #tpu.dot_dimension_numbers<[1], [0], [0], [1], [0, 0, 1, 1], [], []>} : vector<8x128xbf16>, vector<128x512xbf16>, vector<8x512xf32> -> vector<8x512xf32>
    %346 = arith.addf %341, %345 : vector<8x512xf32>
    %347 = vector.extract_strided_slice %305 {offsets = [64, 0], sizes = [8, 128], strides = [1, 1]} : vector<72x128xbf16> to vector<8x128xbf16>
    %c8_262 = arith.constant 8 : index
    %c0_263 = arith.constant 0 : index
    %c0_264 = arith.constant 0 : index
    %348 = vector.load %arg25[%c8_262, %c0_263, %c0_264] : memref<9x128x512xbf16, #tpu.memory_space<vmem>>, vector<1x128x512xbf16>
    %349 = vector.shape_cast %348 : vector<1x128x512xbf16> to vector<128x512xbf16>
    %cst_265 = arith.constant dense<0.000000e+00> : vector<8x512xf32>
    %350 = tpu.matmul %347, %349, %cst_265 {dimension_numbers = #tpu.dot_dimension_numbers<[1], [0], [0], [1], [0, 0, 1, 1], [], []>} : vector<8x128xbf16>, vector<128x512xbf16>, vector<8x512xf32> -> vector<8x512xf32>
    %351 = arith.addf %346, %350 : vector<8x512xf32>
    %c0_266 = arith.constant 0 : index
    %c0_267 = arith.constant 0 : index
    %352 = vector.load %arg26[%c0_266, %c0_267] : memref<8x512xf32, #tpu.memory_space<vmem>>, vector<8x512xf32>
    %353 = arith.addf %351, %352 : vector<8x512xf32>
    %354 = vector.extract_strided_slice %353 {offsets = [0, 0], sizes = [4, 512], strides = [1, 1]} : vector<8x512xf32> to vector<4x512xf32>
    %355 = math.tanh %354 : vector<4x512xf32>
    %c0_268 = arith.constant 0 : index
    %c0_269 = arith.constant 0 : index
    %356 = vector.load %arg27[%c0_268, %c0_269] : memref<4x512xf32, #tpu.memory_space<vmem>>, vector<4x512xf32>
    tpu.vector_store %arg27[%c0_268, %c0_269], %355 {strides = array<i32>} : memref<4x512xf32, #tpu.memory_space<vmem>>, vector<4x512xf32>,
    return
  }
}

</mosaic_0001>

<llo_original>
// kernel: vae_forward.1
$region0: #{vae_forward.1}
  #allocation0 [shape = 'u32[]', space=smem, size = 0x4, offset = 0x4, fixed_abs, tag = 'smem constant byte address 0x4 - core index']
  #allocation1 [shape = 'u32[144,128]{1,0:T(1,128)}', space=vmem, size = 0x12000, scoped, tag = 'internal scratch']
  %s0 = inlined_call_operand.vmem [shape: bf16[128,36], index: 0, kind: input, shape index: {}]
  %s1 = inlined_call_operand.vmem [shape: f32[2,32], index: 1, kind: input, shape index: {}]
  %s2 = inlined_call_operand.vmem [shape: bf16[36,32], index: 2, kind: input, shape index: {}]
  %s3 = inlined_call_operand.hbm [shape: f32[1,32], index: 3, kind: input, shape index: {}]
  %s4 = inlined_call_operand.vmem [shape: bf16[288,128], index: 4, kind: input, shape index: {}]
  %s5 = inlined_call_operand.vmem [shape: bf16[9,32,64], index: 5, kind: input, shape index: {}]
  %s6 = inlined_call_operand.hbm [shape: f32[1,64], index: 6, kind: input, shape index: {}]
  %s7 = inlined_call_operand.vmem [shape: bf16[72,32], index: 7, kind: input, shape index: {}]
  %s8 = inlined_call_operand.vmem [shape: bf16[9,64,128], index: 8, kind: input, shape index: {}]
  %s9 = inlined_call_operand.hbm [shape: f32[1,128], index: 9, kind: input, shape index: {}]
  %s10 = inlined_call_operand.vmem [shape: bf16[128,1024], index: 10, kind: input, shape index: {}]
  %s11 = inlined_call_operand.hbm [shape: bf16[4,2,8], index: 11, kind: input, shape index: {}]
  %s12 = inlined_call_operand.hbm [shape: f32[1,256], index: 12, kind: input, shape index: {}]
  %s13 = inlined_call_operand.vmem [shape: bf16[256,64], index: 13, kind: input, shape index: {}]
  %s14 = inlined_call_operand.hbm [shape: f32[1,64], index: 14, kind: input, shape index: {}]
  %s15 = inlined_call_operand.vmem [shape: bf16[32,512], index: 15, kind: input, shape index: {}]
  %s16 = inlined_call_operand.vmem [shape: bf16[4,8,2], index: 16, kind: input, shape index: {}]
  %s17 = inlined_call_operand.hbm [shape: f32[8,128], index: 17, kind: input, shape index: {}]
  %s18 = inlined_call_operand.vmem [shape: bf16[288,8], index: 18, kind: input, shape index: {}]
  %s19 = inlined_call_operand.vmem [shape: bf16[9,128,64], index: 19, kind: input, shape index: {}]
  %s20 = inlined_call_operand.hbm [shape: f32[1,64], index: 20, kind: input, shape index: {}]
  %s21 = inlined_call_operand.vmem [shape: bf16[288,64], index: 21, kind: input, shape index: {}]
  %s22 = inlined_call_operand.vmem [shape: bf16[9,32,128], index: 22, kind: input, shape index: {}]
  %s23 = inlined_call_operand.hbm [shape: f32[32,128], index: 23, kind: input, shape index: {}]
  %s24 = inlined_call_operand.vmem [shape: bf16[72,32], index: 24, kind: input, shape index: {}]
  %s25 = inlined_call_operand.vmem [shape: bf16[9,128,512], index: 25, kind: input, shape index: {}]
  %s26 = inlined_call_operand.hbm [shape: f32[8,512], index: 26, kind: input, shape index: {}]
  %s27 = inlined_call_operand.vmem [shape: f32[4,512], index: 27, kind: output, shape index: {0}]
  %s28 = inlined_call_operand.vmem [shape: f32[2,64], index: 28, kind: output, shape index: {1}]
  %29 = xla_tuple %s27, %s28
  %s30 = sld [smem:[#allocation0]]
  $region166: #{vae_forward.1} parent=0
    _
  %s32 = ssub.s32 1, %s30
  %s33 = scalar_select 0, %s32, %s30
  $region1: #{vae_forward.1} parent=0
    #allocation2 [shape = 'u8[512]{0}', space=vmem, size = 0x400, scoped, tag = 'input window, operand 3, single buffered']
    #allocation3 [shape = 's32[1]{0}', space=sflag, size = 0x4, scoped, tag = 'scoped memory for vae_forward.1']
    #allocation4 [shape = 'u8[512]{0}', space=vmem, size = 0x400, scoped, tag = 'input window, operand 6, single buffered']
    #allocation5 [shape = 's32[1]{0}', space=sflag, size = 0x4, scoped, tag = 'scoped memory for vae_forward.1']
    #allocation6 [shape = 'u8[512]{0}', space=vmem, size = 0x400, scoped, tag = 'input window, operand 9, single buffered']
    #allocation7 [shape = 'u8[2048]{0}', space=vmem, size = 0x800, scoped, tag = 'input window, operand 11, single buffered']
    #allocation8 [shape = 's32[1]{0}', space=sflag, size = 0x4, scoped, tag = 'scoped memory for vae_forward.1']
    #allocation9 [shape = 'u8[1024]{0}', space=vmem, size = 0x400, scoped, tag = 'input window, operand 12, single buffered']
    #allocation10 [shape = 'u8[512]{0}', space=vmem, size = 0x400, scoped, tag = 'input window, operand 14, single buffered']
    #allocation11 [shape = 's32[1]{0}', space=sflag, size = 0x4, scoped, tag = 'scoped memory for vae_forward.1']
    #allocation12 [shape = 'u8[4096]{0}', space=vmem, size = 0x1000, scoped, tag = 'input window, operand 17, single buffered']
    #allocation13 [shape = 'u8[512]{0}', space=vmem, size = 0x400, scoped, tag = 'input window, operand 20, single buffered']
    #allocation14 [shape = 's32[1]{0}', space=sflag, size = 0x4, scoped, tag = 'scoped memory for vae_forward.1']
    #allocation15 [shape = 'u8[16384]{0}', space=vmem, size = 0x4000, scoped, tag = 'input window, operand 23, single buffered']
    #allocation16 [shape = 'u8[16384]{0}', space=vmem, size = 0x4000, scoped, tag = 'input window, operand 26, single buffered']
    #allocation17 [shape = 's32[1]{0}', space=sflag, size = 0x4, scoped, tag = 'scoped memory for vae_forward.1']
    %34 = vsyncpa [#allocation3], 0
    %35 = vsyncpa [#allocation5], 0
    %36 = vsyncpa [#allocation8], 0
    %37 = vsyncpa [#allocation11], 0
    %38 = vsyncpa [#allocation14], 0
    %39 = vsyncpa [#allocation17], 0
    // Predicated region
    $region2: #{vae_forward.1} parent=1 // pred_check
      _
    $region3: #{vae_forward.1} parent=1 // pred_check_branch
      %41 = sbr.rel (0) target = $region5
    $region4: #{vae_forward.1} parent=1 // pred_region
      _
    $region5: #{vae_forward.1} parent=1 // pred_fallthru
      _
    // Predicated region
    $region6: #{vae_forward.1} parent=1 // pred_check
      _
    $region7: #{vae_forward.1} parent=1 // pred_check_branch
      %43 = sbr.rel (0) target = $region9
    $region8: #{vae_forward.1} parent=1 // pred_region
      _
    $region9: #{vae_forward.1} parent=1 // pred_fallthru
      _
    // Predicated region
    $region10: #{vae_forward.1} parent=1 // pred_check
      _
    $region11: #{vae_forward.1} parent=1 // pred_check_branch
      %45 = sbr.rel (0) target = $region13
    $region12: #{vae_forward.1} parent=1 // pred_region
      _
    $region13: #{vae_forward.1} parent=1 // pred_fallthru
      _
    // Predicated region
    $region14: #{vae_forward.1} parent=1 // pred_check
      _
    $region15: #{vae_forward.1} parent=1 // pred_check_branch
      %47 = sbr.rel (0) target = $region17
    $region16: #{vae_forward.1} parent=1 // pred_region
      %s49 = ssub.s32 16, 16
      %50 = vsyncadd [#allocation3], %s49
      %s52 = sshll.u32 [#allocation2], 4
      %s53 = int_to_ptr.vmem [resolvable:$true] %s52
      %55 = dma.hbm_to_vmem [thread:$0]  %s3, 16, %s53, [#allocation3]
    $region17: #{vae_forward.1} parent=1 // pred_fallthru
      _
    // Predicated region
    $region18: #{vae_forward.1} parent=1 // pred_check
      _
    $region19: #{vae_forward.1} parent=1 // pred_check_branch
      %57 = sbr.rel (0) target = $region21
    $region20: #{vae_forward.1} parent=1 // pred_region
      _
    $region21: #{vae_forward.1} parent=1 // pred_fallthru
      _
    // Predicated region
    $region22: #{vae_forward.1} parent=1 // pred_check
      _
    $region23: #{vae_forward.1} parent=1 // pred_check_branch
      %59 = sbr.rel (0) target = $region25
    $region24: #{vae_forward.1} parent=1 // pred_region
      _
    $region25: #{vae_forward.1} parent=1 // pred_fallthru
      _
    // Predicated region
    $region26: #{vae_forward.1} parent=1 // pred_check
      _
    $region27: #{vae_forward.1} parent=1 // pred_check_branch
      %61 = sbr.rel (0) target = $region29
    $region28: #{vae_forward.1} parent=1 // pred_region
      %s63 = ssub.s32 16, 16
      %64 = vsyncadd [#allocation5], %s63
      %s66 = sshll.u32 [#allocation4], 4
      %s67 = int_to_ptr.vmem [resolvable:$true] %s66
      %69 = dma.hbm_to_vmem [thread:$0]  %s6, 16, %s67, [#allocation5]
    $region29: #{vae_forward.1} parent=1 // pred_fallthru
      _
    // Predicated region
    $region30: #{vae_forward.1} parent=1 // pred_check
      _
    $region31: #{vae_forward.1} parent=1 // pred_check_branch
      %71 = sbr.rel (0) target = $region33
    $region32: #{vae_forward.1} parent=1 // pred_region
      _
    $region33: #{vae_forward.1} parent=1 // pred_fallthru
      _
    // Predicated region
    $region34: #{vae_forward.1} parent=1 // pred_check
      _
    $region35: #{vae_forward.1} parent=1 // pred_check_branch
      %73 = sbr.rel (0) target = $region37
    $region36: #{vae_forward.1} parent=1 // pred_region
      _
    $region37: #{vae_forward.1} parent=1 // pred_fallthru
      _
    // Predicated region
    $region38: #{vae_forward.1} parent=1 // pred_check
      _
    $region39: #{vae_forward.1} parent=1 // pred_check_branch
      %75 = sbr.rel (0) target = $region41
    $region40: #{vae_forward.1} parent=1 // pred_region
      %s77 = ssub.s32 16, 16
      %78 = vsyncadd [#allocation5], %s77
      %s80 = sshll.u32 [#allocation6], 4
      %s81 = int_to_ptr.vmem [resolvable:$true] %s80
      %83 = dma.hbm_to_vmem [thread:$0]  %s9, 16, %s81, [#allocation5]
    $region41: #{vae_forward.1} parent=1 // pred_fallthru
      _
    // Predicated region
    $region42: #{vae_forward.1} parent=1 // pred_check
      _
    $region43: #{vae_forward.1} parent=1 // pred_check_branch
      %85 = sbr.rel (0) target = $region45
    $region44: #{vae_forward.1} parent=1 // pred_region
      _
    $region45: #{vae_forward.1} parent=1 // pred_fallthru
      _
    // Predicated region
    $region46: #{vae_forward.1} parent=1 // pred_check
      _
    $region47: #{vae_forward.1} parent=1 // pred_check_branch
      %87 = sbr.rel (0) target = $region49
    $region48: #{vae_forward.1} parent=1 // pred_region
      %s89 = ssub.s32 64, 64
      %90 = vsyncadd [#allocation8], %s89
      %s91 = sshll.u32 [#allocation7], 4
      %s92 = int_to_ptr.vmem [resolvable:$true] %s91
      %97 = dma.hbm_to_vmem [thread:$0]  %s11, 64, %s92, [#allocation8], 16, 16, 1
    $region49: #{vae_forward.1} parent=1 // pred_fallthru
      _
    // Predicated region
    $region50: #{vae_forward.1} parent=1 // pred_check
      _
    $region51: #{vae_forward.1} parent=1 // pred_check_branch
      %99 = sbr.rel (0) target = $region53
    $region52: #{vae_forward.1} parent=1 // pred_region
      %s101 = ssub.s32 32, 32
      %102 = vsyncadd [#allocation8], %s101
      %s104 = sshll.u32 [#allocation9], 4
      %s105 = int_to_ptr.vmem [resolvable:$true] %s104
      %107 = dma.hbm_to_vmem [thread:$0]  %s12, 32, %s105, [#allocation8]
    $region53: #{vae_forward.1} parent=1 // pred_fallthru
      _
    // Predicated region
    $region54: #{vae_forward.1} parent=1 // pred_check
      _
    $region55: #{vae_forward.1} parent=1 // pred_check_branch
      %109 = sbr.rel (0) target = $region57
    $region56: #{vae_forward.1} parent=1 // pred_region
      _
    $region57: #{vae_forward.1} parent=1 // pred_fallthru
      _
    // Predicated region
    $region58: #{vae_forward.1} parent=1 // pred_check
      _
    $region59: #{vae_forward.1} parent=1 // pred_check_branch
      %111 = sbr.rel (0) target = $region61
    $region60: #{vae_forward.1} parent=1 // pred_region
      %s113 = ssub.s32 16, 16
      %114 = vsyncadd [#allocation11], %s113
      %s116 = sshll.u32 [#allocation10], 4
      %s117 = int_to_ptr.vmem [resolvable:$true] %s116
      %119 = dma.hbm_to_vmem [thread:$0]  %s14, 16, %s117, [#allocation11]
    $region61: #{vae_forward.1} parent=1 // pred_fallthru
      _
    // Predicated region
    $region62: #{vae_forward.1} parent=1 // pred_check
      _
    $region63: #{vae_forward.1} parent=1 // pred_check_branch
      %121 = sbr.rel (0) target = $region65
    $region64: #{vae_forward.1} parent=1 // pred_region
      _
    $region65: #{vae_forward.1} parent=1 // pred_fallthru
      _
    // Predicated region
    $region66: #{vae_forward.1} parent=1 // pred_check
      _
    $region67: #{vae_forward.1} parent=1 // pred_check_branch
      %123 = sbr.rel (0) target = $region69
    $region68: #{vae_forward.1} parent=1 // pred_region
      _
    $region69: #{vae_forward.1} parent=1 // pred_fallthru
      _
    // Predicated region
    $region70: #{vae_forward.1} parent=1 // pred_check
      _
    $region71: #{vae_forward.1} parent=1 // pred_check_branch
      %125 = sbr.rel (0) target = $region73
    $region72: #{vae_forward.1} parent=1 // pred_region
      %s127 = ssub.s32 128, 128
      %128 = vsyncadd [#allocation11], %s127
      %s130 = sshll.u32 [#allocation12], 4
      %s131 = int_to_ptr.vmem [resolvable:$true] %s130
      %133 = dma.hbm_to_vmem [thread:$0]  %s17, 128, %s131, [#allocation11]
    $region73: #{vae_forward.1} parent=1 // pred_fallthru
      _
    // Predicated region
    $region74: #{vae_forward.1} parent=1 // pred_check
      _
    $region75: #{vae_forward.1} parent=1 // pred_check_branch
      %135 = sbr.rel (0) target = $region77
    $region76: #{vae_forward.1} parent=1 // pred_region
      _
    $region77: #{vae_forward.1} parent=1 // pred_fallthru
      _
    // Predicated region
    $region78: #{vae_forward.1} parent=1 // pred_check
      _
    $region79: #{vae_forward.1} parent=1 // pred_check_branch
      %137 = sbr.rel (0) target = $region81
    $region80: #{vae_forward.1} parent=1 // pred_region
      _
    $region81: #{vae_forward.1} parent=1 // pred_fallthru
      _
    // Predicated region
    $region82: #{vae_forward.1} parent=1 // pred_check
      _
    $region83: #{vae_forward.1} parent=1 // pred_check_branch
      %139 = sbr.rel (0) target = $region85
    $region84: #{vae_forward.1} parent=1 // pred_region
      %s141 = ssub.s32 16, 16
      %142 = vsyncadd [#allocation14], %s141
      %s144 = sshll.u32 [#allocation13], 4
      %s145 = int_to_ptr.vmem [resolvable:$true] %s144
      %147 = dma.hbm_to_vmem [thread:$0]  %s20, 16, %s145, [#allocation14]
    $region85: #{vae_forward.1} parent=1 // pred_fallthru
      _
    // Predicated region
    $region86: #{vae_forward.1} parent=1 // pred_check
      _
    $region87: #{vae_forward.1} parent=1 // pred_check_branch
      %149 = sbr.rel (0) target = $region89
    $region88: #{vae_forward.1} parent=1 // pred_region
      _
    $region89: #{vae_forward.1} parent=1 // pred_fallthru
      _
    // Predicated region
    $region90: #{vae_forward.1} parent=1 // pred_check
      _
    $region91: #{vae_forward.1} parent=1 // pred_check_branch
      %151 = sbr.rel (0) target = $region93
    $region92: #{vae_forward.1} parent=1 // pred_region
      _
    $region93: #{vae_forward.1} parent=1 // pred_fallthru
      _
    // Predicated region
    $region94: #{vae_forward.1} parent=1 // pred_check
      _
    $region95: #{vae_forward.1} parent=1 // pred_check_branch
      %153 = sbr.rel (0) target = $region97
    $region96: #{vae_forward.1} parent=1 // pred_region
      %s155 = ssub.s32 512, 512
      %156 = vsyncadd [#allocation14], %s155
      %s157 = sshll.u32 [#allocation15], 4
      %s158 = int_to_ptr.vmem [resolvable:$true] %s157
      %163 = dma.hbm_to_vmem [thread:$0]  %s23, 512, %s158, [#allocation14], 128, 128, 8
    $region97: #{vae_forward.1} parent=1 // pred_fallthru
      _
    // Predicated region
    $region98: #{vae_forward.1} parent=1 // pred_check
      _
    $region99: #{vae_forward.1} parent=1 // pred_check_branch
      %165 = sbr.rel (0) target = $region101
    $region100: #{vae_forward.1} parent=1 // pred_region
      _
    $region101: #{vae_forward.1} parent=1 // pred_fallthru
      _
    // Predicated region
    $region102: #{vae_forward.1} parent=1 // pred_check
      _
    $region103: #{vae_forward.1} parent=1 // pred_check_branch
      %167 = sbr.rel (0) target = $region105
    $region104: #{vae_forward.1} parent=1 // pred_region
      _
    $region105: #{vae_forward.1} parent=1 // pred_fallthru
      _
    // Predicated region
    $region106: #{vae_forward.1} parent=1 // pred_check
      _
    $region107: #{vae_forward.1} parent=1 // pred_check_branch
      %169 = sbr.rel (0) target = $region109
    $region108: #{vae_forward.1} parent=1 // pred_region
      %s171 = ssub.s32 512, 512
      %172 = vsyncadd [#allocation17], %s171
      %s174 = sshll.u32 [#allocation16], 4
      %s175 = int_to_ptr.vmem [resolvable:$true] %s174
      %177 = dma.hbm_to_vmem [thread:$0]  %s26, 512, %s175, [#allocation17]
    $region109: #{vae_forward.1} parent=1 // pred_fallthru
      _
    // Predicated region
    $region110: #{vae_forward.1} parent=1 // pred_check
      _
    $region111: #{vae_forward.1} parent=1 // pred_check_branch
      %179 = sbr.rel (0) target = $region113
    $region112: #{vae_forward.1} parent=1 // pred_region
      %180 = dma.done [#allocation3], 16
    $region113: #{vae_forward.1} parent=1 // pred_fallthru
      _
    // Predicated region
    $region114: #{vae_forward.1} parent=1 // pred_check
      _
    $region115: #{vae_forward.1} parent=1 // pred_check_branch
      %182 = sbr.rel (0) target = $region117
    $region116: #{vae_forward.1} parent=1 // pred_region
      %183 = dma.done [#allocation5], 16
    $region117: #{vae_forward.1} parent=1 // pred_fallthru
      _
    // Predicated region
    $region118: #{vae_forward.1} parent=1 // pred_check
      _
    $region119: #{vae_forward.1} parent=1 // pred_check_branch
      %185 = sbr.rel (0) target = $region121
    $region120: #{vae_forward.1} parent=1 // pred_region
      %186 = dma.done [#allocation5], 16
    $region121: #{vae_forward.1} parent=1 // pred_fallthru
      _
    // Predicated region
    $region122: #{vae_forward.1} parent=1 // pred_check
      _
    $region123: #{vae_forward.1} parent=1 // pred_check_branch
      %188 = sbr.rel (0) target = $region125
    $region124: #{vae_forward.1} parent=1 // pred_region
      %189 = dma.done [#allocation8], 64
    $region125: #{vae_forward.1} parent=1 // pred_fallthru
      _
    // Predicated region
    $region126: #{vae_forward.1} parent=1 // pred_check
      _
    $region127: #{vae_forward.1} parent=1 // pred_check_branch
      %191 = sbr.rel (0) target = $region129
    $region128: #{vae_forward.1} parent=1 // pred_region
      %192 = dma.done [#allocation8], 32
    $region129: #{vae_forward.1} parent=1 // pred_fallthru
      _
    // Predicated region
    $region130: #{vae_forward.1} parent=1 // pred_check
      _
    $region131: #{vae_forward.1} parent=1 // pred_check_branch
      %194 = sbr.rel (0) target = $region133
    $region132: #{vae_forward.1} parent=1 // pred_region
      %195 = dma.done [#allocation11], 16
    $region133: #{vae_forward.1} parent=1 // pred_fallthru
      _
    // Predicated region
    $region134: #{vae_forward.1} parent=1 // pred_check
      _
    $region135: #{vae_forward.1} parent=1 // pred_check_branch
      %197 = sbr.rel (0) target = $region137
    $region136: #{vae_forward.1} parent=1 // pred_region
      %198 = dma.done [#allocation11], 128
    $region137: #{vae_forward.1} parent=1 // pred_fallthru
      _
    // Predicated region
    $region138: #{vae_forward.1} parent=1 // pred_check
      _
    $region139: #{vae_forward.1} parent=1 // pred_check_branch
      %200 = sbr.rel (0) target = $region141
    $region140: #{vae_forward.1} parent=1 // pred_region
      %201 = dma.done [#allocation14], 16
    $region141: #{vae_forward.1} parent=1 // pred_fallthru
      _
    // Predicated region
    $region142: #{vae_forward.1} parent=1 // pred_check
      _
    $region143: #{vae_forward.1} parent=1 // pred_check_branch
      %203 = sbr.rel (0) target = $region145
    $region144: #{vae_forward.1} parent=1 // pred_region
      %204 = dma.done [#allocation14], 512
    $region145: #{vae_forward.1} parent=1 // pred_fallthru
      _
    // Predicated region
    $region146: #{vae_forward.1} parent=1 // pred_check
      _
    $region147: #{vae_forward.1} parent=1 // pred_check_branch
      %206 = sbr.rel (0) target = $region149
    $region148: #{vae_forward.1} parent=1 // pred_region
      %207 = dma.done [#allocation17], 512
    $region149: #{vae_forward.1} parent=1 // pred_fallthru
      _
    %v209 = vld [vmem:[%s0] sm:$0xf]
    %v210 = vld [vmem:[%s0 + $0x4] sm:$0xf]
    %v211 = vld [vmem:[%s0 + $0x8] sm:$0xf]
    %v212 = vld [vmem:[%s0 + $0xc] sm:$0xf]
    %v213 = vld [vmem:[%s0 + $0x10] sm:$0xf]
    %v214 = vld [vmem:[%s0 + $0x14] sm:$0xf]
    %v215 = vld [vmem:[%s0 + $0x18] sm:$0xf]
    %v216 = vld [vmem:[%s0 + $0x1c] sm:$0xf]
    %v217 = vld [vmem:[%s0 + $0x20] sm:$0xf]
    %v218 = vld [vmem:[%s0 + $0x24] sm:$0xf]
    %v219 = vld [vmem:[%s0 + $0x28] sm:$0xf]
    %v220 = vld [vmem:[%s0 + $0x2c] sm:$0xf]
    %v221 = vld [vmem:[%s0 + $0x30] sm:$0xf]
    %v222 = vld [vmem:[%s0 + $0x34] sm:$0xf]
    %v223 = vld [vmem:[%s0 + $0x38] sm:$0xf]
    %v224 = vld [vmem:[%s0 + $0x3c] sm:$0xf]
    %v225 = vld [vmem:[%s2] sm:$0xf]
    %v226 = vld [vmem:[%s2 + $0x4] sm:$0xf]
    %v227 = vld [vmem:[%s2 + $0x8] sm:$0xf]
    %v228 = vld [vmem:[%s2 + $0xc] sm:$0xf]
    %v229 = vld [vmem:[%s2 + $0x10] sm:$0x3]
    %v230 = vld [vmem:[#allocation2] sm:$0x1]
    %v232 = vlaneseq
    %v233 = vshrl.u32 %v232, 7
    %v234 = vsub.s32 0, %v233
    %v235 = vrot.slane %v230, %v234
    %v253 = vunpack.c.l.b16 %v209
    %v254 = vunpack.c.l.b16 %v210
    %v255 = vunpack.c.l.b16 %v211
    %v256 = vunpack.c.l.b16 %v212
    %v257 = vunpack.c.l.b16 %v213
    %v258 = vunpack.c.l.b16 %v214
    %v259 = vunpack.c.l.b16 %v215
    %v260 = vunpack.c.l.b16 %v216
    %v261 = vunpack.c.l.b16 %v217
    %v262 = vunpack.c.l.b16 %v218
    %v263 = vunpack.c.l.b16 %v219
    %v264 = vunpack.c.l.b16 %v220
    %v265 = vunpack.c.l.b16 %v221
    %v266 = vunpack.c.l.b16 %v222
    %v267 = vunpack.c.l.b16 %v223
    %v268 = vunpack.c.l.b16 %v224
    %v269 = vpack.c.b16 %v254, %v253
    %v270 = vpack.c.b16 %v256, %v255
    %v271 = vpack.c.b16 %v258, %v257
    %v272 = vpack.c.b16 %v260, %v259
    %v273 = vpack.c.b16 %v262, %v261
    %v274 = vpack.c.b16 %v264, %v263
    %v275 = vpack.c.b16 %v266, %v265
    %v276 = vpack.c.b16 %v268, %v267
    %v282 = vunpack.c.l.b16 %v225
    %v283 = vunpack.c.l.b16 %v226
    %v284 = vunpack.c.l.b16 %v227
    %v285 = vunpack.c.l.b16 %v228
    %v286 = vunpack.c.l.b16 %v229
    %v287 = vpack.c.b16 %v283, %v282
    %v288 = vpack.c.b16 %v285, %v284
    %v289 = vpack.c.b16 %v286, %v286
    %vm292 = vcmask 293888
    %v294 = vsel %vm292, %v269, 0
    %v297 = vsel %vm292, %v270, 0
    %v300 = vsel %vm292, %v271, 0
    %v303 = vsel %vm292, %v272, 0
    %v306 = vsel %vm292, %v273, 0
    %v309 = vsel %vm292, %v274, 0
    %v312 = vsel %vm292, %v275, 0
    %v315 = vsel %vm292, %v276, 0
    %vm317 = vcmask 1041408
    %v319 = vsel %vm317, %v289, 0
    %321 = vmatprep.subr.bf16.mxu0 0
    %322 = vmatpush1.bf16.msra.mxu0 %v287
    %323 = vmatprep.subr.bf16.mxu0 0
    %324 = vmatpush1.bf16.msra.mxu0 %v288
    %325 = vmatprep.subr.bf16.mxu0 0
    %326 = vmatpush1.bf16.msra.mxu0 %v319
    %327 = vmatprep.subr.bf16.mxu0 0
    %328 = vmatpush1.bf16.msra.mxu0 0
    %329 = vmatprep.subr.bf16.mxu0 0
    %330 = vmatpush1.bf16.msra.mxu0 0
    %331 = vmatprep.subr.bf16.mxu0 0
    %332 = vmatpush1.bf16.msra.mxu0 0
    %333 = vmatprep.subr.bf16.mxu0 0
    %334 = vmatpush1.bf16.msra.mxu0 0
    %335 = vmatprep.subr.bf16.mxu0 0
    %336 = vmatpush1.bf16.msra.mxu0 0
    %337 = vmatprep.subr.bf16.mxu0 0
    %338 = vmatpush1.bf16.msra.mxu0 0
    %339 = vmatprep.subr.bf16.mxu0 0
    %340 = vmatpush1.bf16.msra.mxu0 0
    %341 = vmatprep.subr.bf16.mxu0 0
    %342 = vmatpush1.bf16.msra.mxu0 0
    %343 = vmatprep.subr.bf16.mxu0 0
    %344 = vmatpush1.bf16.msra.mxu0 0
    %345 = vmatprep.subr.bf16.mxu0 0
    %346 = vmatpush1.bf16.msra.mxu0 0
    %347 = vmatprep.subr.bf16.mxu0 0
    %348 = vmatpush1.bf16.msra.mxu0 0
    %349 = vmatprep.subr.bf16.mxu0 0
    %350 = vmatpush1.bf16.msra.mxu0 0
    %351 = vmatprep.subr.bf16.mxu0 0
    %352 = vmatpush1.bf16.msra.mxu0 0
    %353 = vmatprep.mubr.bf16.mxu0 0
    %354 = vmatmul.mubr.bf16.gmra.mrb[0].mxu0 %v294
    %v355 = vpop.f32.mrb[0].mxu0
    %v356 = vadd.f32 %v235, %v355
    %v357 = vpop.f32.mrb[0].mxu0
    %v358 = vpop.f32.mrb[0].mxu0
    %v359 = vadd.f32 %v235, %v358
    %v360 = vpop.f32.mrb[0].mxu0
    %361 = vmatprep.mubr.bf16.mxu0 0
    %362 = vmatmul.mubr.bf16.gmra.mrb[0].mxu0 %v297
    %v363 = vpop.f32.mrb[0].mxu0
    %v364 = vadd.f32 %v235, %v363
    %v365 = vpop.f32.mrb[0].mxu0
    %v366 = vpop.f32.mrb[0].mxu0
    %v367 = vadd.f32 %v235, %v366
    %v368 = vpop.f32.mrb[0].mxu0
    %369 = vmatprep.mubr.bf16.mxu0 0
    %370 = vmatmul.mubr.bf16.gmra.mrb[0].mxu0 %v300
    %v371 = vpop.f32.mrb[0].mxu0
    %v372 = vadd.f32 %v235, %v371
    %v373 = vpop.f32.mrb[0].mxu0
    %v374 = vpop.f32.mrb[0].mxu0
    %v375 = vadd.f32 %v235, %v374
    %v376 = vpop.f32.mrb[0].mxu0
    %377 = vmatprep.mubr.bf16.mxu0 0
    %378 = vmatmul.mubr.bf16.gmra.mrb[0].mxu0 %v303
    %v379 = vpop.f32.mrb[0].mxu0
    %v380 = vadd.f32 %v235, %v379
    %v381 = vpop.f32.mrb[0].mxu0
    %v382 = vpop.f32.mrb[0].mxu0
    %v383 = vadd.f32 %v235, %v382
    %v384 = vpop.f32.mrb[0].mxu0
    %385 = vmatprep.mubr.bf16.mxu0 0
    %386 = vmatmul.mubr.bf16.gmra.mrb[0].mxu0 %v306
    %v387 = vpop.f32.mrb[0].mxu0
    %v388 = vadd.f32 %v235, %v387
    %v389 = vpop.f32.mrb[0].mxu0
    %v390 = vpop.f32.mrb[0].mxu0
    %v391 = vadd.f32 %v235, %v390
    %v392 = vpop.f32.mrb[0].mxu0
    %393 = vmatprep.mubr.bf16.mxu0 0
    %394 = vmatmul.mubr.bf16.gmra.mrb[0].mxu0 %v309
    %v395 = vpop.f32.mrb[0].mxu0
    %v396 = vadd.f32 %v235, %v395
    %v397 = vpop.f32.mrb[0].mxu0
    %v398 = vpop.f32.mrb[0].mxu0
    %v399 = vadd.f32 %v235, %v398
    %v400 = vpop.f32.mrb[0].mxu0
    %401 = vmatprep.mubr.bf16.mxu0 0
    %402 = vmatmul.mubr.bf16.gmra.mrb[0].mxu0 %v312
    %v403 = vpop.f32.mrb[0].mxu0
    %v404 = vadd.f32 %v235, %v403
    %v405 = vpop.f32.mrb[0].mxu0
    %v406 = vpop.f32.mrb[0].mxu0
    %v407 = vadd.f32 %v235, %v406
    %v408 = vpop.f32.mrb[0].mxu0
    %409 = vmatprep.mubr.bf16.mxu0 0
    %410 = vmatmul.mubr.bf16.gmra.mrb[0].mxu0 %v315
    %v411 = vpop.f32.mrb[0].mxu0
    %v412 = vadd.f32 %v235, %v411
    %v413 = vpop.f32.mrb[0].mxu0
    %v414 = vpop.f32.mrb[0].mxu0
    %v415 = vadd.f32 %v235, %v414
    %v416 = vpop.f32.mrb[0].mxu0
    %417 = vdwg.mxu0
    %v418 = vmax.f32 %v356, 0.0
    %v419 = vmax.f32 %v359, 0.0
    %v420 = vmax.f32 %v364, 0.0
    %v421 = vmax.f32 %v367, 0.0
    %v422 = vmax.f32 %v372, 0.0
    %v423 = vmax.f32 %v375, 0.0
    %v424 = vmax.f32 %v380, 0.0
    %v425 = vmax.f32 %v383, 0.0
    %v426 = vmax.f32 %v388, 0.0
    %v427 = vmax.f32 %v391, 0.0
    %v428 = vmax.f32 %v396, 0.0
    %v429 = vmax.f32 %v399, 0.0
    %v430 = vmax.f32 %v404, 0.0
    %v431 = vmax.f32 %v407, 0.0
    %v432 = vmax.f32 %v412, 0.0
    %v433 = vmax.f32 %v415, 0.0
    %v434 = vpack.c.bf16 %v419, %v418
    %v435 = vpack.c.bf16 %v421, %v420
    %v436 = vpack.c.bf16 %v423, %v422
    %v437 = vpack.c.bf16 %v425, %v424
    %v438 = vpack.c.bf16 %v427, %v426
    %v439 = vpack.c.bf16 %v429, %v428
    %v440 = vpack.c.bf16 %v431, %v430
    %v441 = vpack.c.bf16 %v433, %v432
    %v442 = vld [vmem:[%s4] sm:$0xf]
    %v443 = vld [vmem:[%s4 + $0x4] sm:$0xf]
    %v444 = vld [vmem:[%s4 + $0x8] sm:$0xf]
    %v445 = vld [vmem:[%s4 + $0xc] sm:$0xf]
    %v446 = vld [vmem:[%s4 + $0x10] sm:$0xf]
    %v447 = vld [vmem:[%s4 + $0x14] sm:$0xf]
    %v448 = vld [vmem:[%s4 + $0x18] sm:$0xf]
    %v449 = vld [vmem:[%s4 + $0x1c] sm:$0xf]
    %v450 = vld [vmem:[%s4 + $0x20] sm:$0xf]
    %v451 = vld [vmem:[%s4 + $0x24] sm:$0xf]
    %v452 = vld [vmem:[%s4 + $0x28] sm:$0xf]
    %v453 = vld [vmem:[%s4 + $0x2c] sm:$0xf]
    %v454 = vld [vmem:[%s4 + $0x30] sm:$0xf]
    %v455 = vld [vmem:[%s4 + $0x34] sm:$0xf]
    %v456 = vld [vmem:[%s4 + $0x38] sm:$0xf]
    %v457 = vld [vmem:[%s4 + $0x3c] sm:$0xf]
    %v458 = vld [vmem:[%s4 + $0x40] sm:$0xf]
    %v459 = vld [vmem:[%s4 + $0x44] sm:$0xf]
    %v460 = vld [vmem:[%s4 + $0x48] sm:$0xf]
    %v461 = vld [vmem:[%s4 + $0x4c] sm:$0xf]
    %v462 = vld [vmem:[%s4 + $0x50] sm:$0xf]
    %v463 = vld [vmem:[%s4 + $0x54] sm:$0xf]
    %v464 = vld [vmem:[%s4 + $0x58] sm:$0xf]
    %v465 = vld [vmem:[%s4 + $0x5c] sm:$0xf]
    %v466 = vld [vmem:[%s4 + $0x60] sm:$0xf]
    %v467 = vld [vmem:[%s4 + $0x64] sm:$0xf]
    %v468 = vld [vmem:[%s4 + $0x68] sm:$0xf]
    %v469 = vld [vmem:[%s4 + $0x6c] sm:$0xf]
    %v470 = vld [vmem:[%s4 + $0x70] sm:$0xf]
    %v471 = vld [vmem:[%s4 + $0x74] sm:$0xf]
    %v472 = vld [vmem:[%s4 + $0x78] sm:$0xf]
    %v473 = vld [vmem:[%s4 + $0x7c] sm:$0xf]
    %v474 = vld [vmem:[%s4 + $0x80] sm:$0xf]
    %v475 = vld [vmem:[%s4 + $0x84] sm:$0xf]
    %v476 = vld [vmem:[%s4 + $0x88] sm:$0xf]
    %v477 = vld [vmem:[%s4 + $0x8c] sm:$0xf]
    %v514 = vunpack.c.l.b16 %v442
    %v515 = vunpack.c.l.b16 %v443
    %v516 = vunpack.c.l.b16 %v444
    %v517 = vunpack.c.l.b16 %v445
    %v518 = vunpack.c.l.b16 %v446
    %v519 = vunpack.c.l.b16 %v447
    %v520 = vunpack.c.l.b16 %v448
    %v521 = vunpack.c.l.b16 %v449
    %v522 = vunpack.c.l.b16 %v450
    %v523 = vunpack.c.l.b16 %v451
    %v524 = vunpack.c.l.b16 %v452
    %v525 = vunpack.c.l.b16 %v453
    %v526 = vunpack.c.l.b16 %v454
    %v527 = vunpack.c.l.b16 %v455
    %v528 = vunpack.c.l.b16 %v456
    %v529 = vunpack.c.l.b16 %v457
    %v530 = vunpack.c.l.b16 %v458
    %v531 = vunpack.c.l.b16 %v459
    %v532 = vunpack.c.l.b16 %v460
    %v533 = vunpack.c.l.b16 %v461
    %v534 = vunpack.c.l.b16 %v462
    %v535 = vunpack.c.l.b16 %v463
    %v536 = vunpack.c.l.b16 %v464
    %v537 = vunpack.c.l.b16 %v465
    %v538 = vunpack.c.l.b16 %v466
    %v539 = vunpack.c.l.b16 %v467
    %v540 = vunpack.c.l.b16 %v468
    %v541 = vunpack.c.l.b16 %v469
    %v542 = vunpack.c.l.b16 %v470
    %v543 = vunpack.c.l.b16 %v471
    %v544 = vunpack.c.l.b16 %v472
    %v545 = vunpack.c.l.b16 %v473
    %v546 = vunpack.c.l.b16 %v474
    %v547 = vunpack.c.l.b16 %v475
    %v548 = vunpack.c.l.b16 %v476
    %v549 = vunpack.c.l.b16 %v477
    %v550 = vpack.c.b16 %v515, %v514
    %v551 = vpack.c.b16 %v517, %v516
    %v552 = vpack.c.b16 %v519, %v518
    %v553 = vpack.c.b16 %v521, %v520
    %v554 = vpack.c.b16 %v523, %v522
    %v555 = vpack.c.b16 %v525, %v524
    %v556 = vpack.c.b16 %v527, %v526
    %v557 = vpack.c.b16 %v529, %v528
    %v558 = vpack.c.b16 %v531, %v530
    %v559 = vpack.c.b16 %v533, %v532
    %v560 = vpack.c.b16 %v535, %v534
    %v561 = vpack.c.b16 %v537, %v536
    %v562 = vpack.c.b16 %v539, %v538
    %v563 = vpack.c.b16 %v541, %v540
    %v564 = vpack.c.b16 %v543, %v542
    %v565 = vpack.c.b16 %v545, %v544
    %v566 = vpack.c.b16 %v547, %v546
    %v567 = vpack.c.b16 %v549, %v548
    %586 = vmatprep.subr.bf16.mxu0 0
    %587 = vmatpush1.bf16.msra.mxu0 %v434
    %588 = vmatprep.subr.bf16.mxu0 0
    %589 = vmatpush1.bf16.msra.mxu0 %v435
    %590 = vmatprep.subr.bf16.mxu0 0
    %591 = vmatpush1.bf16.msra.mxu0 %v436
    %592 = vmatprep.subr.bf16.mxu0 0
    %593 = vmatpush1.bf16.msra.mxu0 %v437
    %594 = vmatprep.subr.bf16.mxu0 0
    %595 = vmatpush1.bf16.msra.mxu0 %v438
    %596 = vmatprep.subr.bf16.mxu0 0
    %597 = vmatpush1.bf16.msra.mxu0 %v439
    %598 = vmatprep.subr.bf16.mxu0 0
    %599 = vmatpush1.bf16.msra.mxu0 %v440
    %600 = vmatprep.subr.bf16.mxu0 0
    %601 = vmatpush1.bf16.msra.mxu0 %v441
    %602 = vmatprep.subr.bf16.mxu0 0
    %603 = vmatpush1.bf16.msra.mxu0 0
    %604 = vmatprep.subr.bf16.mxu0 0
    %605 = vmatpush1.bf16.msra.mxu0 0
    %606 = vmatprep.subr.bf16.mxu0 0
    %607 = vmatpush1.bf16.msra.mxu0 0
    %608 = vmatprep.subr.bf16.mxu0 0
    %609 = vmatpush1.bf16.msra.mxu0 0
    %610 = vmatprep.subr.bf16.mxu0 0
    %611 = vmatpush1.bf16.msra.mxu0 0
    %612 = vmatprep.subr.bf16.mxu0 0
    %613 = vmatpush1.bf16.msra.mxu0 0
    %614 = vmatprep.subr.bf16.mxu0 0
    %615 = vmatpush1.bf16.msra.mxu0 0
    %616 = vmatprep.subr.bf16.mxu0 0
    %617 = vmatpush1.bf16.msra.mxu0 0
    %618 = vmatprep.mubr.bf16.mxu0 0
    %619 = vmatmul.mubr.bf16.gmra.mrb[0].mxu0 %v550
    %v620 = vpop.f32.mrb[0].mxu0
    %v621 = vadd.f32 0.0, %v620
    %v622 = vpop.f32.mrb[0].mxu0
    %v623 = vpop.f32.mrb[0].mxu0
    %v624 = vadd.f32 0.0, %v623
    %v625 = vpop.f32.mrb[0].mxu0
    %626 = vmatprep.mubr.bf16.mxu0 0
    %627 = vmatmul.mubr.bf16.gmra.mrb[0].mxu0 %v551
    %v628 = vpop.f32.mrb[0].mxu0
    %v629 = vadd.f32 0.0, %v628
    %v630 = vpop.f32.mrb[0].mxu0
    %v631 = vpop.f32.mrb[0].mxu0
    %v632 = vadd.f32 0.0, %v631
    %v633 = vpop.f32.mrb[0].mxu0
    %634 = vmatprep.mubr.bf16.mxu0 0
    %635 = vmatmul.mubr.bf16.gmra.mrb[0].mxu0 %v552
    %v636 = vpop.f32.mrb[0].mxu0
    %v637 = vadd.f32 0.0, %v636
    %v638 = vpop.f32.mrb[0].mxu0
    %v639 = vpop.f32.mrb[0].mxu0
    %v640 = vadd.f32 0.0, %v639
    %v641 = vpop.f32.mrb[0].mxu0
    %642 = vmatprep.mubr.bf16.mxu0 0
    %643 = vmatmul.mubr.bf16.gmra.mrb[0].mxu0 %v553
    %v644 = vpop.f32.mrb[0].mxu0
    %v645 = vadd.f32 0.0, %v644
    %v646 = vpop.f32.mrb[0].mxu0
    %v647 = vpop.f32.mrb[0].mxu0
    %v648 = vadd.f32 0.0, %v647
    %v649 = vpop.f32.mrb[0].mxu0
    %650 = vmatprep.mubr.bf16.mxu0 0
    %651 = vmatmul.mubr.bf16.gmra.mrb[0].mxu0 %v554
    %v652 = vpop.f32.mrb[0].mxu0
    %v653 = vadd.f32 0.0, %v652
    %v654 = vpop.f32.mrb[0].mxu0
    %v655 = vpop.f32.mrb[0].mxu0
    %v656 = vadd.f32 0.0, %v655
    %v657 = vpop.f32.mrb[0].mxu0
    %658 = vmatprep.mubr.bf16.mxu0 0
    %659 = vmatmul.mubr.bf16.gmra.mrb[0].mxu0 %v555
    %v660 = vpop.f32.mrb[0].mxu0
    %v661 = vadd.f32 0.0, %v660
    %v662 = vpop.f32.mrb[0].mxu0
    %v663 = vpop.f32.mrb[0].mxu0
    %v664 = vadd.f32 0.0, %v663
    %v665 = vpop.f32.mrb[0].mxu0
    %666 = vmatprep.mubr.bf16.mxu0 0
    %667 = vmatmul.mubr.bf16.gmra.mrb[0].mxu0 %v556
    %v668 = vpop.f32.mrb[0].mxu0
    %v669 = vadd.f32 0.0, %v668
    %v670 = vpop.f32.mrb[0].mxu0
    %v671 = vpop.f32.mrb[0].mxu0
    %v672 = vadd.f32 0.0, %v671
    %v673 = vpop.f32.mrb[0].mxu0
    %674 = vmatprep.mubr.bf16.mxu0 0
    %675 = vmatmul.mubr.bf16.gmra.mrb[0].mxu0 %v557
    %v676 = vpop.f32.mrb[0].mxu0
    %v677 = vadd.f32 0.0, %v676
    %v678 = vpop.f32.mrb[0].mxu0
    %v679 = vpop.f32.mrb[0].mxu0
    %v680 = vadd.f32 0.0, %v679
    %v681 = vpop.f32.mrb[0].mxu0
    %682 = vmatprep.mubr.bf16.mxu0 0
    %683 = vmatmul.mubr.bf16.gmra.mrb[0].mxu0 %v558
    %v684 = vpop.f32.mrb[0].mxu0
    %v685 = vadd.f32 0.0, %v684
    %v686 = vpop.f32.mrb[0].mxu0
    %v687 = vpop.f32.mrb[0].mxu0
    %v688 = vadd.f32 0.0, %v687
    %v689 = vpop.f32.mrb[0].mxu0
    %690 = vmatprep.mubr.bf16.mxu0 0
    %691 = vmatmul.mubr.bf16.gmra.mrb[0].mxu0 %v559
    %v692 = vpop.f32.mrb[0].mxu0
    %v693 = vadd.f32 0.0, %v692
    %v694 = vpop.f32.mrb[0].mxu0
    %v695 = vpop.f32.mrb[0].mxu0
    %v696 = vadd.f32 0.0, %v695
    %v697 = vpop.f32.mrb[0].mxu0
    %698 = vmatprep.mubr.bf16.mxu0 0
    %699 = vmatmul.mubr.bf16.gmra.mrb[0].mxu0 %v560
    %v700 = vpop.f32.mrb[0].mxu0
    %v701 = vadd.f32 0.0, %v700
    %v702 = vpop.f32.mrb[0].mxu0
    %v703 = vpop.f32.mrb[0].mxu0
    %v704 = vadd.f32 0.0, %v703
    %v705 = vpop.f32.mrb[0].mxu0
    %706 = vmatprep.mubr.bf16.mxu0 0
    %707 = vmatmul.mubr.bf16.gmra.mrb[0].mxu0 %v561
    %v708 = vpop.f32.mrb[0].mxu0
    %v709 = vadd.f32 0.0, %v708
    %v710 = vpop.f32.mrb[0].mxu0
    %v711 = vpop.f32.mrb[0].mxu0
    %v712 = vadd.f32 0.0, %v711
    %v713 = vpop.f32.mrb[0].mxu0
    %714 = vmatprep.mubr.bf16.mxu0 0
    %715 = vmatmul.mubr.bf16.gmra.mrb[0].mxu0 %v562
    %v716 = vpop.f32.mrb[0].mxu0
    %v717 = vadd.f32 0.0, %v716
    %v718 = vpop.f32.mrb[0].mxu0
    %v719 = vpop.f32.mrb[0].mxu0
    %v720 = vadd.f32 0.0, %v719
    %v721 = vpop.f32.mrb[0].mxu0
    %722 = vmatprep.mubr.bf16.mxu0 0
    %723 = vmatmul.mubr.bf16.gmra.mrb[0].mxu0 %v563
    %v724 = vpop.f32.mrb[0].mxu0
    %v725 = vadd.f32 0.0, %v724
    %v726 = vpop.f32.mrb[0].mxu0
    %v727 = vpop.f32.mrb[0].mxu0
    %v728 = vadd.f32 0.0, %v727
    %v729 = vpop.f32.mrb[0].mxu0
    %730 = vmatprep.mubr.bf16.mxu0 0
    %731 = vmatmul.mubr.bf16.gmra.mrb[0].mxu0 %v564
    %v732 = vpop.f32.mrb[0].mxu0
    %v733 = vadd.f32 0.0, %v732
    %v734 = vpop.f32.mrb[0].mxu0
    %v735 = vpop.f32.mrb[0].mxu0
    %v736 = vadd.f32 0.0, %v735
    %v737 = vpop.f32.mrb[0].mxu0
    %738 = vmatprep.mubr.bf16.mxu0 0
    %739 = vmatmul.mubr.bf16.gmra.mrb[0].mxu0 %v565
    %v740 = vpop.f32.mrb[0].mxu0
    %v741 = vadd.f32 0.0, %v740
    %v742 = vpop.f32.mrb[0].mxu0
    %v743 = vpop.f32.mrb[0].mxu0
    %v744 = vadd.f32 0.0, %v743
    %v745 = vpop.f32.mrb[0].mxu0
    %746 = vmatprep.mubr.bf16.mxu0 0
    %747 = vmatmul.mubr.bf16.gmra.mrb[0].mxu0 %v566
    %v748 = vpop.f32.mrb[0].mxu0
    %v749 = vadd.f32 0.0, %v748
    %v750 = vpop.f32.mrb[0].mxu0
    %v751 = vpop.f32.mrb[0].mxu0
    %v752 = vadd.f32 0.0, %v751
    %v753 = vpop.f32.mrb[0].mxu0
    %754 = vmatprep.mubr.bf16.mxu0 0
    %755 = vmatmul.mubr.bf16.gmra.mrb[0].mxu0 %v567
    %v756 = vpop.f32.mrb[0].mxu0
    %v757 = vadd.f32 0.0, %v756
    %v758 = vpop.f32.mrb[0].mxu0
    %v759 = vpop.f32.mrb[0].mxu0
    %v760 = vadd.f32 0.0, %v759
    %v761 = vpop.f32.mrb[0].mxu0
    %762 = vdwg.mxu0
    %v763 = vpack.c.bf16 %v624, %v621
    %v764 = vpack.c.bf16 %v632, %v629
    %v765 = vpack.c.bf16 %v640, %v637
    %v766 = vpack.c.bf16 %v648, %v645
    %v767 = vpack.c.bf16 %v656, %v653
    %v768 = vpack.c.bf16 %v664, %v661
    %v769 = vpack.c.bf16 %v672, %v669
    %v770 = vpack.c.bf16 %v680, %v677
    %v771 = vpack.c.bf16 %v688, %v685
    %v772 = vpack.c.bf16 %v696, %v693
    %v773 = vpack.c.bf16 %v704, %v701
    %v774 = vpack.c.bf16 %v712, %v709
    %v775 = vpack.c.bf16 %v720, %v717
    %v776 = vpack.c.bf16 %v728, %v725
    %v777 = vpack.c.bf16 %v736, %v733
    %v778 = vpack.c.bf16 %v744, %v741
    %v779 = vpack.c.bf16 %v752, %v749
    %v780 = vpack.c.bf16 %v760, %v757
    %v781 = vld [vmem:[%s5] sm:$0xf]
    %v782 = vld [vmem:[%s5 + $0x4] sm:$0xf]
    %v783 = vld [vmem:[%s5 + $0x8] sm:$0xf]
    %v784 = vld [vmem:[%s5 + $0xc] sm:$0xf]
    %s785 = scalar_lea.vmem %s5, 16
    %v786 = vld [vmem:[%s785] sm:$0xf]
    %v787 = vld [vmem:[%s785 + $0x4] sm:$0xf]
    %v788 = vld [vmem:[%s785 + $0x8] sm:$0xf]
    %v789 = vld [vmem:[%s785 + $0xc] sm:$0xf]
    %v794 = vunpack.c.l.b16 %v786
    %v795 = vunpack.c.l.b16 %v787
    %v796 = vunpack.c.l.b16 %v788
    %v797 = vunpack.c.l.b16 %v789
    %v798 = vpack.c.b16 %v795, %v794
    %v799 = vpack.c.b16 %v797, %v796
    %vm802 = vcmask 261120
    %v804 = vsel %vm802, %v765, 0
    %v807 = vsel %vm802, %v766, 0
    %809 = vmatprep.subr.bf16.mxu0 0
    %810 = vmatpush1.bf16.msra.mxu0 %v798
    %811 = vmatprep.subr.bf16.mxu0 0
    %812 = vmatpush1.bf16.msra.mxu0 %v799
    %813 = vmatprep.subr.bf16.mxu0 0
    %814 = vmatpush1.bf16.msra.mxu0 0
    %815 = vmatprep.subr.bf16.mxu0 0
    %816 = vmatpush1.bf16.msra.mxu0 0
    %817 = vmatprep.subr.bf16.mxu0 0
    %818 = vmatpush1.bf16.msra.mxu0 0
    %819 = vmatprep.subr.bf16.mxu0 0
    %820 = vmatpush1.bf16.msra.mxu0 0
    %821 = vmatprep.subr.bf16.mxu0 0
    %822 = vmatpush1.bf16.msra.mxu0 0
    %823 = vmatprep.subr.bf16.mxu0 0
    %824 = vmatpush1.bf16.msra.mxu0 0
    %825 = vmatprep.subr.bf16.mxu0 0
    %826 = vmatpush1.bf16.msra.mxu0 0
    %827 = vmatprep.subr.bf16.mxu0 0
    %828 = vmatpush1.bf16.msra.mxu0 0
    %829 = vmatprep.subr.bf16.mxu0 0
    %830 = vmatpush1.bf16.msra.mxu0 0
    %831 = vmatprep.subr.bf16.mxu0 0
    %832 = vmatpush1.bf16.msra.mxu0 0
    %833 = vmatprep.subr.bf16.mxu0 0
    %834 = vmatpush1.bf16.msra.mxu0 0
    %835 = vmatprep.subr.bf16.mxu0 0
    %836 = vmatpush1.bf16.msra.mxu0 0
    %837 = vmatprep.subr.bf16.mxu0 0
    %838 = vmatpush1.bf16.msra.mxu0 0
    %839 = vmatprep.subr.bf16.mxu0 0
    %840 = vmatpush1.bf16.msra.mxu0 0
    %841 = vmatprep.mubr.bf16.mxu0 0
    %842 = vmatmul.mubr.bf16.gmra.mrb[0].mxu0 %v804
    %v843 = vpop.f32.mrb[0].mxu0
    %v844 = vadd.f32 0.0, %v843
    %v845 = vpop.f32.mrb[0].mxu0
    %v846 = vpop.f32.mrb[0].mxu0
    %v847 = vadd.f32 0.0, %v846
    %v848 = vpop.f32.mrb[0].mxu0
    %849 = vmatprep.mubr.bf16.mxu0 0
    %850 = vmatmul.mubr.bf16.gmra.mrb[0].mxu0 %v807
    %v851 = vpop.f32.mrb[0].mxu0
    %v852 = vadd.f32 0.0, %v851
    %v853 = vpop.f32.mrb[0].mxu0
    %v854 = vpop.f32.mrb[0].mxu0
    %v855 = vadd.f32 0.0, %v854
    %v856 = vpop.f32.mrb[0].mxu0
    %857 = vdwg.mxu0
    %v862 = vunpack.c.l.b16 %v781
    %v863 = vunpack.c.l.b16 %v782
    %v864 = vunpack.c.l.b16 %v783
    %v865 = vunpack.c.l.b16 %v784
    %v866 = vpack.c.b16 %v863, %v862
    %v867 = vpack.c.b16 %v865, %v864
    %v871 = vsel %vm802, %v763, 0
    %v874 = vsel %vm802, %v764, 0
    %876 = vmatprep.subr.bf16.mxu0 0
    %877 = vmatpush1.bf16.msra.mxu0 %v866
    %878 = vmatprep.subr.bf16.mxu0 0
    %879 = vmatpush1.bf16.msra.mxu0 %v867
    %880 = vmatprep.subr.bf16.mxu0 0
    %881 = vmatpush1.bf16.msra.mxu0 0
    %882 = vmatprep.subr.bf16.mxu0 0
    %883 = vmatpush1.bf16.msra.mxu0 0
    %884 = vmatprep.subr.bf16.mxu0 0
    %885 = vmatpush1.bf16.msra.mxu0 0
    %886 = vmatprep.subr.bf16.mxu0 0
    %887 = vmatpush1.bf16.msra.mxu0 0
    %888 = vmatprep.subr.bf16.mxu0 0
    %889 = vmatpush1.bf16.msra.mxu0 0
    %890 = vmatprep.subr.bf16.mxu0 0
    %891 = vmatpush1.bf16.msra.mxu0 0
    %892 = vmatprep.subr.bf16.mxu0 0
    %893 = vmatpush1.bf16.msra.mxu0 0
    %894 = vmatprep.subr.bf16.mxu0 0
    %895 = vmatpush1.bf16.msra.mxu0 0
    %896 = vmatprep.subr.bf16.mxu0 0
    %897 = vmatpush1.bf16.msra.mxu0 0
    %898 = vmatprep.subr.bf16.mxu0 0
    %899 = vmatpush1.bf16.msra.mxu0 0
    %900 = vmatprep.subr.bf16.mxu0 0
    %901 = vmatpush1.bf16.msra.mxu0 0
    %902 = vmatprep.subr.bf16.mxu0 0
    %903 = vmatpush1.bf16.msra.mxu0 0
    %904 = vmatprep.subr.bf16.mxu0 0
    %905 = vmatpush1.bf16.msra.mxu0 0
    %906 = vmatprep.subr.bf16.mxu0 0
    %907 = vmatpush1.bf16.msra.mxu0 0
    %908 = vmatprep.mubr.bf16.mxu0 0
    %909 = vmatmul.mubr.bf16.gmra.mrb[0].mxu0 %v871
    %v910 = vpop.f32.mrb[0].mxu0
    %v911 = vadd.f32 %v844, %v910
    %v912 = vpop.f32.mrb[0].mxu0
    %v913 = vpop.f32.mrb[0].mxu0
    %v914 = vadd.f32 %v847, %v913
    %v915 = vpop.f32.mrb[0].mxu0
    %916 = vmatprep.mubr.bf16.mxu0 0
    %917 = vmatmul.mubr.bf16.gmra.mrb[0].mxu0 %v874
    %v918 = vpop.f32.mrb[0].mxu0
    %v919 = vadd.f32 %v852, %v918
    %v920 = vpop.f32.mrb[0].mxu0
    %v921 = vpop.f32.mrb[0].mxu0
    %v922 = vadd.f32 %v855, %v921
    %v923 = vpop.f32.mrb[0].mxu0
    %924 = vdwg.mxu0
    %s925 = scalar_lea.vmem %s5, 32
    %v926 = vld [vmem:[%s925] sm:$0xf]
    %v927 = vld [vmem:[%s925 + $0x4] sm:$0xf]
    %v928 = vld [vmem:[%s925 + $0x8] sm:$0xf]
    %v929 = vld [vmem:[%s925 + $0xc] sm:$0xf]
    %v934 = vunpack.c.l.b16 %v926
    %v935 = vunpack.c.l.b16 %v927
    %v936 = vunpack.c.l.b16 %v928
    %v937 = vunpack.c.l.b16 %v929
    %v938 = vpack.c.b16 %v935, %v934
    %v939 = vpack.c.b16 %v937, %v936
    %v943 = vsel %vm802, %v767, 0
    %v946 = vsel %vm802, %v768, 0
    %948 = vmatprep.subr.bf16.mxu0 0
    %949 = vmatpush1.bf16.msra.mxu0 %v938
    %950 = vmatprep.subr.bf16.mxu0 0
    %951 = vmatpush1.bf16.msra.mxu0 %v939
    %952 = vmatprep.subr.bf16.mxu0 0
    %953 = vmatpush1.bf16.msra.mxu0 0
    %954 = vmatprep.subr.bf16.mxu0 0
    %955 = vmatpush1.bf16.msra.mxu0 0
    %956 = vmatprep.subr.bf16.mxu0 0
    %957 = vmatpush1.bf16.msra.mxu0 0
    %958 = vmatprep.subr.bf16.mxu0 0
    %959 = vmatpush1.bf16.msra.mxu0 0
    %960 = vmatprep.subr.bf16.mxu0 0
    %961 = vmatpush1.bf16.msra.mxu0 0
    %962 = vmatprep.subr.bf16.mxu0 0
    %963 = vmatpush1.bf16.msra.mxu0 0
    %964 = vmatprep.subr.bf16.mxu0 0
    %965 = vmatpush1.bf16.msra.mxu0 0
    %966 = vmatprep.subr.bf16.mxu0 0
    %967 = vmatpush1.bf16.msra.mxu0 0
    %968 = vmatprep.subr.bf16.mxu0 0
    %969 = vmatpush1.bf16.msra.mxu0 0
    %970 = vmatprep.subr.bf16.mxu0 0
    %971 = vmatpush1.bf16.msra.mxu0 0
    %972 = vmatprep.subr.bf16.mxu0 0
    %973 = vmatpush1.bf16.msra.mxu0 0
    %974 = vmatprep.subr.bf16.mxu0 0
    %975 = vmatpush1.bf16.msra.mxu0 0
    %976 = vmatprep.subr.bf16.mxu0 0
    %977 = vmatpush1.bf16.msra.mxu0 0
    %978 = vmatprep.subr.bf16.mxu0 0
    %979 = vmatpush1.bf16.msra.mxu0 0
    %980 = vmatprep.mubr.bf16.mxu0 0
    %981 = vmatmul.mubr.bf16.gmra.mrb[0].mxu0 %v943
    %v982 = vpop.f32.mrb[0].mxu0
    %v983 = vadd.f32 0.0, %v982
    %v984 = vpop.f32.mrb[0].mxu0
    %v985 = vpop.f32.mrb[0].mxu0
    %v986 = vadd.f32 0.0, %v985
    %v987 = vpop.f32.mrb[0].mxu0
    %988 = vmatprep.mubr.bf16.mxu0 0
    %989 = vmatmul.mubr.bf16.gmra.mrb[0].mxu0 %v946
    %v990 = vpop.f32.mrb[0].mxu0
    %v991 = vadd.f32 0.0, %v990
    %v992 = vpop.f32.mrb[0].mxu0
    %v993 = vpop.f32.mrb[0].mxu0
    %v994 = vadd.f32 0.0, %v993
    %v995 = vpop.f32.mrb[0].mxu0
    %996 = vdwg.mxu0
    %v997 = vadd.f32 %v911, %v983
    %v998 = vadd.f32 %v914, %v986
    %v999 = vadd.f32 %v919, %v991
    %v1000 = vadd.f32 %v922, %v994
    %s1001 = scalar_lea.vmem %s5, 48
    %v1002 = vld [vmem:[%s1001] sm:$0xf]
    %v1003 = vld [vmem:[%s1001 + $0x4] sm:$0xf]
    %v1004 = vld [vmem:[%s1001 + $0x8] sm:$0xf]
    %v1005 = vld [vmem:[%s1001 + $0xc] sm:$0xf]
    %v1010 = vunpack.c.l.b16 %v1002
    %v1011 = vunpack.c.l.b16 %v1003
    %v1012 = vunpack.c.l.b16 %v1004
    %v1013 = vunpack.c.l.b16 %v1005
    %v1014 = vpack.c.b16 %v1011, %v1010
    %v1015 = vpack.c.b16 %v1013, %v1012
    %v1019 = vsel %vm802, %v769, 0
    %v1022 = vsel %vm802, %v770, 0
    %1024 = vmatprep.subr.bf16.mxu0 0
    %1025 = vmatpush1.bf16.msra.mxu0 %v1014
    %1026 = vmatprep.subr.bf16.mxu0 0
    %1027 = vmatpush1.bf16.msra.mxu0 %v1015
    %1028 = vmatprep.subr.bf16.mxu0 0
    %1029 = vmatpush1.bf16.msra.mxu0 0
    %1030 = vmatprep.subr.bf16.mxu0 0
    %1031 = vmatpush1.bf16.msra.mxu0 0
    %1032 = vmatprep.subr.bf16.mxu0 0
    %1033 = vmatpush1.bf16.msra.mxu0 0
    %1034 = vmatprep.subr.bf16.mxu0 0
    %1035 = vmatpush1.bf16.msra.mxu0 0
    %1036 = vmatprep.subr.bf16.mxu0 0
    %1037 = vmatpush1.bf16.msra.mxu0 0
    %1038 = vmatprep.subr.bf16.mxu0 0
    %1039 = vmatpush1.bf16.msra.mxu0 0
    %1040 = vmatprep.subr.bf16.mxu0 0
    %1041 = vmatpush1.bf16.msra.mxu0 0
    %1042 = vmatprep.subr.bf16.mxu0 0
    %1043 = vmatpush1.bf16.msra.mxu0 0
    %1044 = vmatprep.subr.bf16.mxu0 0
    %1045 = vmatpush1.bf16.msra.mxu0 0
    %1046 = vmatprep.subr.bf16.mxu0 0
    %1047 = vmatpush1.bf16.msra.mxu0 0
    %1048 = vmatprep.subr.bf16.mxu0 0
    %1049 = vmatpush1.bf16.msra.mxu0 0
    %1050 = vmatprep.subr.bf16.mxu0 0
    %1051 = vmatpush1.bf16.msra.mxu0 0
    %1052 = vmatprep.subr.bf16.mxu0 0
    %1053 = vmatpush1.bf16.msra.mxu0 0
    %1054 = vmatprep.subr.bf16.mxu0 0
    %1055 = vmatpush1.bf16.msra.mxu0 0
    %1056 = vmatprep.mubr.bf16.mxu0 0
    %1057 = vmatmul.mubr.bf16.gmra.mrb[0].mxu0 %v1019
    %v1058 = vpop.f32.mrb[0].mxu0
    %v1059 = vadd.f32 0.0, %v1058
    %v1060 = vpop.f32.mrb[0].mxu0
    %v1061 = vpop.f32.mrb[0].mxu0
    %v1062 = vadd.f32 0.0, %v1061
    %v1063 = vpop.f32.mrb[0].mxu0
    %1064 = vmatprep.mubr.bf16.mxu0 0
    %1065 = vmatmul.mubr.bf16.gmra.mrb[0].mxu0 %v1022
    %v1066 = vpop.f32.mrb[0].mxu0
    %v1067 = vadd.f32 0.0, %v1066
    %v1068 = vpop.f32.mrb[0].mxu0
    %v1069 = vpop.f32.mrb[0].mxu0
    %v1070 = vadd.f32 0.0, %v1069
    %v1071 = vpop.f32.mrb[0].mxu0
    %1072 = vdwg.mxu0
    %v1073 = vadd.f32 %v997, %v1059
    %v1074 = vadd.f32 %v998, %v1062
    %v1075 = vadd.f32 %v999, %v1067
    %v1076 = vadd.f32 %v1000, %v1070
    %s1077 = scalar_lea.vmem %s5, 64
    %v1078 = vld [vmem:[%s1077] sm:$0xf]
    %v1079 = vld [vmem:[%s1077 + $0x4] sm:$0xf]
    %v1080 = vld [vmem:[%s1077 + $0x8] sm:$0xf]
    %v1081 = vld [vmem:[%s1077 + $0xc] sm:$0xf]
    %v1086 = vunpack.c.l.b16 %v1078
    %v1087 = vunpack.c.l.b16 %v1079
    %v1088 = vunpack.c.l.b16 %v1080
    %v1089 = vunpack.c.l.b16 %v1081
    %v1090 = vpack.c.b16 %v1087, %v1086
    %v1091 = vpack.c.b16 %v1089, %v1088
    %v1095 = vsel %vm802, %v771, 0
    %v1098 = vsel %vm802, %v772, 0
    %1100 = vmatprep.subr.bf16.mxu0 0
    %1101 = vmatpush1.bf16.msra.mxu0 %v1090
    %1102 = vmatprep.subr.bf16.mxu0 0
    %1103 = vmatpush1.bf16.msra.mxu0 %v1091
    %1104 = vmatprep.subr.bf16.mxu0 0
    %1105 = vmatpush1.bf16.msra.mxu0 0
    %1106 = vmatprep.subr.bf16.mxu0 0
    %1107 = vmatpush1.bf16.msra.mxu0 0
    %1108 = vmatprep.subr.bf16.mxu0 0
    %1109 = vmatpush1.bf16.msra.mxu0 0
    %1110 = vmatprep.subr.bf16.mxu0 0
    %1111 = vmatpush1.bf16.msra.mxu0 0
    %1112 = vmatprep.subr.bf16.mxu0 0
    %1113 = vmatpush1.bf16.msra.mxu0 0
    %1114 = vmatprep.subr.bf16.mxu0 0
    %1115 = vmatpush1.bf16.msra.mxu0 0
    %1116 = vmatprep.subr.bf16.mxu0 0
    %1117 = vmatpush1.bf16.msra.mxu0 0
    %1118 = vmatprep.subr.bf16.mxu0 0
    %1119 = vmatpush1.bf16.msra.mxu0 0
    %1120 = vmatprep.subr.bf16.mxu0 0
    %1121 = vmatpush1.bf16.msra.mxu0 0
    %1122 = vmatprep.subr.bf16.mxu0 0
    %1123 = vmatpush1.bf16.msra.mxu0 0
    %1124 = vmatprep.subr.bf16.mxu0 0
    %1125 = vmatpush1.bf16.msra.mxu0 0
    %1126 = vmatprep.subr.bf16.mxu0 0
    %1127 = vmatpush1.bf16.msra.mxu0 0
    %1128 = vmatprep.subr.bf16.mxu0 0
    %1129 = vmatpush1.bf16.msra.mxu0 0
    %1130 = vmatprep.subr.bf16.mxu0 0
    %1131 = vmatpush1.bf16.msra.mxu0 0
    %1132 = vmatprep.mubr.bf16.mxu0 0
    %1133 = vmatmul.mubr.bf16.gmra.mrb[0].mxu0 %v1095
    %v1134 = vpop.f32.mrb[0].mxu0
    %v1135 = vadd.f32 0.0, %v1134
    %v1136 = vpop.f32.mrb[0].mxu0
    %v1137 = vpop.f32.mrb[0].mxu0
    %v1138 = vadd.f32 0.0, %v1137
    %v1139 = vpop.f32.mrb[0].mxu0
    %1140 = vmatprep.mubr.bf16.mxu0 0
    %1141 = vmatmul.mubr.bf16.gmra.mrb[0].mxu0 %v1098
    %v1142 = vpop.f32.mrb[0].mxu0
    %v1143 = vadd.f32 0.0, %v1142
    %v1144 = vpop.f32.mrb[0].mxu0
    %v1145 = vpop.f32.mrb[0].mxu0
    %v1146 = vadd.f32 0.0, %v1145
    %v1147 = vpop.f32.mrb[0].mxu0
    %1148 = vdwg.mxu0
    %v1149 = vadd.f32 %v1073, %v1135
    %v1150 = vadd.f32 %v1074, %v1138
    %v1151 = vadd.f32 %v1075, %v1143
    %v1152 = vadd.f32 %v1076, %v1146
    %s1153 = scalar_lea.vmem %s5, 80
    %v1154 = vld [vmem:[%s1153] sm:$0xf]
    %v1155 = vld [vmem:[%s1153 + $0x4] sm:$0xf]
    %v1156 = vld [vmem:[%s1153 + $0x8] sm:$0xf]
    %v1157 = vld [vmem:[%s1153 + $0xc] sm:$0xf]
    %v1162 = vunpack.c.l.b16 %v1154
    %v1163 = vunpack.c.l.b16 %v1155
    %v1164 = vunpack.c.l.b16 %v1156
    %v1165 = vunpack.c.l.b16 %v1157
    %v1166 = vpack.c.b16 %v1163, %v1162
    %v1167 = vpack.c.b16 %v1165, %v1164
    %v1171 = vsel %vm802, %v773, 0
    %v1174 = vsel %vm802, %v774, 0
    %1176 = vmatprep.subr.bf16.mxu0 0
    %1177 = vmatpush1.bf16.msra.mxu0 %v1166
    %1178 = vmatprep.subr.bf16.mxu0 0
    %1179 = vmatpush1.bf16.msra.mxu0 %v1167
    %1180 = vmatprep.subr.bf16.mxu0 0
    %1181 = vmatpush1.bf16.msra.mxu0 0
    %1182 = vmatprep.subr.bf16.mxu0 0
    %1183 = vmatpush1.bf16.msra.mxu0 0
    %1184 = vmatprep.subr.bf16.mxu0 0
    %1185 = vmatpush1.bf16.msra.mxu0 0
    %1186 = vmatprep.subr.bf16.mxu0 0
    %1187 = vmatpush1.bf16.msra.mxu0 0
    %1188 = vmatprep.subr.bf16.mxu0 0
    %1189 = vmatpush1.bf16.msra.mxu0 0
    %1190 = vmatprep.subr.bf16.mxu0 0
    %1191 = vmatpush1.bf16.msra.mxu0 0
    %1192 = vmatprep.subr.bf16.mxu0 0
    %1193 = vmatpush1.bf16.msra.mxu0 0
    %1194 = vmatprep.subr.bf16.mxu0 0
    %1195 = vmatpush1.bf16.msra.mxu0 0
    %1196 = vmatprep.subr.bf16.mxu0 0
    %1197 = vmatpush1.bf16.msra.mxu0 0
    %1198 = vmatprep.subr.bf16.mxu0 0
    %1199 = vmatpush1.bf16.msra.mxu0 0
    %1200 = vmatprep.subr.bf16.mxu0 0
    %1201 = vmatpush1.bf16.msra.mxu0 0
    %1202 = vmatprep.subr.bf16.mxu0 0
    %1203 = vmatpush1.bf16.msra.mxu0 0
    %1204 = vmatprep.subr.bf16.mxu0 0
    %1205 = vmatpush1.bf16.msra.mxu0 0
    %1206 = vmatprep.subr.bf16.mxu0 0
    %1207 = vmatpush1.bf16.msra.mxu0 0
    %1208 = vmatprep.mubr.bf16.mxu0 0
    %1209 = vmatmul.mubr.bf16.gmra.mrb[0].mxu0 %v1171
    %v1210 = vpop.f32.mrb[0].mxu0
    %v1211 = vadd.f32 0.0, %v1210
    %v1212 = vpop.f32.mrb[0].mxu0
    %v1213 = vpop.f32.mrb[0].mxu0
    %v1214 = vadd.f32 0.0, %v1213
    %v1215 = vpop.f32.mrb[0].mxu0
    %1216 = vmatprep.mubr.bf16.mxu0 0
    %1217 = vmatmul.mubr.bf16.gmra.mrb[0].mxu0 %v1174
    %v1218 = vpop.f32.mrb[0].mxu0
    %v1219 = vadd.f32 0.0, %v1218
    %v1220 = vpop.f32.mrb[0].mxu0
    %v1221 = vpop.f32.mrb[0].mxu0
    %v1222 = vadd.f32 0.0, %v1221
    %v1223 = vpop.f32.mrb[0].mxu0
    %1224 = vdwg.mxu0
    %v1225 = vadd.f32 %v1149, %v1211
    %v1226 = vadd.f32 %v1150, %v1214
    %v1227 = vadd.f32 %v1151, %v1219
    %v1228 = vadd.f32 %v1152, %v1222
    %s1229 = scalar_lea.vmem %s5, 96
    %v1230 = vld [vmem:[%s1229] sm:$0xf]
    %v1231 = vld [vmem:[%s1229 + $0x4] sm:$0xf]
    %v1232 = vld [vmem:[%s1229 + $0x8] sm:$0xf]
    %v1233 = vld [vmem:[%s1229 + $0xc] sm:$0xf]
    %v1238 = vunpack.c.l.b16 %v1230
    %v1239 = vunpack.c.l.b16 %v1231
    %v1240 = vunpack.c.l.b16 %v1232
    %v1241 = vunpack.c.l.b16 %v1233
    %v1242 = vpack.c.b16 %v1239, %v1238
    %v1243 = vpack.c.b16 %v1241, %v1240
    %v1247 = vsel %vm802, %v775, 0
    %v1250 = vsel %vm802, %v776, 0
    %1252 = vmatprep.subr.bf16.mxu0 0
    %1253 = vmatpush1.bf16.msra.mxu0 %v1242
    %1254 = vmatprep.subr.bf16.mxu0 0
    %1255 = vmatpush1.bf16.msra.mxu0 %v1243
    %1256 = vmatprep.subr.bf16.mxu0 0
    %1257 = vmatpush1.bf16.msra.mxu0 0
    %1258 = vmatprep.subr.bf16.mxu0 0
    %1259 = vmatpush1.bf16.msra.mxu0 0
    %1260 = vmatprep.subr.bf16.mxu0 0
    %1261 = vmatpush1.bf16.msra.mxu0 0
    %1262 = vmatprep.subr.bf16.mxu0 0
    %1263 = vmatpush1.bf16.msra.mxu0 0
    %1264 = vmatprep.subr.bf16.mxu0 0
    %1265 = vmatpush1.bf16.msra.mxu0 0
    %1266 = vmatprep.subr.bf16.mxu0 0
    %1267 = vmatpush1.bf16.msra.mxu0 0
    %1268 = vmatprep.subr.bf16.mxu0 0
    %1269 = vmatpush1.bf16.msra.mxu0 0
    %1270 = vmatprep.subr.bf16.mxu0 0
    %1271 = vmatpush1.bf16.msra.mxu0 0
    %1272 = vmatprep.subr.bf16.mxu0 0
    %1273 = vmatpush1.bf16.msra.mxu0 0
    %1274 = vmatprep.subr.bf16.mxu0 0
    %1275 = vmatpush1.bf16.msra.mxu0 0
    %1276 = vmatprep.subr.bf16.mxu0 0
    %1277 = vmatpush1.bf16.msra.mxu0 0
    %1278 = vmatprep.subr.bf16.mxu0 0
    %1279 = vmatpush1.bf16.msra.mxu0 0
    %1280 = vmatprep.subr.bf16.mxu0 0
    %1281 = vmatpush1.bf16.msra.mxu0 0
    %1282 = vmatprep.subr.bf16.mxu0 0
    %1283 = vmatpush1.bf16.msra.mxu0 0
    %1284 = vmatprep.mubr.bf16.mxu0 0
    %1285 = vmatmul.mubr.bf16.gmra.mrb[0].mxu0 %v1247
    %v1286 = vpop.f32.mrb[0].mxu0
    %v1287 = vadd.f32 0.0, %v1286
    %v1288 = vpop.f32.mrb[0].mxu0
    %v1289 = vpop.f32.mrb[0].mxu0
    %v1290 = vadd.f32 0.0, %v1289
    %v1291 = vpop.f32.mrb[0].mxu0
    %1292 = vmatprep.mubr.bf16.mxu0 0
    %1293 = vmatmul.mubr.bf16.gmra.mrb[0].mxu0 %v1250
    %v1294 = vpop.f32.mrb[0].mxu0
    %v1295 = vadd.f32 0.0, %v1294
    %v1296 = vpop.f32.mrb[0].mxu0
    %v1297 = vpop.f32.mrb[0].mxu0
    %v1298 = vadd.f32 0.0, %v1297
    %v1299 = vpop.f32.mrb[0].mxu0
    %1300 = vdwg.mxu0
    %v1301 = vadd.f32 %v1225, %v1287
    %v1302 = vadd.f32 %v1226, %v1290
    %v1303 = vadd.f32 %v1227, %v1295
    %v1304 = vadd.f32 %v1228, %v1298
    %s1305 = scalar_lea.vmem %s5, 112
    %v1306 = vld [vmem:[%s1305] sm:$0xf]
    %v1307 = vld [vmem:[%s1305 + $0x4] sm:$0xf]
    %v1308 = vld [vmem:[%s1305 + $0x8] sm:$0xf]
    %v1309 = vld [vmem:[%s1305 + $0xc] sm:$0xf]
    %v1314 = vunpack.c.l.b16 %v1306
    %v1315 = vunpack.c.l.b16 %v1307
    %v1316 = vunpack.c.l.b16 %v1308
    %v1317 = vunpack.c.l.b16 %v1309
    %v1318 = vpack.c.b16 %v1315, %v1314
    %v1319 = vpack.c.b16 %v1317, %v1316
    %v1323 = vsel %vm802, %v777, 0
    %v1326 = vsel %vm802, %v778, 0
    %1328 = vmatprep.subr.bf16.mxu0 0
    %1329 = vmatpush1.bf16.msra.mxu0 %v1318
    %1330 = vmatprep.subr.bf16.mxu0 0
    %1331 = vmatpush1.bf16.msra.mxu0 %v1319
    %1332 = vmatprep.subr.bf16.mxu0 0
    %1333 = vmatpush1.bf16.msra.mxu0 0
    %1334 = vmatprep.subr.bf16.mxu0 0
    %1335 = vmatpush1.bf16.msra.mxu0 0
    %1336 = vmatprep.subr.bf16.mxu0 0
    %1337 = vmatpush1.bf16.msra.mxu0 0
    %1338 = vmatprep.subr.bf16.mxu0 0
    %1339 = vmatpush1.bf16.msra.mxu0 0
    %1340 = vmatprep.subr.bf16.mxu0 0
    %1341 = vmatpush1.bf16.msra.mxu0 0
    %1342 = vmatprep.subr.bf16.mxu0 0
    %1343 = vmatpush1.bf16.msra.mxu0 0
    %1344 = vmatprep.subr.bf16.mxu0 0
    %1345 = vmatpush1.bf16.msra.mxu0 0
    %1346 = vmatprep.subr.bf16.mxu0 0
    %1347 = vmatpush1.bf16.msra.mxu0 0
    %1348 = vmatprep.subr.bf16.mxu0 0
    %1349 = vmatpush1.bf16.msra.mxu0 0
    %1350 = vmatprep.subr.bf16.mxu0 0
    %1351 = vmatpush1.bf16.msra.mxu0 0
    %1352 = vmatprep.subr.bf16.mxu0 0
    %1353 = vmatpush1.bf16.msra.mxu0 0
    %1354 = vmatprep.subr.bf16.mxu0 0
    %1355 = vmatpush1.bf16.msra.mxu0 0
    %1356 = vmatprep.subr.bf16.mxu0 0
    %1357 = vmatpush1.bf16.msra.mxu0 0
    %1358 = vmatprep.subr.bf16.mxu0 0
    %1359 = vmatpush1.bf16.msra.mxu0 0
    %1360 = vmatprep.mubr.bf16.mxu0 0
    %1361 = vmatmul.mubr.bf16.gmra.mrb[0].mxu0 %v1323
    %v1362 = vpop.f32.mrb[0].mxu0
    %v1363 = vadd.f32 0.0, %v1362
    %v1364 = vpop.f32.mrb[0].mxu0
    %v1365 = vpop.f32.mrb[0].mxu0
    %v1366 = vadd.f32 0.0, %v1365
    %v1367 = vpop.f32.mrb[0].mxu0
    %1368 = vmatprep.mubr.bf16.mxu0 0
    %1369 = vmatmul.mubr.bf16.gmra.mrb[0].mxu0 %v1326
    %v1370 = vpop.f32.mrb[0].mxu0
    %v1371 = vadd.f32 0.0, %v1370
    %v1372 = vpop.f32.mrb[0].mxu0
    %v1373 = vpop.f32.mrb[0].mxu0
    %v1374 = vadd.f32 0.0, %v1373
    %v1375 = vpop.f32.mrb[0].mxu0
    %1376 = vdwg.mxu0
    %v1377 = vadd.f32 %v1301, %v1363
    %v1378 = vadd.f32 %v1302, %v1366
    %v1379 = vadd.f32 %v1303, %v1371
    %v1380 = vadd.f32 %v1304, %v1374
    %s1381 = scalar_lea.vmem %s5, 128
    %v1382 = vld [vmem:[%s1381] sm:$0xf]
    %v1383 = vld [vmem:[%s1381 + $0x4] sm:$0xf]
    %v1384 = vld [vmem:[%s1381 + $0x8] sm:$0xf]
    %v1385 = vld [vmem:[%s1381 + $0xc] sm:$0xf]
    %v1390 = vunpack.c.l.b16 %v1382
    %v1391 = vunpack.c.l.b16 %v1383
    %v1392 = vunpack.c.l.b16 %v1384
    %v1393 = vunpack.c.l.b16 %v1385
    %v1394 = vpack.c.b16 %v1391, %v1390
    %v1395 = vpack.c.b16 %v1393, %v1392
    %v1399 = vsel %vm802, %v779, 0
    %v1402 = vsel %vm802, %v780, 0
    %1404 = vmatprep.subr.bf16.mxu0 0
    %1405 = vmatpush1.bf16.msra.mxu0 %v1394
    %1406 = vmatprep.subr.bf16.mxu0 0
    %1407 = vmatpush1.bf16.msra.mxu0 %v1395
    %1408 = vmatprep.subr.bf16.mxu0 0
    %1409 = vmatpush1.bf16.msra.mxu0 0
    %1410 = vmatprep.subr.bf16.mxu0 0
    %1411 = vmatpush1.bf16.msra.mxu0 0
    %1412 = vmatprep.subr.bf16.mxu0 0
    %1413 = vmatpush1.bf16.msra.mxu0 0
    %1414 = vmatprep.subr.bf16.mxu0 0
    %1415 = vmatpush1.bf16.msra.mxu0 0
    %1416 = vmatprep.subr.bf16.mxu0 0
    %1417 = vmatpush1.bf16.msra.mxu0 0
    %1418 = vmatprep.subr.bf16.mxu0 0
    %1419 = vmatpush1.bf16.msra.mxu0 0
    %1420 = vmatprep.subr.bf16.mxu0 0
    %1421 = vmatpush1.bf16.msra.mxu0 0
    %1422 = vmatprep.subr.bf16.mxu0 0
    %1423 = vmatpush1.bf16.msra.mxu0 0
    %1424 = vmatprep.subr.bf16.mxu0 0
    %1425 = vmatpush1.bf16.msra.mxu0 0
    %1426 = vmatprep.subr.bf16.mxu0 0
    %1427 = vmatpush1.bf16.msra.mxu0 0
    %1428 = vmatprep.subr.bf16.mxu0 0
    %1429 = vmatpush1.bf16.msra.mxu0 0
    %1430 = vmatprep.subr.bf16.mxu0 0
    %1431 = vmatpush1.bf16.msra.mxu0 0
    %1432 = vmatprep.subr.bf16.mxu0 0
    %1433 = vmatpush1.bf16.msra.mxu0 0
    %1434 = vmatprep.subr.bf16.mxu0 0
    %1435 = vmatpush1.bf16.msra.mxu0 0
    %1436 = vmatprep.mubr.bf16.mxu0 0
    %1437 = vmatmul.mubr.bf16.gmra.mrb[0].mxu0 %v1399
    %v1438 = vpop.f32.mrb[0].mxu0
    %v1439 = vadd.f32 0.0, %v1438
    %v1440 = vpop.f32.mrb[0].mxu0
    %v1441 = vpop.f32.mrb[0].mxu0
    %v1442 = vadd.f32 0.0, %v1441
    %v1443 = vpop.f32.mrb[0].mxu0
    %1444 = vmatprep.mubr.bf16.mxu0 0
    %1445 = vmatmul.mubr.bf16.gmra.mrb[0].mxu0 %v1402
    %v1446 = vpop.f32.mrb[0].mxu0
    %v1447 = vadd.f32 0.0, %v1446
    %v1448 = vpop.f32.mrb[0].mxu0
    %v1449 = vpop.f32.mrb[0].mxu0
    %v1450 = vadd.f32 0.0, %v1449
    %v1451 = vpop.f32.mrb[0].mxu0
    %1452 = vdwg.mxu0
    %v1453 = vadd.f32 %v1377, %v1439
    %v1454 = vadd.f32 %v1378, %v1442
    %v1455 = vadd.f32 %v1379, %v1447
    %v1456 = vadd.f32 %v1380, %v1450
    %v1457 = vld [vmem:[#allocation4] sm:$0x1]
    %v1459 = vlaneseq
    %v1460 = vshrl.u32 %v1459, 7
    %v1461 = vsub.s32 0, %v1460
    %v1462 = vrot.slane %v1457, %v1461
    %v1464 = vadd.f32 %v1453, %v1462
    %v1465 = vadd.f32 %v1454, %v1462
    %v1466 = vadd.f32 %v1455, %v1462
    %v1467 = vadd.f32 %v1456, %v1462
    %v1468 = vmax.f32 %v1464, 0.0
    %v1469 = vmax.f32 %v1465, 0.0
    %v1470 = vmax.f32 %v1466, 0.0
    %v1471 = vmax.f32 %v1467, 0.0
    %v1472 = vpack.c.bf16 %v1469, %v1468
    %v1473 = vpack.c.bf16 %v1471, %v1470
    %v1474 = vld [vmem:[%s7] sm:$0xf]
    %v1475 = vld [vmem:[%s7 + $0x4] sm:$0xf]
    %v1476 = vld [vmem:[%s7 + $0x8] sm:$0xf]
    %v1477 = vld [vmem:[%s7 + $0xc] sm:$0xf]
    %v1478 = vld [vmem:[%s7 + $0x10] sm:$0xf]
    %v1479 = vld [vmem:[%s7 + $0x14] sm:$0xf]
    %v1480 = vld [vmem:[%s7 + $0x18] sm:$0xf]
    %v1481 = vld [vmem:[%s7 + $0x1c] sm:$0xf]
    %v1482 = vld [vmem:[%s7 + $0x20] sm:$0xf]
    %v1492 = vunpack.c.l.b16 %v1474
    %v1493 = vunpack.c.l.b16 %v1475
    %v1494 = vunpack.c.l.b16 %v1476
    %v1495 = vunpack.c.l.b16 %v1477
    %v1496 = vunpack.c.l.b16 %v1478
    %v1497 = vunpack.c.l.b16 %v1479
    %v1498 = vunpack.c.l.b16 %v1480
    %v1499 = vunpack.c.l.b16 %v1481
    %v1500 = vunpack.c.l.b16 %v1482
    %v1501 = vpack.c.b16 %v1493, %v1492
    %v1502 = vpack.c.b16 %v1495, %v1494
    %v1503 = vpack.c.b16 %v1497, %v1496
    %v1504 = vpack.c.b16 %v1499, %v1498
    %v1505 = vpack.c.b16 %v1500, %v1500
    %v1507 = vsel %vm802, %v1501, 0
    %v1510 = vsel %vm802, %v1502, 0
    %v1513 = vsel %vm802, %v1503, 0
    %v1516 = vsel %vm802, %v1504, 0
    %v1519 = vsel %vm802, %v1505, 0
    %1521 = vmatprep.subr.bf16.mxu0 0
    %1522 = vmatpush1.bf16.msra.mxu0 %v1472
    %1523 = vmatprep.subr.bf16.mxu0 0
    %1524 = vmatpush1.bf16.msra.mxu0 %v1473
    %1525 = vmatprep.subr.bf16.mxu0 0
    %1526 = vmatpush1.bf16.msra.mxu0 0
    %1527 = vmatprep.subr.bf16.mxu0 0
    %1528 = vmatpush1.bf16.msra.mxu0 0
    %1529 = vmatprep.subr.bf16.mxu0 0
    %1530 = vmatpush1.bf16.msra.mxu0 0
    %1531 = vmatprep.subr.bf16.mxu0 0
    %1532 = vmatpush1.bf16.msra.mxu0 0
    %1533 = vmatprep.subr.bf16.mxu0 0
    %1534 = vmatpush1.bf16.msra.mxu0 0
    %1535 = vmatprep.subr.bf16.mxu0 0
    %1536 = vmatpush1.bf16.msra.mxu0 0
    %1537 = vmatprep.subr.bf16.mxu0 0
    %1538 = vmatpush1.bf16.msra.mxu0 0
    %1539 = vmatprep.subr.bf16.mxu0 0
    %1540 = vmatpush1.bf16.msra.mxu0 0
    %1541 = vmatprep.subr.bf16.mxu0 0
    %1542 = vmatpush1.bf16.msra.mxu0 0
    %1543 = vmatprep.subr.bf16.mxu0 0
    %1544 = vmatpush1.bf16.msra.mxu0 0
    %1545 = vmatprep.subr.bf16.mxu0 0
    %1546 = vmatpush1.bf16.msra.mxu0 0
    %1547 = vmatprep.subr.bf16.mxu0 0
    %1548 = vmatpush1.bf16.msra.mxu0 0
    %1549 = vmatprep.subr.bf16.mxu0 0
    %1550 = vmatpush1.bf16.msra.mxu0 0
    %1551 = vmatprep.subr.bf16.mxu0 0
    %1552 = vmatpush1.bf16.msra.mxu0 0
    %1553 = vmatprep.mubr.bf16.mxu0 0
    %1554 = vmatmul.mubr.bf16.gmra.mrb[0].mxu0 %v1507
    %v1555 = vpop.f32.mrb[0].mxu0
    %v1556 = vadd.f32 0.0, %v1555
    %v1557 = vpop.f32.mrb[0].mxu0
    %v1558 = vpop.f32.mrb[0].mxu0
    %v1559 = vadd.f32 0.0, %v1558
    %v1560 = vpop.f32.mrb[0].mxu0
    %1561 = vmatprep.mubr.bf16.mxu0 0
    %1562 = vmatmul.mubr.bf16.gmra.mrb[0].mxu0 %v1510
    %v1563 = vpop.f32.mrb[0].mxu0
    %v1564 = vadd.f32 0.0, %v1563
    %v1565 = vpop.f32.mrb[0].mxu0
    %v1566 = vpop.f32.mrb[0].mxu0
    %v1567 = vadd.f32 0.0, %v1566
    %v1568 = vpop.f32.mrb[0].mxu0
    %1569 = vmatprep.mubr.bf16.mxu0 0
    %1570 = vmatmul.mubr.bf16.gmra.mrb[0].mxu0 %v1513
    %v1571 = vpop.f32.mrb[0].mxu0
    %v1572 = vadd.f32 0.0, %v1571
    %v1573 = vpop.f32.mrb[0].mxu0
    %v1574 = vpop.f32.mrb[0].mxu0
    %v1575 = vadd.f32 0.0, %v1574
    %v1576 = vpop.f32.mrb[0].mxu0
    %1577 = vmatprep.mubr.bf16.mxu0 0
    %1578 = vmatmul.mubr.bf16.gmra.mrb[0].mxu0 %v1516
    %v1579 = vpop.f32.mrb[0].mxu0
    %v1580 = vadd.f32 0.0, %v1579
    %v1581 = vpop.f32.mrb[0].mxu0
    %v1582 = vpop.f32.mrb[0].mxu0
    %v1583 = vadd.f32 0.0, %v1582
    %v1584 = vpop.f32.mrb[0].mxu0
    %1585 = vmatprep.mubr.bf16.mxu0 0
    %1586 = vmatmul.mubr.bf16.gmra.mrb[0].mxu0 %v1519
    %v1587 = vpop.f32.mrb[0].mxu0
    %v1588 = vadd.f32 0.0, %v1587
    %v1589 = vpop.f32.mrb[0].mxu0
    %v1590 = vpop.f32.mrb[0].mxu0
    %v1591 = vpop.f32.mrb[0].mxu0
    %1592 = vdwg.mxu0
    %v1593 = vpack.c.bf16 %v1559, %v1556
    %v1594 = vpack.c.bf16 %v1567, %v1564
    %v1595 = vpack.c.bf16 %v1575, %v1572
    %v1596 = vpack.c.bf16 %v1583, %v1580
    %v1597 = vpack.c.bf16 %v1588, %v1588
    %v1598 = vld [vmem:[%s8] sm:$0xf]
    %v1599 = vld [vmem:[%s8 + $0x4] sm:$0xf]
    %v1600 = vld [vmem:[%s8 + $0x8] sm:$0xf]
    %v1601 = vld [vmem:[%s8 + $0xc] sm:$0xf]
    %v1602 = vld [vmem:[%s8 + $0x10] sm:$0xf]
    %v1603 = vld [vmem:[%s8 + $0x14] sm:$0xf]
    %v1604 = vld [vmem:[%s8 + $0x18] sm:$0xf]
    %v1605 = vld [vmem:[%s8 + $0x1c] sm:$0xf]
    %s1606 = scalar_lea.vmem %s8, 32
    %v1607 = vld [vmem:[%s1606] sm:$0xf]
    %v1608 = vld [vmem:[%s1606 + $0x4] sm:$0xf]
    %v1609 = vld [vmem:[%s1606 + $0x8] sm:$0xf]
    %v1610 = vld [vmem:[%s1606 + $0xc] sm:$0xf]
    %v1611 = vld [vmem:[%s1606 + $0x10] sm:$0xf]
    %v1612 = vld [vmem:[%s1606 + $0x14] sm:$0xf]
    %v1613 = vld [vmem:[%s1606 + $0x18] sm:$0xf]
    %v1614 = vld [vmem:[%s1606 + $0x1c] sm:$0xf]
    %v1616 = vrot.slane %v1593, 4
    %v1625 = vunpack.c.l.b16 %v1607
    %v1626 = vunpack.c.l.b16 %v1608
    %v1627 = vunpack.c.l.b16 %v1609
    %v1628 = vunpack.c.l.b16 %v1610
    %v1629 = vunpack.c.l.b16 %v1611
    %v1630 = vunpack.c.l.b16 %v1612
    %v1631 = vunpack.c.l.b16 %v1613
    %v1632 = vunpack.c.l.b16 %v1614
    %v1633 = vpack.c.b16 %v1626, %v1625
    %v1634 = vpack.c.b16 %v1628, %v1627
    %v1635 = vpack.c.b16 %v1630, %v1629
    %v1636 = vpack.c.b16 %v1632, %v1631
    %vm1641 = vcmask 523264
    %v1643 = vsel %vm1641, %v1616, 0
    %1645 = vmatprep.subr.bf16.mxu0 0
    %1646 = vmatpush1.bf16.msra.mxu0 %v1633
    %1647 = vmatprep.subr.bf16.mxu0 0
    %1648 = vmatpush1.bf16.msra.mxu0 %v1634
    %1649 = vmatprep.subr.bf16.mxu0 0
    %1650 = vmatpush1.bf16.msra.mxu0 %v1635
    %1651 = vmatprep.subr.bf16.mxu0 0
    %1652 = vmatpush1.bf16.msra.mxu0 %v1636
    %1653 = vmatprep.subr.bf16.mxu0 0
    %1654 = vmatpush1.bf16.msra.mxu0 0
    %1655 = vmatprep.subr.bf16.mxu0 0
    %1656 = vmatpush1.bf16.msra.mxu0 0
    %1657 = vmatprep.subr.bf16.mxu0 0
    %1658 = vmatpush1.bf16.msra.mxu0 0
    %1659 = vmatprep.subr.bf16.mxu0 0
    %1660 = vmatpush1.bf16.msra.mxu0 0
    %1661 = vmatprep.subr.bf16.mxu0 0
    %1662 = vmatpush1.bf16.msra.mxu0 0
    %1663 = vmatprep.subr.bf16.mxu0 0
    %1664 = vmatpush1.bf16.msra.mxu0 0
    %1665 = vmatprep.subr.bf16.mxu0 0
    %1666 = vmatpush1.bf16.msra.mxu0 0
    %1667 = vmatprep.subr.bf16.mxu0 0
    %1668 = vmatpush1.bf16.msra.mxu0 0
    %1669 = vmatprep.subr.bf16.mxu0 0
    %1670 = vmatpush1.bf16.msra.mxu0 0
    %1671 = vmatprep.subr.bf16.mxu0 0
    %1672 = vmatpush1.bf16.msra.mxu0 0
    %1673 = vmatprep.subr.bf16.mxu0 0
    %1674 = vmatpush1.bf16.msra.mxu0 0
    %1675 = vmatprep.subr.bf16.mxu0 0
    %1676 = vmatpush1.bf16.msra.mxu0 0
    %1677 = vmatprep.mubr.bf16.mxu0 0
    %1678 = vmatmul.mubr.bf16.gmra.mrb[0].mxu0 %v1643
    %v1679 = vpop.f32.mrb[0].mxu0
    %v1680 = vadd.f32 0.0, %v1679
    %v1681 = vpop.f32.mrb[0].mxu0
    %v1682 = vpop.f32.mrb[0].mxu0
    %v1683 = vpop.f32.mrb[0].mxu0
    %1684 = vdwg.mxu0
    %v1693 = vunpack.c.l.b16 %v1598
    %v1694 = vunpack.c.l.b16 %v1599
    %v1695 = vunpack.c.l.b16 %v1600
    %v1696 = vunpack.c.l.b16 %v1601
    %v1697 = vunpack.c.l.b16 %v1602
    %v1698 = vunpack.c.l.b16 %v1603
    %v1699 = vunpack.c.l.b16 %v1604
    %v1700 = vunpack.c.l.b16 %v1605
    %v1701 = vpack.c.b16 %v1694, %v1693
    %v1702 = vpack.c.b16 %v1696, %v1695
    %v1703 = vpack.c.b16 %v1698, %v1697
    %v1704 = vpack.c.b16 %v1700, %v1699
    %v1710 = vsel %vm1641, %v1593, 0
    %1712 = vmatprep.subr.bf16.mxu0 0
    %1713 = vmatpush1.bf16.msra.mxu0 %v1701
    %1714 = vmatprep.subr.bf16.mxu0 0
    %1715 = vmatpush1.bf16.msra.mxu0 %v1702
    %1716 = vmatprep.subr.bf16.mxu0 0
    %1717 = vmatpush1.bf16.msra.mxu0 %v1703
    %1718 = vmatprep.subr.bf16.mxu0 0
    %1719 = vmatpush1.bf16.msra.mxu0 %v1704
    %1720 = vmatprep.subr.bf16.mxu0 0
    %1721 = vmatpush1.bf16.msra.mxu0 0
    %1722 = vmatprep.subr.bf16.mxu0 0
    %1723 = vmatpush1.bf16.msra.mxu0 0
    %1724 = vmatprep.subr.bf16.mxu0 0
    %1725 = vmatpush1.bf16.msra.mxu0 0
    %1726 = vmatprep.subr.bf16.mxu0 0
    %1727 = vmatpush1.bf16.msra.mxu0 0
    %1728 = vmatprep.subr.bf16.mxu0 0
    %1729 = vmatpush1.bf16.msra.mxu0 0
    %1730 = vmatprep.subr.bf16.mxu0 0
    %1731 = vmatpush1.bf16.msra.mxu0 0
    %1732 = vmatprep.subr.bf16.mxu0 0
    %1733 = vmatpush1.bf16.msra.mxu0 0
    %1734 = vmatprep.subr.bf16.mxu0 0
    %1735 = vmatpush1.bf16.msra.mxu0 0
    %1736 = vmatprep.subr.bf16.mxu0 0
    %1737 = vmatpush1.bf16.msra.mxu0 0
    %1738 = vmatprep.subr.bf16.mxu0 0
    %1739 = vmatpush1.bf16.msra.mxu0 0
    %1740 = vmatprep.subr.bf16.mxu0 0
    %1741 = vmatpush1.bf16.msra.mxu0 0
    %1742 = vmatprep.subr.bf16.mxu0 0
    %1743 = vmatpush1.bf16.msra.mxu0 0
    %1744 = vmatprep.mubr.bf16.mxu0 0
    %1745 = vmatmul.mubr.bf16.gmra.mrb[0].mxu0 %v1710
    %v1746 = vpop.f32.mrb[0].mxu0
    %v1747 = vadd.f32 %v1680, %v1746
    %v1748 = vpop.f32.mrb[0].mxu0
    %v1749 = vpop.f32.mrb[0].mxu0
    %v1750 = vpop.f32.mrb[0].mxu0
    %1751 = vdwg.mxu0
    %s1752 = scalar_lea.vmem %s8, 64
    %v1753 = vld [vmem:[%s1752] sm:$0xf]
    %v1754 = vld [vmem:[%s1752 + $0x4] sm:$0xf]
    %v1755 = vld [vmem:[%s1752 + $0x8] sm:$0xf]
    %v1756 = vld [vmem:[%s1752 + $0xc] sm:$0xf]
    %v1757 = vld [vmem:[%s1752 + $0x10] sm:$0xf]
    %v1758 = vld [vmem:[%s1752 + $0x14] sm:$0xf]
    %v1759 = vld [vmem:[%s1752 + $0x18] sm:$0xf]
    %v1760 = vld [vmem:[%s1752 + $0x1c] sm:$0xf]
    %v1769 = vunpack.c.l.b16 %v1753
    %v1770 = vunpack.c.l.b16 %v1754
    %v1771 = vunpack.c.l.b16 %v1755
    %v1772 = vunpack.c.l.b16 %v1756
    %v1773 = vunpack.c.l.b16 %v1757
    %v1774 = vunpack.c.l.b16 %v1758
    %v1775 = vunpack.c.l.b16 %v1759
    %v1776 = vunpack.c.l.b16 %v1760
    %v1777 = vpack.c.b16 %v1770, %v1769
    %v1778 = vpack.c.b16 %v1772, %v1771
    %v1779 = vpack.c.b16 %v1774, %v1773
    %v1780 = vpack.c.b16 %v1776, %v1775
    %v1786 = vsel %vm1641, %v1594, 0
    %1788 = vmatprep.subr.bf16.mxu0 0
    %1789 = vmatpush1.bf16.msra.mxu0 %v1777
    %1790 = vmatprep.subr.bf16.mxu0 0
    %1791 = vmatpush1.bf16.msra.mxu0 %v1778
    %1792 = vmatprep.subr.bf16.mxu0 0
    %1793 = vmatpush1.bf16.msra.mxu0 %v1779
    %1794 = vmatprep.subr.bf16.mxu0 0
    %1795 = vmatpush1.bf16.msra.mxu0 %v1780
    %1796 = vmatprep.subr.bf16.mxu0 0
    %1797 = vmatpush1.bf16.msra.mxu0 0
    %1798 = vmatprep.subr.bf16.mxu0 0
    %1799 = vmatpush1.bf16.msra.mxu0 0
    %1800 = vmatprep.subr.bf16.mxu0 0
    %1801 = vmatpush1.bf16.msra.mxu0 0
    %1802 = vmatprep.subr.bf16.mxu0 0
    %1803 = vmatpush1.bf16.msra.mxu0 0
    %1804 = vmatprep.subr.bf16.mxu0 0
    %1805 = vmatpush1.bf16.msra.mxu0 0
    %1806 = vmatprep.subr.bf16.mxu0 0
    %1807 = vmatpush1.bf16.msra.mxu0 0
    %1808 = vmatprep.subr.bf16.mxu0 0
    %1809 = vmatpush1.bf16.msra.mxu0 0
    %1810 = vmatprep.subr.bf16.mxu0 0
    %1811 = vmatpush1.bf16.msra.mxu0 0
    %1812 = vmatprep.subr.bf16.mxu0 0
    %1813 = vmatpush1.bf16.msra.mxu0 0
    %1814 = vmatprep.subr.bf16.mxu0 0
    %1815 = vmatpush1.bf16.msra.mxu0 0
    %1816 = vmatprep.subr.bf16.mxu0 0
    %1817 = vmatpush1.bf16.msra.mxu0 0
    %1818 = vmatprep.subr.bf16.mxu0 0
    %1819 = vmatpush1.bf16.msra.mxu0 0
    %1820 = vmatprep.mubr.bf16.mxu0 0
    %1821 = vmatmul.mubr.bf16.gmra.mrb[0].mxu0 %v1786
    %v1822 = vpop.f32.mrb[0].mxu0
    %v1823 = vadd.f32 0.0, %v1822
    %v1824 = vpop.f32.mrb[0].mxu0
    %v1825 = vpop.f32.mrb[0].mxu0
    %v1826 = vpop.f32.mrb[0].mxu0
    %1827 = vdwg.mxu0
    %v1828 = vadd.f32 %v1747, %v1823
    %s1829 = scalar_lea.vmem %s8, 96
    %v1830 = vld [vmem:[%s1829] sm:$0xf]
    %v1831 = vld [vmem:[%s1829 + $0x4] sm:$0xf]
    %v1832 = vld [vmem:[%s1829 + $0x8] sm:$0xf]
    %v1833 = vld [vmem:[%s1829 + $0xc] sm:$0xf]
    %v1834 = vld [vmem:[%s1829 + $0x10] sm:$0xf]
    %v1835 = vld [vmem:[%s1829 + $0x14] sm:$0xf]
    %v1836 = vld [vmem:[%s1829 + $0x18] sm:$0xf]
    %v1837 = vld [vmem:[%s1829 + $0x1c] sm:$0xf]
    %v1839 = vrot.slane %v1594, 4
    %v1848 = vunpack.c.l.b16 %v1830
    %v1849 = vunpack.c.l.b16 %v1831
    %v1850 = vunpack.c.l.b16 %v1832
    %v1851 = vunpack.c.l.b16 %v1833
    %v1852 = vunpack.c.l.b16 %v1834
    %v1853 = vunpack.c.l.b16 %v1835
    %v1854 = vunpack.c.l.b16 %v1836
    %v1855 = vunpack.c.l.b16 %v1837
    %v1856 = vpack.c.b16 %v1849, %v1848
    %v1857 = vpack.c.b16 %v1851, %v1850
    %v1858 = vpack.c.b16 %v1853, %v1852
    %v1859 = vpack.c.b16 %v1855, %v1854
    %v1865 = vsel %vm1641, %v1839, 0
    %1867 = vmatprep.subr.bf16.mxu0 0
    %1868 = vmatpush1.bf16.msra.mxu0 %v1856
    %1869 = vmatprep.subr.bf16.mxu0 0
    %1870 = vmatpush1.bf16.msra.mxu0 %v1857
    %1871 = vmatprep.subr.bf16.mxu0 0
    %1872 = vmatpush1.bf16.msra.mxu0 %v1858
    %1873 = vmatprep.subr.bf16.mxu0 0
    %1874 = vmatpush1.bf16.msra.mxu0 %v1859
    %1875 = vmatprep.subr.bf16.mxu0 0
    %1876 = vmatpush1.bf16.msra.mxu0 0
    %1877 = vmatprep.subr.bf16.mxu0 0
    %1878 = vmatpush1.bf16.msra.mxu0 0
    %1879 = vmatprep.subr.bf16.mxu0 0
    %1880 = vmatpush1.bf16.msra.mxu0 0
    %1881 = vmatprep.subr.bf16.mxu0 0
    %1882 = vmatpush1.bf16.msra.mxu0 0
    %1883 = vmatprep.subr.bf16.mxu0 0
    %1884 = vmatpush1.bf16.msra.mxu0 0
    %1885 = vmatprep.subr.bf16.mxu0 0
    %1886 = vmatpush1.bf16.msra.mxu0 0
    %1887 = vmatprep.subr.bf16.mxu0 0
    %1888 = vmatpush1.bf16.msra.mxu0 0
    %1889 = vmatprep.subr.bf16.mxu0 0
    %1890 = vmatpush1.bf16.msra.mxu0 0
    %1891 = vmatprep.subr.bf16.mxu0 0
    %1892 = vmatpush1.bf16.msra.mxu0 0
    %1893 = vmatprep.subr.bf16.mxu0 0
    %1894 = vmatpush1.bf16.msra.mxu0 0
    %1895 = vmatprep.subr.bf16.mxu0 0
    %1896 = vmatpush1.bf16.msra.mxu0 0
    %1897 = vmatprep.subr.bf16.mxu0 0
    %1898 = vmatpush1.bf16.msra.mxu0 0
    %1899 = vmatprep.mubr.bf16.mxu0 0
    %1900 = vmatmul.mubr.bf16.gmra.mrb[0].mxu0 %v1865
    %v1901 = vpop.f32.mrb[0].mxu0
    %v1902 = vadd.f32 0.0, %v1901
    %v1903 = vpop.f32.mrb[0].mxu0
    %v1904 = vpop.f32.mrb[0].mxu0
    %v1905 = vpop.f32.mrb[0].mxu0
    %1906 = vdwg.mxu0
    %v1907 = vadd.f32 %v1828, %v1902
    %s1908 = scalar_lea.vmem %s8, 128
    %v1909 = vld [vmem:[%s1908] sm:$0xf]
    %v1910 = vld [vmem:[%s1908 + $0x4] sm:$0xf]
    %v1911 = vld [vmem:[%s1908 + $0x8] sm:$0xf]
    %v1912 = vld [vmem:[%s1908 + $0xc] sm:$0xf]
    %v1913 = vld [vmem:[%s1908 + $0x10] sm:$0xf]
    %v1914 = vld [vmem:[%s1908 + $0x14] sm:$0xf]
    %v1915 = vld [vmem:[%s1908 + $0x18] sm:$0xf]
    %v1916 = vld [vmem:[%s1908 + $0x1c] sm:$0xf]
    %v1925 = vunpack.c.l.b16 %v1909
    %v1926 = vunpack.c.l.b16 %v1910
    %v1927 = vunpack.c.l.b16 %v1911
    %v1928 = vunpack.c.l.b16 %v1912
    %v1929 = vunpack.c.l.b16 %v1913
    %v1930 = vunpack.c.l.b16 %v1914
    %v1931 = vunpack.c.l.b16 %v1915
    %v1932 = vunpack.c.l.b16 %v1916
    %v1933 = vpack.c.b16 %v1926, %v1925
    %v1934 = vpack.c.b16 %v1928, %v1927
    %v1935 = vpack.c.b16 %v1930, %v1929
    %v1936 = vpack.c.b16 %v1932, %v1931
    %v1942 = vsel %vm1641, %v1595, 0
    %1944 = vmatprep.subr.bf16.mxu0 0
    %1945 = vmatpush1.bf16.msra.mxu0 %v1933
    %1946 = vmatprep.subr.bf16.mxu0 0
    %1947 = vmatpush1.bf16.msra.mxu0 %v1934
    %1948 = vmatprep.subr.bf16.mxu0 0
    %1949 = vmatpush1.bf16.msra.mxu0 %v1935
    %1950 = vmatprep.subr.bf16.mxu0 0
    %1951 = vmatpush1.bf16.msra.mxu0 %v1936
    %1952 = vmatprep.subr.bf16.mxu0 0
    %1953 = vmatpush1.bf16.msra.mxu0 0
    %1954 = vmatprep.subr.bf16.mxu0 0
    %1955 = vmatpush1.bf16.msra.mxu0 0
    %1956 = vmatprep.subr.bf16.mxu0 0
    %1957 = vmatpush1.bf16.msra.mxu0 0
    %1958 = vmatprep.subr.bf16.mxu0 0
    %1959 = vmatpush1.bf16.msra.mxu0 0
    %1960 = vmatprep.subr.bf16.mxu0 0
    %1961 = vmatpush1.bf16.msra.mxu0 0
    %1962 = vmatprep.subr.bf16.mxu0 0
    %1963 = vmatpush1.bf16.msra.mxu0 0
    %1964 = vmatprep.subr.bf16.mxu0 0
    %1965 = vmatpush1.bf16.msra.mxu0 0
    %1966 = vmatprep.subr.bf16.mxu0 0
    %1967 = vmatpush1.bf16.msra.mxu0 0
    %1968 = vmatprep.subr.bf16.mxu0 0
    %1969 = vmatpush1.bf16.msra.mxu0 0
    %1970 = vmatprep.subr.bf16.mxu0 0
    %1971 = vmatpush1.bf16.msra.mxu0 0
    %1972 = vmatprep.subr.bf16.mxu0 0
    %1973 = vmatpush1.bf16.msra.mxu0 0
    %1974 = vmatprep.subr.bf16.mxu0 0
    %1975 = vmatpush1.bf16.msra.mxu0 0
    %1976 = vmatprep.mubr.bf16.mxu0 0
    %1977 = vmatmul.mubr.bf16.gmra.mrb[0].mxu0 %v1942
    %v1978 = vpop.f32.mrb[0].mxu0
    %v1979 = vadd.f32 0.0, %v1978
    %v1980 = vpop.f32.mrb[0].mxu0
    %v1981 = vpop.f32.mrb[0].mxu0
    %v1982 = vpop.f32.mrb[0].mxu0
    %1983 = vdwg.mxu0
    %v1984 = vadd.f32 %v1907, %v1979
    %s1985 = scalar_lea.vmem %s8, 160
    %v1986 = vld [vmem:[%s1985] sm:$0xf]
    %v1987 = vld [vmem:[%s1985 + $0x4] sm:$0xf]
    %v1988 = vld [vmem:[%s1985 + $0x8] sm:$0xf]
    %v1989 = vld [vmem:[%s1985 + $0xc] sm:$0xf]
    %v1990 = vld [vmem:[%s1985 + $0x10] sm:$0xf]
    %v1991 = vld [vmem:[%s1985 + $0x14] sm:$0xf]
    %v1992 = vld [vmem:[%s1985 + $0x18] sm:$0xf]
    %v1993 = vld [vmem:[%s1985 + $0x1c] sm:$0xf]
    %v1995 = vrot.slane %v1595, 4
    %v2004 = vunpack.c.l.b16 %v1986
    %v2005 = vunpack.c.l.b16 %v1987
    %v2006 = vunpack.c.l.b16 %v1988
    %v2007 = vunpack.c.l.b16 %v1989
    %v2008 = vunpack.c.l.b16 %v1990
    %v2009 = vunpack.c.l.b16 %v1991
    %v2010 = vunpack.c.l.b16 %v1992
    %v2011 = vunpack.c.l.b16 %v1993
    %v2012 = vpack.c.b16 %v2005, %v2004
    %v2013 = vpack.c.b16 %v2007, %v2006
    %v2014 = vpack.c.b16 %v2009, %v2008
    %v2015 = vpack.c.b16 %v2011, %v2010
    %v2021 = vsel %vm1641, %v1995, 0
    %2023 = vmatprep.subr.bf16.mxu0 0
    %2024 = vmatpush1.bf16.msra.mxu0 %v2012
    %2025 = vmatprep.subr.bf16.mxu0 0
    %2026 = vmatpush1.bf16.msra.mxu0 %v2013
    %2027 = vmatprep.subr.bf16.mxu0 0
    %2028 = vmatpush1.bf16.msra.mxu0 %v2014
    %2029 = vmatprep.subr.bf16.mxu0 0
    %2030 = vmatpush1.bf16.msra.mxu0 %v2015
    %2031 = vmatprep.subr.bf16.mxu0 0
    %2032 = vmatpush1.bf16.msra.mxu0 0
    %2033 = vmatprep.subr.bf16.mxu0 0
    %2034 = vmatpush1.bf16.msra.mxu0 0
    %2035 = vmatprep.subr.bf16.mxu0 0
    %2036 = vmatpush1.bf16.msra.mxu0 0
    %2037 = vmatprep.subr.bf16.mxu0 0
    %2038 = vmatpush1.bf16.msra.mxu0 0
    %2039 = vmatprep.subr.bf16.mxu0 0
    %2040 = vmatpush1.bf16.msra.mxu0 0
    %2041 = vmatprep.subr.bf16.mxu0 0
    %2042 = vmatpush1.bf16.msra.mxu0 0
    %2043 = vmatprep.subr.bf16.mxu0 0
    %2044 = vmatpush1.bf16.msra.mxu0 0
    %2045 = vmatprep.subr.bf16.mxu0 0
    %2046 = vmatpush1.bf16.msra.mxu0 0
    %2047 = vmatprep.subr.bf16.mxu0 0
    %2048 = vmatpush1.bf16.msra.mxu0 0
    %2049 = vmatprep.subr.bf16.mxu0 0
    %2050 = vmatpush1.bf16.msra.mxu0 0
    %2051 = vmatprep.subr.bf16.mxu0 0
    %2052 = vmatpush1.bf16.msra.mxu0 0
    %2053 = vmatprep.subr.bf16.mxu0 0
    %2054 = vmatpush1.bf16.msra.mxu0 0
    %2055 = vmatprep.mubr.bf16.mxu0 0
    %2056 = vmatmul.mubr.bf16.gmra.mrb[0].mxu0 %v2021
    %v2057 = vpop.f32.mrb[0].mxu0
    %v2058 = vadd.f32 0.0, %v2057
    %v2059 = vpop.f32.mrb[0].mxu0
    %v2060 = vpop.f32.mrb[0].mxu0
    %v2061 = vpop.f32.mrb[0].mxu0
    %2062 = vdwg.mxu0
    %v2063 = vadd.f32 %v1984, %v2058
    %s2064 = scalar_lea.vmem %s8, 192
    %v2065 = vld [vmem:[%s2064] sm:$0xf]
    %v2066 = vld [vmem:[%s2064 + $0x4] sm:$0xf]
    %v2067 = vld [vmem:[%s2064 + $0x8] sm:$0xf]
    %v2068 = vld [vmem:[%s2064 + $0xc] sm:$0xf]
    %v2069 = vld [vmem:[%s2064 + $0x10] sm:$0xf]
    %v2070 = vld [vmem:[%s2064 + $0x14] sm:$0xf]
    %v2071 = vld [vmem:[%s2064 + $0x18] sm:$0xf]
    %v2072 = vld [vmem:[%s2064 + $0x1c] sm:$0xf]
    %v2081 = vunpack.c.l.b16 %v2065
    %v2082 = vunpack.c.l.b16 %v2066
    %v2083 = vunpack.c.l.b16 %v2067
    %v2084 = vunpack.c.l.b16 %v2068
    %v2085 = vunpack.c.l.b16 %v2069
    %v2086 = vunpack.c.l.b16 %v2070
    %v2087 = vunpack.c.l.b16 %v2071
    %v2088 = vunpack.c.l.b16 %v2072
    %v2089 = vpack.c.b16 %v2082, %v2081
    %v2090 = vpack.c.b16 %v2084, %v2083
    %v2091 = vpack.c.b16 %v2086, %v2085
    %v2092 = vpack.c.b16 %v2088, %v2087
    %v2098 = vsel %vm1641, %v1596, 0
    %2100 = vmatprep.subr.bf16.mxu0 0
    %2101 = vmatpush1.bf16.msra.mxu0 %v2089
    %2102 = vmatprep.subr.bf16.mxu0 0
    %2103 = vmatpush1.bf16.msra.mxu0 %v2090
    %2104 = vmatprep.subr.bf16.mxu0 0
    %2105 = vmatpush1.bf16.msra.mxu0 %v2091
    %2106 = vmatprep.subr.bf16.mxu0 0
    %2107 = vmatpush1.bf16.msra.mxu0 %v2092
    %2108 = vmatprep.subr.bf16.mxu0 0
    %2109 = vmatpush1.bf16.msra.mxu0 0
    %2110 = vmatprep.subr.bf16.mxu0 0
    %2111 = vmatpush1.bf16.msra.mxu0 0
    %2112 = vmatprep.subr.bf16.mxu0 0
    %2113 = vmatpush1.bf16.msra.mxu0 0
    %2114 = vmatprep.subr.bf16.mxu0 0
    %2115 = vmatpush1.bf16.msra.mxu0 0
    %2116 = vmatprep.subr.bf16.mxu0 0
    %2117 = vmatpush1.bf16.msra.mxu0 0
    %2118 = vmatprep.subr.bf16.mxu0 0
    %2119 = vmatpush1.bf16.msra.mxu0 0
    %2120 = vmatprep.subr.bf16.mxu0 0
    %2121 = vmatpush1.bf16.msra.mxu0 0
    %2122 = vmatprep.subr.bf16.mxu0 0
    %2123 = vmatpush1.bf16.msra.mxu0 0
    %2124 = vmatprep.subr.bf16.mxu0 0
    %2125 = vmatpush1.bf16.msra.mxu0 0
    %2126 = vmatprep.subr.bf16.mxu0 0
    %2127 = vmatpush1.bf16.msra.mxu0 0
    %2128 = vmatprep.subr.bf16.mxu0 0
    %2129 = vmatpush1.bf16.msra.mxu0 0
    %2130 = vmatprep.subr.bf16.mxu0 0
    %2131 = vmatpush1.bf16.msra.mxu0 0
    %2132 = vmatprep.mubr.bf16.mxu0 0
    %2133 = vmatmul.mubr.bf16.gmra.mrb[0].mxu0 %v2098
    %v2134 = vpop.f32.mrb[0].mxu0
    %v2135 = vadd.f32 0.0, %v2134
    %v2136 = vpop.f32.mrb[0].mxu0
    %v2137 = vpop.f32.mrb[0].mxu0
    %v2138 = vpop.f32.mrb[0].mxu0
    %2139 = vdwg.mxu0
    %v2140 = vadd.f32 %v2063, %v2135
    %s2141 = scalar_lea.vmem %s8, 224
    %v2142 = vld [vmem:[%s2141] sm:$0xf]
    %v2143 = vld [vmem:[%s2141 + $0x4] sm:$0xf]
    %v2144 = vld [vmem:[%s2141 + $0x8] sm:$0xf]
    %v2145 = vld [vmem:[%s2141 + $0xc] sm:$0xf]
    %v2146 = vld [vmem:[%s2141 + $0x10] sm:$0xf]
    %v2147 = vld [vmem:[%s2141 + $0x14] sm:$0xf]
    %v2148 = vld [vmem:[%s2141 + $0x18] sm:$0xf]
    %v2149 = vld [vmem:[%s2141 + $0x1c] sm:$0xf]
    %v2151 = vrot.slane %v1596, 4
    %v2160 = vunpack.c.l.b16 %v2142
    %v2161 = vunpack.c.l.b16 %v2143
    %v2162 = vunpack.c.l.b16 %v2144
    %v2163 = vunpack.c.l.b16 %v2145
    %v2164 = vunpack.c.l.b16 %v2146
    %v2165 = vunpack.c.l.b16 %v2147
    %v2166 = vunpack.c.l.b16 %v2148
    %v2167 = vunpack.c.l.b16 %v2149
    %v2168 = vpack.c.b16 %v2161, %v2160
    %v2169 = vpack.c.b16 %v2163, %v2162
    %v2170 = vpack.c.b16 %v2165, %v2164
    %v2171 = vpack.c.b16 %v2167, %v2166
    %v2177 = vsel %vm1641, %v2151, 0
    %2179 = vmatprep.subr.bf16.mxu0 0
    %2180 = vmatpush1.bf16.msra.mxu0 %v2168
    %2181 = vmatprep.subr.bf16.mxu0 0
    %2182 = vmatpush1.bf16.msra.mxu0 %v2169
    %2183 = vmatprep.subr.bf16.mxu0 0
    %2184 = vmatpush1.bf16.msra.mxu0 %v2170
    %2185 = vmatprep.subr.bf16.mxu0 0
    %2186 = vmatpush1.bf16.msra.mxu0 %v2171
    %2187 = vmatprep.subr.bf16.mxu0 0
    %2188 = vmatpush1.bf16.msra.mxu0 0
    %2189 = vmatprep.subr.bf16.mxu0 0
    %2190 = vmatpush1.bf16.msra.mxu0 0
    %2191 = vmatprep.subr.bf16.mxu0 0
    %2192 = vmatpush1.bf16.msra.mxu0 0
    %2193 = vmatprep.subr.bf16.mxu0 0
    %2194 = vmatpush1.bf16.msra.mxu0 0
    %2195 = vmatprep.subr.bf16.mxu0 0
    %2196 = vmatpush1.bf16.msra.mxu0 0
    %2197 = vmatprep.subr.bf16.mxu0 0
    %2198 = vmatpush1.bf16.msra.mxu0 0
    %2199 = vmatprep.subr.bf16.mxu0 0
    %2200 = vmatpush1.bf16.msra.mxu0 0
    %2201 = vmatprep.subr.bf16.mxu0 0
    %2202 = vmatpush1.bf16.msra.mxu0 0
    %2203 = vmatprep.subr.bf16.mxu0 0
    %2204 = vmatpush1.bf16.msra.mxu0 0
    %2205 = vmatprep.subr.bf16.mxu0 0
    %2206 = vmatpush1.bf16.msra.mxu0 0
    %2207 = vmatprep.subr.bf16.mxu0 0
    %2208 = vmatpush1.bf16.msra.mxu0 0
    %2209 = vmatprep.subr.bf16.mxu0 0
    %2210 = vmatpush1.bf16.msra.mxu0 0
    %2211 = vmatprep.mubr.bf16.mxu0 0
    %2212 = vmatmul.mubr.bf16.gmra.mrb[0].mxu0 %v2177
    %v2213 = vpop.f32.mrb[0].mxu0
    %v2214 = vadd.f32 0.0, %v2213
    %v2215 = vpop.f32.mrb[0].mxu0
    %v2216 = vpop.f32.mrb[0].mxu0
    %v2217 = vpop.f32.mrb[0].mxu0
    %2218 = vdwg.mxu0
    %v2219 = vadd.f32 %v2140, %v2214
    %s2220 = scalar_lea.vmem %s8, 256
    %v2221 = vld [vmem:[%s2220] sm:$0xf]
    %v2222 = vld [vmem:[%s2220 + $0x4] sm:$0xf]
    %v2223 = vld [vmem:[%s2220 + $0x8] sm:$0xf]
    %v2224 = vld [vmem:[%s2220 + $0xc] sm:$0xf]
    %v2225 = vld [vmem:[%s2220 + $0x10] sm:$0xf]
    %v2226 = vld [vmem:[%s2220 + $0x14] sm:$0xf]
    %v2227 = vld [vmem:[%s2220 + $0x18] sm:$0xf]
    %v2228 = vld [vmem:[%s2220 + $0x1c] sm:$0xf]
    %v2237 = vunpack.c.l.b16 %v2221
    %v2238 = vunpack.c.l.b16 %v2222
    %v2239 = vunpack.c.l.b16 %v2223
    %v2240 = vunpack.c.l.b16 %v2224
    %v2241 = vunpack.c.l.b16 %v2225
    %v2242 = vunpack.c.l.b16 %v2226
    %v2243 = vunpack.c.l.b16 %v2227
    %v2244 = vunpack.c.l.b16 %v2228
    %v2245 = vpack.c.b16 %v2238, %v2237
    %v2246 = vpack.c.b16 %v2240, %v2239
    %v2247 = vpack.c.b16 %v2242, %v2241
    %v2248 = vpack.c.b16 %v2244, %v2243
    %v2254 = vsel %vm1641, %v1597, 0
    %2256 = vmatprep.subr.bf16.mxu0 0
    %2257 = vmatpush1.bf16.msra.mxu0 %v2245
    %2258 = vmatprep.subr.bf16.mxu0 0
    %2259 = vmatpush1.bf16.msra.mxu0 %v2246
    %2260 = vmatprep.subr.bf16.mxu0 0
    %2261 = vmatpush1.bf16.msra.mxu0 %v2247
    %2262 = vmatprep.subr.bf16.mxu0 0
    %2263 = vmatpush1.bf16.msra.mxu0 %v2248
    %2264 = vmatprep.subr.bf16.mxu0 0
    %2265 = vmatpush1.bf16.msra.mxu0 0
    %2266 = vmatprep.subr.bf16.mxu0 0
    %2267 = vmatpush1.bf16.msra.mxu0 0
    %2268 = vmatprep.subr.bf16.mxu0 0
    %2269 = vmatpush1.bf16.msra.mxu0 0
    %2270 = vmatprep.subr.bf16.mxu0 0
    %2271 = vmatpush1.bf16.msra.mxu0 0
    %2272 = vmatprep.subr.bf16.mxu0 0
    %2273 = vmatpush1.bf16.msra.mxu0 0
    %2274 = vmatprep.subr.bf16.mxu0 0
    %2275 = vmatpush1.bf16.msra.mxu0 0
    %2276 = vmatprep.subr.bf16.mxu0 0
    %2277 = vmatpush1.bf16.msra.mxu0 0
    %2278 = vmatprep.subr.bf16.mxu0 0
    %2279 = vmatpush1.bf16.msra.mxu0 0
    %2280 = vmatprep.subr.bf16.mxu0 0
    %2281 = vmatpush1.bf16.msra.mxu0 0
    %2282 = vmatprep.subr.bf16.mxu0 0
    %2283 = vmatpush1.bf16.msra.mxu0 0
    %2284 = vmatprep.subr.bf16.mxu0 0
    %2285 = vmatpush1.bf16.msra.mxu0 0
    %2286 = vmatprep.subr.bf16.mxu0 0
    %2287 = vmatpush1.bf16.msra.mxu0 0
    %2288 = vmatprep.mubr.bf16.mxu0 0
    %2289 = vmatmul.mubr.bf16.gmra.mrb[0].mxu0 %v2254
    %v2290 = vpop.f32.mrb[0].mxu0
    %v2291 = vadd.f32 0.0, %v2290
    %v2292 = vpop.f32.mrb[0].mxu0
    %v2293 = vpop.f32.mrb[0].mxu0
    %v2294 = vpop.f32.mrb[0].mxu0
    %2295 = vdwg.mxu0
    %v2296 = vadd.f32 %v2219, %v2291
    %v2297 = vld [vmem:[#allocation6] sm:$0x1]
    %v2299 = vlaneseq
    %v2300 = vshrl.u32 %v2299, 7
    %v2301 = vsub.s32 0, %v2300
    %v2302 = vrot.slane %v2297, %v2301
    %v2304 = vadd.f32 %v2296, %v2302
    %v2305 = vmax.f32 %v2304, 0.0
    %v2306 = vpack.c.bf16 %v2305, %v2305
    %v2307 = vld [vmem:[%s10] sm:$0xff]
    %v2308 = vld [vmem:[%s10 + $0x8] sm:$0xff]
    %v2309 = vld [vmem:[%s10 + $0x10] sm:$0xff]
    %v2310 = vld [vmem:[%s10 + $0x18] sm:$0xff]
    %v2311 = vld [vmem:[%s10 + $0x20] sm:$0xff]
    %v2312 = vld [vmem:[%s10 + $0x28] sm:$0xff]
    %v2313 = vld [vmem:[%s10 + $0x30] sm:$0xff]
    %v2314 = vld [vmem:[%s10 + $0x38] sm:$0xff]
    %v2315 = vld [vmem:[%s10 + $0x40] sm:$0xff]
    %v2316 = vld [vmem:[%s10 + $0x48] sm:$0xff]
    %v2317 = vld [vmem:[%s10 + $0x50] sm:$0xff]
    %v2318 = vld [vmem:[%s10 + $0x58] sm:$0xff]
    %v2319 = vld [vmem:[%s10 + $0x60] sm:$0xff]
    %v2320 = vld [vmem:[%s10 + $0x68] sm:$0xff]
    %v2321 = vld [vmem:[%s10 + $0x70] sm:$0xff]
    %v2322 = vld [vmem:[%s10 + $0x78] sm:$0xff]
    %v2323 = vld [vmem:[%s10 + $0x80] sm:$0xff]
    %v2324 = vld [vmem:[%s10 + $0x88] sm:$0xff]
    %v2325 = vld [vmem:[%s10 + $0x90] sm:$0xff]
    %v2326 = vld [vmem:[%s10 + $0x98] sm:$0xff]
    %v2327 = vld [vmem:[%s10 + $0xa0] sm:$0xff]
    %v2328 = vld [vmem:[%s10 + $0xa8] sm:$0xff]
    %v2329 = vld [vmem:[%s10 + $0xb0] sm:$0xff]
    %v2330 = vld [vmem:[%s10 + $0xb8] sm:$0xff]
    %v2331 = vld [vmem:[%s10 + $0xc0] sm:$0xff]
    %v2332 = vld [vmem:[%s10 + $0xc8] sm:$0xff]
    %v2333 = vld [vmem:[%s10 + $0xd0] sm:$0xff]
    %v2334 = vld [vmem:[%s10 + $0xd8] sm:$0xff]
    %v2335 = vld [vmem:[%s10 + $0xe0] sm:$0xff]
    %v2336 = vld [vmem:[%s10 + $0xe8] sm:$0xff]
    %v2337 = vld [vmem:[%s10 + $0xf0] sm:$0xff]
    %v2338 = vld [vmem:[%s10 + $0xf8] sm:$0xff]
    %v2339 = vld [vmem:[%s10 + $0x100] sm:$0xff]
    %v2340 = vld [vmem:[%s10 + $0x108] sm:$0xff]
    %v2341 = vld [vmem:[%s10 + $0x110] sm:$0xff]
    %v2342 = vld [vmem:[%s10 + $0x118] sm:$0xff]
    %v2343 = vld [vmem:[%s10 + $0x120] sm:$0xff]
    %v2344 = vld [vmem:[%s10 + $0x128] sm:$0xff]
    %v2345 = vld [vmem:[%s10 + $0x130] sm:$0xff]
    %v2346 = vld [vmem:[%s10 + $0x138] sm:$0xff]
    %v2347 = vld [vmem:[%s10 + $0x140] sm:$0xff]
    %v2348 = vld [vmem:[%s10 + $0x148] sm:$0xff]
    %v2349 = vld [vmem:[%s10 + $0x150] sm:$0xff]
    %v2350 = vld [vmem:[%s10 + $0x158] sm:$0xff]
    %v2351 = vld [vmem:[%s10 + $0x160] sm:$0xff]
    %v2352 = vld [vmem:[%s10 + $0x168] sm:$0xff]
    %v2353 = vld [vmem:[%s10 + $0x170] sm:$0xff]
    %v2354 = vld [vmem:[%s10 + $0x178] sm:$0xff]
    %v2355 = vld [vmem:[%s10 + $0x180] sm:$0xff]
    %v2356 = vld [vmem:[%s10 + $0x188] sm:$0xff]
    %v2357 = vld [vmem:[%s10 + $0x190] sm:$0xff]
    %v2358 = vld [vmem:[%s10 + $0x198] sm:$0xff]
    %v2359 = vld [vmem:[%s10 + $0x1a0] sm:$0xff]
    %v2360 = vld [vmem:[%s10 + $0x1a8] sm:$0xff]
    %v2361 = vld [vmem:[%s10 + $0x1b0] sm:$0xff]
    %v2362 = vld [vmem:[%s10 + $0x1b8] sm:$0xff]
    %v2363 = vld [vmem:[%s10 + $0x1c0] sm:$0xff]
    %v2364 = vld [vmem:[%s10 + $0x1c8] sm:$0xff]
    %v2365 = vld [vmem:[%s10 + $0x1d0] sm:$0xff]
    %v2366 = vld [vmem:[%s10 + $0x1d8] sm:$0xff]
    %v2367 = vld [vmem:[%s10 + $0x1e0] sm:$0xff]
    %v2368 = vld [vmem:[%s10 + $0x1e8] sm:$0xff]
    %v2369 = vld [vmem:[%s10 + $0x1f0] sm:$0xff]
    %v2370 = vld [vmem:[%s10 + $0x1f8] sm:$0xff]
    %v2435 = vunpack.c.l.b16 %v2307
    %v2436 = vunpack.c.h.b16 %v2307
    %v2437 = vunpack.c.l.b16 %v2308
    %v2438 = vunpack.c.h.b16 %v2308
    %v2439 = vunpack.c.l.b16 %v2309
    %v2440 = vunpack.c.h.b16 %v2309
    %v2441 = vunpack.c.l.b16 %v2310
    %v2442 = vunpack.c.h.b16 %v2310
    %v2443 = vunpack.c.l.b16 %v2311
    %v2444 = vunpack.c.h.b16 %v2311
    %v2445 = vunpack.c.l.b16 %v2312
    %v2446 = vunpack.c.h.b16 %v2312
    %v2447 = vunpack.c.l.b16 %v2313
    %v2448 = vunpack.c.h.b16 %v2313
    %v2449 = vunpack.c.l.b16 %v2314
    %v2450 = vunpack.c.h.b16 %v2314
    %v2451 = vunpack.c.l.b16 %v2315
    %v2452 = vunpack.c.h.b16 %v2315
    %v2453 = vunpack.c.l.b16 %v2316
    %v2454 = vunpack.c.h.b16 %v2316
    %v2455 = vunpack.c.l.b16 %v2317
    %v2456 = vunpack.c.h.b16 %v2317
    %v2457 = vunpack.c.l.b16 %v2318
    %v2458 = vunpack.c.h.b16 %v2318
    %v2459 = vunpack.c.l.b16 %v2319
    %v2460 = vunpack.c.h.b16 %v2319
    %v2461 = vunpack.c.l.b16 %v2320
    %v2462 = vunpack.c.h.b16 %v2320
    %v2463 = vunpack.c.l.b16 %v2321
    %v2464 = vunpack.c.h.b16 %v2321
    %v2465 = vunpack.c.l.b16 %v2322
    %v2466 = vunpack.c.h.b16 %v2322
    %v2467 = vunpack.c.l.b16 %v2323
    %v2468 = vunpack.c.h.b16 %v2323
    %v2469 = vunpack.c.l.b16 %v2324
    %v2470 = vunpack.c.h.b16 %v2324
    %v2471 = vunpack.c.l.b16 %v2325
    %v2472 = vunpack.c.h.b16 %v2325
    %v2473 = vunpack.c.l.b16 %v2326
    %v2474 = vunpack.c.h.b16 %v2326
    %v2475 = vunpack.c.l.b16 %v2327
    %v2476 = vunpack.c.h.b16 %v2327
    %v2477 = vunpack.c.l.b16 %v2328
    %v2478 = vunpack.c.h.b16 %v2328
    %v2479 = vunpack.c.l.b16 %v2329
    %v2480 = vunpack.c.h.b16 %v2329
    %v2481 = vunpack.c.l.b16 %v2330
    %v2482 = vunpack.c.h.b16 %v2330
    %v2483 = vunpack.c.l.b16 %v2331
    %v2484 = vunpack.c.h.b16 %v2331
    %v2485 = vunpack.c.l.b16 %v2332
    %v2486 = vunpack.c.h.b16 %v2332
    %v2487 = vunpack.c.l.b16 %v2333
    %v2488 = vunpack.c.h.b16 %v2333
    %v2489 = vunpack.c.l.b16 %v2334
    %v2490 = vunpack.c.h.b16 %v2334
    %v2491 = vunpack.c.l.b16 %v2335
    %v2492 = vunpack.c.h.b16 %v2335
    %v2493 = vunpack.c.l.b16 %v2336
    %v2494 = vunpack.c.h.b16 %v2336
    %v2495 = vunpack.c.l.b16 %v2337
    %v2496 = vunpack.c.h.b16 %v2337
    %v2497 = vunpack.c.l.b16 %v2338
    %v2498 = vunpack.c.h.b16 %v2338
    %v2499 = vunpack.c.l.b16 %v2339
    %v2500 = vunpack.c.h.b16 %v2339
    %v2501 = vunpack.c.l.b16 %v2340
    %v2502 = vunpack.c.h.b16 %v2340
    %v2503 = vunpack.c.l.b16 %v2341
    %v2504 = vunpack.c.h.b16 %v2341
    %v2505 = vunpack.c.l.b16 %v2342
    %v2506 = vunpack.c.h.b16 %v2342
    %v2507 = vunpack.c.l.b16 %v2343
    %v2508 = vunpack.c.h.b16 %v2343
    %v2509 = vunpack.c.l.b16 %v2344
    %v2510 = vunpack.c.h.b16 %v2344
    %v2511 = vunpack.c.l.b16 %v2345
    %v2512 = vunpack.c.h.b16 %v2345
    %v2513 = vunpack.c.l.b16 %v2346
    %v2514 = vunpack.c.h.b16 %v2346
    %v2515 = vunpack.c.l.b16 %v2347
    %v2516 = vunpack.c.h.b16 %v2347
    %v2517 = vunpack.c.l.b16 %v2348
    %v2518 = vunpack.c.h.b16 %v2348
    %v2519 = vunpack.c.l.b16 %v2349
    %v2520 = vunpack.c.h.b16 %v2349
    %v2521 = vunpack.c.l.b16 %v2350
    %v2522 = vunpack.c.h.b16 %v2350
    %v2523 = vunpack.c.l.b16 %v2351
    %v2524 = vunpack.c.h.b16 %v2351
    %v2525 = vunpack.c.l.b16 %v2352
    %v2526 = vunpack.c.h.b16 %v2352
    %v2527 = vunpack.c.l.b16 %v2353
    %v2528 = vunpack.c.h.b16 %v2353
    %v2529 = vunpack.c.l.b16 %v2354
    %v2530 = vunpack.c.h.b16 %v2354
    %v2531 = vunpack.c.l.b16 %v2355
    %v2532 = vunpack.c.h.b16 %v2355
    %v2533 = vunpack.c.l.b16 %v2356
    %v2534 = vunpack.c.h.b16 %v2356
    %v2535 = vunpack.c.l.b16 %v2357
    %v2536 = vunpack.c.h.b16 %v2357
    %v2537 = vunpack.c.l.b16 %v2358
    %v2538 = vunpack.c.h.b16 %v2358
    %v2539 = vunpack.c.l.b16 %v2359
    %v2540 = vunpack.c.h.b16 %v2359
    %v2541 = vunpack.c.l.b16 %v2360
    %v2542 = vunpack.c.h.b16 %v2360
    %v2543 = vunpack.c.l.b16 %v2361
    %v2544 = vunpack.c.h.b16 %v2361
    %v2545 = vunpack.c.l.b16 %v2362
    %v2546 = vunpack.c.h.b16 %v2362
    %v2547 = vunpack.c.l.b16 %v2363
    %v2548 = vunpack.c.h.b16 %v2363
    %v2549 = vunpack.c.l.b16 %v2364
    %v2550 = vunpack.c.h.b16 %v2364
    %v2551 = vunpack.c.l.b16 %v2365
    %v2552 = vunpack.c.h.b16 %v2365
    %v2553 = vunpack.c.l.b16 %v2366
    %v2554 = vunpack.c.h.b16 %v2366
    %v2555 = vunpack.c.l.b16 %v2367
    %v2556 = vunpack.c.h.b16 %v2367
    %v2557 = vunpack.c.l.b16 %v2368
    %v2558 = vunpack.c.h.b16 %v2368
    %v2559 = vunpack.c.l.b16 %v2369
    %v2560 = vunpack.c.h.b16 %v2369
    %v2561 = vunpack.c.l.b16 %v2370
    %v2562 = vunpack.c.h.b16 %v2370
    %v2563 = vpack.c.b16 %v2443, %v2435
    %v2564 = vpack.c.b16 %v2444, %v2436
    %v2565 = vpack.c.b16 %v2445, %v2437
    %v2566 = vpack.c.b16 %v2446, %v2438
    %v2567 = vpack.c.b16 %v2447, %v2439
    %v2568 = vpack.c.b16 %v2448, %v2440
    %v2569 = vpack.c.b16 %v2449, %v2441
    %v2570 = vpack.c.b16 %v2450, %v2442
    %v2571 = vpack.c.b16 %v2459, %v2451
    %v2572 = vpack.c.b16 %v2460, %v2452
    %v2573 = vpack.c.b16 %v2461, %v2453
    %v2574 = vpack.c.b16 %v2462, %v2454
    %v2575 = vpack.c.b16 %v2463, %v2455
    %v2576 = vpack.c.b16 %v2464, %v2456
    %v2577 = vpack.c.b16 %v2465, %v2457
    %v2578 = vpack.c.b16 %v2466, %v2458
    %v2579 = vpack.c.b16 %v2475, %v2467
    %v2580 = vpack.c.b16 %v2476, %v2468
    %v2581 = vpack.c.b16 %v2477, %v2469
    %v2582 = vpack.c.b16 %v2478, %v2470
    %v2583 = vpack.c.b16 %v2479, %v2471
    %v2584 = vpack.c.b16 %v2480, %v2472
    %v2585 = vpack.c.b16 %v2481, %v2473
    %v2586 = vpack.c.b16 %v2482, %v2474
    %v2587 = vpack.c.b16 %v2491, %v2483
    %v2588 = vpack.c.b16 %v2492, %v2484
    %v2589 = vpack.c.b16 %v2493, %v2485
    %v2590 = vpack.c.b16 %v2494, %v2486
    %v2591 = vpack.c.b16 %v2495, %v2487
    %v2592 = vpack.c.b16 %v2496, %v2488
    %v2593 = vpack.c.b16 %v2497, %v2489
    %v2594 = vpack.c.b16 %v2498, %v2490
    %v2595 = vpack.c.b16 %v2507, %v2499
    %v2596 = vpack.c.b16 %v2508, %v2500
    %v2597 = vpack.c.b16 %v2509, %v2501
    %v2598 = vpack.c.b16 %v2510, %v2502
    %v2599 = vpack.c.b16 %v2511, %v2503
    %v2600 = vpack.c.b16 %v2512, %v2504
    %v2601 = vpack.c.b16 %v2513, %v2505
    %v2602 = vpack.c.b16 %v2514, %v2506
    %v2603 = vpack.c.b16 %v2523, %v2515
    %v2604 = vpack.c.b16 %v2524, %v2516
    %v2605 = vpack.c.b16 %v2525, %v2517
    %v2606 = vpack.c.b16 %v2526, %v2518
    %v2607 = vpack.c.b16 %v2527, %v2519
    %v2608 = vpack.c.b16 %v2528, %v2520
    %v2609 = vpack.c.b16 %v2529, %v2521
    %v2610 = vpack.c.b16 %v2530, %v2522
    %v2611 = vpack.c.b16 %v2539, %v2531
    %v2612 = vpack.c.b16 %v2540, %v2532
    %v2613 = vpack.c.b16 %v2541, %v2533
    %v2614 = vpack.c.b16 %v2542, %v2534
    %v2615 = vpack.c.b16 %v2543, %v2535
    %v2616 = vpack.c.b16 %v2544, %v2536
    %v2617 = vpack.c.b16 %v2545, %v2537
    %v2618 = vpack.c.b16 %v2546, %v2538
    %v2619 = vpack.c.b16 %v2555, %v2547
    %v2620 = vpack.c.b16 %v2556, %v2548
    %v2621 = vpack.c.b16 %v2557, %v2549
    %v2622 = vpack.c.b16 %v2558, %v2550
    %v2623 = vpack.c.b16 %v2559, %v2551
    %v2624 = vpack.c.b16 %v2560, %v2552
    %v2625 = vpack.c.b16 %v2561, %v2553
    %v2626 = vpack.c.b16 %v2562, %v2554
    %2691 = vmatprep.subr.bf16.mxu0 %v2564
    %2692 = vmatpush1.bf16.msra.mxu0 %v2563
    %2693 = vmatprep.subr.bf16.mxu0 %v2572
    %2694 = vmatpush1.bf16.msra.mxu0 %v2571
    %2695 = vmatprep.subr.bf16.mxu0 %v2580
    %2696 = vmatpush1.bf16.msra.mxu0 %v2579
    %2697 = vmatprep.subr.bf16.mxu0 %v2588
    %2698 = vmatpush1.bf16.msra.mxu0 %v2587
    %2699 = vmatprep.subr.bf16.mxu0 %v2596
    %2700 = vmatpush1.bf16.msra.mxu0 %v2595
    %2701 = vmatprep.subr.bf16.mxu0 %v2604
    %2702 = vmatpush1.bf16.msra.mxu0 %v2603
    %2703 = vmatprep.subr.bf16.mxu0 %v2612
    %2704 = vmatpush1.bf16.msra.mxu0 %v2611
    %2705 = vmatprep.subr.bf16.mxu0 %v2620
    %2706 = vmatpush1.bf16.msra.mxu0 %v2619
    %2707 = vmatprep.subr.bf16.mxu0 0
    %2708 = vmatpush1.bf16.msra.mxu0 0
    %2709 = vmatprep.subr.bf16.mxu0 0
    %2710 = vmatpush1.bf16.msra.mxu0 0
    %2711 = vmatprep.subr.bf16.mxu0 0
    %2712 = vmatpush1.bf16.msra.mxu0 0
    %2713 = vmatprep.subr.bf16.mxu0 0
    %2714 = vmatpush1.bf16.msra.mxu0 0
    %2715 = vmatprep.subr.bf16.mxu0 0
    %2716 = vmatpush1.bf16.msra.mxu0 0
    %2717 = vmatprep.subr.bf16.mxu0 0
    %2718 = vmatpush1.bf16.msra.mxu0 0
    %2719 = vmatprep.subr.bf16.mxu0 0
    %2720 = vmatpush1.bf16.msra.mxu0 0
    %2721 = vmatprep.subr.bf16.mxu0 0
    %2722 = vmatpush1.bf16.msra.mxu0 0
    %2723 = vmatprep.mubr.bf16.mxu0 0
    %2724 = vmatmul.mubr.bf16.gmra.mrb[0].mxu0 %v2306
    %v2725 = vpop.f32.mrb[0].mxu0
    %v2726 = vadd.f32 0.0, %v2725
    %v2727 = vpop.f32.mrb[0].mxu0
    %v2728 = vadd.f32 0.0, %v2727
    %v2729 = vpop.f32.mrb[0].mxu0
    %v2730 = vpop.f32.mrb[0].mxu0
    %2731 = vdwg.mxu0
    %2732 = vmatprep.subr.bf16.mxu0 %v2566
    %2733 = vmatpush1.bf16.msra.mxu0 %v2565
    %2734 = vmatprep.subr.bf16.mxu0 %v2574
    %2735 = vmatpush1.bf16.msra.mxu0 %v2573
    %2736 = vmatprep.subr.bf16.mxu0 %v2582
    %2737 = vmatpush1.bf16.msra.mxu0 %v2581
    %2738 = vmatprep.subr.bf16.mxu0 %v2590
    %2739 = vmatpush1.bf16.msra.mxu0 %v2589
    %2740 = vmatprep.subr.bf16.mxu0 %v2598
    %2741 = vmatpush1.bf16.msra.mxu0 %v2597
    %2742 = vmatprep.subr.bf16.mxu0 %v2606
    %2743 = vmatpush1.bf16.msra.mxu0 %v2605
    %2744 = vmatprep.subr.bf16.mxu0 %v2614
    %2745 = vmatpush1.bf16.msra.mxu0 %v2613
    %2746 = vmatprep.subr.bf16.mxu0 %v2622
    %2747 = vmatpush1.bf16.msra.mxu0 %v2621
    %2748 = vmatprep.subr.bf16.mxu0 0
    %2749 = vmatpush1.bf16.msra.mxu0 0
    %2750 = vmatprep.subr.bf16.mxu0 0
    %2751 = vmatpush1.bf16.msra.mxu0 0
    %2752 = vmatprep.subr.bf16.mxu0 0
    %2753 = vmatpush1.bf16.msra.mxu0 0
    %2754 = vmatprep.subr.bf16.mxu0 0
    %2755 = vmatpush1.bf16.msra.mxu0 0
    %2756 = vmatprep.subr.bf16.mxu0 0
    %2757 = vmatpush1.bf16.msra.mxu0 0
    %2758 = vmatprep.subr.bf16.mxu0 0
    %2759 = vmatpush1.bf16.msra.mxu0 0
    %2760 = vmatprep.subr.bf16.mxu0 0
    %2761 = vmatpush1.bf16.msra.mxu0 0
    %2762 = vmatprep.subr.bf16.mxu0 0
    %2763 = vmatpush1.bf16.msra.mxu0 0
    %2764 = vmatprep.mubr.bf16.mxu0 0
    %2765 = vmatmul.mubr.bf16.gmra.mrb[0].mxu0 %v2306
    %v2766 = vpop.f32.mrb[0].mxu0
    %v2767 = vadd.f32 0.0, %v2766
    %v2768 = vpop.f32.mrb[0].mxu0
    %v2769 = vadd.f32 0.0, %v2768
    %v2770 = vpop.f32.mrb[0].mxu0
    %v2771 = vpop.f32.mrb[0].mxu0
    %2772 = vdwg.mxu0
    %2773 = vmatprep.subr.bf16.mxu0 %v2568
    %2774 = vmatpush1.bf16.msra.mxu0 %v2567
    %2775 = vmatprep.subr.bf16.mxu0 %v2576
    %2776 = vmatpush1.bf16.msra.mxu0 %v2575
    %2777 = vmatprep.subr.bf16.mxu0 %v2584
    %2778 = vmatpush1.bf16.msra.mxu0 %v2583
    %2779 = vmatprep.subr.bf16.mxu0 %v2592
    %2780 = vmatpush1.bf16.msra.mxu0 %v2591
    %2781 = vmatprep.subr.bf16.mxu0 %v2600
    %2782 = vmatpush1.bf16.msra.mxu0 %v2599
    %2783 = vmatprep.subr.bf16.mxu0 %v2608
    %2784 = vmatpush1.bf16.msra.mxu0 %v2607
    %2785 = vmatprep.subr.bf16.mxu0 %v2616
    %2786 = vmatpush1.bf16.msra.mxu0 %v2615
    %2787 = vmatprep.subr.bf16.mxu0 %v2624
    %2788 = vmatpush1.bf16.msra.mxu0 %v2623
    %2789 = vmatprep.subr.bf16.mxu0 0
    %2790 = vmatpush1.bf16.msra.mxu0 0
    %2791 = vmatprep.subr.bf16.mxu0 0
    %2792 = vmatpush1.bf16.msra.mxu0 0
    %2793 = vmatprep.subr.bf16.mxu0 0
    %2794 = vmatpush1.bf16.msra.mxu0 0
    %2795 = vmatprep.subr.bf16.mxu0 0
    %2796 = vmatpush1.bf16.msra.mxu0 0
    %2797 = vmatprep.subr.bf16.mxu0 0
    %2798 = vmatpush1.bf16.msra.mxu0 0
    %2799 = vmatprep.subr.bf16.mxu0 0
    %2800 = vmatpush1.bf16.msra.mxu0 0
    %2801 = vmatprep.subr.bf16.mxu0 0
    %2802 = vmatpush1.bf16.msra.mxu0 0
    %2803 = vmatprep.subr.bf16.mxu0 0
    %2804 = vmatpush1.bf16.msra.mxu0 0
    %2805 = vmatprep.mubr.bf16.mxu0 0
    %2806 = vmatmul.mubr.bf16.gmra.mrb[0].mxu0 %v2306
    %v2807 = vpop.f32.mrb[0].mxu0
    %v2808 = vadd.f32 0.0, %v2807
    %v2809 = vpop.f32.mrb[0].mxu0
    %v2810 = vadd.f32 0.0, %v2809
    %v2811 = vpop.f32.mrb[0].mxu0
    %v2812 = vpop.f32.mrb[0].mxu0
    %2813 = vdwg.mxu0
    %2814 = vmatprep.subr.bf16.mxu0 %v2570
    %2815 = vmatpush1.bf16.msra.mxu0 %v2569
    %2816 = vmatprep.subr.bf16.mxu0 %v2578
    %2817 = vmatpush1.bf16.msra.mxu0 %v2577
    %2818 = vmatprep.subr.bf16.mxu0 %v2586
    %2819 = vmatpush1.bf16.msra.mxu0 %v2585
    %2820 = vmatprep.subr.bf16.mxu0 %v2594
    %2821 = vmatpush1.bf16.msra.mxu0 %v2593
    %2822 = vmatprep.subr.bf16.mxu0 %v2602
    %2823 = vmatpush1.bf16.msra.mxu0 %v2601
    %2824 = vmatprep.subr.bf16.mxu0 %v2610
    %2825 = vmatpush1.bf16.msra.mxu0 %v2609
    %2826 = vmatprep.subr.bf16.mxu0 %v2618
    %2827 = vmatpush1.bf16.msra.mxu0 %v2617
    %2828 = vmatprep.subr.bf16.mxu0 %v2626
    %2829 = vmatpush1.bf16.msra.mxu0 %v2625
    %2830 = vmatprep.subr.bf16.mxu0 0
    %2831 = vmatpush1.bf16.msra.mxu0 0
    %2832 = vmatprep.subr.bf16.mxu0 0
    %2833 = vmatpush1.bf16.msra.mxu0 0
    %2834 = vmatprep.subr.bf16.mxu0 0
    %2835 = vmatpush1.bf16.msra.mxu0 0
    %2836 = vmatprep.subr.bf16.mxu0 0
    %2837 = vmatpush1.bf16.msra.mxu0 0
    %2838 = vmatprep.subr.bf16.mxu0 0
    %2839 = vmatpush1.bf16.msra.mxu0 0
    %2840 = vmatprep.subr.bf16.mxu0 0
    %2841 = vmatpush1.bf16.msra.mxu0 0
    %2842 = vmatprep.subr.bf16.mxu0 0
    %2843 = vmatpush1.bf16.msra.mxu0 0
    %2844 = vmatprep.subr.bf16.mxu0 0
    %2845 = vmatpush1.bf16.msra.mxu0 0
    %2846 = vmatprep.mubr.bf16.mxu0 0
    %2847 = vmatmul.mubr.bf16.gmra.mrb[0].mxu0 %v2306
    %v2848 = vpop.f32.mrb[0].mxu0
    %v2849 = vadd.f32 0.0, %v2848
    %v2850 = vpop.f32.mrb[0].mxu0
    %v2851 = vadd.f32 0.0, %v2850
    %v2852 = vpop.f32.mrb[0].mxu0
    %v2853 = vpop.f32.mrb[0].mxu0
    %2854 = vdwg.mxu0
    %v2855 = vpack.c.bf16 %v2726, %v2726
    %v2856 = vpack.c.bf16 %v2728, %v2728
    %v2857 = vpack.c.bf16 %v2767, %v2767
    %v2858 = vpack.c.bf16 %v2769, %v2769
    %v2859 = vpack.c.bf16 %v2808, %v2808
    %v2860 = vpack.c.bf16 %v2810, %v2810
    %v2861 = vpack.c.bf16 %v2849, %v2849
    %v2862 = vpack.c.bf16 %v2851, %v2851
    %v2863 = vld [vmem:[#allocation7] sm:$0x1]
    %s2864 = scalar_lea.vmem [#allocation7], 1
    %v2865 = vld [vmem:[%s2864] sm:$0x1]
    %vm2866 = vcmask 64512
    %v2868 = vsel %vm2866, %v2865, 0
    %vm2870 = vcmask 1043456
    %v2872 = vsel %vm2870, %v2857, 0
    %v2875 = vsel %vm2870, %v2858, 0
    %2877 = vmatprep.subr.bf16.mxu0 %v2875
    %2878 = vmatpush1.bf16.msra.mxu0 %v2872
    %2879 = vmatprep.subr.bf16.mxu0 0
    %2880 = vmatpush1.bf16.msra.mxu0 0
    %2881 = vmatprep.subr.bf16.mxu0 0
    %2882 = vmatpush1.bf16.msra.mxu0 0
    %2883 = vmatprep.subr.bf16.mxu0 0
    %2884 = vmatpush1.bf16.msra.mxu0 0
    %2885 = vmatprep.subr.bf16.mxu0 0
    %2886 = vmatpush1.bf16.msra.mxu0 0
    %2887 = vmatprep.subr.bf16.mxu0 0
    %2888 = vmatpush1.bf16.msra.mxu0 0
    %2889 = vmatprep.subr.bf16.mxu0 0
    %2890 = vmatpush1.bf16.msra.mxu0 0
    %2891 = vmatprep.subr.bf16.mxu0 0
    %2892 = vmatpush1.bf16.msra.mxu0 0
    %2893 = vmatprep.subr.bf16.mxu0 0
    %2894 = vmatpush1.bf16.msra.mxu0 0
    %2895 = vmatprep.subr.bf16.mxu0 0
    %2896 = vmatpush1.bf16.msra.mxu0 0
    %2897 = vmatprep.subr.bf16.mxu0 0
    %2898 = vmatpush1.bf16.msra.mxu0 0
    %2899 = vmatprep.subr.bf16.mxu0 0
    %2900 = vmatpush1.bf16.msra.mxu0 0
    %2901 = vmatprep.subr.bf16.mxu0 0
    %2902 = vmatpush1.bf16.msra.mxu0 0
    %2903 = vmatprep.subr.bf16.mxu0 0
    %2904 = vmatpush1.bf16.msra.mxu0 0
    %2905 = vmatprep.subr.bf16.mxu0 0
    %2906 = vmatpush1.bf16.msra.mxu0 0
    %2907 = vmatprep.subr.bf16.mxu0 0
    %2908 = vmatpush1.bf16.msra.mxu0 0
    %2909 = vmatprep.mubr.bf16.mxu0 0
    %2910 = vmatmul.mubr.bf16.gmra.mrb[0].mxu0 %v2868
    %v2911 = vpop.f32.mrb[0].mxu0
    %v2912 = vadd.f32 0.0, %v2911
    %v2913 = vpop.f32.mrb[0].mxu0
    %v2914 = vadd.f32 0.0, %v2913
    %v2915 = vpop.f32.mrb[0].mxu0
    %v2916 = vpop.f32.mrb[0].mxu0
    %2917 = vdwg.mxu0
    %v2919 = vsel %vm2866, %v2863, 0
    %v2922 = vsel %vm2870, %v2855, 0
    %v2925 = vsel %vm2870, %v2856, 0
    %2927 = vmatprep.subr.bf16.mxu0 %v2925
    %2928 = vmatpush1.bf16.msra.mxu0 %v2922
    %2929 = vmatprep.subr.bf16.mxu0 0
    %2930 = vmatpush1.bf16.msra.mxu0 0
    %2931 = vmatprep.subr.bf16.mxu0 0
    %2932 = vmatpush1.bf16.msra.mxu0 0
    %2933 = vmatprep.subr.bf16.mxu0 0
    %2934 = vmatpush1.bf16.msra.mxu0 0
    %2935 = vmatprep.subr.bf16.mxu0 0
    %2936 = vmatpush1.bf16.msra.mxu0 0
    %2937 = vmatprep.subr.bf16.mxu0 0
    %2938 = vmatpush1.bf16.msra.mxu0 0
    %2939 = vmatprep.subr.bf16.mxu0 0
    %2940 = vmatpush1.bf16.msra.mxu0 0
    %2941 = vmatprep.subr.bf16.mxu0 0
    %2942 = vmatpush1.bf16.msra.mxu0 0
    %2943 = vmatprep.subr.bf16.mxu0 0
    %2944 = vmatpush1.bf16.msra.mxu0 0
    %2945 = vmatprep.subr.bf16.mxu0 0
    %2946 = vmatpush1.bf16.msra.mxu0 0
    %2947 = vmatprep.subr.bf16.mxu0 0
    %2948 = vmatpush1.bf16.msra.mxu0 0
    %2949 = vmatprep.subr.bf16.mxu0 0
    %2950 = vmatpush1.bf16.msra.mxu0 0
    %2951 = vmatprep.subr.bf16.mxu0 0
    %2952 = vmatpush1.bf16.msra.mxu0 0
    %2953 = vmatprep.subr.bf16.mxu0 0
    %2954 = vmatpush1.bf16.msra.mxu0 0
    %2955 = vmatprep.subr.bf16.mxu0 0
    %2956 = vmatpush1.bf16.msra.mxu0 0
    %2957 = vmatprep.subr.bf16.mxu0 0
    %2958 = vmatpush1.bf16.msra.mxu0 0
    %2959 = vmatprep.mubr.bf16.mxu0 0
    %2960 = vmatmul.mubr.bf16.gmra.mrb[0].mxu0 %v2919
    %v2961 = vpop.f32.mrb[0].mxu0
    %v2962 = vadd.f32 %v2912, %v2961
    %v2963 = vpop.f32.mrb[0].mxu0
    %v2964 = vadd.f32 %v2914, %v2963
    %v2965 = vpop.f32.mrb[0].mxu0
    %v2966 = vpop.f32.mrb[0].mxu0
    %2967 = vdwg.mxu0
    %s2968 = scalar_lea.vmem [#allocation7], 2
    %v2969 = vld [vmem:[%s2968] sm:$0x1]
    %v2971 = vsel %vm2866, %v2969, 0
    %v2974 = vsel %vm2870, %v2859, 0
    %v2977 = vsel %vm2870, %v2860, 0
    %2979 = vmatprep.subr.bf16.mxu0 %v2977
    %2980 = vmatpush1.bf16.msra.mxu0 %v2974
    %2981 = vmatprep.subr.bf16.mxu0 0
    %2982 = vmatpush1.bf16.msra.mxu0 0
    %2983 = vmatprep.subr.bf16.mxu0 0
    %2984 = vmatpush1.bf16.msra.mxu0 0
    %2985 = vmatprep.subr.bf16.mxu0 0
    %2986 = vmatpush1.bf16.msra.mxu0 0
    %2987 = vmatprep.subr.bf16.mxu0 0
    %2988 = vmatpush1.bf16.msra.mxu0 0
    %2989 = vmatprep.subr.bf16.mxu0 0
    %2990 = vmatpush1.bf16.msra.mxu0 0
    %2991 = vmatprep.subr.bf16.mxu0 0
    %2992 = vmatpush1.bf16.msra.mxu0 0
    %2993 = vmatprep.subr.bf16.mxu0 0
    %2994 = vmatpush1.bf16.msra.mxu0 0
    %2995 = vmatprep.subr.bf16.mxu0 0
    %2996 = vmatpush1.bf16.msra.mxu0 0
    %2997 = vmatprep.subr.bf16.mxu0 0
    %2998 = vmatpush1.bf16.msra.mxu0 0
    %2999 = vmatprep.subr.bf16.mxu0 0
    %3000 = vmatpush1.bf16.msra.mxu0 0
    %3001 = vmatprep.subr.bf16.mxu0 0
    %3002 = vmatpush1.bf16.msra.mxu0 0
    %3003 = vmatprep.subr.bf16.mxu0 0
    %3004 = vmatpush1.bf16.msra.mxu0 0
    %3005 = vmatprep.subr.bf16.mxu0 0
    %3006 = vmatpush1.bf16.msra.mxu0 0
    %3007 = vmatprep.subr.bf16.mxu0 0
    %3008 = vmatpush1.bf16.msra.mxu0 0
    %3009 = vmatprep.subr.bf16.mxu0 0
    %3010 = vmatpush1.bf16.msra.mxu0 0
    %3011 = vmatprep.mubr.bf16.mxu0 0
    %3012 = vmatmul.mubr.bf16.gmra.mrb[0].mxu0 %v2971
    %v3013 = vpop.f32.mrb[0].mxu0
    %v3014 = vadd.f32 0.0, %v3013
    %v3015 = vpop.f32.mrb[0].mxu0
    %v3016 = vadd.f32 0.0, %v3015
    %v3017 = vpop.f32.mrb[0].mxu0
    %v3018 = vpop.f32.mrb[0].mxu0
    %3019 = vdwg.mxu0
    %v3020 = vadd.f32 %v2962, %v3014
    %v3021 = vadd.f32 %v2964, %v3016
    %s3022 = scalar_lea.vmem [#allocation7], 3
    %v3023 = vld [vmem:[%s3022] sm:$0x1]
    %v3025 = vsel %vm2866, %v3023, 0
    %v3028 = vsel %vm2870, %v2861, 0
    %v3031 = vsel %vm2870, %v2862, 0
    %3033 = vmatprep.subr.bf16.mxu0 %v3031
    %3034 = vmatpush1.bf16.msra.mxu0 %v3028
    %3035 = vmatprep.subr.bf16.mxu0 0
    %3036 = vmatpush1.bf16.msra.mxu0 0
    %3037 = vmatprep.subr.bf16.mxu0 0
    %3038 = vmatpush1.bf16.msra.mxu0 0
    %3039 = vmatprep.subr.bf16.mxu0 0
    %3040 = vmatpush1.bf16.msra.mxu0 0
    %3041 = vmatprep.subr.bf16.mxu0 0
    %3042 = vmatpush1.bf16.msra.mxu0 0
    %3043 = vmatprep.subr.bf16.mxu0 0
    %3044 = vmatpush1.bf16.msra.mxu0 0
    %3045 = vmatprep.subr.bf16.mxu0 0
    %3046 = vmatpush1.bf16.msra.mxu0 0
    %3047 = vmatprep.subr.bf16.mxu0 0
    %3048 = vmatpush1.bf16.msra.mxu0 0
    %3049 = vmatprep.subr.bf16.mxu0 0
    %3050 = vmatpush1.bf16.msra.mxu0 0
    %3051 = vmatprep.subr.bf16.mxu0 0
    %3052 = vmatpush1.bf16.msra.mxu0 0
    %3053 = vmatprep.subr.bf16.mxu0 0
    %3054 = vmatpush1.bf16.msra.mxu0 0
    %3055 = vmatprep.subr.bf16.mxu0 0
    %3056 = vmatpush1.bf16.msra.mxu0 0
    %3057 = vmatprep.subr.bf16.mxu0 0
    %3058 = vmatpush1.bf16.msra.mxu0 0
    %3059 = vmatprep.subr.bf16.mxu0 0
    %3060 = vmatpush1.bf16.msra.mxu0 0
    %3061 = vmatprep.subr.bf16.mxu0 0
    %3062 = vmatpush1.bf16.msra.mxu0 0
    %3063 = vmatprep.subr.bf16.mxu0 0
    %3064 = vmatpush1.bf16.msra.mxu0 0
    %3065 = vmatprep.mubr.bf16.mxu0 0
    %3066 = vmatmul.mubr.bf16.gmra.mrb[0].mxu0 %v3025
    %v3067 = vpop.f32.mrb[0].mxu0
    %v3068 = vadd.f32 0.0, %v3067
    %v3069 = vpop.f32.mrb[0].mxu0
    %v3070 = vadd.f32 0.0, %v3069
    %v3071 = vpop.f32.mrb[0].mxu0
    %v3072 = vpop.f32.mrb[0].mxu0
    %3073 = vdwg.mxu0
    %v3074 = vadd.f32 %v3020, %v3068
    %v3075 = vadd.f32 %v3021, %v3070
    %v3076 = vld [vmem:[#allocation9] sm:$0x3]
    %v3078 = vlaneseq
    %v3079 = vshrl.u32 %v3078, 7
    %v3080 = vsub.s32 0, %v3079
    %v3081 = vrot.slane %v3076, %v3080
    %v3082 = vlaneseq
    %v3083 = vshrl.u32 %v3082, 7
    %v3084 = vsub.s32 1, %v3083
    %v3085 = vrot.slane %v3076, %v3084
    %v3088 = vadd.f32 %v3074, %v3081
    %v3089 = vadd.f32 %v3075, %v3085
    %v3090 = vmax.f32 %v3088, 0.0
    %v3091 = vmax.f32 %v3089, 0.0
    %v3092 = vpack.c.bf16 %v3090, %v3090
    %v3093 = vpack.c.bf16 %v3091, %v3091
    %v3094 = vld [vmem:[%s13] sm:$0xf]
    %v3095 = vld [vmem:[%s13 + $0x4] sm:$0xf]
    %v3096 = vld [vmem:[%s13 + $0x8] sm:$0xf]
    %v3097 = vld [vmem:[%s13 + $0xc] sm:$0xf]
    %v3098 = vld [vmem:[%s13 + $0x10] sm:$0xf]
    %v3099 = vld [vmem:[%s13 + $0x14] sm:$0xf]
    %v3100 = vld [vmem:[%s13 + $0x18] sm:$0xf]
    %v3101 = vld [vmem:[%s13 + $0x1c] sm:$0xf]
    %v3102 = vld [vmem:[%s13 + $0x20] sm:$0xf]
    %v3103 = vld [vmem:[%s13 + $0x24] sm:$0xf]
    %v3104 = vld [vmem:[%s13 + $0x28] sm:$0xf]
    %v3105 = vld [vmem:[%s13 + $0x2c] sm:$0xf]
    %v3106 = vld [vmem:[%s13 + $0x30] sm:$0xf]
    %v3107 = vld [vmem:[%s13 + $0x34] sm:$0xf]
    %v3108 = vld [vmem:[%s13 + $0x38] sm:$0xf]
    %v3109 = vld [vmem:[%s13 + $0x3c] sm:$0xf]
    %v3110 = vld [vmem:[%s13 + $0x40] sm:$0xf]
    %v3111 = vld [vmem:[%s13 + $0x44] sm:$0xf]
    %v3112 = vld [vmem:[%s13 + $0x48] sm:$0xf]
    %v3113 = vld [vmem:[%s13 + $0x4c] sm:$0xf]
    %v3114 = vld [vmem:[%s13 + $0x50] sm:$0xf]
    %v3115 = vld [vmem:[%s13 + $0x54] sm:$0xf]
    %v3116 = vld [vmem:[%s13 + $0x58] sm:$0xf]
    %v3117 = vld [vmem:[%s13 + $0x5c] sm:$0xf]
    %v3118 = vld [vmem:[%s13 + $0x60] sm:$0xf]
    %v3119 = vld [vmem:[%s13 + $0x64] sm:$0xf]
    %v3120 = vld [vmem:[%s13 + $0x68] sm:$0xf]
    %v3121 = vld [vmem:[%s13 + $0x6c] sm:$0xf]
    %v3122 = vld [vmem:[%s13 + $0x70] sm:$0xf]
    %v3123 = vld [vmem:[%s13 + $0x74] sm:$0xf]
    %v3124 = vld [vmem:[%s13 + $0x78] sm:$0xf]
    %v3125 = vld [vmem:[%s13 + $0x7c] sm:$0xf]
    %v3126 = vld [vmem:[#allocation10] sm:$0x1]
    %v3128 = vlaneseq
    %v3129 = vshrl.u32 %v3128, 7
    %v3130 = vsub.s32 0, %v3129
    %v3131 = vrot.slane %v3126, %v3130
    %v3165 = vunpack.c.l.b16 %v3094
    %v3166 = vunpack.c.l.b16 %v3095
    %v3167 = vunpack.c.l.b16 %v3096
    %v3168 = vunpack.c.l.b16 %v3097
    %v3169 = vunpack.c.l.b16 %v3098
    %v3170 = vunpack.c.l.b16 %v3099
    %v3171 = vunpack.c.l.b16 %v3100
    %v3172 = vunpack.c.l.b16 %v3101
    %v3173 = vunpack.c.l.b16 %v3102
    %v3174 = vunpack.c.l.b16 %v3103
    %v3175 = vunpack.c.l.b16 %v3104
    %v3176 = vunpack.c.l.b16 %v3105
    %v3177 = vunpack.c.l.b16 %v3106
    %v3178 = vunpack.c.l.b16 %v3107
    %v3179 = vunpack.c.l.b16 %v3108
    %v3180 = vunpack.c.l.b16 %v3109
    %v3181 = vunpack.c.l.b16 %v3110
    %v3182 = vunpack.c.l.b16 %v3111
    %v3183 = vunpack.c.l.b16 %v3112
    %v3184 = vunpack.c.l.b16 %v3113
    %v3185 = vunpack.c.l.b16 %v3114
    %v3186 = vunpack.c.l.b16 %v3115
    %v3187 = vunpack.c.l.b16 %v3116
    %v3188 = vunpack.c.l.b16 %v3117
    %v3189 = vunpack.c.l.b16 %v3118
    %v3190 = vunpack.c.l.b16 %v3119
    %v3191 = vunpack.c.l.b16 %v3120
    %v3192 = vunpack.c.l.b16 %v3121
    %v3193 = vunpack.c.l.b16 %v3122
    %v3194 = vunpack.c.l.b16 %v3123
    %v3195 = vunpack.c.l.b16 %v3124
    %v3196 = vunpack.c.l.b16 %v3125
    %v3197 = vpack.c.b16 %v3166, %v3165
    %v3198 = vpack.c.b16 %v3168, %v3167
    %v3199 = vpack.c.b16 %v3170, %v3169
    %v3200 = vpack.c.b16 %v3172, %v3171
    %v3201 = vpack.c.b16 %v3174, %v3173
    %v3202 = vpack.c.b16 %v3176, %v3175
    %v3203 = vpack.c.b16 %v3178, %v3177
    %v3204 = vpack.c.b16 %v3180, %v3179
    %v3205 = vpack.c.b16 %v3182, %v3181
    %v3206 = vpack.c.b16 %v3184, %v3183
    %v3207 = vpack.c.b16 %v3186, %v3185
    %v3208 = vpack.c.b16 %v3188, %v3187
    %v3209 = vpack.c.b16 %v3190, %v3189
    %v3210 = vpack.c.b16 %v3192, %v3191
    %v3211 = vpack.c.b16 %v3194, %v3193
    %v3212 = vpack.c.b16 %v3196, %v3195
    %3229 = vmatprep.subr.bf16.mxu0 0
    %3230 = vmatpush1.bf16.msra.mxu0 %v3197
    %3231 = vmatprep.subr.bf16.mxu0 0
    %3232 = vmatpush1.bf16.msra.mxu0 %v3198
    %3233 = vmatprep.subr.bf16.mxu0 0
    %3234 = vmatpush1.bf16.msra.mxu0 %v3199
    %3235 = vmatprep.subr.bf16.mxu0 0
    %3236 = vmatpush1.bf16.msra.mxu0 %v3200
    %3237 = vmatprep.subr.bf16.mxu0 0
    %3238 = vmatpush1.bf16.msra.mxu0 %v3201
    %3239 = vmatprep.subr.bf16.mxu0 0
    %3240 = vmatpush1.bf16.msra.mxu0 %v3202
    %3241 = vmatprep.subr.bf16.mxu0 0
    %3242 = vmatpush1.bf16.msra.mxu0 %v3203
    %3243 = vmatprep.subr.bf16.mxu0 0
    %3244 = vmatpush1.bf16.msra.mxu0 %v3204
    %3245 = vmatprep.subr.bf16.mxu0 0
    %3246 = vmatpush1.bf16.msra.mxu0 %v3205
    %3247 = vmatprep.subr.bf16.mxu0 0
    %3248 = vmatpush1.bf16.msra.mxu0 %v3206
    %3249 = vmatprep.subr.bf16.mxu0 0
    %3250 = vmatpush1.bf16.msra.mxu0 %v3207
    %3251 = vmatprep.subr.bf16.mxu0 0
    %3252 = vmatpush1.bf16.msra.mxu0 %v3208
    %3253 = vmatprep.subr.bf16.mxu0 0
    %3254 = vmatpush1.bf16.msra.mxu0 %v3209
    %3255 = vmatprep.subr.bf16.mxu0 0
    %3256 = vmatpush1.bf16.msra.mxu0 %v3210
    %3257 = vmatprep.subr.bf16.mxu0 0
    %3258 = vmatpush1.bf16.msra.mxu0 %v3211
    %3259 = vmatprep.subr.bf16.mxu0 0
    %3260 = vmatpush1.bf16.msra.mxu0 %v3212
    %3261 = vmatprep.mubr.bf16.mxu0 %v3093
    %3262 = vmatmul.mubr.bf16.gmra.mrb[0].mxu0 %v3092
    %v3263 = vpop.f32.mrb[0].mxu0
    %v3264 = vadd.f32 %v3131, %v3263
    %v3265 = vpop.f32.mrb[0].mxu0
    %v3266 = vpop.f32.mrb[0].mxu0
    %v3267 = vpop.f32.mrb[0].mxu0
    %3268 = vdwg.mxu0
    %vm3269 = vcmask 517120
    %3270 = vst.msk [vmem:[%s28] sm:$0x3] %vm3269, %v3264
    %v3271 = vld [vmem:[%s1] sm:$0x3]
    %v3272 = vmul.f32 %v3264, 0.5
    %v3273 = vmul.f32 %v3272, 1.442695
    %v3274 = vpow.pop %v3273
    %3276 = vrot.lane.b32.xlu0 %v3274, 96
    %v3277 = vpop.permute.xlu0 %3276
    %v3279 = vmul.f32 %v3271, %v3277
    %v3280 = vadd.f32 %v3264, %v3279
    %v3281 = vpack.c.bf16 %v3280, %v3280
    %v3282 = vld [vmem:[%s15] sm:$0xff]
    %v3283 = vld [vmem:[%s15 + $0x8] sm:$0xff]
    %v3284 = vld [vmem:[%s15 + $0x10] sm:$0xff]
    %v3285 = vld [vmem:[%s15 + $0x18] sm:$0xff]
    %v3286 = vld [vmem:[%s15 + $0x20] sm:$0xff]
    %v3287 = vld [vmem:[%s15 + $0x28] sm:$0xff]
    %v3288 = vld [vmem:[%s15 + $0x30] sm:$0xff]
    %v3289 = vld [vmem:[%s15 + $0x38] sm:$0xff]
    %v3298 = vunpack.c.l.b16 %v3282
    %v3299 = vunpack.c.h.b16 %v3282
    %v3300 = vunpack.c.l.b16 %v3283
    %v3301 = vunpack.c.h.b16 %v3283
    %v3302 = vunpack.c.l.b16 %v3284
    %v3303 = vunpack.c.h.b16 %v3284
    %v3304 = vunpack.c.l.b16 %v3285
    %v3305 = vunpack.c.h.b16 %v3285
    %v3306 = vunpack.c.l.b16 %v3286
    %v3307 = vunpack.c.h.b16 %v3286
    %v3308 = vunpack.c.l.b16 %v3287
    %v3309 = vunpack.c.h.b16 %v3287
    %v3310 = vunpack.c.l.b16 %v3288
    %v3311 = vunpack.c.h.b16 %v3288
    %v3312 = vunpack.c.l.b16 %v3289
    %v3313 = vunpack.c.h.b16 %v3289
    %v3314 = vpack.c.b16 %v3302, %v3298
    %v3315 = vpack.c.b16 %v3303, %v3299
    %v3316 = vpack.c.b16 %v3304, %v3300
    %v3317 = vpack.c.b16 %v3305, %v3301
    %v3318 = vpack.c.b16 %v3310, %v3306
    %v3319 = vpack.c.b16 %v3311, %v3307
    %v3320 = vpack.c.b16 %v3312, %v3308
    %v3321 = vpack.c.b16 %v3313, %v3309
    %v3331 = vsel %vm802, %v3281, 0
    %3333 = vmatprep.subr.bf16.mxu0 %v3315
    %3334 = vmatpush1.bf16.msra.mxu0 %v3314
    %3335 = vmatprep.subr.bf16.mxu0 %v3319
    %3336 = vmatpush1.bf16.msra.mxu0 %v3318
    %3337 = vmatprep.subr.bf16.mxu0 0
    %3338 = vmatpush1.bf16.msra.mxu0 0
    %3339 = vmatprep.subr.bf16.mxu0 0
    %3340 = vmatpush1.bf16.msra.mxu0 0
    %3341 = vmatprep.subr.bf16.mxu0 0
    %3342 = vmatpush1.bf16.msra.mxu0 0
    %3343 = vmatprep.subr.bf16.mxu0 0
    %3344 = vmatpush1.bf16.msra.mxu0 0
    %3345 = vmatprep.subr.bf16.mxu0 0
    %3346 = vmatpush1.bf16.msra.mxu0 0
    %3347 = vmatprep.subr.bf16.mxu0 0
    %3348 = vmatpush1.bf16.msra.mxu0 0
    %3349 = vmatprep.subr.bf16.mxu0 0
    %3350 = vmatpush1.bf16.msra.mxu0 0
    %3351 = vmatprep.subr.bf16.mxu0 0
    %3352 = vmatpush1.bf16.msra.mxu0 0
    %3353 = vmatprep.subr.bf16.mxu0 0
    %3354 = vmatpush1.bf16.msra.mxu0 0
    %3355 = vmatprep.subr.bf16.mxu0 0
    %3356 = vmatpush1.bf16.msra.mxu0 0
    %3357 = vmatprep.subr.bf16.mxu0 0
    %3358 = vmatpush1.bf16.msra.mxu0 0
    %3359 = vmatprep.subr.bf16.mxu0 0
    %3360 = vmatpush1.bf16.msra.mxu0 0
    %3361 = vmatprep.subr.bf16.mxu0 0
    %3362 = vmatpush1.bf16.msra.mxu0 0
    %3363 = vmatprep.subr.bf16.mxu0 0
    %3364 = vmatpush1.bf16.msra.mxu0 0
    %3365 = vmatprep.mubr.bf16.mxu0 0
    %3366 = vmatmul.mubr.bf16.gmra.mrb[0].mxu0 %v3331
    %v3367 = vpop.f32.mrb[0].mxu0
    %v3368 = vadd.f32 0.0, %v3367
    %v3369 = vpop.f32.mrb[0].mxu0
    %v3370 = vadd.f32 0.0, %v3369
    %v3371 = vpop.f32.mrb[0].mxu0
    %v3372 = vpop.f32.mrb[0].mxu0
    %3373 = vdwg.mxu0
    %3374 = vmatprep.subr.bf16.mxu0 %v3317
    %3375 = vmatpush1.bf16.msra.mxu0 %v3316
    %3376 = vmatprep.subr.bf16.mxu0 %v3321
    %3377 = vmatpush1.bf16.msra.mxu0 %v3320
    %3378 = vmatprep.subr.bf16.mxu0 0
    %3379 = vmatpush1.bf16.msra.mxu0 0
    %3380 = vmatprep.subr.bf16.mxu0 0
    %3381 = vmatpush1.bf16.msra.mxu0 0
    %3382 = vmatprep.subr.bf16.mxu0 0
    %3383 = vmatpush1.bf16.msra.mxu0 0
    %3384 = vmatprep.subr.bf16.mxu0 0
    %3385 = vmatpush1.bf16.msra.mxu0 0
    %3386 = vmatprep.subr.bf16.mxu0 0
    %3387 = vmatpush1.bf16.msra.mxu0 0
    %3388 = vmatprep.subr.bf16.mxu0 0
    %3389 = vmatpush1.bf16.msra.mxu0 0
    %3390 = vmatprep.subr.bf16.mxu0 0
    %3391 = vmatpush1.bf16.msra.mxu0 0
    %3392 = vmatprep.subr.bf16.mxu0 0
    %3393 = vmatpush1.bf16.msra.mxu0 0
    %3394 = vmatprep.subr.bf16.mxu0 0
    %3395 = vmatpush1.bf16.msra.mxu0 0
    %3396 = vmatprep.subr.bf16.mxu0 0
    %3397 = vmatpush1.bf16.msra.mxu0 0
    %3398 = vmatprep.subr.bf16.mxu0 0
    %3399 = vmatpush1.bf16.msra.mxu0 0
    %3400 = vmatprep.subr.bf16.mxu0 0
    %3401 = vmatpush1.bf16.msra.mxu0 0
    %3402 = vmatprep.subr.bf16.mxu0 0
    %3403 = vmatpush1.bf16.msra.mxu0 0
    %3404 = vmatprep.subr.bf16.mxu0 0
    %3405 = vmatpush1.bf16.msra.mxu0 0
    %3406 = vmatprep.mubr.bf16.mxu0 0
    %3407 = vmatmul.mubr.bf16.gmra.mrb[0].mxu0 %v3331
    %v3408 = vpop.f32.mrb[0].mxu0
    %v3409 = vadd.f32 0.0, %v3408
    %v3410 = vpop.f32.mrb[0].mxu0
    %v3411 = vadd.f32 0.0, %v3410
    %v3412 = vpop.f32.mrb[0].mxu0
    %v3413 = vpop.f32.mrb[0].mxu0
    %3414 = vdwg.mxu0
    %v3415 = vpack.c.bf16 %v3368, %v3368
    %v3416 = vpack.c.bf16 %v3370, %v3370
    %v3417 = vpack.c.bf16 %v3409, %v3409
    %v3418 = vpack.c.bf16 %v3411, %v3411
    %v3419 = vld [vmem:[%s16] sm:$0xf]
    %s3420 = scalar_lea.vmem %s16, 4
    %v3421 = vld [vmem:[%s3420] sm:$0xf]
    %vm3422 = vcmask 15360
    %v3424 = vsel %vm3422, %v3421, 0
    %vm3426 = vcmask 1040384
    %v3428 = vsel %vm3426, %v3416, 0
    %3430 = vmatprep.subr.bf16.mxu0 0
    %3431 = vmatpush1.bf16.msra.mxu0 %v3428
    %3432 = vmatprep.subr.bf16.mxu0 0
    %3433 = vmatpush1.bf16.msra.mxu0 0
    %3434 = vmatprep.subr.bf16.mxu0 0
    %3435 = vmatpush1.bf16.msra.mxu0 0
    %3436 = vmatprep.subr.bf16.mxu0 0
    %3437 = vmatpush1.bf16.msra.mxu0 0
    %3438 = vmatprep.subr.bf16.mxu0 0
    %3439 = vmatpush1.bf16.msra.mxu0 0
    %3440 = vmatprep.subr.bf16.mxu0 0
    %3441 = vmatpush1.bf16.msra.mxu0 0
    %3442 = vmatprep.subr.bf16.mxu0 0
    %3443 = vmatpush1.bf16.msra.mxu0 0
    %3444 = vmatprep.subr.bf16.mxu0 0
    %3445 = vmatpush1.bf16.msra.mxu0 0
    %3446 = vmatprep.subr.bf16.mxu0 0
    %3447 = vmatpush1.bf16.msra.mxu0 0
    %3448 = vmatprep.subr.bf16.mxu0 0
    %3449 = vmatpush1.bf16.msra.mxu0 0
    %3450 = vmatprep.subr.bf16.mxu0 0
    %3451 = vmatpush1.bf16.msra.mxu0 0
    %3452 = vmatprep.subr.bf16.mxu0 0
    %3453 = vmatpush1.bf16.msra.mxu0 0
    %3454 = vmatprep.subr.bf16.mxu0 0
    %3455 = vmatpush1.bf16.msra.mxu0 0
    %3456 = vmatprep.subr.bf16.mxu0 0
    %3457 = vmatpush1.bf16.msra.mxu0 0
    %3458 = vmatprep.subr.bf16.mxu0 0
    %3459 = vmatpush1.bf16.msra.mxu0 0
    %3460 = vmatprep.subr.bf16.mxu0 0
    %3461 = vmatpush1.bf16.msra.mxu0 0
    %3462 = vmatprep.mubr.bf16.mxu0 0
    %3463 = vmatmul.mubr.bf16.gmra.mrb[0].mxu0 %v3424
    %v3464 = vpop.f32.mrb[0].mxu0
    %v3465 = vadd.f32 0.0, %v3464
    %v3466 = vpop.f32.mrb[0].mxu0
    %v3467 = vpop.f32.mrb[0].mxu0
    %v3468 = vpop.f32.mrb[0].mxu0
    %3469 = vdwg.mxu0
    %v3471 = vsel %vm3422, %v3419, 0
    %v3474 = vsel %vm3426, %v3415, 0
    %3476 = vmatprep.subr.bf16.mxu0 0
    %3477 = vmatpush1.bf16.msra.mxu0 %v3474
    %3478 = vmatprep.subr.bf16.mxu0 0
    %3479 = vmatpush1.bf16.msra.mxu0 0
    %3480 = vmatprep.subr.bf16.mxu0 0
    %3481 = vmatpush1.bf16.msra.mxu0 0
    %3482 = vmatprep.subr.bf16.mxu0 0
    %3483 = vmatpush1.bf16.msra.mxu0 0
    %3484 = vmatprep.subr.bf16.mxu0 0
    %3485 = vmatpush1.bf16.msra.mxu0 0
    %3486 = vmatprep.subr.bf16.mxu0 0
    %3487 = vmatpush1.bf16.msra.mxu0 0
    %3488 = vmatprep.subr.bf16.mxu0 0
    %3489 = vmatpush1.bf16.msra.mxu0 0
    %3490 = vmatprep.subr.bf16.mxu0 0
    %3491 = vmatpush1.bf16.msra.mxu0 0
    %3492 = vmatprep.subr.bf16.mxu0 0
    %3493 = vmatpush1.bf16.msra.mxu0 0
    %3494 = vmatprep.subr.bf16.mxu0 0
    %3495 = vmatpush1.bf16.msra.mxu0 0
    %3496 = vmatprep.subr.bf16.mxu0 0
    %3497 = vmatpush1.bf16.msra.mxu0 0
    %3498 = vmatprep.subr.bf16.mxu0 0
    %3499 = vmatpush1.bf16.msra.mxu0 0
    %3500 = vmatprep.subr.bf16.mxu0 0
    %3501 = vmatpush1.bf16.msra.mxu0 0
    %3502 = vmatprep.subr.bf16.mxu0 0
    %3503 = vmatpush1.bf16.msra.mxu0 0
    %3504 = vmatprep.subr.bf16.mxu0 0
    %3505 = vmatpush1.bf16.msra.mxu0 0
    %3506 = vmatprep.subr.bf16.mxu0 0
    %3507 = vmatpush1.bf16.msra.mxu0 0
    %3508 = vmatprep.mubr.bf16.mxu0 0
    %3509 = vmatmul.mubr.bf16.gmra.mrb[0].mxu0 %v3471
    %v3510 = vpop.f32.mrb[0].mxu0
    %v3511 = vadd.f32 %v3465, %v3510
    %v3512 = vpop.f32.mrb[0].mxu0
    %v3513 = vpop.f32.mrb[0].mxu0
    %v3514 = vpop.f32.mrb[0].mxu0
    %3515 = vdwg.mxu0
    %s3516 = scalar_lea.vmem %s16, 8
    %v3517 = vld [vmem:[%s3516] sm:$0xf]
    %v3519 = vsel %vm3422, %v3517, 0
    %v3522 = vsel %vm3426, %v3417, 0
    %3524 = vmatprep.subr.bf16.mxu0 0
    %3525 = vmatpush1.bf16.msra.mxu0 %v3522
    %3526 = vmatprep.subr.bf16.mxu0 0
    %3527 = vmatpush1.bf16.msra.mxu0 0
    %3528 = vmatprep.subr.bf16.mxu0 0
    %3529 = vmatpush1.bf16.msra.mxu0 0
    %3530 = vmatprep.subr.bf16.mxu0 0
    %3531 = vmatpush1.bf16.msra.mxu0 0
    %3532 = vmatprep.subr.bf16.mxu0 0
    %3533 = vmatpush1.bf16.msra.mxu0 0
    %3534 = vmatprep.subr.bf16.mxu0 0
    %3535 = vmatpush1.bf16.msra.mxu0 0
    %3536 = vmatprep.subr.bf16.mxu0 0
    %3537 = vmatpush1.bf16.msra.mxu0 0
    %3538 = vmatprep.subr.bf16.mxu0 0
    %3539 = vmatpush1.bf16.msra.mxu0 0
    %3540 = vmatprep.subr.bf16.mxu0 0
    %3541 = vmatpush1.bf16.msra.mxu0 0
    %3542 = vmatprep.subr.bf16.mxu0 0
    %3543 = vmatpush1.bf16.msra.mxu0 0
    %3544 = vmatprep.subr.bf16.mxu0 0
    %3545 = vmatpush1.bf16.msra.mxu0 0
    %3546 = vmatprep.subr.bf16.mxu0 0
    %3547 = vmatpush1.bf16.msra.mxu0 0
    %3548 = vmatprep.subr.bf16.mxu0 0
    %3549 = vmatpush1.bf16.msra.mxu0 0
    %3550 = vmatprep.subr.bf16.mxu0 0
    %3551 = vmatpush1.bf16.msra.mxu0 0
    %3552 = vmatprep.subr.bf16.mxu0 0
    %3553 = vmatpush1.bf16.msra.mxu0 0
    %3554 = vmatprep.subr.bf16.mxu0 0
    %3555 = vmatpush1.bf16.msra.mxu0 0
    %3556 = vmatprep.mubr.bf16.mxu0 0
    %3557 = vmatmul.mubr.bf16.gmra.mrb[0].mxu0 %v3519
    %v3558 = vpop.f32.mrb[0].mxu0
    %v3559 = vadd.f32 0.0, %v3558
    %v3560 = vpop.f32.mrb[0].mxu0
    %v3561 = vpop.f32.mrb[0].mxu0
    %v3562 = vpop.f32.mrb[0].mxu0
    %3563 = vdwg.mxu0
    %v3564 = vadd.f32 %v3511, %v3559
    %s3565 = scalar_lea.vmem %s16, 12
    %v3566 = vld [vmem:[%s3565] sm:$0xf]
    %v3568 = vsel %vm3422, %v3566, 0
    %v3571 = vsel %vm3426, %v3418, 0
    %3573 = vmatprep.subr.bf16.mxu0 0
    %3574 = vmatpush1.bf16.msra.mxu0 %v3571
    %3575 = vmatprep.subr.bf16.mxu0 0
    %3576 = vmatpush1.bf16.msra.mxu0 0
    %3577 = vmatprep.subr.bf16.mxu0 0
    %3578 = vmatpush1.bf16.msra.mxu0 0
    %3579 = vmatprep.subr.bf16.mxu0 0
    %3580 = vmatpush1.bf16.msra.mxu0 0
    %3581 = vmatprep.subr.bf16.mxu0 0
    %3582 = vmatpush1.bf16.msra.mxu0 0
    %3583 = vmatprep.subr.bf16.mxu0 0
    %3584 = vmatpush1.bf16.msra.mxu0 0
    %3585 = vmatprep.subr.bf16.mxu0 0
    %3586 = vmatpush1.bf16.msra.mxu0 0
    %3587 = vmatprep.subr.bf16.mxu0 0
    %3588 = vmatpush1.bf16.msra.mxu0 0
    %3589 = vmatprep.subr.bf16.mxu0 0
    %3590 = vmatpush1.bf16.msra.mxu0 0
    %3591 = vmatprep.subr.bf16.mxu0 0
    %3592 = vmatpush1.bf16.msra.mxu0 0
    %3593 = vmatprep.subr.bf16.mxu0 0
    %3594 = vmatpush1.bf16.msra.mxu0 0
    %3595 = vmatprep.subr.bf16.mxu0 0
    %3596 = vmatpush1.bf16.msra.mxu0 0
    %3597 = vmatprep.subr.bf16.mxu0 0
    %3598 = vmatpush1.bf16.msra.mxu0 0
    %3599 = vmatprep.subr.bf16.mxu0 0
    %3600 = vmatpush1.bf16.msra.mxu0 0
    %3601 = vmatprep.subr.bf16.mxu0 0
    %3602 = vmatpush1.bf16.msra.mxu0 0
    %3603 = vmatprep.subr.bf16.mxu0 0
    %3604 = vmatpush1.bf16.msra.mxu0 0
    %3605 = vmatprep.mubr.bf16.mxu0 0
    %3606 = vmatmul.mubr.bf16.gmra.mrb[0].mxu0 %v3568
    %v3607 = vpop.f32.mrb[0].mxu0
    %v3608 = vadd.f32 0.0, %v3607
    %v3609 = vpop.f32.mrb[0].mxu0
    %v3610 = vpop.f32.mrb[0].mxu0
    %v3611 = vpop.f32.mrb[0].mxu0
    %3612 = vdwg.mxu0
    %v3613 = vadd.f32 %v3564, %v3608
    %v3614 = vld [vmem:[#allocation12] sm:$0xff]
    %v3615 = vadd.f32 %v3613, %v3614
    %v3616 = vmax.f32 %v3615, 0.0
    %v3617 = vpack.c.bf16 %v3616, %v3616
    %v3618 = vld [vmem:[%s18] sm:$0xf]
    %v3619 = vld [vmem:[%s18 + $0x4] sm:$0xf]
    %v3620 = vld [vmem:[%s18 + $0x8] sm:$0xf]
    %v3621 = vld [vmem:[%s18 + $0xc] sm:$0xf]
    %v3622 = vld [vmem:[%s18 + $0x10] sm:$0xf]
    %v3623 = vld [vmem:[%s18 + $0x14] sm:$0xf]
    %v3624 = vld [vmem:[%s18 + $0x18] sm:$0xf]
    %v3625 = vld [vmem:[%s18 + $0x1c] sm:$0xf]
    %v3626 = vld [vmem:[%s18 + $0x20] sm:$0xf]
    %v3627 = vld [vmem:[%s18 + $0x24] sm:$0xf]
    %v3628 = vld [vmem:[%s18 + $0x28] sm:$0xf]
    %v3629 = vld [vmem:[%s18 + $0x2c] sm:$0xf]
    %v3630 = vld [vmem:[%s18 + $0x30] sm:$0xf]
    %v3631 = vld [vmem:[%s18 + $0x34] sm:$0xf]
    %v3632 = vld [vmem:[%s18 + $0x38] sm:$0xf]
    %v3633 = vld [vmem:[%s18 + $0x3c] sm:$0xf]
    %v3634 = vld [vmem:[%s18 + $0x40] sm:$0xf]
    %v3635 = vld [vmem:[%s18 + $0x44] sm:$0xf]
    %v3636 = vld [vmem:[%s18 + $0x48] sm:$0xf]
    %v3637 = vld [vmem:[%s18 + $0x4c] sm:$0xf]
    %v3638 = vld [vmem:[%s18 + $0x50] sm:$0xf]
    %v3639 = vld [vmem:[%s18 + $0x54] sm:$0xf]
    %v3640 = vld [vmem:[%s18 + $0x58] sm:$0xf]
    %v3641 = vld [vmem:[%s18 + $0x5c] sm:$0xf]
    %v3642 = vld [vmem:[%s18 + $0x60] sm:$0xf]
    %v3643 = vld [vmem:[%s18 + $0x64] sm:$0xf]
    %v3644 = vld [vmem:[%s18 + $0x68] sm:$0xf]
    %v3645 = vld [vmem:[%s18 + $0x6c] sm:$0xf]
    %v3646 = vld [vmem:[%s18 + $0x70] sm:$0xf]
    %v3647 = vld [vmem:[%s18 + $0x74] sm:$0xf]
    %v3648 = vld [vmem:[%s18 + $0x78] sm:$0xf]
    %v3649 = vld [vmem:[%s18 + $0x7c] sm:$0xf]
    %v3650 = vld [vmem:[%s18 + $0x80] sm:$0xf]
    %v3651 = vld [vmem:[%s18 + $0x84] sm:$0xf]
    %v3652 = vld [vmem:[%s18 + $0x88] sm:$0xf]
    %v3653 = vld [vmem:[%s18 + $0x8c] sm:$0xf]
    %v3690 = vunpack.c.l.b16 %v3618
    %v3691 = vunpack.c.l.b16 %v3619
    %v3692 = vunpack.c.l.b16 %v3620
    %v3693 = vunpack.c.l.b16 %v3621
    %v3694 = vunpack.c.l.b16 %v3622
    %v3695 = vunpack.c.l.b16 %v3623
    %v3696 = vunpack.c.l.b16 %v3624
    %v3697 = vunpack.c.l.b16 %v3625
    %v3698 = vunpack.c.l.b16 %v3626
    %v3699 = vunpack.c.l.b16 %v3627
    %v3700 = vunpack.c.l.b16 %v3628
    %v3701 = vunpack.c.l.b16 %v3629
    %v3702 = vunpack.c.l.b16 %v3630
    %v3703 = vunpack.c.l.b16 %v3631
    %v3704 = vunpack.c.l.b16 %v3632
    %v3705 = vunpack.c.l.b16 %v3633
    %v3706 = vunpack.c.l.b16 %v3634
    %v3707 = vunpack.c.l.b16 %v3635
    %v3708 = vunpack.c.l.b16 %v3636
    %v3709 = vunpack.c.l.b16 %v3637
    %v3710 = vunpack.c.l.b16 %v3638
    %v3711 = vunpack.c.l.b16 %v3639
    %v3712 = vunpack.c.l.b16 %v3640
    %v3713 = vunpack.c.l.b16 %v3641
    %v3714 = vunpack.c.l.b16 %v3642
    %v3715 = vunpack.c.l.b16 %v3643
    %v3716 = vunpack.c.l.b16 %v3644
    %v3717 = vunpack.c.l.b16 %v3645
    %v3718 = vunpack.c.l.b16 %v3646
    %v3719 = vunpack.c.l.b16 %v3647
    %v3720 = vunpack.c.l.b16 %v3648
    %v3721 = vunpack.c.l.b16 %v3649
    %v3722 = vunpack.c.l.b16 %v3650
    %v3723 = vunpack.c.l.b16 %v3651
    %v3724 = vunpack.c.l.b16 %v3652
    %v3725 = vunpack.c.l.b16 %v3653
    %v3726 = vpack.c.b16 %v3691, %v3690
    %v3727 = vpack.c.b16 %v3693, %v3692
    %v3728 = vpack.c.b16 %v3695, %v3694
    %v3729 = vpack.c.b16 %v3697, %v3696
    %v3730 = vpack.c.b16 %v3699, %v3698
    %v3731 = vpack.c.b16 %v3701, %v3700
    %v3732 = vpack.c.b16 %v3703, %v3702
    %v3733 = vpack.c.b16 %v3705, %v3704
    %v3734 = vpack.c.b16 %v3707, %v3706
    %v3735 = vpack.c.b16 %v3709, %v3708
    %v3736 = vpack.c.b16 %v3711, %v3710
    %v3737 = vpack.c.b16 %v3713, %v3712
    %v3738 = vpack.c.b16 %v3715, %v3714
    %v3739 = vpack.c.b16 %v3717, %v3716
    %v3740 = vpack.c.b16 %v3719, %v3718
    %v3741 = vpack.c.b16 %v3721, %v3720
    %v3742 = vpack.c.b16 %v3723, %v3722
    %v3743 = vpack.c.b16 %v3725, %v3724
    %v3745 = vsel %vm2866, %v3726, 0
    %v3748 = vsel %vm2866, %v3727, 0
    %v3751 = vsel %vm2866, %v3728, 0
    %v3754 = vsel %vm2866, %v3729, 0
    %v3757 = vsel %vm2866, %v3730, 0
    %v3760 = vsel %vm2866, %v3731, 0
    %v3763 = vsel %vm2866, %v3732, 0
    %v3766 = vsel %vm2866, %v3733, 0
    %v3769 = vsel %vm2866, %v3734, 0
    %v3772 = vsel %vm2866, %v3735, 0
    %v3775 = vsel %vm2866, %v3736, 0
    %v3778 = vsel %vm2866, %v3737, 0
    %v3781 = vsel %vm2866, %v3738, 0
    %v3784 = vsel %vm2866, %v3739, 0
    %v3787 = vsel %vm2866, %v3740, 0
    %v3790 = vsel %vm2866, %v3741, 0
    %v3793 = vsel %vm2866, %v3742, 0
    %v3796 = vsel %vm2866, %v3743, 0
    %v3799 = vsel %vm2870, %v3617, 0
    %3801 = vmatprep.subr.bf16.mxu0 0
    %3802 = vmatpush1.bf16.msra.mxu0 %v3799
    %3803 = vmatprep.subr.bf16.mxu0 0
    %3804 = vmatpush1.bf16.msra.mxu0 0
    %3805 = vmatprep.subr.bf16.mxu0 0
    %3806 = vmatpush1.bf16.msra.mxu0 0
    %3807 = vmatprep.subr.bf16.mxu0 0
    %3808 = vmatpush1.bf16.msra.mxu0 0
    %3809 = vmatprep.subr.bf16.mxu0 0
    %3810 = vmatpush1.bf16.msra.mxu0 0
    %3811 = vmatprep.subr.bf16.mxu0 0
    %3812 = vmatpush1.bf16.msra.mxu0 0
    %3813 = vmatprep.subr.bf16.mxu0 0
    %3814 = vmatpush1.bf16.msra.mxu0 0
    %3815 = vmatprep.subr.bf16.mxu0 0
    %3816 = vmatpush1.bf16.msra.mxu0 0
    %3817 = vmatprep.subr.bf16.mxu0 0
    %3818 = vmatpush1.bf16.msra.mxu0 0
    %3819 = vmatprep.subr.bf16.mxu0 0
    %3820 = vmatpush1.bf16.msra.mxu0 0
    %3821 = vmatprep.subr.bf16.mxu0 0
    %3822 = vmatpush1.bf16.msra.mxu0 0
    %3823 = vmatprep.subr.bf16.mxu0 0
    %3824 = vmatpush1.bf16.msra.mxu0 0
    %3825 = vmatprep.subr.bf16.mxu0 0
    %3826 = vmatpush1.bf16.msra.mxu0 0
    %3827 = vmatprep.subr.bf16.mxu0 0
    %3828 = vmatpush1.bf16.msra.mxu0 0
    %3829 = vmatprep.subr.bf16.mxu0 0
    %3830 = vmatpush1.bf16.msra.mxu0 0
    %3831 = vmatprep.subr.bf16.mxu0 0
    %3832 = vmatpush1.bf16.msra.mxu0 0
    %3833 = vmatprep.mubr.bf16.mxu0 0
    %3834 = vmatmul.mubr.bf16.gmra.mrb[0].mxu0 %v3745
    %v3835 = vpop.f32.mrb[0].mxu0
    %v3836 = vadd.f32 0.0, %v3835
    %v3837 = vpop.f32.mrb[0].mxu0
    %v3838 = vpop.f32.mrb[0].mxu0
    %v3839 = vadd.f32 0.0, %v3838
    %v3840 = vpop.f32.mrb[0].mxu0
    %3841 = vmatprep.mubr.bf16.mxu0 0
    %3842 = vmatmul.mubr.bf16.gmra.mrb[0].mxu0 %v3748
    %v3843 = vpop.f32.mrb[0].mxu0
    %v3844 = vadd.f32 0.0, %v3843
    %v3845 = vpop.f32.mrb[0].mxu0
    %v3846 = vpop.f32.mrb[0].mxu0
    %v3847 = vadd.f32 0.0, %v3846
    %v3848 = vpop.f32.mrb[0].mxu0
    %3849 = vmatprep.mubr.bf16.mxu0 0
    %3850 = vmatmul.mubr.bf16.gmra.mrb[0].mxu0 %v3751
    %v3851 = vpop.f32.mrb[0].mxu0
    %v3852 = vadd.f32 0.0, %v3851
    %v3853 = vpop.f32.mrb[0].mxu0
    %v3854 = vpop.f32.mrb[0].mxu0
    %v3855 = vadd.f32 0.0, %v3854
    %v3856 = vpop.f32.mrb[0].mxu0
    %3857 = vmatprep.mubr.bf16.mxu0 0
    %3858 = vmatmul.mubr.bf16.gmra.mrb[0].mxu0 %v3754
    %v3859 = vpop.f32.mrb[0].mxu0
    %v3860 = vadd.f32 0.0, %v3859
    %v3861 = vpop.f32.mrb[0].mxu0
    %v3862 = vpop.f32.mrb[0].mxu0
    %v3863 = vadd.f32 0.0, %v3862
    %v3864 = vpop.f32.mrb[0].mxu0
    %3865 = vmatprep.mubr.bf16.mxu0 0
    %3866 = vmatmul.mubr.bf16.gmra.mrb[0].mxu0 %v3757
    %v3867 = vpop.f32.mrb[0].mxu0
    %v3868 = vadd.f32 0.0, %v3867
    %v3869 = vpop.f32.mrb[0].mxu0
    %v3870 = vpop.f32.mrb[0].mxu0
    %v3871 = vadd.f32 0.0, %v3870
    %v3872 = vpop.f32.mrb[0].mxu0
    %3873 = vmatprep.mubr.bf16.mxu0 0
    %3874 = vmatmul.mubr.bf16.gmra.mrb[0].mxu0 %v3760
    %v3875 = vpop.f32.mrb[0].mxu0
    %v3876 = vadd.f32 0.0, %v3875
    %v3877 = vpop.f32.mrb[0].mxu0
    %v3878 = vpop.f32.mrb[0].mxu0
    %v3879 = vadd.f32 0.0, %v3878
    %v3880 = vpop.f32.mrb[0].mxu0
    %3881 = vmatprep.mubr.bf16.mxu0 0
    %3882 = vmatmul.mubr.bf16.gmra.mrb[0].mxu0 %v3763
    %v3883 = vpop.f32.mrb[0].mxu0
    %v3884 = vadd.f32 0.0, %v3883
    %v3885 = vpop.f32.mrb[0].mxu0
    %v3886 = vpop.f32.mrb[0].mxu0
    %v3887 = vadd.f32 0.0, %v3886
    %v3888 = vpop.f32.mrb[0].mxu0
    %3889 = vmatprep.mubr.bf16.mxu0 0
    %3890 = vmatmul.mubr.bf16.gmra.mrb[0].mxu0 %v3766
    %v3891 = vpop.f32.mrb[0].mxu0
    %v3892 = vadd.f32 0.0, %v3891
    %v3893 = vpop.f32.mrb[0].mxu0
    %v3894 = vpop.f32.mrb[0].mxu0
    %v3895 = vadd.f32 0.0, %v3894
    %v3896 = vpop.f32.mrb[0].mxu0
    %3897 = vmatprep.mubr.bf16.mxu0 0
    %3898 = vmatmul.mubr.bf16.gmra.mrb[0].mxu0 %v3769
    %v3899 = vpop.f32.mrb[0].mxu0
    %v3900 = vadd.f32 0.0, %v3899
    %v3901 = vpop.f32.mrb[0].mxu0
    %v3902 = vpop.f32.mrb[0].mxu0
    %v3903 = vadd.f32 0.0, %v3902
    %v3904 = vpop.f32.mrb[0].mxu0
    %3905 = vmatprep.mubr.bf16.mxu0 0
    %3906 = vmatmul.mubr.bf16.gmra.mrb[0].mxu0 %v3772
    %v3907 = vpop.f32.mrb[0].mxu0
    %v3908 = vadd.f32 0.0, %v3907
    %v3909 = vpop.f32.mrb[0].mxu0
    %v3910 = vpop.f32.mrb[0].mxu0
    %v3911 = vadd.f32 0.0, %v3910
    %v3912 = vpop.f32.mrb[0].mxu0
    %3913 = vmatprep.mubr.bf16.mxu0 0
    %3914 = vmatmul.mubr.bf16.gmra.mrb[0].mxu0 %v3775
    %v3915 = vpop.f32.mrb[0].mxu0
    %v3916 = vadd.f32 0.0, %v3915
    %v3917 = vpop.f32.mrb[0].mxu0
    %v3918 = vpop.f32.mrb[0].mxu0
    %v3919 = vadd.f32 0.0, %v3918
    %v3920 = vpop.f32.mrb[0].mxu0
    %3921 = vmatprep.mubr.bf16.mxu0 0
    %3922 = vmatmul.mubr.bf16.gmra.mrb[0].mxu0 %v3778
    %v3923 = vpop.f32.mrb[0].mxu0
    %v3924 = vadd.f32 0.0, %v3923
    %v3925 = vpop.f32.mrb[0].mxu0
    %v3926 = vpop.f32.mrb[0].mxu0
    %v3927 = vadd.f32 0.0, %v3926
    %v3928 = vpop.f32.mrb[0].mxu0
    %3929 = vmatprep.mubr.bf16.mxu0 0
    %3930 = vmatmul.mubr.bf16.gmra.mrb[0].mxu0 %v3781
    %v3931 = vpop.f32.mrb[0].mxu0
    %v3932 = vadd.f32 0.0, %v3931
    %v3933 = vpop.f32.mrb[0].mxu0
    %v3934 = vpop.f32.mrb[0].mxu0
    %v3935 = vadd.f32 0.0, %v3934
    %v3936 = vpop.f32.mrb[0].mxu0
    %3937 = vmatprep.mubr.bf16.mxu0 0
    %3938 = vmatmul.mubr.bf16.gmra.mrb[0].mxu0 %v3784
    %v3939 = vpop.f32.mrb[0].mxu0
    %v3940 = vadd.f32 0.0, %v3939
    %v3941 = vpop.f32.mrb[0].mxu0
    %v3942 = vpop.f32.mrb[0].mxu0
    %v3943 = vadd.f32 0.0, %v3942
    %v3944 = vpop.f32.mrb[0].mxu0
    %3945 = vmatprep.mubr.bf16.mxu0 0
    %3946 = vmatmul.mubr.bf16.gmra.mrb[0].mxu0 %v3787
    %v3947 = vpop.f32.mrb[0].mxu0
    %v3948 = vadd.f32 0.0, %v3947
    %v3949 = vpop.f32.mrb[0].mxu0
    %v3950 = vpop.f32.mrb[0].mxu0
    %v3951 = vadd.f32 0.0, %v3950
    %v3952 = vpop.f32.mrb[0].mxu0
    %3953 = vmatprep.mubr.bf16.mxu0 0
    %3954 = vmatmul.mubr.bf16.gmra.mrb[0].mxu0 %v3790
    %v3955 = vpop.f32.mrb[0].mxu0
    %v3956 = vadd.f32 0.0, %v3955
    %v3957 = vpop.f32.mrb[0].mxu0
    %v3958 = vpop.f32.mrb[0].mxu0
    %v3959 = vadd.f32 0.0, %v3958
    %v3960 = vpop.f32.mrb[0].mxu0
    %3961 = vmatprep.mubr.bf16.mxu0 0
    %3962 = vmatmul.mubr.bf16.gmra.mrb[0].mxu0 %v3793
    %v3963 = vpop.f32.mrb[0].mxu0
    %v3964 = vadd.f32 0.0, %v3963
    %v3965 = vpop.f32.mrb[0].mxu0
    %v3966 = vpop.f32.mrb[0].mxu0
    %v3967 = vadd.f32 0.0, %v3966
    %v3968 = vpop.f32.mrb[0].mxu0
    %3969 = vmatprep.mubr.bf16.mxu0 0
    %3970 = vmatmul.mubr.bf16.gmra.mrb[0].mxu0 %v3796
    %v3971 = vpop.f32.mrb[0].mxu0
    %v3972 = vadd.f32 0.0, %v3971
    %v3973 = vpop.f32.mrb[0].mxu0
    %v3974 = vpop.f32.mrb[0].mxu0
    %v3975 = vadd.f32 0.0, %v3974
    %v3976 = vpop.f32.mrb[0].mxu0
    %3977 = vdwg.mxu0
    %v3978 = vpack.c.bf16 %v3839, %v3836
    %v3979 = vpack.c.bf16 %v3847, %v3844
    %v3980 = vpack.c.bf16 %v3855, %v3852
    %v3981 = vpack.c.bf16 %v3863, %v3860
    %v3982 = vpack.c.bf16 %v3871, %v3868
    %v3983 = vpack.c.bf16 %v3879, %v3876
    %v3984 = vpack.c.bf16 %v3887, %v3884
    %v3985 = vpack.c.bf16 %v3895, %v3892
    %v3986 = vpack.c.bf16 %v3903, %v3900
    %v3987 = vpack.c.bf16 %v3911, %v3908
    %v3988 = vpack.c.bf16 %v3919, %v3916
    %v3989 = vpack.c.bf16 %v3927, %v3924
    %v3990 = vpack.c.bf16 %v3935, %v3932
    %v3991 = vpack.c.bf16 %v3943, %v3940
    %v3992 = vpack.c.bf16 %v3951, %v3948
    %v3993 = vpack.c.bf16 %v3959, %v3956
    %v3994 = vpack.c.bf16 %v3967, %v3964
    %v3995 = vpack.c.bf16 %v3975, %v3972
    %v3996 = vld [vmem:[%s19] sm:$0xf]
    %v3997 = vld [vmem:[%s19 + $0x4] sm:$0xf]
    %v3998 = vld [vmem:[%s19 + $0x8] sm:$0xf]
    %v3999 = vld [vmem:[%s19 + $0xc] sm:$0xf]
    %v4000 = vld [vmem:[%s19 + $0x10] sm:$0xf]
    %v4001 = vld [vmem:[%s19 + $0x14] sm:$0xf]
    %v4002 = vld [vmem:[%s19 + $0x18] sm:$0xf]
    %v4003 = vld [vmem:[%s19 + $0x1c] sm:$0xf]
    %v4004 = vld [vmem:[%s19 + $0x20] sm:$0xf]
    %v4005 = vld [vmem:[%s19 + $0x24] sm:$0xf]
    %v4006 = vld [vmem:[%s19 + $0x28] sm:$0xf]
    %v4007 = vld [vmem:[%s19 + $0x2c] sm:$0xf]
    %v4008 = vld [vmem:[%s19 + $0x30] sm:$0xf]
    %v4009 = vld [vmem:[%s19 + $0x34] sm:$0xf]
    %v4010 = vld [vmem:[%s19 + $0x38] sm:$0xf]
    %v4011 = vld [vmem:[%s19 + $0x3c] sm:$0xf]
    %s4012 = scalar_lea.vmem %s19, 64
    %v4013 = vld [vmem:[%s4012] sm:$0xf]
    %v4014 = vld [vmem:[%s4012 + $0x4] sm:$0xf]
    %v4015 = vld [vmem:[%s4012 + $0x8] sm:$0xf]
    %v4016 = vld [vmem:[%s4012 + $0xc] sm:$0xf]
    %v4017 = vld [vmem:[%s4012 + $0x10] sm:$0xf]
    %v4018 = vld [vmem:[%s4012 + $0x14] sm:$0xf]
    %v4019 = vld [vmem:[%s4012 + $0x18] sm:$0xf]
    %v4020 = vld [vmem:[%s4012 + $0x1c] sm:$0xf]
    %v4021 = vld [vmem:[%s4012 + $0x20] sm:$0xf]
    %v4022 = vld [vmem:[%s4012 + $0x24] sm:$0xf]
    %v4023 = vld [vmem:[%s4012 + $0x28] sm:$0xf]
    %v4024 = vld [vmem:[%s4012 + $0x2c] sm:$0xf]
    %v4025 = vld [vmem:[%s4012 + $0x30] sm:$0xf]
    %v4026 = vld [vmem:[%s4012 + $0x34] sm:$0xf]
    %v4027 = vld [vmem:[%s4012 + $0x38] sm:$0xf]
    %v4028 = vld [vmem:[%s4012 + $0x3c] sm:$0xf]
    %v4045 = vunpack.c.l.b16 %v4013
    %v4046 = vunpack.c.l.b16 %v4014
    %v4047 = vunpack.c.l.b16 %v4015
    %v4048 = vunpack.c.l.b16 %v4016
    %v4049 = vunpack.c.l.b16 %v4017
    %v4050 = vunpack.c.l.b16 %v4018
    %v4051 = vunpack.c.l.b16 %v4019
    %v4052 = vunpack.c.l.b16 %v4020
    %v4053 = vunpack.c.l.b16 %v4021
    %v4054 = vunpack.c.l.b16 %v4022
    %v4055 = vunpack.c.l.b16 %v4023
    %v4056 = vunpack.c.l.b16 %v4024
    %v4057 = vunpack.c.l.b16 %v4025
    %v4058 = vunpack.c.l.b16 %v4026
    %v4059 = vunpack.c.l.b16 %v4027
    %v4060 = vunpack.c.l.b16 %v4028
    %v4061 = vpack.c.b16 %v4046, %v4045
    %v4062 = vpack.c.b16 %v4048, %v4047
    %v4063 = vpack.c.b16 %v4050, %v4049
    %v4064 = vpack.c.b16 %v4052, %v4051
    %v4065 = vpack.c.b16 %v4054, %v4053
    %v4066 = vpack.c.b16 %v4056, %v4055
    %v4067 = vpack.c.b16 %v4058, %v4057
    %v4068 = vpack.c.b16 %v4060, %v4059
    %4077 = vmatprep.subr.bf16.mxu0 0
    %4078 = vmatpush1.bf16.msra.mxu0 %v4061
    %4079 = vmatprep.subr.bf16.mxu0 0
    %4080 = vmatpush1.bf16.msra.mxu0 %v4062
    %4081 = vmatprep.subr.bf16.mxu0 0
    %4082 = vmatpush1.bf16.msra.mxu0 %v4063
    %4083 = vmatprep.subr.bf16.mxu0 0
    %4084 = vmatpush1.bf16.msra.mxu0 %v4064
    %4085 = vmatprep.subr.bf16.mxu0 0
    %4086 = vmatpush1.bf16.msra.mxu0 %v4065
    %4087 = vmatprep.subr.bf16.mxu0 0
    %4088 = vmatpush1.bf16.msra.mxu0 %v4066
    %4089 = vmatprep.subr.bf16.mxu0 0
    %4090 = vmatpush1.bf16.msra.mxu0 %v4067
    %4091 = vmatprep.subr.bf16.mxu0 0
    %4092 = vmatpush1.bf16.msra.mxu0 %v4068
    %4093 = vmatprep.subr.bf16.mxu0 0
    %4094 = vmatpush1.bf16.msra.mxu0 0
    %4095 = vmatprep.subr.bf16.mxu0 0
    %4096 = vmatpush1.bf16.msra.mxu0 0
    %4097 = vmatprep.subr.bf16.mxu0 0
    %4098 = vmatpush1.bf16.msra.mxu0 0
    %4099 = vmatprep.subr.bf16.mxu0 0
    %4100 = vmatpush1.bf16.msra.mxu0 0
    %4101 = vmatprep.subr.bf16.mxu0 0
    %4102 = vmatpush1.bf16.msra.mxu0 0
    %4103 = vmatprep.subr.bf16.mxu0 0
    %4104 = vmatpush1.bf16.msra.mxu0 0
    %4105 = vmatprep.subr.bf16.mxu0 0
    %4106 = vmatpush1.bf16.msra.mxu0 0
    %4107 = vmatprep.subr.bf16.mxu0 0
    %4108 = vmatpush1.bf16.msra.mxu0 0
    %4109 = vmatprep.mubr.bf16.mxu0 0
    %4110 = vmatmul.mubr.bf16.gmra.mrb[0].mxu0 %v3980
    %v4111 = vpop.f32.mrb[0].mxu0
    %v4112 = vadd.f32 0.0, %v4111
    %v4113 = vpop.f32.mrb[0].mxu0
    %v4114 = vpop.f32.mrb[0].mxu0
    %v4115 = vadd.f32 0.0, %v4114
    %v4116 = vpop.f32.mrb[0].mxu0
    %4117 = vmatprep.mubr.bf16.mxu0 0
    %4118 = vmatmul.mubr.bf16.gmra.mrb[0].mxu0 %v3981
    %v4119 = vpop.f32.mrb[0].mxu0
    %v4120 = vadd.f32 0.0, %v4119
    %v4121 = vpop.f32.mrb[0].mxu0
    %v4122 = vpop.f32.mrb[0].mxu0
    %v4123 = vadd.f32 0.0, %v4122
    %v4124 = vpop.f32.mrb[0].mxu0
    %4125 = vdwg.mxu0
    %v4142 = vunpack.c.l.b16 %v3996
    %v4143 = vunpack.c.l.b16 %v3997
    %v4144 = vunpack.c.l.b16 %v3998
    %v4145 = vunpack.c.l.b16 %v3999
    %v4146 = vunpack.c.l.b16 %v4000
    %v4147 = vunpack.c.l.b16 %v4001
    %v4148 = vunpack.c.l.b16 %v4002
    %v4149 = vunpack.c.l.b16 %v4003
    %v4150 = vunpack.c.l.b16 %v4004
    %v4151 = vunpack.c.l.b16 %v4005
    %v4152 = vunpack.c.l.b16 %v4006
    %v4153 = vunpack.c.l.b16 %v4007
    %v4154 = vunpack.c.l.b16 %v4008
    %v4155 = vunpack.c.l.b16 %v4009
    %v4156 = vunpack.c.l.b16 %v4010
    %v4157 = vunpack.c.l.b16 %v4011
    %v4158 = vpack.c.b16 %v4143, %v4142
    %v4159 = vpack.c.b16 %v4145, %v4144
    %v4160 = vpack.c.b16 %v4147, %v4146
    %v4161 = vpack.c.b16 %v4149, %v4148
    %v4162 = vpack.c.b16 %v4151, %v4150
    %v4163 = vpack.c.b16 %v4153, %v4152
    %v4164 = vpack.c.b16 %v4155, %v4154
    %v4165 = vpack.c.b16 %v4157, %v4156
    %4174 = vmatprep.subr.bf16.mxu0 0
    %4175 = vmatpush1.bf16.msra.mxu0 %v4158
    %4176 = vmatprep.subr.bf16.mxu0 0
    %4177 = vmatpush1.bf16.msra.mxu0 %v4159
    %4178 = vmatprep.subr.bf16.mxu0 0
    %4179 = vmatpush1.bf16.msra.mxu0 %v4160
    %4180 = vmatprep.subr.bf16.mxu0 0
    %4181 = vmatpush1.bf16.msra.mxu0 %v4161
    %4182 = vmatprep.subr.bf16.mxu0 0
    %4183 = vmatpush1.bf16.msra.mxu0 %v4162
    %4184 = vmatprep.subr.bf16.mxu0 0
    %4185 = vmatpush1.bf16.msra.mxu0 %v4163
    %4186 = vmatprep.subr.bf16.mxu0 0
    %4187 = vmatpush1.bf16.msra.mxu0 %v4164
    %4188 = vmatprep.subr.bf16.mxu0 0
    %4189 = vmatpush1.bf16.msra.mxu0 %v4165
    %4190 = vmatprep.subr.bf16.mxu0 0
    %4191 = vmatpush1.bf16.msra.mxu0 0
    %4192 = vmatprep.subr.bf16.mxu0 0
    %4193 = vmatpush1.bf16.msra.mxu0 0
    %4194 = vmatprep.subr.bf16.mxu0 0
    %4195 = vmatpush1.bf16.msra.mxu0 0
    %4196 = vmatprep.subr.bf16.mxu0 0
    %4197 = vmatpush1.bf16.msra.mxu0 0
    %4198 = vmatprep.subr.bf16.mxu0 0
    %4199 = vmatpush1.bf16.msra.mxu0 0
    %4200 = vmatprep.subr.bf16.mxu0 0
    %4201 = vmatpush1.bf16.msra.mxu0 0
    %4202 = vmatprep.subr.bf16.mxu0 0
    %4203 = vmatpush1.bf16.msra.mxu0 0
    %4204 = vmatprep.subr.bf16.mxu0 0
    %4205 = vmatpush1.bf16.msra.mxu0 0
    %4206 = vmatprep.mubr.bf16.mxu0 0
    %4207 = vmatmul.mubr.bf16.gmra.mrb[0].mxu0 %v3978
    %v4208 = vpop.f32.mrb[0].mxu0
    %v4209 = vadd.f32 %v4112, %v4208
    %v4210 = vpop.f32.mrb[0].mxu0
    %v4211 = vpop.f32.mrb[0].mxu0
    %v4212 = vadd.f32 %v4115, %v4211
    %v4213 = vpop.f32.mrb[0].mxu0
    %4214 = vmatprep.mubr.bf16.mxu0 0
    %4215 = vmatmul.mubr.bf16.gmra.mrb[0].mxu0 %v3979
    %v4216 = vpop.f32.mrb[0].mxu0
    %v4217 = vadd.f32 %v4120, %v4216
    %v4218 = vpop.f32.mrb[0].mxu0
    %v4219 = vpop.f32.mrb[0].mxu0
    %v4220 = vadd.f32 %v4123, %v4219
    %v4221 = vpop.f32.mrb[0].mxu0
    %4222 = vdwg.mxu0
    %s4223 = scalar_lea.vmem %s19, 128
    %v4224 = vld [vmem:[%s4223] sm:$0xf]
    %v4225 = vld [vmem:[%s4223 + $0x4] sm:$0xf]
    %v4226 = vld [vmem:[%s4223 + $0x8] sm:$0xf]
    %v4227 = vld [vmem:[%s4223 + $0xc] sm:$0xf]
    %v4228 = vld [vmem:[%s4223 + $0x10] sm:$0xf]
    %v4229 = vld [vmem:[%s4223 + $0x14] sm:$0xf]
    %v4230 = vld [vmem:[%s4223 + $0x18] sm:$0xf]
    %v4231 = vld [vmem:[%s4223 + $0x1c] sm:$0xf]
    %v4232 = vld [vmem:[%s4223 + $0x20] sm:$0xf]
    %v4233 = vld [vmem:[%s4223 + $0x24] sm:$0xf]
    %v4234 = vld [vmem:[%s4223 + $0x28] sm:$0xf]
    %v4235 = vld [vmem:[%s4223 + $0x2c] sm:$0xf]
    %v4236 = vld [vmem:[%s4223 + $0x30] sm:$0xf]
    %v4237 = vld [vmem:[%s4223 + $0x34] sm:$0xf]
    %v4238 = vld [vmem:[%s4223 + $0x38] sm:$0xf]
    %v4239 = vld [vmem:[%s4223 + $0x3c] sm:$0xf]
    %v4256 = vunpack.c.l.b16 %v4224
    %v4257 = vunpack.c.l.b16 %v4225
    %v4258 = vunpack.c.l.b16 %v4226
    %v4259 = vunpack.c.l.b16 %v4227
    %v4260 = vunpack.c.l.b16 %v4228
    %v4261 = vunpack.c.l.b16 %v4229
    %v4262 = vunpack.c.l.b16 %v4230
    %v4263 = vunpack.c.l.b16 %v4231
    %v4264 = vunpack.c.l.b16 %v4232
    %v4265 = vunpack.c.l.b16 %v4233
    %v4266 = vunpack.c.l.b16 %v4234
    %v4267 = vunpack.c.l.b16 %v4235
    %v4268 = vunpack.c.l.b16 %v4236
    %v4269 = vunpack.c.l.b16 %v4237
    %v4270 = vunpack.c.l.b16 %v4238
    %v4271 = vunpack.c.l.b16 %v4239
    %v4272 = vpack.c.b16 %v4257, %v4256
    %v4273 = vpack.c.b16 %v4259, %v4258
    %v4274 = vpack.c.b16 %v4261, %v4260
    %v4275 = vpack.c.b16 %v4263, %v4262
    %v4276 = vpack.c.b16 %v4265, %v4264
    %v4277 = vpack.c.b16 %v4267, %v4266
    %v4278 = vpack.c.b16 %v4269, %v4268
    %v4279 = vpack.c.b16 %v4271, %v4270
    %4288 = vmatprep.subr.bf16.mxu0 0
    %4289 = vmatpush1.bf16.msra.mxu0 %v4272
    %4290 = vmatprep.subr.bf16.mxu0 0
    %4291 = vmatpush1.bf16.msra.mxu0 %v4273
    %4292 = vmatprep.subr.bf16.mxu0 0
    %4293 = vmatpush1.bf16.msra.mxu0 %v4274
    %4294 = vmatprep.subr.bf16.mxu0 0
    %4295 = vmatpush1.bf16.msra.mxu0 %v4275
    %4296 = vmatprep.subr.bf16.mxu0 0
    %4297 = vmatpush1.bf16.msra.mxu0 %v4276
    %4298 = vmatprep.subr.bf16.mxu0 0
    %4299 = vmatpush1.bf16.msra.mxu0 %v4277
    %4300 = vmatprep.subr.bf16.mxu0 0
    %4301 = vmatpush1.bf16.msra.mxu0 %v4278
    %4302 = vmatprep.subr.bf16.mxu0 0
    %4303 = vmatpush1.bf16.msra.mxu0 %v4279
    %4304 = vmatprep.subr.bf16.mxu0 0
    %4305 = vmatpush1.bf16.msra.mxu0 0
    %4306 = vmatprep.subr.bf16.mxu0 0
    %4307 = vmatpush1.bf16.msra.mxu0 0
    %4308 = vmatprep.subr.bf16.mxu0 0
    %4309 = vmatpush1.bf16.msra.mxu0 0
    %4310 = vmatprep.subr.bf16.mxu0 0
    %4311 = vmatpush1.bf16.msra.mxu0 0
    %4312 = vmatprep.subr.bf16.mxu0 0
    %4313 = vmatpush1.bf16.msra.mxu0 0
    %4314 = vmatprep.subr.bf16.mxu0 0
    %4315 = vmatpush1.bf16.msra.mxu0 0
    %4316 = vmatprep.subr.bf16.mxu0 0
    %4317 = vmatpush1.bf16.msra.mxu0 0
    %4318 = vmatprep.subr.bf16.mxu0 0
    %4319 = vmatpush1.bf16.msra.mxu0 0
    %4320 = vmatprep.mubr.bf16.mxu0 0
    %4321 = vmatmul.mubr.bf16.gmra.mrb[0].mxu0 %v3982
    %v4322 = vpop.f32.mrb[0].mxu0
    %v4323 = vadd.f32 0.0, %v4322
    %v4324 = vpop.f32.mrb[0].mxu0
    %v4325 = vpop.f32.mrb[0].mxu0
    %v4326 = vadd.f32 0.0, %v4325
    %v4327 = vpop.f32.mrb[0].mxu0
    %4328 = vmatprep.mubr.bf16.mxu0 0
    %4329 = vmatmul.mubr.bf16.gmra.mrb[0].mxu0 %v3983
    %v4330 = vpop.f32.mrb[0].mxu0
    %v4331 = vadd.f32 0.0, %v4330
    %v4332 = vpop.f32.mrb[0].mxu0
    %v4333 = vpop.f32.mrb[0].mxu0
    %v4334 = vadd.f32 0.0, %v4333
    %v4335 = vpop.f32.mrb[0].mxu0
    %4336 = vdwg.mxu0
    %v4337 = vadd.f32 %v4209, %v4323
    %v4338 = vadd.f32 %v4212, %v4326
    %v4339 = vadd.f32 %v4217, %v4331
    %v4340 = vadd.f32 %v4220, %v4334
    %s4341 = scalar_lea.vmem %s19, 192
    %v4342 = vld [vmem:[%s4341] sm:$0xf]
    %v4343 = vld [vmem:[%s4341 + $0x4] sm:$0xf]
    %v4344 = vld [vmem:[%s4341 + $0x8] sm:$0xf]
    %v4345 = vld [vmem:[%s4341 + $0xc] sm:$0xf]
    %v4346 = vld [vmem:[%s4341 + $0x10] sm:$0xf]
    %v4347 = vld [vmem:[%s4341 + $0x14] sm:$0xf]
    %v4348 = vld [vmem:[%s4341 + $0x18] sm:$0xf]
    %v4349 = vld [vmem:[%s4341 + $0x1c] sm:$0xf]
    %v4350 = vld [vmem:[%s4341 + $0x20] sm:$0xf]
    %v4351 = vld [vmem:[%s4341 + $0x24] sm:$0xf]
    %v4352 = vld [vmem:[%s4341 + $0x28] sm:$0xf]
    %v4353 = vld [vmem:[%s4341 + $0x2c] sm:$0xf]
    %v4354 = vld [vmem:[%s4341 + $0x30] sm:$0xf]
    %v4355 = vld [vmem:[%s4341 + $0x34] sm:$0xf]
    %v4356 = vld [vmem:[%s4341 + $0x38] sm:$0xf]
    %v4357 = vld [vmem:[%s4341 + $0x3c] sm:$0xf]
    %v4374 = vunpack.c.l.b16 %v4342
    %v4375 = vunpack.c.l.b16 %v4343
    %v4376 = vunpack.c.l.b16 %v4344
    %v4377 = vunpack.c.l.b16 %v4345
    %v4378 = vunpack.c.l.b16 %v4346
    %v4379 = vunpack.c.l.b16 %v4347
    %v4380 = vunpack.c.l.b16 %v4348
    %v4381 = vunpack.c.l.b16 %v4349
    %v4382 = vunpack.c.l.b16 %v4350
    %v4383 = vunpack.c.l.b16 %v4351
    %v4384 = vunpack.c.l.b16 %v4352
    %v4385 = vunpack.c.l.b16 %v4353
    %v4386 = vunpack.c.l.b16 %v4354
    %v4387 = vunpack.c.l.b16 %v4355
    %v4388 = vunpack.c.l.b16 %v4356
    %v4389 = vunpack.c.l.b16 %v4357
    %v4390 = vpack.c.b16 %v4375, %v4374
    %v4391 = vpack.c.b16 %v4377, %v4376
    %v4392 = vpack.c.b16 %v4379, %v4378
    %v4393 = vpack.c.b16 %v4381, %v4380
    %v4394 = vpack.c.b16 %v4383, %v4382
    %v4395 = vpack.c.b16 %v4385, %v4384
    %v4396 = vpack.c.b16 %v4387, %v4386
    %v4397 = vpack.c.b16 %v4389, %v4388
    %4406 = vmatprep.subr.bf16.mxu0 0
    %4407 = vmatpush1.bf16.msra.mxu0 %v4390
    %4408 = vmatprep.subr.bf16.mxu0 0
    %4409 = vmatpush1.bf16.msra.mxu0 %v4391
    %4410 = vmatprep.subr.bf16.mxu0 0
    %4411 = vmatpush1.bf16.msra.mxu0 %v4392
    %4412 = vmatprep.subr.bf16.mxu0 0
    %4413 = vmatpush1.bf16.msra.mxu0 %v4393
    %4414 = vmatprep.subr.bf16.mxu0 0
    %4415 = vmatpush1.bf16.msra.mxu0 %v4394
    %4416 = vmatprep.subr.bf16.mxu0 0
    %4417 = vmatpush1.bf16.msra.mxu0 %v4395
    %4418 = vmatprep.subr.bf16.mxu0 0
    %4419 = vmatpush1.bf16.msra.mxu0 %v4396
    %4420 = vmatprep.subr.bf16.mxu0 0
    %4421 = vmatpush1.bf16.msra.mxu0 %v4397
    %4422 = vmatprep.subr.bf16.mxu0 0
    %4423 = vmatpush1.bf16.msra.mxu0 0
    %4424 = vmatprep.subr.bf16.mxu0 0
    %4425 = vmatpush1.bf16.msra.mxu0 0
    %4426 = vmatprep.subr.bf16.mxu0 0
    %4427 = vmatpush1.bf16.msra.mxu0 0
    %4428 = vmatprep.subr.bf16.mxu0 0
    %4429 = vmatpush1.bf16.msra.mxu0 0
    %4430 = vmatprep.subr.bf16.mxu0 0
    %4431 = vmatpush1.bf16.msra.mxu0 0
    %4432 = vmatprep.subr.bf16.mxu0 0
    %4433 = vmatpush1.bf16.msra.mxu0 0
    %4434 = vmatprep.subr.bf16.mxu0 0
    %4435 = vmatpush1.bf16.msra.mxu0 0
    %4436 = vmatprep.subr.bf16.mxu0 0
    %4437 = vmatpush1.bf16.msra.mxu0 0
    %4438 = vmatprep.mubr.bf16.mxu0 0
    %4439 = vmatmul.mubr.bf16.gmra.mrb[0].mxu0 %v3984
    %v4440 = vpop.f32.mrb[0].mxu0
    %v4441 = vadd.f32 0.0, %v4440
    %v4442 = vpop.f32.mrb[0].mxu0
    %v4443 = vpop.f32.mrb[0].mxu0
    %v4444 = vadd.f32 0.0, %v4443
    %v4445 = vpop.f32.mrb[0].mxu0
    %4446 = vmatprep.mubr.bf16.mxu0 0
    %4447 = vmatmul.mubr.bf16.gmra.mrb[0].mxu0 %v3985
    %v4448 = vpop.f32.mrb[0].mxu0
    %v4449 = vadd.f32 0.0, %v4448
    %v4450 = vpop.f32.mrb[0].mxu0
    %v4451 = vpop.f32.mrb[0].mxu0
    %v4452 = vadd.f32 0.0, %v4451
    %v4453 = vpop.f32.mrb[0].mxu0
    %4454 = vdwg.mxu0
    %v4455 = vadd.f32 %v4337, %v4441
    %v4456 = vadd.f32 %v4338, %v4444
    %v4457 = vadd.f32 %v4339, %v4449
    %v4458 = vadd.f32 %v4340, %v4452
    %s4459 = scalar_lea.vmem %s19, 256
    %v4460 = vld [vmem:[%s4459] sm:$0xf]
    %v4461 = vld [vmem:[%s4459 + $0x4] sm:$0xf]
    %v4462 = vld [vmem:[%s4459 + $0x8] sm:$0xf]
    %v4463 = vld [vmem:[%s4459 + $0xc] sm:$0xf]
    %v4464 = vld [vmem:[%s4459 + $0x10] sm:$0xf]
    %v4465 = vld [vmem:[%s4459 + $0x14] sm:$0xf]
    %v4466 = vld [vmem:[%s4459 + $0x18] sm:$0xf]
    %v4467 = vld [vmem:[%s4459 + $0x1c] sm:$0xf]
    %v4468 = vld [vmem:[%s4459 + $0x20] sm:$0xf]
    %v4469 = vld [vmem:[%s4459 + $0x24] sm:$0xf]
    %v4470 = vld [vmem:[%s4459 + $0x28] sm:$0xf]
    %v4471 = vld [vmem:[%s4459 + $0x2c] sm:$0xf]
    %v4472 = vld [vmem:[%s4459 + $0x30] sm:$0xf]
    %v4473 = vld [vmem:[%s4459 + $0x34] sm:$0xf]
    %v4474 = vld [vmem:[%s4459 + $0x38] sm:$0xf]
    %v4475 = vld [vmem:[%s4459 + $0x3c] sm:$0xf]
    %v4492 = vunpack.c.l.b16 %v4460
    %v4493 = vunpack.c.l.b16 %v4461
    %v4494 = vunpack.c.l.b16 %v4462
    %v4495 = vunpack.c.l.b16 %v4463
    %v4496 = vunpack.c.l.b16 %v4464
    %v4497 = vunpack.c.l.b16 %v4465
    %v4498 = vunpack.c.l.b16 %v4466
    %v4499 = vunpack.c.l.b16 %v4467
    %v4500 = vunpack.c.l.b16 %v4468
    %v4501 = vunpack.c.l.b16 %v4469
    %v4502 = vunpack.c.l.b16 %v4470
    %v4503 = vunpack.c.l.b16 %v4471
    %v4504 = vunpack.c.l.b16 %v4472
    %v4505 = vunpack.c.l.b16 %v4473
    %v4506 = vunpack.c.l.b16 %v4474
    %v4507 = vunpack.c.l.b16 %v4475
    %v4508 = vpack.c.b16 %v4493, %v4492
    %v4509 = vpack.c.b16 %v4495, %v4494
    %v4510 = vpack.c.b16 %v4497, %v4496
    %v4511 = vpack.c.b16 %v4499, %v4498
    %v4512 = vpack.c.b16 %v4501, %v4500
    %v4513 = vpack.c.b16 %v4503, %v4502
    %v4514 = vpack.c.b16 %v4505, %v4504
    %v4515 = vpack.c.b16 %v4507, %v4506
    %4524 = vmatprep.subr.bf16.mxu0 0
    %4525 = vmatpush1.bf16.msra.mxu0 %v4508
    %4526 = vmatprep.subr.bf16.mxu0 0
    %4527 = vmatpush1.bf16.msra.mxu0 %v4509
    %4528 = vmatprep.subr.bf16.mxu0 0
    %4529 = vmatpush1.bf16.msra.mxu0 %v4510
    %4530 = vmatprep.subr.bf16.mxu0 0
    %4531 = vmatpush1.bf16.msra.mxu0 %v4511
    %4532 = vmatprep.subr.bf16.mxu0 0
    %4533 = vmatpush1.bf16.msra.mxu0 %v4512
    %4534 = vmatprep.subr.bf16.mxu0 0
    %4535 = vmatpush1.bf16.msra.mxu0 %v4513
    %4536 = vmatprep.subr.bf16.mxu0 0
    %4537 = vmatpush1.bf16.msra.mxu0 %v4514
    %4538 = vmatprep.subr.bf16.mxu0 0
    %4539 = vmatpush1.bf16.msra.mxu0 %v4515
    %4540 = vmatprep.subr.bf16.mxu0 0
    %4541 = vmatpush1.bf16.msra.mxu0 0
    %4542 = vmatprep.subr.bf16.mxu0 0
    %4543 = vmatpush1.bf16.msra.mxu0 0
    %4544 = vmatprep.subr.bf16.mxu0 0
    %4545 = vmatpush1.bf16.msra.mxu0 0
    %4546 = vmatprep.subr.bf16.mxu0 0
    %4547 = vmatpush1.bf16.msra.mxu0 0
    %4548 = vmatprep.subr.bf16.mxu0 0
    %4549 = vmatpush1.bf16.msra.mxu0 0
    %4550 = vmatprep.subr.bf16.mxu0 0
    %4551 = vmatpush1.bf16.msra.mxu0 0
    %4552 = vmatprep.subr.bf16.mxu0 0
    %4553 = vmatpush1.bf16.msra.mxu0 0
    %4554 = vmatprep.subr.bf16.mxu0 0
    %4555 = vmatpush1.bf16.msra.mxu0 0
    %4556 = vmatprep.mubr.bf16.mxu0 0
    %4557 = vmatmul.mubr.bf16.gmra.mrb[0].mxu0 %v3986
    %v4558 = vpop.f32.mrb[0].mxu0
    %v4559 = vadd.f32 0.0, %v4558
    %v4560 = vpop.f32.mrb[0].mxu0
    %v4561 = vpop.f32.mrb[0].mxu0
    %v4562 = vadd.f32 0.0, %v4561
    %v4563 = vpop.f32.mrb[0].mxu0
    %4564 = vmatprep.mubr.bf16.mxu0 0
    %4565 = vmatmul.mubr.bf16.gmra.mrb[0].mxu0 %v3987
    %v4566 = vpop.f32.mrb[0].mxu0
    %v4567 = vadd.f32 0.0, %v4566
    %v4568 = vpop.f32.mrb[0].mxu0
    %v4569 = vpop.f32.mrb[0].mxu0
    %v4570 = vadd.f32 0.0, %v4569
    %v4571 = vpop.f32.mrb[0].mxu0
    %4572 = vdwg.mxu0
    %v4573 = vadd.f32 %v4455, %v4559
    %v4574 = vadd.f32 %v4456, %v4562
    %v4575 = vadd.f32 %v4457, %v4567
    %v4576 = vadd.f32 %v4458, %v4570
    %s4577 = scalar_lea.vmem %s19, 320
    %v4578 = vld [vmem:[%s4577] sm:$0xf]
    %v4579 = vld [vmem:[%s4577 + $0x4] sm:$0xf]
    %v4580 = vld [vmem:[%s4577 + $0x8] sm:$0xf]
    %v4581 = vld [vmem:[%s4577 + $0xc] sm:$0xf]
    %v4582 = vld [vmem:[%s4577 + $0x10] sm:$0xf]
    %v4583 = vld [vmem:[%s4577 + $0x14] sm:$0xf]
    %v4584 = vld [vmem:[%s4577 + $0x18] sm:$0xf]
    %v4585 = vld [vmem:[%s4577 + $0x1c] sm:$0xf]
    %v4586 = vld [vmem:[%s4577 + $0x20] sm:$0xf]
    %v4587 = vld [vmem:[%s4577 + $0x24] sm:$0xf]
    %v4588 = vld [vmem:[%s4577 + $0x28] sm:$0xf]
    %v4589 = vld [vmem:[%s4577 + $0x2c] sm:$0xf]
    %v4590 = vld [vmem:[%s4577 + $0x30] sm:$0xf]
    %v4591 = vld [vmem:[%s4577 + $0x34] sm:$0xf]
    %v4592 = vld [vmem:[%s4577 + $0x38] sm:$0xf]
    %v4593 = vld [vmem:[%s4577 + $0x3c] sm:$0xf]
    %v4610 = vunpack.c.l.b16 %v4578
    %v4611 = vunpack.c.l.b16 %v4579
    %v4612 = vunpack.c.l.b16 %v4580
    %v4613 = vunpack.c.l.b16 %v4581
    %v4614 = vunpack.c.l.b16 %v4582
    %v4615 = vunpack.c.l.b16 %v4583
    %v4616 = vunpack.c.l.b16 %v4584
    %v4617 = vunpack.c.l.b16 %v4585
    %v4618 = vunpack.c.l.b16 %v4586
    %v4619 = vunpack.c.l.b16 %v4587
    %v4620 = vunpack.c.l.b16 %v4588
    %v4621 = vunpack.c.l.b16 %v4589
    %v4622 = vunpack.c.l.b16 %v4590
    %v4623 = vunpack.c.l.b16 %v4591
    %v4624 = vunpack.c.l.b16 %v4592
    %v4625 = vunpack.c.l.b16 %v4593
    %v4626 = vpack.c.b16 %v4611, %v4610
    %v4627 = vpack.c.b16 %v4613, %v4612
    %v4628 = vpack.c.b16 %v4615, %v4614
    %v4629 = vpack.c.b16 %v4617, %v4616
    %v4630 = vpack.c.b16 %v4619, %v4618
    %v4631 = vpack.c.b16 %v4621, %v4620
    %v4632 = vpack.c.b16 %v4623, %v4622
    %v4633 = vpack.c.b16 %v4625, %v4624
    %4642 = vmatprep.subr.bf16.mxu0 0
    %4643 = vmatpush1.bf16.msra.mxu0 %v4626
    %4644 = vmatprep.subr.bf16.mxu0 0
    %4645 = vmatpush1.bf16.msra.mxu0 %v4627
    %4646 = vmatprep.subr.bf16.mxu0 0
    %4647 = vmatpush1.bf16.msra.mxu0 %v4628
    %4648 = vmatprep.subr.bf16.mxu0 0
    %4649 = vmatpush1.bf16.msra.mxu0 %v4629
    %4650 = vmatprep.subr.bf16.mxu0 0
    %4651 = vmatpush1.bf16.msra.mxu0 %v4630
    %4652 = vmatprep.subr.bf16.mxu0 0
    %4653 = vmatpush1.bf16.msra.mxu0 %v4631
    %4654 = vmatprep.subr.bf16.mxu0 0
    %4655 = vmatpush1.bf16.msra.mxu0 %v4632
    %4656 = vmatprep.subr.bf16.mxu0 0
    %4657 = vmatpush1.bf16.msra.mxu0 %v4633
    %4658 = vmatprep.subr.bf16.mxu0 0
    %4659 = vmatpush1.bf16.msra.mxu0 0
    %4660 = vmatprep.subr.bf16.mxu0 0
    %4661 = vmatpush1.bf16.msra.mxu0 0
    %4662 = vmatprep.subr.bf16.mxu0 0
    %4663 = vmatpush1.bf16.msra.mxu0 0
    %4664 = vmatprep.subr.bf16.mxu0 0
    %4665 = vmatpush1.bf16.msra.mxu0 0
    %4666 = vmatprep.subr.bf16.mxu0 0
    %4667 = vmatpush1.bf16.msra.mxu0 0
    %4668 = vmatprep.subr.bf16.mxu0 0
    %4669 = vmatpush1.bf16.msra.mxu0 0
    %4670 = vmatprep.subr.bf16.mxu0 0
    %4671 = vmatpush1.bf16.msra.mxu0 0
    %4672 = vmatprep.subr.bf16.mxu0 0
    %4673 = vmatpush1.bf16.msra.mxu0 0
    %4674 = vmatprep.mubr.bf16.mxu0 0
    %4675 = vmatmul.mubr.bf16.gmra.mrb[0].mxu0 %v3988
    %v4676 = vpop.f32.mrb[0].mxu0
    %v4677 = vadd.f32 0.0, %v4676
    %v4678 = vpop.f32.mrb[0].mxu0
    %v4679 = vpop.f32.mrb[0].mxu0
    %v4680 = vadd.f32 0.0, %v4679
    %v4681 = vpop.f32.mrb[0].mxu0
    %4682 = vmatprep.mubr.bf16.mxu0 0
    %4683 = vmatmul.mubr.bf16.gmra.mrb[0].mxu0 %v3989
    %v4684 = vpop.f32.mrb[0].mxu0
    %v4685 = vadd.f32 0.0, %v4684
    %v4686 = vpop.f32.mrb[0].mxu0
    %v4687 = vpop.f32.mrb[0].mxu0
    %v4688 = vadd.f32 0.0, %v4687
    %v4689 = vpop.f32.mrb[0].mxu0
    %4690 = vdwg.mxu0
    %v4691 = vadd.f32 %v4573, %v4677
    %v4692 = vadd.f32 %v4574, %v4680
    %v4693 = vadd.f32 %v4575, %v4685
    %v4694 = vadd.f32 %v4576, %v4688
    %s4695 = scalar_lea.vmem %s19, 384
    %v4696 = vld [vmem:[%s4695] sm:$0xf]
    %v4697 = vld [vmem:[%s4695 + $0x4] sm:$0xf]
    %v4698 = vld [vmem:[%s4695 + $0x8] sm:$0xf]
    %v4699 = vld [vmem:[%s4695 + $0xc] sm:$0xf]
    %v4700 = vld [vmem:[%s4695 + $0x10] sm:$0xf]
    %v4701 = vld [vmem:[%s4695 + $0x14] sm:$0xf]
    %v4702 = vld [vmem:[%s4695 + $0x18] sm:$0xf]
    %v4703 = vld [vmem:[%s4695 + $0x1c] sm:$0xf]
    %v4704 = vld [vmem:[%s4695 + $0x20] sm:$0xf]
    %v4705 = vld [vmem:[%s4695 + $0x24] sm:$0xf]
    %v4706 = vld [vmem:[%s4695 + $0x28] sm:$0xf]
    %v4707 = vld [vmem:[%s4695 + $0x2c] sm:$0xf]
    %v4708 = vld [vmem:[%s4695 + $0x30] sm:$0xf]
    %v4709 = vld [vmem:[%s4695 + $0x34] sm:$0xf]
    %v4710 = vld [vmem:[%s4695 + $0x38] sm:$0xf]
    %v4711 = vld [vmem:[%s4695 + $0x3c] sm:$0xf]
    %v4728 = vunpack.c.l.b16 %v4696
    %v4729 = vunpack.c.l.b16 %v4697
    %v4730 = vunpack.c.l.b16 %v4698
    %v4731 = vunpack.c.l.b16 %v4699
    %v4732 = vunpack.c.l.b16 %v4700
    %v4733 = vunpack.c.l.b16 %v4701
    %v4734 = vunpack.c.l.b16 %v4702
    %v4735 = vunpack.c.l.b16 %v4703
    %v4736 = vunpack.c.l.b16 %v4704
    %v4737 = vunpack.c.l.b16 %v4705
    %v4738 = vunpack.c.l.b16 %v4706
    %v4739 = vunpack.c.l.b16 %v4707
    %v4740 = vunpack.c.l.b16 %v4708
    %v4741 = vunpack.c.l.b16 %v4709
    %v4742 = vunpack.c.l.b16 %v4710
    %v4743 = vunpack.c.l.b16 %v4711
    %v4744 = vpack.c.b16 %v4729, %v4728
    %v4745 = vpack.c.b16 %v4731, %v4730
    %v4746 = vpack.c.b16 %v4733, %v4732
    %v4747 = vpack.c.b16 %v4735, %v4734
    %v4748 = vpack.c.b16 %v4737, %v4736
    %v4749 = vpack.c.b16 %v4739, %v4738
    %v4750 = vpack.c.b16 %v4741, %v4740
    %v4751 = vpack.c.b16 %v4743, %v4742
    %4760 = vmatprep.subr.bf16.mxu0 0
    %4761 = vmatpush1.bf16.msra.mxu0 %v4744
    %4762 = vmatprep.subr.bf16.mxu0 0
    %4763 = vmatpush1.bf16.msra.mxu0 %v4745
    %4764 = vmatprep.subr.bf16.mxu0 0
    %4765 = vmatpush1.bf16.msra.mxu0 %v4746
    %4766 = vmatprep.subr.bf16.mxu0 0
    %4767 = vmatpush1.bf16.msra.mxu0 %v4747
    %4768 = vmatprep.subr.bf16.mxu0 0
    %4769 = vmatpush1.bf16.msra.mxu0 %v4748
    %4770 = vmatprep.subr.bf16.mxu0 0
    %4771 = vmatpush1.bf16.msra.mxu0 %v4749
    %4772 = vmatprep.subr.bf16.mxu0 0
    %4773 = vmatpush1.bf16.msra.mxu0 %v4750
    %4774 = vmatprep.subr.bf16.mxu0 0
    %4775 = vmatpush1.bf16.msra.mxu0 %v4751
    %4776 = vmatprep.subr.bf16.mxu0 0
    %4777 = vmatpush1.bf16.msra.mxu0 0
    %4778 = vmatprep.subr.bf16.mxu0 0
    %4779 = vmatpush1.bf16.msra.mxu0 0
    %4780 = vmatprep.subr.bf16.mxu0 0
    %4781 = vmatpush1.bf16.msra.mxu0 0
    %4782 = vmatprep.subr.bf16.mxu0 0
    %4783 = vmatpush1.bf16.msra.mxu0 0
    %4784 = vmatprep.subr.bf16.mxu0 0
    %4785 = vmatpush1.bf16.msra.mxu0 0
    %4786 = vmatprep.subr.bf16.mxu0 0
    %4787 = vmatpush1.bf16.msra.mxu0 0
    %4788 = vmatprep.subr.bf16.mxu0 0
    %4789 = vmatpush1.bf16.msra.mxu0 0
    %4790 = vmatprep.subr.bf16.mxu0 0
    %4791 = vmatpush1.bf16.msra.mxu0 0
    %4792 = vmatprep.mubr.bf16.mxu0 0
    %4793 = vmatmul.mubr.bf16.gmra.mrb[0].mxu0 %v3990
    %v4794 = vpop.f32.mrb[0].mxu0
    %v4795 = vadd.f32 0.0, %v4794
    %v4796 = vpop.f32.mrb[0].mxu0
    %v4797 = vpop.f32.mrb[0].mxu0
    %v4798 = vadd.f32 0.0, %v4797
    %v4799 = vpop.f32.mrb[0].mxu0
    %4800 = vmatprep.mubr.bf16.mxu0 0
    %4801 = vmatmul.mubr.bf16.gmra.mrb[0].mxu0 %v3991
    %v4802 = vpop.f32.mrb[0].mxu0
    %v4803 = vadd.f32 0.0, %v4802
    %v4804 = vpop.f32.mrb[0].mxu0
    %v4805 = vpop.f32.mrb[0].mxu0
    %v4806 = vadd.f32 0.0, %v4805
    %v4807 = vpop.f32.mrb[0].mxu0
    %4808 = vdwg.mxu0
    %v4809 = vadd.f32 %v4691, %v4795
    %v4810 = vadd.f32 %v4692, %v4798
    %v4811 = vadd.f32 %v4693, %v4803
    %v4812 = vadd.f32 %v4694, %v4806
    %s4813 = scalar_lea.vmem %s19, 448
    %v4814 = vld [vmem:[%s4813] sm:$0xf]
    %v4815 = vld [vmem:[%s4813 + $0x4] sm:$0xf]
    %v4816 = vld [vmem:[%s4813 + $0x8] sm:$0xf]
    %v4817 = vld [vmem:[%s4813 + $0xc] sm:$0xf]
    %v4818 = vld [vmem:[%s4813 + $0x10] sm:$0xf]
    %v4819 = vld [vmem:[%s4813 + $0x14] sm:$0xf]
    %v4820 = vld [vmem:[%s4813 + $0x18] sm:$0xf]
    %v4821 = vld [vmem:[%s4813 + $0x1c] sm:$0xf]
    %v4822 = vld [vmem:[%s4813 + $0x20] sm:$0xf]
    %v4823 = vld [vmem:[%s4813 + $0x24] sm:$0xf]
    %v4824 = vld [vmem:[%s4813 + $0x28] sm:$0xf]
    %v4825 = vld [vmem:[%s4813 + $0x2c] sm:$0xf]
    %v4826 = vld [vmem:[%s4813 + $0x30] sm:$0xf]
    %v4827 = vld [vmem:[%s4813 + $0x34] sm:$0xf]
    %v4828 = vld [vmem:[%s4813 + $0x38] sm:$0xf]
    %v4829 = vld [vmem:[%s4813 + $0x3c] sm:$0xf]
    %v4846 = vunpack.c.l.b16 %v4814
    %v4847 = vunpack.c.l.b16 %v4815
    %v4848 = vunpack.c.l.b16 %v4816
    %v4849 = vunpack.c.l.b16 %v4817
    %v4850 = vunpack.c.l.b16 %v4818
    %v4851 = vunpack.c.l.b16 %v4819
    %v4852 = vunpack.c.l.b16 %v4820
    %v4853 = vunpack.c.l.b16 %v4821
    %v4854 = vunpack.c.l.b16 %v4822
    %v4855 = vunpack.c.l.b16 %v4823
    %v4856 = vunpack.c.l.b16 %v4824
    %v4857 = vunpack.c.l.b16 %v4825
    %v4858 = vunpack.c.l.b16 %v4826
    %v4859 = vunpack.c.l.b16 %v4827
    %v4860 = vunpack.c.l.b16 %v4828
    %v4861 = vunpack.c.l.b16 %v4829
    %v4862 = vpack.c.b16 %v4847, %v4846
    %v4863 = vpack.c.b16 %v4849, %v4848
    %v4864 = vpack.c.b16 %v4851, %v4850
    %v4865 = vpack.c.b16 %v4853, %v4852
    %v4866 = vpack.c.b16 %v4855, %v4854
    %v4867 = vpack.c.b16 %v4857, %v4856
    %v4868 = vpack.c.b16 %v4859, %v4858
    %v4869 = vpack.c.b16 %v4861, %v4860
    %4878 = vmatprep.subr.bf16.mxu0 0
    %4879 = vmatpush1.bf16.msra.mxu0 %v4862
    %4880 = vmatprep.subr.bf16.mxu0 0
    %4881 = vmatpush1.bf16.msra.mxu0 %v4863
    %4882 = vmatprep.subr.bf16.mxu0 0
    %4883 = vmatpush1.bf16.msra.mxu0 %v4864
    %4884 = vmatprep.subr.bf16.mxu0 0
    %4885 = vmatpush1.bf16.msra.mxu0 %v4865
    %4886 = vmatprep.subr.bf16.mxu0 0
    %4887 = vmatpush1.bf16.msra.mxu0 %v4866
    %4888 = vmatprep.subr.bf16.mxu0 0
    %4889 = vmatpush1.bf16.msra.mxu0 %v4867
    %4890 = vmatprep.subr.bf16.mxu0 0
    %4891 = vmatpush1.bf16.msra.mxu0 %v4868
    %4892 = vmatprep.subr.bf16.mxu0 0
    %4893 = vmatpush1.bf16.msra.mxu0 %v4869
    %4894 = vmatprep.subr.bf16.mxu0 0
    %4895 = vmatpush1.bf16.msra.mxu0 0
    %4896 = vmatprep.subr.bf16.mxu0 0
    %4897 = vmatpush1.bf16.msra.mxu0 0
    %4898 = vmatprep.subr.bf16.mxu0 0
    %4899 = vmatpush1.bf16.msra.mxu0 0
    %4900 = vmatprep.subr.bf16.mxu0 0
    %4901 = vmatpush1.bf16.msra.mxu0 0
    %4902 = vmatprep.subr.bf16.mxu0 0
    %4903 = vmatpush1.bf16.msra.mxu0 0
    %4904 = vmatprep.subr.bf16.mxu0 0
    %4905 = vmatpush1.bf16.msra.mxu0 0
    %4906 = vmatprep.subr.bf16.mxu0 0
    %4907 = vmatpush1.bf16.msra.mxu0 0
    %4908 = vmatprep.subr.bf16.mxu0 0
    %4909 = vmatpush1.bf16.msra.mxu0 0
    %4910 = vmatprep.mubr.bf16.mxu0 0
    %4911 = vmatmul.mubr.bf16.gmra.mrb[0].mxu0 %v3992
    %v4912 = vpop.f32.mrb[0].mxu0
    %v4913 = vadd.f32 0.0, %v4912
    %v4914 = vpop.f32.mrb[0].mxu0
    %v4915 = vpop.f32.mrb[0].mxu0
    %v4916 = vadd.f32 0.0, %v4915
    %v4917 = vpop.f32.mrb[0].mxu0
    %4918 = vmatprep.mubr.bf16.mxu0 0
    %4919 = vmatmul.mubr.bf16.gmra.mrb[0].mxu0 %v3993
    %v4920 = vpop.f32.mrb[0].mxu0
    %v4921 = vadd.f32 0.0, %v4920
    %v4922 = vpop.f32.mrb[0].mxu0
    %v4923 = vpop.f32.mrb[0].mxu0
    %v4924 = vadd.f32 0.0, %v4923
    %v4925 = vpop.f32.mrb[0].mxu0
    %4926 = vdwg.mxu0
    %v4927 = vadd.f32 %v4809, %v4913
    %v4928 = vadd.f32 %v4810, %v4916
    %v4929 = vadd.f32 %v4811, %v4921
    %v4930 = vadd.f32 %v4812, %v4924
    %s4931 = scalar_lea.vmem %s19, 512
    %v4932 = vld [vmem:[%s4931] sm:$0xf]
    %v4933 = vld [vmem:[%s4931 + $0x4] sm:$0xf]
    %v4934 = vld [vmem:[%s4931 + $0x8] sm:$0xf]
    %v4935 = vld [vmem:[%s4931 + $0xc] sm:$0xf]
    %v4936 = vld [vmem:[%s4931 + $0x10] sm:$0xf]
    %v4937 = vld [vmem:[%s4931 + $0x14] sm:$0xf]
    %v4938 = vld [vmem:[%s4931 + $0x18] sm:$0xf]
    %v4939 = vld [vmem:[%s4931 + $0x1c] sm:$0xf]
    %v4940 = vld [vmem:[%s4931 + $0x20] sm:$0xf]
    %v4941 = vld [vmem:[%s4931 + $0x24] sm:$0xf]
    %v4942 = vld [vmem:[%s4931 + $0x28] sm:$0xf]
    %v4943 = vld [vmem:[%s4931 + $0x2c] sm:$0xf]
    %v4944 = vld [vmem:[%s4931 + $0x30] sm:$0xf]
    %v4945 = vld [vmem:[%s4931 + $0x34] sm:$0xf]
    %v4946 = vld [vmem:[%s4931 + $0x38] sm:$0xf]
    %v4947 = vld [vmem:[%s4931 + $0x3c] sm:$0xf]
    %v4964 = vunpack.c.l.b16 %v4932
    %v4965 = vunpack.c.l.b16 %v4933
    %v4966 = vunpack.c.l.b16 %v4934
    %v4967 = vunpack.c.l.b16 %v4935
    %v4968 = vunpack.c.l.b16 %v4936
    %v4969 = vunpack.c.l.b16 %v4937
    %v4970 = vunpack.c.l.b16 %v4938
    %v4971 = vunpack.c.l.b16 %v4939
    %v4972 = vunpack.c.l.b16 %v4940
    %v4973 = vunpack.c.l.b16 %v4941
    %v4974 = vunpack.c.l.b16 %v4942
    %v4975 = vunpack.c.l.b16 %v4943
    %v4976 = vunpack.c.l.b16 %v4944
    %v4977 = vunpack.c.l.b16 %v4945
    %v4978 = vunpack.c.l.b16 %v4946
    %v4979 = vunpack.c.l.b16 %v4947
    %v4980 = vpack.c.b16 %v4965, %v4964
    %v4981 = vpack.c.b16 %v4967, %v4966
    %v4982 = vpack.c.b16 %v4969, %v4968
    %v4983 = vpack.c.b16 %v4971, %v4970
    %v4984 = vpack.c.b16 %v4973, %v4972
    %v4985 = vpack.c.b16 %v4975, %v4974
    %v4986 = vpack.c.b16 %v4977, %v4976
    %v4987 = vpack.c.b16 %v4979, %v4978
    %4996 = vmatprep.subr.bf16.mxu0 0
    %4997 = vmatpush1.bf16.msra.mxu0 %v4980
    %4998 = vmatprep.subr.bf16.mxu0 0
    %4999 = vmatpush1.bf16.msra.mxu0 %v4981
    %5000 = vmatprep.subr.bf16.mxu0 0
    %5001 = vmatpush1.bf16.msra.mxu0 %v4982
    %5002 = vmatprep.subr.bf16.mxu0 0
    %5003 = vmatpush1.bf16.msra.mxu0 %v4983
    %5004 = vmatprep.subr.bf16.mxu0 0
    %5005 = vmatpush1.bf16.msra.mxu0 %v4984
    %5006 = vmatprep.subr.bf16.mxu0 0
    %5007 = vmatpush1.bf16.msra.mxu0 %v4985
    %5008 = vmatprep.subr.bf16.mxu0 0
    %5009 = vmatpush1.bf16.msra.mxu0 %v4986
    %5010 = vmatprep.subr.bf16.mxu0 0
    %5011 = vmatpush1.bf16.msra.mxu0 %v4987
    %5012 = vmatprep.subr.bf16.mxu0 0
    %5013 = vmatpush1.bf16.msra.mxu0 0
    %5014 = vmatprep.subr.bf16.mxu0 0
    %5015 = vmatpush1.bf16.msra.mxu0 0
    %5016 = vmatprep.subr.bf16.mxu0 0
    %5017 = vmatpush1.bf16.msra.mxu0 0
    %5018 = vmatprep.subr.bf16.mxu0 0
    %5019 = vmatpush1.bf16.msra.mxu0 0
    %5020 = vmatprep.subr.bf16.mxu0 0
    %5021 = vmatpush1.bf16.msra.mxu0 0
    %5022 = vmatprep.subr.bf16.mxu0 0
    %5023 = vmatpush1.bf16.msra.mxu0 0
    %5024 = vmatprep.subr.bf16.mxu0 0
    %5025 = vmatpush1.bf16.msra.mxu0 0
    %5026 = vmatprep.subr.bf16.mxu0 0
    %5027 = vmatpush1.bf16.msra.mxu0 0
    %5028 = vmatprep.mubr.bf16.mxu0 0
    %5029 = vmatmul.mubr.bf16.gmra.mrb[0].mxu0 %v3994
    %v5030 = vpop.f32.mrb[0].mxu0
    %v5031 = vadd.f32 0.0, %v5030
    %v5032 = vpop.f32.mrb[0].mxu0
    %v5033 = vpop.f32.mrb[0].mxu0
    %v5034 = vadd.f32 0.0, %v5033
    %v5035 = vpop.f32.mrb[0].mxu0
    %5036 = vmatprep.mubr.bf16.mxu0 0
    %5037 = vmatmul.mubr.bf16.gmra.mrb[0].mxu0 %v3995
    %v5038 = vpop.f32.mrb[0].mxu0
    %v5039 = vadd.f32 0.0, %v5038
    %v5040 = vpop.f32.mrb[0].mxu0
    %v5041 = vpop.f32.mrb[0].mxu0
    %v5042 = vadd.f32 0.0, %v5041
    %v5043 = vpop.f32.mrb[0].mxu0
    %5044 = vdwg.mxu0
    %v5045 = vadd.f32 %v4927, %v5031
    %v5046 = vadd.f32 %v4928, %v5034
    %v5047 = vadd.f32 %v4929, %v5039
    %v5048 = vadd.f32 %v4930, %v5042
    %v5049 = vld [vmem:[#allocation13] sm:$0x1]
    %v5051 = vlaneseq
    %v5052 = vshrl.u32 %v5051, 7
    %v5053 = vsub.s32 0, %v5052
    %v5054 = vrot.slane %v5049, %v5053
    %v5056 = vadd.f32 %v5045, %v5054
    %v5057 = vadd.f32 %v5046, %v5054
    %v5058 = vadd.f32 %v5047, %v5054
    %v5059 = vadd.f32 %v5048, %v5054
    %v5060 = vmax.f32 %v5056, 0.0
    %v5061 = vmax.f32 %v5057, 0.0
    %v5062 = vmax.f32 %v5058, 0.0
    %v5063 = vmax.f32 %v5059, 0.0
    %v5064 = vpack.c.bf16 %v5061, %v5060
    %v5065 = vpack.c.bf16 %v5063, %v5062
    %v5066 = vld [vmem:[%s21] sm:$0xf]
    %v5067 = vld [vmem:[%s21 + $0x4] sm:$0xf]
    %v5068 = vld [vmem:[%s21 + $0x8] sm:$0xf]
    %v5069 = vld [vmem:[%s21 + $0xc] sm:$0xf]
    %v5070 = vld [vmem:[%s21 + $0x10] sm:$0xf]
    %v5071 = vld [vmem:[%s21 + $0x14] sm:$0xf]
    %v5072 = vld [vmem:[%s21 + $0x18] sm:$0xf]
    %v5073 = vld [vmem:[%s21 + $0x1c] sm:$0xf]
    %v5074 = vld [vmem:[%s21 + $0x20] sm:$0xf]
    %v5075 = vld [vmem:[%s21 + $0x24] sm:$0xf]
    %v5076 = vld [vmem:[%s21 + $0x28] sm:$0xf]
    %v5077 = vld [vmem:[%s21 + $0x2c] sm:$0xf]
    %v5078 = vld [vmem:[%s21 + $0x30] sm:$0xf]
    %v5079 = vld [vmem:[%s21 + $0x34] sm:$0xf]
    %v5080 = vld [vmem:[%s21 + $0x38] sm:$0xf]
    %v5081 = vld [vmem:[%s21 + $0x3c] sm:$0xf]
    %v5082 = vld [vmem:[%s21 + $0x40] sm:$0xf]
    %v5083 = vld [vmem:[%s21 + $0x44] sm:$0xf]
    %v5084 = vld [vmem:[%s21 + $0x48] sm:$0xf]
    %v5085 = vld [vmem:[%s21 + $0x4c] sm:$0xf]
    %v5086 = vld [vmem:[%s21 + $0x50] sm:$0xf]
    %v5087 = vld [vmem:[%s21 + $0x54] sm:$0xf]
    %v5088 = vld [vmem:[%s21 + $0x58] sm:$0xf]
    %v5089 = vld [vmem:[%s21 + $0x5c] sm:$0xf]
    %v5090 = vld [vmem:[%s21 + $0x60] sm:$0xf]
    %v5091 = vld [vmem:[%s21 + $0x64] sm:$0xf]
    %v5092 = vld [vmem:[%s21 + $0x68] sm:$0xf]
    %v5093 = vld [vmem:[%s21 + $0x6c] sm:$0xf]
    %v5094 = vld [vmem:[%s21 + $0x70] sm:$0xf]
    %v5095 = vld [vmem:[%s21 + $0x74] sm:$0xf]
    %v5096 = vld [vmem:[%s21 + $0x78] sm:$0xf]
    %v5097 = vld [vmem:[%s21 + $0x7c] sm:$0xf]
    %v5098 = vld [vmem:[%s21 + $0x80] sm:$0xf]
    %v5099 = vld [vmem:[%s21 + $0x84] sm:$0xf]
    %v5100 = vld [vmem:[%s21 + $0x88] sm:$0xf]
    %v5101 = vld [vmem:[%s21 + $0x8c] sm:$0xf]
    %v5138 = vunpack.c.l.b16 %v5066
    %v5139 = vunpack.c.l.b16 %v5067
    %v5140 = vunpack.c.l.b16 %v5068
    %v5141 = vunpack.c.l.b16 %v5069
    %v5142 = vunpack.c.l.b16 %v5070
    %v5143 = vunpack.c.l.b16 %v5071
    %v5144 = vunpack.c.l.b16 %v5072
    %v5145 = vunpack.c.l.b16 %v5073
    %v5146 = vunpack.c.l.b16 %v5074
    %v5147 = vunpack.c.l.b16 %v5075
    %v5148 = vunpack.c.l.b16 %v5076
    %v5149 = vunpack.c.l.b16 %v5077
    %v5150 = vunpack.c.l.b16 %v5078
    %v5151 = vunpack.c.l.b16 %v5079
    %v5152 = vunpack.c.l.b16 %v5080
    %v5153 = vunpack.c.l.b16 %v5081
    %v5154 = vunpack.c.l.b16 %v5082
    %v5155 = vunpack.c.l.b16 %v5083
    %v5156 = vunpack.c.l.b16 %v5084
    %v5157 = vunpack.c.l.b16 %v5085
    %v5158 = vunpack.c.l.b16 %v5086
    %v5159 = vunpack.c.l.b16 %v5087
    %v5160 = vunpack.c.l.b16 %v5088
    %v5161 = vunpack.c.l.b16 %v5089
    %v5162 = vunpack.c.l.b16 %v5090
    %v5163 = vunpack.c.l.b16 %v5091
    %v5164 = vunpack.c.l.b16 %v5092
    %v5165 = vunpack.c.l.b16 %v5093
    %v5166 = vunpack.c.l.b16 %v5094
    %v5167 = vunpack.c.l.b16 %v5095
    %v5168 = vunpack.c.l.b16 %v5096
    %v5169 = vunpack.c.l.b16 %v5097
    %v5170 = vunpack.c.l.b16 %v5098
    %v5171 = vunpack.c.l.b16 %v5099
    %v5172 = vunpack.c.l.b16 %v5100
    %v5173 = vunpack.c.l.b16 %v5101
    %v5174 = vpack.c.b16 %v5139, %v5138
    %v5175 = vpack.c.b16 %v5141, %v5140
    %v5176 = vpack.c.b16 %v5143, %v5142
    %v5177 = vpack.c.b16 %v5145, %v5144
    %v5178 = vpack.c.b16 %v5147, %v5146
    %v5179 = vpack.c.b16 %v5149, %v5148
    %v5180 = vpack.c.b16 %v5151, %v5150
    %v5181 = vpack.c.b16 %v5153, %v5152
    %v5182 = vpack.c.b16 %v5155, %v5154
    %v5183 = vpack.c.b16 %v5157, %v5156
    %v5184 = vpack.c.b16 %v5159, %v5158
    %v5185 = vpack.c.b16 %v5161, %v5160
    %v5186 = vpack.c.b16 %v5163, %v5162
    %v5187 = vpack.c.b16 %v5165, %v5164
    %v5188 = vpack.c.b16 %v5167, %v5166
    %v5189 = vpack.c.b16 %v5169, %v5168
    %v5190 = vpack.c.b16 %v5171, %v5170
    %v5191 = vpack.c.b16 %v5173, %v5172
    %v5193 = vsel %vm1641, %v5174, 0
    %v5196 = vsel %vm1641, %v5175, 0
    %v5199 = vsel %vm1641, %v5176, 0
    %v5202 = vsel %vm1641, %v5177, 0
    %v5205 = vsel %vm1641, %v5178, 0
    %v5208 = vsel %vm1641, %v5179, 0
    %v5211 = vsel %vm1641, %v5180, 0
    %v5214 = vsel %vm1641, %v5181, 0
    %v5217 = vsel %vm1641, %v5182, 0
    %v5220 = vsel %vm1641, %v5183, 0
    %v5223 = vsel %vm1641, %v5184, 0
    %v5226 = vsel %vm1641, %v5185, 0
    %v5229 = vsel %vm1641, %v5186, 0
    %v5232 = vsel %vm1641, %v5187, 0
    %v5235 = vsel %vm1641, %v5188, 0
    %v5238 = vsel %vm1641, %v5189, 0
    %v5241 = vsel %vm1641, %v5190, 0
    %v5244 = vsel %vm1641, %v5191, 0
    %v5247 = vsel %vm1641, %v5064, 0
    %v5250 = vsel %vm1641, %v5065, 0
    %5252 = vmatprep.subr.bf16.mxu0 0
    %5253 = vmatpush1.bf16.xpose.msra.mxu0 %v5247
    %5254 = vmatprep.subr.bf16.mxu0 0
    %5255 = vmatpush1.bf16.xpose.msra.mxu0 %v5250
    %5256 = vmatprep.subr.bf16.mxu0 0
    %5257 = vmatpush1.bf16.xpose.msra.mxu0 0
    %5258 = vmatprep.subr.bf16.mxu0 0
    %5259 = vmatpush1.bf16.xpose.msra.mxu0 0
    %5260 = vmatprep.subr.bf16.mxu0 0
    %5261 = vmatpush1.bf16.xpose.msra.mxu0 0
    %5262 = vmatprep.subr.bf16.mxu0 0
    %5263 = vmatpush1.bf16.xpose.msra.mxu0 0
    %5264 = vmatprep.subr.bf16.mxu0 0
    %5265 = vmatpush1.bf16.xpose.msra.mxu0 0
    %5266 = vmatprep.subr.bf16.mxu0 0
    %5267 = vmatpush1.bf16.xpose.msra.mxu0 0
    %5268 = vmatprep.subr.bf16.mxu0 0
    %5269 = vmatpush1.bf16.xpose.msra.mxu0 0
    %5270 = vmatprep.subr.bf16.mxu0 0
    %5271 = vmatpush1.bf16.xpose.msra.mxu0 0
    %5272 = vmatprep.subr.bf16.mxu0 0
    %5273 = vmatpush1.bf16.xpose.msra.mxu0 0
    %5274 = vmatprep.subr.bf16.mxu0 0
    %5275 = vmatpush1.bf16.xpose.msra.mxu0 0
    %5276 = vmatprep.subr.bf16.mxu0 0
    %5277 = vmatpush1.bf16.xpose.msra.mxu0 0
    %5278 = vmatprep.subr.bf16.mxu0 0
    %5279 = vmatpush1.bf16.xpose.msra.mxu0 0
    %5280 = vmatprep.subr.bf16.mxu0 0
    %5281 = vmatpush1.bf16.xpose.msra.mxu0 0
    %5282 = vmatprep.subr.bf16.mxu0 0
    %5283 = vmatpush1.bf16.xpose.msra.mxu0 0
    %5284 = vmatprep.mubr.bf16.mxu0 0
    %5285 = vmatmul.mubr.bf16.gmra.mrb[0].mxu0 %v5193
    %v5286 = vpop.f32.mrb[0].mxu0
    %v5287 = vadd.f32 0.0, %v5286
    %v5288 = vpop.f32.mrb[0].mxu0
    %v5289 = vpop.f32.mrb[0].mxu0
    %v5290 = vadd.f32 0.0, %v5289
    %v5291 = vpop.f32.mrb[0].mxu0
    %5292 = vmatprep.mubr.bf16.mxu0 0
    %5293 = vmatmul.mubr.bf16.gmra.mrb[0].mxu0 %v5196
    %v5294 = vpop.f32.mrb[0].mxu0
    %v5295 = vadd.f32 0.0, %v5294
    %v5296 = vpop.f32.mrb[0].mxu0
    %v5297 = vpop.f32.mrb[0].mxu0
    %v5298 = vadd.f32 0.0, %v5297
    %v5299 = vpop.f32.mrb[0].mxu0
    %5300 = vmatprep.mubr.bf16.mxu0 0
    %5301 = vmatmul.mubr.bf16.gmra.mrb[0].mxu0 %v5199
    %v5302 = vpop.f32.mrb[0].mxu0
    %v5303 = vadd.f32 0.0, %v5302
    %v5304 = vpop.f32.mrb[0].mxu0
    %v5305 = vpop.f32.mrb[0].mxu0
    %v5306 = vadd.f32 0.0, %v5305
    %v5307 = vpop.f32.mrb[0].mxu0
    %5308 = vmatprep.mubr.bf16.mxu0 0
    %5309 = vmatmul.mubr.bf16.gmra.mrb[0].mxu0 %v5202
    %v5310 = vpop.f32.mrb[0].mxu0
    %v5311 = vadd.f32 0.0, %v5310
    %v5312 = vpop.f32.mrb[0].mxu0
    %v5313 = vpop.f32.mrb[0].mxu0
    %v5314 = vadd.f32 0.0, %v5313
    %v5315 = vpop.f32.mrb[0].mxu0
    %5316 = vmatprep.mubr.bf16.mxu0 0
    %5317 = vmatmul.mubr.bf16.gmra.mrb[0].mxu0 %v5205
    %v5318 = vpop.f32.mrb[0].mxu0
    %v5319 = vadd.f32 0.0, %v5318
    %v5320 = vpop.f32.mrb[0].mxu0
    %v5321 = vpop.f32.mrb[0].mxu0
    %v5322 = vadd.f32 0.0, %v5321
    %v5323 = vpop.f32.mrb[0].mxu0
    %5324 = vmatprep.mubr.bf16.mxu0 0
    %5325 = vmatmul.mubr.bf16.gmra.mrb[0].mxu0 %v5208
    %v5326 = vpop.f32.mrb[0].mxu0
    %v5327 = vadd.f32 0.0, %v5326
    %v5328 = vpop.f32.mrb[0].mxu0
    %v5329 = vpop.f32.mrb[0].mxu0
    %v5330 = vadd.f32 0.0, %v5329
    %v5331 = vpop.f32.mrb[0].mxu0
    %5332 = vmatprep.mubr.bf16.mxu0 0
    %5333 = vmatmul.mubr.bf16.gmra.mrb[0].mxu0 %v5211
    %v5334 = vpop.f32.mrb[0].mxu0
    %v5335 = vadd.f32 0.0, %v5334
    %v5336 = vpop.f32.mrb[0].mxu0
    %v5337 = vpop.f32.mrb[0].mxu0
    %v5338 = vadd.f32 0.0, %v5337
    %v5339 = vpop.f32.mrb[0].mxu0
    %5340 = vmatprep.mubr.bf16.mxu0 0
    %5341 = vmatmul.mubr.bf16.gmra.mrb[0].mxu0 %v5214
    %v5342 = vpop.f32.mrb[0].mxu0
    %v5343 = vadd.f32 0.0, %v5342
    %v5344 = vpop.f32.mrb[0].mxu0
    %v5345 = vpop.f32.mrb[0].mxu0
    %v5346 = vadd.f32 0.0, %v5345
    %v5347 = vpop.f32.mrb[0].mxu0
    %5348 = vmatprep.mubr.bf16.mxu0 0
    %5349 = vmatmul.mubr.bf16.gmra.mrb[0].mxu0 %v5217
    %v5350 = vpop.f32.mrb[0].mxu0
    %v5351 = vadd.f32 0.0, %v5350
    %v5352 = vpop.f32.mrb[0].mxu0
    %v5353 = vpop.f32.mrb[0].mxu0
    %v5354 = vadd.f32 0.0, %v5353
    %v5355 = vpop.f32.mrb[0].mxu0
    %5356 = vmatprep.mubr.bf16.mxu0 0
    %5357 = vmatmul.mubr.bf16.gmra.mrb[0].mxu0 %v5220
    %v5358 = vpop.f32.mrb[0].mxu0
    %v5359 = vadd.f32 0.0, %v5358
    %v5360 = vpop.f32.mrb[0].mxu0
    %v5361 = vpop.f32.mrb[0].mxu0
    %v5362 = vadd.f32 0.0, %v5361
    %v5363 = vpop.f32.mrb[0].mxu0
    %5364 = vmatprep.mubr.bf16.mxu0 0
    %5365 = vmatmul.mubr.bf16.gmra.mrb[0].mxu0 %v5223
    %v5366 = vpop.f32.mrb[0].mxu0
    %v5367 = vadd.f32 0.0, %v5366
    %v5368 = vpop.f32.mrb[0].mxu0
    %v5369 = vpop.f32.mrb[0].mxu0
    %v5370 = vadd.f32 0.0, %v5369
    %v5371 = vpop.f32.mrb[0].mxu0
    %5372 = vmatprep.mubr.bf16.mxu0 0
    %5373 = vmatmul.mubr.bf16.gmra.mrb[0].mxu0 %v5226
    %v5374 = vpop.f32.mrb[0].mxu0
    %v5375 = vadd.f32 0.0, %v5374
    %v5376 = vpop.f32.mrb[0].mxu0
    %v5377 = vpop.f32.mrb[0].mxu0
    %v5378 = vadd.f32 0.0, %v5377
    %v5379 = vpop.f32.mrb[0].mxu0
    %5380 = vmatprep.mubr.bf16.mxu0 0
    %5381 = vmatmul.mubr.bf16.gmra.mrb[0].mxu0 %v5229
    %v5382 = vpop.f32.mrb[0].mxu0
    %v5383 = vadd.f32 0.0, %v5382
    %v5384 = vpop.f32.mrb[0].mxu0
    %v5385 = vpop.f32.mrb[0].mxu0
    %v5386 = vadd.f32 0.0, %v5385
    %v5387 = vpop.f32.mrb[0].mxu0
    %5388 = vmatprep.mubr.bf16.mxu0 0
    %5389 = vmatmul.mubr.bf16.gmra.mrb[0].mxu0 %v5232
    %v5390 = vpop.f32.mrb[0].mxu0
    %v5391 = vadd.f32 0.0, %v5390
    %v5392 = vpop.f32.mrb[0].mxu0
    %v5393 = vpop.f32.mrb[0].mxu0
    %v5394 = vadd.f32 0.0, %v5393
    %v5395 = vpop.f32.mrb[0].mxu0
    %5396 = vmatprep.mubr.bf16.mxu0 0
    %5397 = vmatmul.mubr.bf16.gmra.mrb[0].mxu0 %v5235
    %v5398 = vpop.f32.mrb[0].mxu0
    %v5399 = vadd.f32 0.0, %v5398
    %v5400 = vpop.f32.mrb[0].mxu0
    %v5401 = vpop.f32.mrb[0].mxu0
    %v5402 = vadd.f32 0.0, %v5401
    %v5403 = vpop.f32.mrb[0].mxu0
    %5404 = vmatprep.mubr.bf16.mxu0 0
    %5405 = vmatmul.mubr.bf16.gmra.mrb[0].mxu0 %v5238
    %v5406 = vpop.f32.mrb[0].mxu0
    %v5407 = vadd.f32 0.0, %v5406
    %v5408 = vpop.f32.mrb[0].mxu0
    %v5409 = vpop.f32.mrb[0].mxu0
    %v5410 = vadd.f32 0.0, %v5409
    %v5411 = vpop.f32.mrb[0].mxu0
    %5412 = vmatprep.mubr.bf16.mxu0 0
    %5413 = vmatmul.mubr.bf16.gmra.mrb[0].mxu0 %v5241
    %v5414 = vpop.f32.mrb[0].mxu0
    %v5415 = vadd.f32 0.0, %v5414
    %v5416 = vpop.f32.mrb[0].mxu0
    %v5417 = vpop.f32.mrb[0].mxu0
    %v5418 = vadd.f32 0.0, %v5417
    %v5419 = vpop.f32.mrb[0].mxu0
    %5420 = vmatprep.mubr.bf16.mxu0 0
    %5421 = vmatmul.mubr.bf16.gmra.mrb[0].mxu0 %v5244
    %v5422 = vpop.f32.mrb[0].mxu0
    %v5423 = vadd.f32 0.0, %v5422
    %v5424 = vpop.f32.mrb[0].mxu0
    %v5425 = vpop.f32.mrb[0].mxu0
    %v5426 = vadd.f32 0.0, %v5425
    %v5427 = vpop.f32.mrb[0].mxu0
    %5428 = vdwg.mxu0
    %v5429 = vpack.c.bf16 %v5290, %v5287
    %v5430 = vpack.c.bf16 %v5298, %v5295
    %v5431 = vpack.c.bf16 %v5306, %v5303
    %v5432 = vpack.c.bf16 %v5314, %v5311
    %v5433 = vpack.c.bf16 %v5322, %v5319
    %v5434 = vpack.c.bf16 %v5330, %v5327
    %v5435 = vpack.c.bf16 %v5338, %v5335
    %v5436 = vpack.c.bf16 %v5346, %v5343
    %v5437 = vpack.c.bf16 %v5354, %v5351
    %v5438 = vpack.c.bf16 %v5362, %v5359
    %v5439 = vpack.c.bf16 %v5370, %v5367
    %v5440 = vpack.c.bf16 %v5378, %v5375
    %v5441 = vpack.c.bf16 %v5386, %v5383
    %v5442 = vpack.c.bf16 %v5394, %v5391
    %v5443 = vpack.c.bf16 %v5402, %v5399
    %v5444 = vpack.c.bf16 %v5410, %v5407
    %v5445 = vpack.c.bf16 %v5418, %v5415
    %v5446 = vpack.c.bf16 %v5426, %v5423
    %v5447 = vld [vmem:[%s22] sm:$0xf]
    %v5448 = vld [vmem:[%s22 + $0x4] sm:$0xf]
    %v5449 = vld [vmem:[%s22 + $0x8] sm:$0xf]
    %v5450 = vld [vmem:[%s22 + $0xc] sm:$0xf]
    %s5451 = scalar_lea.vmem %s22, 16
    %v5452 = vld [vmem:[%s5451] sm:$0xf]
    %v5453 = vld [vmem:[%s5451 + $0x4] sm:$0xf]
    %v5454 = vld [vmem:[%s5451 + $0x8] sm:$0xf]
    %v5455 = vld [vmem:[%s5451 + $0xc] sm:$0xf]
    %v5460 = vunpack.c.l.b16 %v5452
    %v5461 = vunpack.c.l.b16 %v5453
    %v5462 = vunpack.c.l.b16 %v5454
    %v5463 = vunpack.c.l.b16 %v5455
    %v5464 = vpack.c.b16 %v5461, %v5460
    %v5465 = vpack.c.b16 %v5463, %v5462
    %v5469 = vsel %vm802, %v5431, 0
    %v5472 = vsel %vm802, %v5432, 0
    %5474 = vmatprep.subr.bf16.mxu0 0
    %5475 = vmatpush1.bf16.msra.mxu0 %v5464
    %5476 = vmatprep.subr.bf16.mxu0 0
    %5477 = vmatpush1.bf16.msra.mxu0 %v5465
    %5478 = vmatprep.subr.bf16.mxu0 0
    %5479 = vmatpush1.bf16.msra.mxu0 0
    %5480 = vmatprep.subr.bf16.mxu0 0
    %5481 = vmatpush1.bf16.msra.mxu0 0
    %5482 = vmatprep.subr.bf16.mxu0 0
    %5483 = vmatpush1.bf16.msra.mxu0 0
    %5484 = vmatprep.subr.bf16.mxu0 0
    %5485 = vmatpush1.bf16.msra.mxu0 0
    %5486 = vmatprep.subr.bf16.mxu0 0
    %5487 = vmatpush1.bf16.msra.mxu0 0
    %5488 = vmatprep.subr.bf16.mxu0 0
    %5489 = vmatpush1.bf16.msra.mxu0 0
    %5490 = vmatprep.subr.bf16.mxu0 0
    %5491 = vmatpush1.bf16.msra.mxu0 0
    %5492 = vmatprep.subr.bf16.mxu0 0
    %5493 = vmatpush1.bf16.msra.mxu0 0
    %5494 = vmatprep.subr.bf16.mxu0 0
    %5495 = vmatpush1.bf16.msra.mxu0 0
    %5496 = vmatprep.subr.bf16.mxu0 0
    %5497 = vmatpush1.bf16.msra.mxu0 0
    %5498 = vmatprep.subr.bf16.mxu0 0
    %5499 = vmatpush1.bf16.msra.mxu0 0
    %5500 = vmatprep.subr.bf16.mxu0 0
    %5501 = vmatpush1.bf16.msra.mxu0 0
    %5502 = vmatprep.subr.bf16.mxu0 0
    %5503 = vmatpush1.bf16.msra.mxu0 0
    %5504 = vmatprep.subr.bf16.mxu0 0
    %5505 = vmatpush1.bf16.msra.mxu0 0
    %5506 = vmatprep.mubr.bf16.mxu0 0
    %5507 = vmatmul.mubr.bf16.gmra.mrb[0].mxu0 %v5469
    %v5508 = vpop.f32.mrb[0].mxu0
    %v5509 = vadd.f32 0.0, %v5508
    %v5510 = vpop.f32.mrb[0].mxu0
    %v5511 = vpop.f32.mrb[0].mxu0
    %v5512 = vadd.f32 0.0, %v5511
    %v5513 = vpop.f32.mrb[0].mxu0
    %5514 = vmatprep.mubr.bf16.mxu0 0
    %5515 = vmatmul.mubr.bf16.gmra.mrb[0].mxu0 %v5472
    %v5516 = vpop.f32.mrb[0].mxu0
    %v5517 = vadd.f32 0.0, %v5516
    %v5518 = vpop.f32.mrb[0].mxu0
    %v5519 = vpop.f32.mrb[0].mxu0
    %v5520 = vadd.f32 0.0, %v5519
    %v5521 = vpop.f32.mrb[0].mxu0
    %5522 = vdwg.mxu0
    %v5527 = vunpack.c.l.b16 %v5447
    %v5528 = vunpack.c.l.b16 %v5448
    %v5529 = vunpack.c.l.b16 %v5449
    %v5530 = vunpack.c.l.b16 %v5450
    %v5531 = vpack.c.b16 %v5528, %v5527
    %v5532 = vpack.c.b16 %v5530, %v5529
    %v5536 = vsel %vm802, %v5429, 0
    %v5539 = vsel %vm802, %v5430, 0
    %5541 = vmatprep.subr.bf16.mxu0 0
    %5542 = vmatpush1.bf16.msra.mxu0 %v5531
    %5543 = vmatprep.subr.bf16.mxu0 0
    %5544 = vmatpush1.bf16.msra.mxu0 %v5532
    %5545 = vmatprep.subr.bf16.mxu0 0
    %5546 = vmatpush1.bf16.msra.mxu0 0
    %5547 = vmatprep.subr.bf16.mxu0 0
    %5548 = vmatpush1.bf16.msra.mxu0 0
    %5549 = vmatprep.subr.bf16.mxu0 0
    %5550 = vmatpush1.bf16.msra.mxu0 0
    %5551 = vmatprep.subr.bf16.mxu0 0
    %5552 = vmatpush1.bf16.msra.mxu0 0
    %5553 = vmatprep.subr.bf16.mxu0 0
    %5554 = vmatpush1.bf16.msra.mxu0 0
    %5555 = vmatprep.subr.bf16.mxu0 0
    %5556 = vmatpush1.bf16.msra.mxu0 0
    %5557 = vmatprep.subr.bf16.mxu0 0
    %5558 = vmatpush1.bf16.msra.mxu0 0
    %5559 = vmatprep.subr.bf16.mxu0 0
    %5560 = vmatpush1.bf16.msra.mxu0 0
    %5561 = vmatprep.subr.bf16.mxu0 0
    %5562 = vmatpush1.bf16.msra.mxu0 0
    %5563 = vmatprep.subr.bf16.mxu0 0
    %5564 = vmatpush1.bf16.msra.mxu0 0
    %5565 = vmatprep.subr.bf16.mxu0 0
    %5566 = vmatpush1.bf16.msra.mxu0 0
    %5567 = vmatprep.subr.bf16.mxu0 0
    %5568 = vmatpush1.bf16.msra.mxu0 0
    %5569 = vmatprep.subr.bf16.mxu0 0
    %5570 = vmatpush1.bf16.msra.mxu0 0
    %5571 = vmatprep.subr.bf16.mxu0 0
    %5572 = vmatpush1.bf16.msra.mxu0 0
    %5573 = vmatprep.mubr.bf16.mxu0 0
    %5574 = vmatmul.mubr.bf16.gmra.mrb[0].mxu0 %v5536
    %v5575 = vpop.f32.mrb[0].mxu0
    %v5576 = vadd.f32 %v5509, %v5575
    %v5577 = vpop.f32.mrb[0].mxu0
    %v5578 = vpop.f32.mrb[0].mxu0
    %v5579 = vadd.f32 %v5512, %v5578
    %v5580 = vpop.f32.mrb[0].mxu0
    %5581 = vmatprep.mubr.bf16.mxu0 0
    %5582 = vmatmul.mubr.bf16.gmra.mrb[0].mxu0 %v5539
    %v5583 = vpop.f32.mrb[0].mxu0
    %v5584 = vadd.f32 %v5517, %v5583
    %v5585 = vpop.f32.mrb[0].mxu0
    %v5586 = vpop.f32.mrb[0].mxu0
    %v5587 = vadd.f32 %v5520, %v5586
    %v5588 = vpop.f32.mrb[0].mxu0
    %5589 = vdwg.mxu0
    %s5590 = scalar_lea.vmem %s22, 32
    %v5591 = vld [vmem:[%s5590] sm:$0xf]
    %v5592 = vld [vmem:[%s5590 + $0x4] sm:$0xf]
    %v5593 = vld [vmem:[%s5590 + $0x8] sm:$0xf]
    %v5594 = vld [vmem:[%s5590 + $0xc] sm:$0xf]
    %v5599 = vunpack.c.l.b16 %v5591
    %v5600 = vunpack.c.l.b16 %v5592
    %v5601 = vunpack.c.l.b16 %v5593
    %v5602 = vunpack.c.l.b16 %v5594
    %v5603 = vpack.c.b16 %v5600, %v5599
    %v5604 = vpack.c.b16 %v5602, %v5601
    %v5608 = vsel %vm802, %v5433, 0
    %v5611 = vsel %vm802, %v5434, 0
    %5613 = vmatprep.subr.bf16.mxu0 0
    %5614 = vmatpush1.bf16.msra.mxu0 %v5603
    %5615 = vmatprep.subr.bf16.mxu0 0
    %5616 = vmatpush1.bf16.msra.mxu0 %v5604
    %5617 = vmatprep.subr.bf16.mxu0 0
    %5618 = vmatpush1.bf16.msra.mxu0 0
    %5619 = vmatprep.subr.bf16.mxu0 0
    %5620 = vmatpush1.bf16.msra.mxu0 0
    %5621 = vmatprep.subr.bf16.mxu0 0
    %5622 = vmatpush1.bf16.msra.mxu0 0
    %5623 = vmatprep.subr.bf16.mxu0 0
    %5624 = vmatpush1.bf16.msra.mxu0 0
    %5625 = vmatprep.subr.bf16.mxu0 0
    %5626 = vmatpush1.bf16.msra.mxu0 0
    %5627 = vmatprep.subr.bf16.mxu0 0
    %5628 = vmatpush1.bf16.msra.mxu0 0
    %5629 = vmatprep.subr.bf16.mxu0 0
    %5630 = vmatpush1.bf16.msra.mxu0 0
    %5631 = vmatprep.subr.bf16.mxu0 0
    %5632 = vmatpush1.bf16.msra.mxu0 0
    %5633 = vmatprep.subr.bf16.mxu0 0
    %5634 = vmatpush1.bf16.msra.mxu0 0
    %5635 = vmatprep.subr.bf16.mxu0 0
    %5636 = vmatpush1.bf16.msra.mxu0 0
    %5637 = vmatprep.subr.bf16.mxu0 0
    %5638 = vmatpush1.bf16.msra.mxu0 0
    %5639 = vmatprep.subr.bf16.mxu0 0
    %5640 = vmatpush1.bf16.msra.mxu0 0
    %5641 = vmatprep.subr.bf16.mxu0 0
    %5642 = vmatpush1.bf16.msra.mxu0 0
    %5643 = vmatprep.subr.bf16.mxu0 0
    %5644 = vmatpush1.bf16.msra.mxu0 0
    %5645 = vmatprep.mubr.bf16.mxu0 0
    %5646 = vmatmul.mubr.bf16.gmra.mrb[0].mxu0 %v5608
    %v5647 = vpop.f32.mrb[0].mxu0
    %v5648 = vadd.f32 0.0, %v5647
    %v5649 = vpop.f32.mrb[0].mxu0
    %v5650 = vpop.f32.mrb[0].mxu0
    %v5651 = vadd.f32 0.0, %v5650
    %v5652 = vpop.f32.mrb[0].mxu0
    %5653 = vmatprep.mubr.bf16.mxu0 0
    %5654 = vmatmul.mubr.bf16.gmra.mrb[0].mxu0 %v5611
    %v5655 = vpop.f32.mrb[0].mxu0
    %v5656 = vadd.f32 0.0, %v5655
    %v5657 = vpop.f32.mrb[0].mxu0
    %v5658 = vpop.f32.mrb[0].mxu0
    %v5659 = vadd.f32 0.0, %v5658
    %v5660 = vpop.f32.mrb[0].mxu0
    %5661 = vdwg.mxu0
    %v5662 = vadd.f32 %v5576, %v5648
    %v5663 = vadd.f32 %v5579, %v5651
    %v5664 = vadd.f32 %v5584, %v5656
    %v5665 = vadd.f32 %v5587, %v5659
    %s5666 = scalar_lea.vmem %s22, 48
    %v5667 = vld [vmem:[%s5666] sm:$0xf]
    %v5668 = vld [vmem:[%s5666 + $0x4] sm:$0xf]
    %v5669 = vld [vmem:[%s5666 + $0x8] sm:$0xf]
    %v5670 = vld [vmem:[%s5666 + $0xc] sm:$0xf]
    %v5675 = vunpack.c.l.b16 %v5667
    %v5676 = vunpack.c.l.b16 %v5668
    %v5677 = vunpack.c.l.b16 %v5669
    %v5678 = vunpack.c.l.b16 %v5670
    %v5679 = vpack.c.b16 %v5676, %v5675
    %v5680 = vpack.c.b16 %v5678, %v5677
    %v5684 = vsel %vm802, %v5435, 0
    %v5687 = vsel %vm802, %v5436, 0
    %5689 = vmatprep.subr.bf16.mxu0 0
    %5690 = vmatpush1.bf16.msra.mxu0 %v5679
    %5691 = vmatprep.subr.bf16.mxu0 0
    %5692 = vmatpush1.bf16.msra.mxu0 %v5680
    %5693 = vmatprep.subr.bf16.mxu0 0
    %5694 = vmatpush1.bf16.msra.mxu0 0
    %5695 = vmatprep.subr.bf16.mxu0 0
    %5696 = vmatpush1.bf16.msra.mxu0 0
    %5697 = vmatprep.subr.bf16.mxu0 0
    %5698 = vmatpush1.bf16.msra.mxu0 0
    %5699 = vmatprep.subr.bf16.mxu0 0
    %5700 = vmatpush1.bf16.msra.mxu0 0
    %5701 = vmatprep.subr.bf16.mxu0 0
    %5702 = vmatpush1.bf16.msra.mxu0 0
    %5703 = vmatprep.subr.bf16.mxu0 0
    %5704 = vmatpush1.bf16.msra.mxu0 0
    %5705 = vmatprep.subr.bf16.mxu0 0
    %5706 = vmatpush1.bf16.msra.mxu0 0
    %5707 = vmatprep.subr.bf16.mxu0 0
    %5708 = vmatpush1.bf16.msra.mxu0 0
    %5709 = vmatprep.subr.bf16.mxu0 0
    %5710 = vmatpush1.bf16.msra.mxu0 0
    %5711 = vmatprep.subr.bf16.mxu0 0
    %5712 = vmatpush1.bf16.msra.mxu0 0
    %5713 = vmatprep.subr.bf16.mxu0 0
    %5714 = vmatpush1.bf16.msra.mxu0 0
    %5715 = vmatprep.subr.bf16.mxu0 0
    %5716 = vmatpush1.bf16.msra.mxu0 0
    %5717 = vmatprep.subr.bf16.mxu0 0
    %5718 = vmatpush1.bf16.msra.mxu0 0
    %5719 = vmatprep.subr.bf16.mxu0 0
    %5720 = vmatpush1.bf16.msra.mxu0 0
    %5721 = vmatprep.mubr.bf16.mxu0 0
    %5722 = vmatmul.mubr.bf16.gmra.mrb[0].mxu0 %v5684
    %v5723 = vpop.f32.mrb[0].mxu0
    %v5724 = vadd.f32 0.0, %v5723
    %v5725 = vpop.f32.mrb[0].mxu0
    %v5726 = vpop.f32.mrb[0].mxu0
    %v5727 = vadd.f32 0.0, %v5726
    %v5728 = vpop.f32.mrb[0].mxu0
    %5729 = vmatprep.mubr.bf16.mxu0 0
    %5730 = vmatmul.mubr.bf16.gmra.mrb[0].mxu0 %v5687
    %v5731 = vpop.f32.mrb[0].mxu0
    %v5732 = vadd.f32 0.0, %v5731
    %v5733 = vpop.f32.mrb[0].mxu0
    %v5734 = vpop.f32.mrb[0].mxu0
    %v5735 = vadd.f32 0.0, %v5734
    %v5736 = vpop.f32.mrb[0].mxu0
    %5737 = vdwg.mxu0
    %v5738 = vadd.f32 %v5662, %v5724
    %v5739 = vadd.f32 %v5663, %v5727
    %v5740 = vadd.f32 %v5664, %v5732
    %v5741 = vadd.f32 %v5665, %v5735
    %s5742 = scalar_lea.vmem %s22, 64
    %v5743 = vld [vmem:[%s5742] sm:$0xf]
    %v5744 = vld [vmem:[%s5742 + $0x4] sm:$0xf]
    %v5745 = vld [vmem:[%s5742 + $0x8] sm:$0xf]
    %v5746 = vld [vmem:[%s5742 + $0xc] sm:$0xf]
    %v5751 = vunpack.c.l.b16 %v5743
    %v5752 = vunpack.c.l.b16 %v5744
    %v5753 = vunpack.c.l.b16 %v5745
    %v5754 = vunpack.c.l.b16 %v5746
    %v5755 = vpack.c.b16 %v5752, %v5751
    %v5756 = vpack.c.b16 %v5754, %v5753
    %v5760 = vsel %vm802, %v5437, 0
    %v5763 = vsel %vm802, %v5438, 0
    %5765 = vmatprep.subr.bf16.mxu0 0
    %5766 = vmatpush1.bf16.msra.mxu0 %v5755
    %5767 = vmatprep.subr.bf16.mxu0 0
    %5768 = vmatpush1.bf16.msra.mxu0 %v5756
    %5769 = vmatprep.subr.bf16.mxu0 0
    %5770 = vmatpush1.bf16.msra.mxu0 0
    %5771 = vmatprep.subr.bf16.mxu0 0
    %5772 = vmatpush1.bf16.msra.mxu0 0
    %5773 = vmatprep.subr.bf16.mxu0 0
    %5774 = vmatpush1.bf16.msra.mxu0 0
    %5775 = vmatprep.subr.bf16.mxu0 0
    %5776 = vmatpush1.bf16.msra.mxu0 0
    %5777 = vmatprep.subr.bf16.mxu0 0
    %5778 = vmatpush1.bf16.msra.mxu0 0
    %5779 = vmatprep.subr.bf16.mxu0 0
    %5780 = vmatpush1.bf16.msra.mxu0 0
    %5781 = vmatprep.subr.bf16.mxu0 0
    %5782 = vmatpush1.bf16.msra.mxu0 0
    %5783 = vmatprep.subr.bf16.mxu0 0
    %5784 = vmatpush1.bf16.msra.mxu0 0
    %5785 = vmatprep.subr.bf16.mxu0 0
    %5786 = vmatpush1.bf16.msra.mxu0 0
    %5787 = vmatprep.subr.bf16.mxu0 0
    %5788 = vmatpush1.bf16.msra.mxu0 0
    %5789 = vmatprep.subr.bf16.mxu0 0
    %5790 = vmatpush1.bf16.msra.mxu0 0
    %5791 = vmatprep.subr.bf16.mxu0 0
    %5792 = vmatpush1.bf16.msra.mxu0 0
    %5793 = vmatprep.subr.bf16.mxu0 0
    %5794 = vmatpush1.bf16.msra.mxu0 0
    %5795 = vmatprep.subr.bf16.mxu0 0
    %5796 = vmatpush1.bf16.msra.mxu0 0
    %5797 = vmatprep.mubr.bf16.mxu0 0
    %5798 = vmatmul.mubr.bf16.gmra.mrb[0].mxu0 %v5760
    %v5799 = vpop.f32.mrb[0].mxu0
    %v5800 = vadd.f32 0.0, %v5799
    %v5801 = vpop.f32.mrb[0].mxu0
    %v5802 = vpop.f32.mrb[0].mxu0
    %v5803 = vadd.f32 0.0, %v5802
    %v5804 = vpop.f32.mrb[0].mxu0
    %5805 = vmatprep.mubr.bf16.mxu0 0
    %5806 = vmatmul.mubr.bf16.gmra.mrb[0].mxu0 %v5763
    %v5807 = vpop.f32.mrb[0].mxu0
    %v5808 = vadd.f32 0.0, %v5807
    %v5809 = vpop.f32.mrb[0].mxu0
    %v5810 = vpop.f32.mrb[0].mxu0
    %v5811 = vadd.f32 0.0, %v5810
    %v5812 = vpop.f32.mrb[0].mxu0
    %5813 = vdwg.mxu0
    %v5814 = vadd.f32 %v5738, %v5800
    %v5815 = vadd.f32 %v5739, %v5803
    %v5816 = vadd.f32 %v5740, %v5808
    %v5817 = vadd.f32 %v5741, %v5811
    %s5818 = scalar_lea.vmem %s22, 80
    %v5819 = vld [vmem:[%s5818] sm:$0xf]
    %v5820 = vld [vmem:[%s5818 + $0x4] sm:$0xf]
    %v5821 = vld [vmem:[%s5818 + $0x8] sm:$0xf]
    %v5822 = vld [vmem:[%s5818 + $0xc] sm:$0xf]
    %v5827 = vunpack.c.l.b16 %v5819
    %v5828 = vunpack.c.l.b16 %v5820
    %v5829 = vunpack.c.l.b16 %v5821
    %v5830 = vunpack.c.l.b16 %v5822
    %v5831 = vpack.c.b16 %v5828, %v5827
    %v5832 = vpack.c.b16 %v5830, %v5829
    %v5836 = vsel %vm802, %v5439, 0
    %v5839 = vsel %vm802, %v5440, 0
    %5841 = vmatprep.subr.bf16.mxu0 0
    %5842 = vmatpush1.bf16.msra.mxu0 %v5831
    %5843 = vmatprep.subr.bf16.mxu0 0
    %5844 = vmatpush1.bf16.msra.mxu0 %v5832
    %5845 = vmatprep.subr.bf16.mxu0 0
    %5846 = vmatpush1.bf16.msra.mxu0 0
    %5847 = vmatprep.subr.bf16.mxu0 0
    %5848 = vmatpush1.bf16.msra.mxu0 0
    %5849 = vmatprep.subr.bf16.mxu0 0
    %5850 = vmatpush1.bf16.msra.mxu0 0
    %5851 = vmatprep.subr.bf16.mxu0 0
    %5852 = vmatpush1.bf16.msra.mxu0 0
    %5853 = vmatprep.subr.bf16.mxu0 0
    %5854 = vmatpush1.bf16.msra.mxu0 0
    %5855 = vmatprep.subr.bf16.mxu0 0
    %5856 = vmatpush1.bf16.msra.mxu0 0
    %5857 = vmatprep.subr.bf16.mxu0 0
    %5858 = vmatpush1.bf16.msra.mxu0 0
    %5859 = vmatprep.subr.bf16.mxu0 0
    %5860 = vmatpush1.bf16.msra.mxu0 0
    %5861 = vmatprep.subr.bf16.mxu0 0
    %5862 = vmatpush1.bf16.msra.mxu0 0
    %5863 = vmatprep.subr.bf16.mxu0 0
    %5864 = vmatpush1.bf16.msra.mxu0 0
    %5865 = vmatprep.subr.bf16.mxu0 0
    %5866 = vmatpush1.bf16.msra.mxu0 0
    %5867 = vmatprep.subr.bf16.mxu0 0
    %5868 = vmatpush1.bf16.msra.mxu0 0
    %5869 = vmatprep.subr.bf16.mxu0 0
    %5870 = vmatpush1.bf16.msra.mxu0 0
    %5871 = vmatprep.subr.bf16.mxu0 0
    %5872 = vmatpush1.bf16.msra.mxu0 0
    %5873 = vmatprep.mubr.bf16.mxu0 0
    %5874 = vmatmul.mubr.bf16.gmra.mrb[0].mxu0 %v5836
    %v5875 = vpop.f32.mrb[0].mxu0
    %v5876 = vadd.f32 0.0, %v5875
    %v5877 = vpop.f32.mrb[0].mxu0
    %v5878 = vpop.f32.mrb[0].mxu0
    %v5879 = vadd.f32 0.0, %v5878
    %v5880 = vpop.f32.mrb[0].mxu0
    %5881 = vmatprep.mubr.bf16.mxu0 0
    %5882 = vmatmul.mubr.bf16.gmra.mrb[0].mxu0 %v5839
    %v5883 = vpop.f32.mrb[0].mxu0
    %v5884 = vadd.f32 0.0, %v5883
    %v5885 = vpop.f32.mrb[0].mxu0
    %v5886 = vpop.f32.mrb[0].mxu0
    %v5887 = vadd.f32 0.0, %v5886
    %v5888 = vpop.f32.mrb[0].mxu0
    %5889 = vdwg.mxu0
    %v5890 = vadd.f32 %v5814, %v5876
    %v5891 = vadd.f32 %v5815, %v5879
    %v5892 = vadd.f32 %v5816, %v5884
    %v5893 = vadd.f32 %v5817, %v5887
    %s5894 = scalar_lea.vmem %s22, 96
    %v5895 = vld [vmem:[%s5894] sm:$0xf]
    %v5896 = vld [vmem:[%s5894 + $0x4] sm:$0xf]
    %v5897 = vld [vmem:[%s5894 + $0x8] sm:$0xf]
    %v5898 = vld [vmem:[%s5894 + $0xc] sm:$0xf]
    %v5903 = vunpack.c.l.b16 %v5895
    %v5904 = vunpack.c.l.b16 %v5896
    %v5905 = vunpack.c.l.b16 %v5897
    %v5906 = vunpack.c.l.b16 %v5898
    %v5907 = vpack.c.b16 %v5904, %v5903
    %v5908 = vpack.c.b16 %v5906, %v5905
    %v5912 = vsel %vm802, %v5441, 0
    %v5915 = vsel %vm802, %v5442, 0
    %5917 = vmatprep.subr.bf16.mxu0 0
    %5918 = vmatpush1.bf16.msra.mxu0 %v5907
    %5919 = vmatprep.subr.bf16.mxu0 0
    %5920 = vmatpush1.bf16.msra.mxu0 %v5908
    %5921 = vmatprep.subr.bf16.mxu0 0
    %5922 = vmatpush1.bf16.msra.mxu0 0
    %5923 = vmatprep.subr.bf16.mxu0 0
    %5924 = vmatpush1.bf16.msra.mxu0 0
    %5925 = vmatprep.subr.bf16.mxu0 0
    %5926 = vmatpush1.bf16.msra.mxu0 0
    %5927 = vmatprep.subr.bf16.mxu0 0
    %5928 = vmatpush1.bf16.msra.mxu0 0
    %5929 = vmatprep.subr.bf16.mxu0 0
    %5930 = vmatpush1.bf16.msra.mxu0 0
    %5931 = vmatprep.subr.bf16.mxu0 0
    %5932 = vmatpush1.bf16.msra.mxu0 0
    %5933 = vmatprep.subr.bf16.mxu0 0
    %5934 = vmatpush1.bf16.msra.mxu0 0
    %5935 = vmatprep.subr.bf16.mxu0 0
    %5936 = vmatpush1.bf16.msra.mxu0 0
    %5937 = vmatprep.subr.bf16.mxu0 0
    %5938 = vmatpush1.bf16.msra.mxu0 0
    %5939 = vmatprep.subr.bf16.mxu0 0
    %5940 = vmatpush1.bf16.msra.mxu0 0
    %5941 = vmatprep.subr.bf16.mxu0 0
    %5942 = vmatpush1.bf16.msra.mxu0 0
    %5943 = vmatprep.subr.bf16.mxu0 0
    %5944 = vmatpush1.bf16.msra.mxu0 0
    %5945 = vmatprep.subr.bf16.mxu0 0
    %5946 = vmatpush1.bf16.msra.mxu0 0
    %5947 = vmatprep.subr.bf16.mxu0 0
    %5948 = vmatpush1.bf16.msra.mxu0 0
    %5949 = vmatprep.mubr.bf16.mxu0 0
    %5950 = vmatmul.mubr.bf16.gmra.mrb[0].mxu0 %v5912
    %v5951 = vpop.f32.mrb[0].mxu0
    %v5952 = vadd.f32 0.0, %v5951
    %v5953 = vpop.f32.mrb[0].mxu0
    %v5954 = vpop.f32.mrb[0].mxu0
    %v5955 = vadd.f32 0.0, %v5954
    %v5956 = vpop.f32.mrb[0].mxu0
    %5957 = vmatprep.mubr.bf16.mxu0 0
    %5958 = vmatmul.mubr.bf16.gmra.mrb[0].mxu0 %v5915
    %v5959 = vpop.f32.mrb[0].mxu0
    %v5960 = vadd.f32 0.0, %v5959
    %v5961 = vpop.f32.mrb[0].mxu0
    %v5962 = vpop.f32.mrb[0].mxu0
    %v5963 = vadd.f32 0.0, %v5962
    %v5964 = vpop.f32.mrb[0].mxu0
    %5965 = vdwg.mxu0
    %v5966 = vadd.f32 %v5890, %v5952
    %v5967 = vadd.f32 %v5891, %v5955
    %v5968 = vadd.f32 %v5892, %v5960
    %v5969 = vadd.f32 %v5893, %v5963
    %s5970 = scalar_lea.vmem %s22, 112
    %v5971 = vld [vmem:[%s5970] sm:$0xf]
    %v5972 = vld [vmem:[%s5970 + $0x4] sm:$0xf]
    %v5973 = vld [vmem:[%s5970 + $0x8] sm:$0xf]
    %v5974 = vld [vmem:[%s5970 + $0xc] sm:$0xf]
    %v5979 = vunpack.c.l.b16 %v5971
    %v5980 = vunpack.c.l.b16 %v5972
    %v5981 = vunpack.c.l.b16 %v5973
    %v5982 = vunpack.c.l.b16 %v5974
    %v5983 = vpack.c.b16 %v5980, %v5979
    %v5984 = vpack.c.b16 %v5982, %v5981
    %v5988 = vsel %vm802, %v5443, 0
    %v5991 = vsel %vm802, %v5444, 0
    %5993 = vmatprep.subr.bf16.mxu0 0
    %5994 = vmatpush1.bf16.msra.mxu0 %v5983
    %5995 = vmatprep.subr.bf16.mxu0 0
    %5996 = vmatpush1.bf16.msra.mxu0 %v5984
    %5997 = vmatprep.subr.bf16.mxu0 0
    %5998 = vmatpush1.bf16.msra.mxu0 0
    %5999 = vmatprep.subr.bf16.mxu0 0
    %6000 = vmatpush1.bf16.msra.mxu0 0
    %6001 = vmatprep.subr.bf16.mxu0 0
    %6002 = vmatpush1.bf16.msra.mxu0 0
    %6003 = vmatprep.subr.bf16.mxu0 0
    %6004 = vmatpush1.bf16.msra.mxu0 0
    %6005 = vmatprep.subr.bf16.mxu0 0
    %6006 = vmatpush1.bf16.msra.mxu0 0
    %6007 = vmatprep.subr.bf16.mxu0 0
    %6008 = vmatpush1.bf16.msra.mxu0 0
    %6009 = vmatprep.subr.bf16.mxu0 0
    %6010 = vmatpush1.bf16.msra.mxu0 0
    %6011 = vmatprep.subr.bf16.mxu0 0
    %6012 = vmatpush1.bf16.msra.mxu0 0
    %6013 = vmatprep.subr.bf16.mxu0 0
    %6014 = vmatpush1.bf16.msra.mxu0 0
    %6015 = vmatprep.subr.bf16.mxu0 0
    %6016 = vmatpush1.bf16.msra.mxu0 0
    %6017 = vmatprep.subr.bf16.mxu0 0
    %6018 = vmatpush1.bf16.msra.mxu0 0
    %6019 = vmatprep.subr.bf16.mxu0 0
    %6020 = vmatpush1.bf16.msra.mxu0 0
    %6021 = vmatprep.subr.bf16.mxu0 0
    %6022 = vmatpush1.bf16.msra.mxu0 0
    %6023 = vmatprep.subr.bf16.mxu0 0
    %6024 = vmatpush1.bf16.msra.mxu0 0
    %6025 = vmatprep.mubr.bf16.mxu0 0
    %6026 = vmatmul.mubr.bf16.gmra.mrb[0].mxu0 %v5988
    %v6027 = vpop.f32.mrb[0].mxu0
    %v6028 = vadd.f32 0.0, %v6027
    %v6029 = vpop.f32.mrb[0].mxu0
    %v6030 = vpop.f32.mrb[0].mxu0
    %v6031 = vadd.f32 0.0, %v6030
    %v6032 = vpop.f32.mrb[0].mxu0
    %6033 = vmatprep.mubr.bf16.mxu0 0
    %6034 = vmatmul.mubr.bf16.gmra.mrb[0].mxu0 %v5991
    %v6035 = vpop.f32.mrb[0].mxu0
    %v6036 = vadd.f32 0.0, %v6035
    %v6037 = vpop.f32.mrb[0].mxu0
    %v6038 = vpop.f32.mrb[0].mxu0
    %v6039 = vadd.f32 0.0, %v6038
    %v6040 = vpop.f32.mrb[0].mxu0
    %6041 = vdwg.mxu0
    %v6042 = vadd.f32 %v5966, %v6028
    %v6043 = vadd.f32 %v5967, %v6031
    %v6044 = vadd.f32 %v5968, %v6036
    %v6045 = vadd.f32 %v5969, %v6039
    %s6046 = scalar_lea.vmem %s22, 128
    %v6047 = vld [vmem:[%s6046] sm:$0xf]
    %v6048 = vld [vmem:[%s6046 + $0x4] sm:$0xf]
    %v6049 = vld [vmem:[%s6046 + $0x8] sm:$0xf]
    %v6050 = vld [vmem:[%s6046 + $0xc] sm:$0xf]
    %v6055 = vunpack.c.l.b16 %v6047
    %v6056 = vunpack.c.l.b16 %v6048
    %v6057 = vunpack.c.l.b16 %v6049
    %v6058 = vunpack.c.l.b16 %v6050
    %v6059 = vpack.c.b16 %v6056, %v6055
    %v6060 = vpack.c.b16 %v6058, %v6057
    %v6064 = vsel %vm802, %v5445, 0
    %v6067 = vsel %vm802, %v5446, 0
    %6069 = vmatprep.subr.bf16.mxu0 0
    %6070 = vmatpush1.bf16.msra.mxu0 %v6059
    %6071 = vmatprep.subr.bf16.mxu0 0
    %6072 = vmatpush1.bf16.msra.mxu0 %v6060
    %6073 = vmatprep.subr.bf16.mxu0 0
    %6074 = vmatpush1.bf16.msra.mxu0 0
    %6075 = vmatprep.subr.bf16.mxu0 0
    %6076 = vmatpush1.bf16.msra.mxu0 0
    %6077 = vmatprep.subr.bf16.mxu0 0
    %6078 = vmatpush1.bf16.msra.mxu0 0
    %6079 = vmatprep.subr.bf16.mxu0 0
    %6080 = vmatpush1.bf16.msra.mxu0 0
    %6081 = vmatprep.subr.bf16.mxu0 0
    %6082 = vmatpush1.bf16.msra.mxu0 0
    %6083 = vmatprep.subr.bf16.mxu0 0
    %6084 = vmatpush1.bf16.msra.mxu0 0
    %6085 = vmatprep.subr.bf16.mxu0 0
    %6086 = vmatpush1.bf16.msra.mxu0 0
    %6087 = vmatprep.subr.bf16.mxu0 0
    %6088 = vmatpush1.bf16.msra.mxu0 0
    %6089 = vmatprep.subr.bf16.mxu0 0
    %6090 = vmatpush1.bf16.msra.mxu0 0
    %6091 = vmatprep.subr.bf16.mxu0 0
    %6092 = vmatpush1.bf16.msra.mxu0 0
    %6093 = vmatprep.subr.bf16.mxu0 0
    %6094 = vmatpush1.bf16.msra.mxu0 0
    %6095 = vmatprep.subr.bf16.mxu0 0
    %6096 = vmatpush1.bf16.msra.mxu0 0
    %6097 = vmatprep.subr.bf16.mxu0 0
    %6098 = vmatpush1.bf16.msra.mxu0 0
    %6099 = vmatprep.subr.bf16.mxu0 0
    %6100 = vmatpush1.bf16.msra.mxu0 0
    %6101 = vmatprep.mubr.bf16.mxu0 0
    %6102 = vmatmul.mubr.bf16.gmra.mrb[0].mxu0 %v6064
    %v6103 = vpop.f32.mrb[0].mxu0
    %v6104 = vadd.f32 0.0, %v6103
    %v6105 = vpop.f32.mrb[0].mxu0
    %v6106 = vpop.f32.mrb[0].mxu0
    %v6107 = vadd.f32 0.0, %v6106
    %v6108 = vpop.f32.mrb[0].mxu0
    %6109 = vmatprep.mubr.bf16.mxu0 0
    %6110 = vmatmul.mubr.bf16.gmra.mrb[0].mxu0 %v6067
    %v6111 = vpop.f32.mrb[0].mxu0
    %v6112 = vadd.f32 0.0, %v6111
    %v6113 = vpop.f32.mrb[0].mxu0
    %v6114 = vpop.f32.mrb[0].mxu0
    %v6115 = vadd.f32 0.0, %v6114
    %v6116 = vpop.f32.mrb[0].mxu0
    %6117 = vdwg.mxu0
    %v6118 = vadd.f32 %v6042, %v6104
    %v6119 = vadd.f32 %v6043, %v6107
    %v6120 = vadd.f32 %v6044, %v6112
    %v6121 = vadd.f32 %v6045, %v6115
    %v6122 = vld [vmem:[#allocation15] sm:$0xff]
    %v6123 = vld [vmem:[#allocation15 + $0x8] sm:$0xff]
    %v6124 = vld [vmem:[#allocation15 + $0x10] sm:$0xff]
    %v6125 = vld [vmem:[#allocation15 + $0x18] sm:$0xff]
    %v6126 = vadd.f32 %v6118, %v6122
    %v6127 = vadd.f32 %v6119, %v6123
    %v6128 = vadd.f32 %v6120, %v6124
    %v6129 = vadd.f32 %v6121, %v6125
    %v6130 = vmax.f32 %v6126, 0.0
    %v6131 = vmax.f32 %v6127, 0.0
    %v6132 = vmax.f32 %v6128, 0.0
    %v6133 = vmax.f32 %v6129, 0.0
    %v6134 = vpack.c.bf16 %v6131, %v6130
    %v6135 = vpack.c.bf16 %v6133, %v6132
    %v6136 = vld [vmem:[%s24] sm:$0xf]
    %v6137 = vld [vmem:[%s24 + $0x4] sm:$0xf]
    %v6138 = vld [vmem:[%s24 + $0x8] sm:$0xf]
    %v6139 = vld [vmem:[%s24 + $0xc] sm:$0xf]
    %v6140 = vld [vmem:[%s24 + $0x10] sm:$0xf]
    %v6141 = vld [vmem:[%s24 + $0x14] sm:$0xf]
    %v6142 = vld [vmem:[%s24 + $0x18] sm:$0xf]
    %v6143 = vld [vmem:[%s24 + $0x1c] sm:$0xf]
    %v6144 = vld [vmem:[%s24 + $0x20] sm:$0xf]
    %v6154 = vunpack.c.l.b16 %v6136
    %v6155 = vunpack.c.l.b16 %v6137
    %v6156 = vunpack.c.l.b16 %v6138
    %v6157 = vunpack.c.l.b16 %v6139
    %v6158 = vunpack.c.l.b16 %v6140
    %v6159 = vunpack.c.l.b16 %v6141
    %v6160 = vunpack.c.l.b16 %v6142
    %v6161 = vunpack.c.l.b16 %v6143
    %v6162 = vunpack.c.l.b16 %v6144
    %v6163 = vpack.c.b16 %v6155, %v6154
    %v6164 = vpack.c.b16 %v6157, %v6156
    %v6165 = vpack.c.b16 %v6159, %v6158
    %v6166 = vpack.c.b16 %v6161, %v6160
    %v6167 = vpack.c.b16 %v6162, %v6162
    %v6169 = vsel %vm802, %v6163, 0
    %v6172 = vsel %vm802, %v6164, 0
    %v6175 = vsel %vm802, %v6165, 0
    %v6178 = vsel %vm802, %v6166, 0
    %v6181 = vsel %vm802, %v6167, 0
    %6183 = vmatprep.subr.bf16.mxu0 0
    %6184 = vmatpush1.bf16.msra.mxu0 %v6134
    %6185 = vmatprep.subr.bf16.mxu0 0
    %6186 = vmatpush1.bf16.msra.mxu0 %v6135
    %6187 = vmatprep.subr.bf16.mxu0 0
    %6188 = vmatpush1.bf16.msra.mxu0 0
    %6189 = vmatprep.subr.bf16.mxu0 0
    %6190 = vmatpush1.bf16.msra.mxu0 0
    %6191 = vmatprep.subr.bf16.mxu0 0
    %6192 = vmatpush1.bf16.msra.mxu0 0
    %6193 = vmatprep.subr.bf16.mxu0 0
    %6194 = vmatpush1.bf16.msra.mxu0 0
    %6195 = vmatprep.subr.bf16.mxu0 0
    %6196 = vmatpush1.bf16.msra.mxu0 0
    %6197 = vmatprep.subr.bf16.mxu0 0
    %6198 = vmatpush1.bf16.msra.mxu0 0
    %6199 = vmatprep.subr.bf16.mxu0 0
    %6200 = vmatpush1.bf16.msra.mxu0 0
    %6201 = vmatprep.subr.bf16.mxu0 0
    %6202 = vmatpush1.bf16.msra.mxu0 0
    %6203 = vmatprep.subr.bf16.mxu0 0
    %6204 = vmatpush1.bf16.msra.mxu0 0
    %6205 = vmatprep.subr.bf16.mxu0 0
    %6206 = vmatpush1.bf16.msra.mxu0 0
    %6207 = vmatprep.subr.bf16.mxu0 0
    %6208 = vmatpush1.bf16.msra.mxu0 0
    %6209 = vmatprep.subr.bf16.mxu0 0
    %6210 = vmatpush1.bf16.msra.mxu0 0
    %6211 = vmatprep.subr.bf16.mxu0 0
    %6212 = vmatpush1.bf16.msra.mxu0 0
    %6213 = vmatprep.subr.bf16.mxu0 0
    %6214 = vmatpush1.bf16.msra.mxu0 0
    %6215 = vmatprep.mubr.bf16.mxu0 0
    %6216 = vmatmul.mubr.bf16.gmra.mrb[0].mxu0 %v6169
    %v6217 = vpop.f32.mrb[0].mxu0
    %v6218 = vadd.f32 0.0, %v6217
    %v6219 = vpop.f32.mrb[0].mxu0
    %v6220 = vpop.f32.mrb[0].mxu0
    %v6221 = vadd.f32 0.0, %v6220
    %v6222 = vpop.f32.mrb[0].mxu0
    %6223 = vmatprep.mubr.bf16.mxu0 0
    %6224 = vmatmul.mubr.bf16.gmra.mrb[0].mxu0 %v6172
    %v6225 = vpop.f32.mrb[0].mxu0
    %v6226 = vadd.f32 0.0, %v6225
    %v6227 = vpop.f32.mrb[0].mxu0
    %v6228 = vpop.f32.mrb[0].mxu0
    %v6229 = vadd.f32 0.0, %v6228
    %v6230 = vpop.f32.mrb[0].mxu0
    %6231 = vmatprep.mubr.bf16.mxu0 0
    %6232 = vmatmul.mubr.bf16.gmra.mrb[0].mxu0 %v6175
    %v6233 = vpop.f32.mrb[0].mxu0
    %v6234 = vadd.f32 0.0, %v6233
    %v6235 = vpop.f32.mrb[0].mxu0
    %v6236 = vpop.f32.mrb[0].mxu0
    %v6237 = vadd.f32 0.0, %v6236
    %v6238 = vpop.f32.mrb[0].mxu0
    %6239 = vmatprep.mubr.bf16.mxu0 0
    %6240 = vmatmul.mubr.bf16.gmra.mrb[0].mxu0 %v6178
    %v6241 = vpop.f32.mrb[0].mxu0
    %v6242 = vadd.f32 0.0, %v6241
    %v6243 = vpop.f32.mrb[0].mxu0
    %v6244 = vpop.f32.mrb[0].mxu0
    %v6245 = vadd.f32 0.0, %v6244
    %v6246 = vpop.f32.mrb[0].mxu0
    %6247 = vmatprep.mubr.bf16.mxu0 0
    %6248 = vmatmul.mubr.bf16.gmra.mrb[0].mxu0 %v6181
    %v6249 = vpop.f32.mrb[0].mxu0
    %v6250 = vadd.f32 0.0, %v6249
    %v6251 = vpop.f32.mrb[0].mxu0
    %v6252 = vpop.f32.mrb[0].mxu0
    %v6253 = vpop.f32.mrb[0].mxu0
    %6254 = vdwg.mxu0
    %v6255 = vpack.c.bf16 %v6221, %v6218
    %v6256 = vpack.c.bf16 %v6229, %v6226
    %v6257 = vpack.c.bf16 %v6237, %v6234
    %v6258 = vpack.c.bf16 %v6245, %v6242
    %v6259 = vpack.c.bf16 %v6250, %v6250
    %v6260 = vld [vmem:[%s25] sm:$0xff]
    %v6261 = vld [vmem:[%s25 + $0x8] sm:$0xff]
    %v6262 = vld [vmem:[%s25 + $0x10] sm:$0xff]
    %v6263 = vld [vmem:[%s25 + $0x18] sm:$0xff]
    %v6264 = vld [vmem:[%s25 + $0x20] sm:$0xff]
    %v6265 = vld [vmem:[%s25 + $0x28] sm:$0xff]
    %v6266 = vld [vmem:[%s25 + $0x30] sm:$0xff]
    %v6267 = vld [vmem:[%s25 + $0x38] sm:$0xff]
    %v6268 = vld [vmem:[%s25 + $0x40] sm:$0xff]
    %v6269 = vld [vmem:[%s25 + $0x48] sm:$0xff]
    %v6270 = vld [vmem:[%s25 + $0x50] sm:$0xff]
    %v6271 = vld [vmem:[%s25 + $0x58] sm:$0xff]
    %v6272 = vld [vmem:[%s25 + $0x60] sm:$0xff]
    %v6273 = vld [vmem:[%s25 + $0x68] sm:$0xff]
    %v6274 = vld [vmem:[%s25 + $0x70] sm:$0xff]
    %v6275 = vld [vmem:[%s25 + $0x78] sm:$0xff]
    %v6276 = vld [vmem:[%s25 + $0x80] sm:$0xff]
    %v6277 = vld [vmem:[%s25 + $0x88] sm:$0xff]
    %v6278 = vld [vmem:[%s25 + $0x90] sm:$0xff]
    %v6279 = vld [vmem:[%s25 + $0x98] sm:$0xff]
    %v6280 = vld [vmem:[%s25 + $0xa0] sm:$0xff]
    %v6281 = vld [vmem:[%s25 + $0xa8] sm:$0xff]
    %v6282 = vld [vmem:[%s25 + $0xb0] sm:$0xff]
    %v6283 = vld [vmem:[%s25 + $0xb8] sm:$0xff]
    %v6284 = vld [vmem:[%s25 + $0xc0] sm:$0xff]
    %v6285 = vld [vmem:[%s25 + $0xc8] sm:$0xff]
    %v6286 = vld [vmem:[%s25 + $0xd0] sm:$0xff]
    %v6287 = vld [vmem:[%s25 + $0xd8] sm:$0xff]
    %v6288 = vld [vmem:[%s25 + $0xe0] sm:$0xff]
    %v6289 = vld [vmem:[%s25 + $0xe8] sm:$0xff]
    %v6290 = vld [vmem:[%s25 + $0xf0] sm:$0xff]
    %v6291 = vld [vmem:[%s25 + $0xf8] sm:$0xff]
    %s6292 = scalar_lea.vmem %s25, 256
    %v6293 = vld [vmem:[%s6292] sm:$0xff]
    %v6294 = vld [vmem:[%s6292 + $0x8] sm:$0xff]
    %v6295 = vld [vmem:[%s6292 + $0x10] sm:$0xff]
    %v6296 = vld [vmem:[%s6292 + $0x18] sm:$0xff]
    %v6297 = vld [vmem:[%s6292 + $0x20] sm:$0xff]
    %v6298 = vld [vmem:[%s6292 + $0x28] sm:$0xff]
    %v6299 = vld [vmem:[%s6292 + $0x30] sm:$0xff]
    %v6300 = vld [vmem:[%s6292 + $0x38] sm:$0xff]
    %v6301 = vld [vmem:[%s6292 + $0x40] sm:$0xff]
    %v6302 = vld [vmem:[%s6292 + $0x48] sm:$0xff]
    %v6303 = vld [vmem:[%s6292 + $0x50] sm:$0xff]
    %v6304 = vld [vmem:[%s6292 + $0x58] sm:$0xff]
    %v6305 = vld [vmem:[%s6292 + $0x60] sm:$0xff]
    %v6306 = vld [vmem:[%s6292 + $0x68] sm:$0xff]
    %v6307 = vld [vmem:[%s6292 + $0x70] sm:$0xff]
    %v6308 = vld [vmem:[%s6292 + $0x78] sm:$0xff]
    %v6309 = vld [vmem:[%s6292 + $0x80] sm:$0xff]
    %v6310 = vld [vmem:[%s6292 + $0x88] sm:$0xff]
    %v6311 = vld [vmem:[%s6292 + $0x90] sm:$0xff]
    %v6312 = vld [vmem:[%s6292 + $0x98] sm:$0xff]
    %v6313 = vld [vmem:[%s6292 + $0xa0] sm:$0xff]
    %v6314 = vld [vmem:[%s6292 + $0xa8] sm:$0xff]
    %v6315 = vld [vmem:[%s6292 + $0xb0] sm:$0xff]
    %v6316 = vld [vmem:[%s6292 + $0xb8] sm:$0xff]
    %v6317 = vld [vmem:[%s6292 + $0xc0] sm:$0xff]
    %v6318 = vld [vmem:[%s6292 + $0xc8] sm:$0xff]
    %v6319 = vld [vmem:[%s6292 + $0xd0] sm:$0xff]
    %v6320 = vld [vmem:[%s6292 + $0xd8] sm:$0xff]
    %v6321 = vld [vmem:[%s6292 + $0xe0] sm:$0xff]
    %v6322 = vld [vmem:[%s6292 + $0xe8] sm:$0xff]
    %v6323 = vld [vmem:[%s6292 + $0xf0] sm:$0xff]
    %v6324 = vld [vmem:[%s6292 + $0xf8] sm:$0xff]
    %v6326 = vrot.slane %v6255, 4
    %v6360 = vunpack.c.l.b16 %v6293
    %v6361 = vunpack.c.h.b16 %v6293
    %v6362 = vunpack.c.l.b16 %v6294
    %v6363 = vunpack.c.h.b16 %v6294
    %v6364 = vunpack.c.l.b16 %v6295
    %v6365 = vunpack.c.h.b16 %v6295
    %v6366 = vunpack.c.l.b16 %v6296
    %v6367 = vunpack.c.h.b16 %v6296
    %v6368 = vunpack.c.l.b16 %v6297
    %v6369 = vunpack.c.h.b16 %v6297
    %v6370 = vunpack.c.l.b16 %v6298
    %v6371 = vunpack.c.h.b16 %v6298
    %v6372 = vunpack.c.l.b16 %v6299
    %v6373 = vunpack.c.h.b16 %v6299
    %v6374 = vunpack.c.l.b16 %v6300
    %v6375 = vunpack.c.h.b16 %v6300
    %v6376 = vunpack.c.l.b16 %v6301
    %v6377 = vunpack.c.h.b16 %v6301
    %v6378 = vunpack.c.l.b16 %v6302
    %v6379 = vunpack.c.h.b16 %v6302
    %v6380 = vunpack.c.l.b16 %v6303
    %v6381 = vunpack.c.h.b16 %v6303
    %v6382 = vunpack.c.l.b16 %v6304
    %v6383 = vunpack.c.h.b16 %v6304
    %v6384 = vunpack.c.l.b16 %v6305
    %v6385 = vunpack.c.h.b16 %v6305
    %v6386 = vunpack.c.l.b16 %v6306
    %v6387 = vunpack.c.h.b16 %v6306
    %v6388 = vunpack.c.l.b16 %v6307
    %v6389 = vunpack.c.h.b16 %v6307
    %v6390 = vunpack.c.l.b16 %v6308
    %v6391 = vunpack.c.h.b16 %v6308
    %v6392 = vunpack.c.l.b16 %v6309
    %v6393 = vunpack.c.h.b16 %v6309
    %v6394 = vunpack.c.l.b16 %v6310
    %v6395 = vunpack.c.h.b16 %v6310
    %v6396 = vunpack.c.l.b16 %v6311
    %v6397 = vunpack.c.h.b16 %v6311
    %v6398 = vunpack.c.l.b16 %v6312
    %v6399 = vunpack.c.h.b16 %v6312
    %v6400 = vunpack.c.l.b16 %v6313
    %v6401 = vunpack.c.h.b16 %v6313
    %v6402 = vunpack.c.l.b16 %v6314
    %v6403 = vunpack.c.h.b16 %v6314
    %v6404 = vunpack.c.l.b16 %v6315
    %v6405 = vunpack.c.h.b16 %v6315
    %v6406 = vunpack.c.l.b16 %v6316
    %v6407 = vunpack.c.h.b16 %v6316
    %v6408 = vunpack.c.l.b16 %v6317
    %v6409 = vunpack.c.h.b16 %v6317
    %v6410 = vunpack.c.l.b16 %v6318
    %v6411 = vunpack.c.h.b16 %v6318
    %v6412 = vunpack.c.l.b16 %v6319
    %v6413 = vunpack.c.h.b16 %v6319
    %v6414 = vunpack.c.l.b16 %v6320
    %v6415 = vunpack.c.h.b16 %v6320
    %v6416 = vunpack.c.l.b16 %v6321
    %v6417 = vunpack.c.h.b16 %v6321
    %v6418 = vunpack.c.l.b16 %v6322
    %v6419 = vunpack.c.h.b16 %v6322
    %v6420 = vunpack.c.l.b16 %v6323
    %v6421 = vunpack.c.h.b16 %v6323
    %v6422 = vunpack.c.l.b16 %v6324
    %v6423 = vunpack.c.h.b16 %v6324
    %v6424 = vpack.c.b16 %v6364, %v6360
    %v6425 = vpack.c.b16 %v6365, %v6361
    %v6426 = vpack.c.b16 %v6366, %v6362
    %v6427 = vpack.c.b16 %v6367, %v6363
    %v6428 = vpack.c.b16 %v6372, %v6368
    %v6429 = vpack.c.b16 %v6373, %v6369
    %v6430 = vpack.c.b16 %v6374, %v6370
    %v6431 = vpack.c.b16 %v6375, %v6371
    %v6432 = vpack.c.b16 %v6380, %v6376
    %v6433 = vpack.c.b16 %v6381, %v6377
    %v6434 = vpack.c.b16 %v6382, %v6378
    %v6435 = vpack.c.b16 %v6383, %v6379
    %v6436 = vpack.c.b16 %v6388, %v6384
    %v6437 = vpack.c.b16 %v6389, %v6385
    %v6438 = vpack.c.b16 %v6390, %v6386
    %v6439 = vpack.c.b16 %v6391, %v6387
    %v6440 = vpack.c.b16 %v6396, %v6392
    %v6441 = vpack.c.b16 %v6397, %v6393
    %v6442 = vpack.c.b16 %v6398, %v6394
    %v6443 = vpack.c.b16 %v6399, %v6395
    %v6444 = vpack.c.b16 %v6404, %v6400
    %v6445 = vpack.c.b16 %v6405, %v6401
    %v6446 = vpack.c.b16 %v6406, %v6402
    %v6447 = vpack.c.b16 %v6407, %v6403
    %v6448 = vpack.c.b16 %v6412, %v6408
    %v6449 = vpack.c.b16 %v6413, %v6409
    %v6450 = vpack.c.b16 %v6414, %v6410
    %v6451 = vpack.c.b16 %v6415, %v6411
    %v6452 = vpack.c.b16 %v6420, %v6416
    %v6453 = vpack.c.b16 %v6421, %v6417
    %v6454 = vpack.c.b16 %v6422, %v6418
    %v6455 = vpack.c.b16 %v6423, %v6419
    %6488 = vmatprep.subr.bf16.mxu0 %v6425
    %6489 = vmatpush1.bf16.msra.mxu0 %v6424
    %6490 = vmatprep.subr.bf16.mxu0 %v6429
    %6491 = vmatpush1.bf16.msra.mxu0 %v6428
    %6492 = vmatprep.subr.bf16.mxu0 %v6433
    %6493 = vmatpush1.bf16.msra.mxu0 %v6432
    %6494 = vmatprep.subr.bf16.mxu0 %v6437
    %6495 = vmatpush1.bf16.msra.mxu0 %v6436
    %6496 = vmatprep.subr.bf16.mxu0 %v6441
    %6497 = vmatpush1.bf16.msra.mxu0 %v6440
    %6498 = vmatprep.subr.bf16.mxu0 %v6445
    %6499 = vmatpush1.bf16.msra.mxu0 %v6444
    %6500 = vmatprep.subr.bf16.mxu0 %v6449
    %6501 = vmatpush1.bf16.msra.mxu0 %v6448
    %6502 = vmatprep.subr.bf16.mxu0 %v6453
    %6503 = vmatpush1.bf16.msra.mxu0 %v6452
    %6504 = vmatprep.subr.bf16.mxu0 0
    %6505 = vmatpush1.bf16.msra.mxu0 0
    %6506 = vmatprep.subr.bf16.mxu0 0
    %6507 = vmatpush1.bf16.msra.mxu0 0
    %6508 = vmatprep.subr.bf16.mxu0 0
    %6509 = vmatpush1.bf16.msra.mxu0 0
    %6510 = vmatprep.subr.bf16.mxu0 0
    %6511 = vmatpush1.bf16.msra.mxu0 0
    %6512 = vmatprep.subr.bf16.mxu0 0
    %6513 = vmatpush1.bf16.msra.mxu0 0
    %6514 = vmatprep.subr.bf16.mxu0 0
    %6515 = vmatpush1.bf16.msra.mxu0 0
    %6516 = vmatprep.subr.bf16.mxu0 0
    %6517 = vmatpush1.bf16.msra.mxu0 0
    %6518 = vmatprep.subr.bf16.mxu0 0
    %6519 = vmatpush1.bf16.msra.mxu0 0
    %6520 = vmatprep.mubr.bf16.mxu0 0
    %6521 = vmatmul.mubr.bf16.gmra.mrb[0].mxu0 %v6326
    %v6522 = vpop.f32.mrb[0].mxu0
    %v6523 = vadd.f32 0.0, %v6522
    %v6524 = vpop.f32.mrb[0].mxu0
    %v6525 = vadd.f32 0.0, %v6524
    %v6526 = vpop.f32.mrb[0].mxu0
    %v6527 = vpop.f32.mrb[0].mxu0
    %6528 = vdwg.mxu0
    %6529 = vmatprep.subr.bf16.mxu0 %v6427
    %6530 = vmatpush1.bf16.msra.mxu0 %v6426
    %6531 = vmatprep.subr.bf16.mxu0 %v6431
    %6532 = vmatpush1.bf16.msra.mxu0 %v6430
    %6533 = vmatprep.subr.bf16.mxu0 %v6435
    %6534 = vmatpush1.bf16.msra.mxu0 %v6434
    %6535 = vmatprep.subr.bf16.mxu0 %v6439
    %6536 = vmatpush1.bf16.msra.mxu0 %v6438
    %6537 = vmatprep.subr.bf16.mxu0 %v6443
    %6538 = vmatpush1.bf16.msra.mxu0 %v6442
    %6539 = vmatprep.subr.bf16.mxu0 %v6447
    %6540 = vmatpush1.bf16.msra.mxu0 %v6446
    %6541 = vmatprep.subr.bf16.mxu0 %v6451
    %6542 = vmatpush1.bf16.msra.mxu0 %v6450
    %6543 = vmatprep.subr.bf16.mxu0 %v6455
    %6544 = vmatpush1.bf16.msra.mxu0 %v6454
    %6545 = vmatprep.subr.bf16.mxu0 0
    %6546 = vmatpush1.bf16.msra.mxu0 0
    %6547 = vmatprep.subr.bf16.mxu0 0
    %6548 = vmatpush1.bf16.msra.mxu0 0
    %6549 = vmatprep.subr.bf16.mxu0 0
    %6550 = vmatpush1.bf16.msra.mxu0 0
    %6551 = vmatprep.subr.bf16.mxu0 0
    %6552 = vmatpush1.bf16.msra.mxu0 0
    %6553 = vmatprep.subr.bf16.mxu0 0
    %6554 = vmatpush1.bf16.msra.mxu0 0
    %6555 = vmatprep.subr.bf16.mxu0 0
    %6556 = vmatpush1.bf16.msra.mxu0 0
    %6557 = vmatprep.subr.bf16.mxu0 0
    %6558 = vmatpush1.bf16.msra.mxu0 0
    %6559 = vmatprep.subr.bf16.mxu0 0
    %6560 = vmatpush1.bf16.msra.mxu0 0
    %6561 = vmatprep.mubr.bf16.mxu0 0
    %6562 = vmatmul.mubr.bf16.gmra.mrb[0].mxu0 %v6326
    %v6563 = vpop.f32.mrb[0].mxu0
    %v6564 = vadd.f32 0.0, %v6563
    %v6565 = vpop.f32.mrb[0].mxu0
    %v6566 = vadd.f32 0.0, %v6565
    %v6567 = vpop.f32.mrb[0].mxu0
    %v6568 = vpop.f32.mrb[0].mxu0
    %6569 = vdwg.mxu0
    %v6602 = vunpack.c.l.b16 %v6260
    %v6603 = vunpack.c.h.b16 %v6260
    %v6604 = vunpack.c.l.b16 %v6261
    %v6605 = vunpack.c.h.b16 %v6261
    %v6606 = vunpack.c.l.b16 %v6262
    %v6607 = vunpack.c.h.b16 %v6262
    %v6608 = vunpack.c.l.b16 %v6263
    %v6609 = vunpack.c.h.b16 %v6263
    %v6610 = vunpack.c.l.b16 %v6264
    %v6611 = vunpack.c.h.b16 %v6264
    %v6612 = vunpack.c.l.b16 %v6265
    %v6613 = vunpack.c.h.b16 %v6265
    %v6614 = vunpack.c.l.b16 %v6266
    %v6615 = vunpack.c.h.b16 %v6266
    %v6616 = vunpack.c.l.b16 %v6267
    %v6617 = vunpack.c.h.b16 %v6267
    %v6618 = vunpack.c.l.b16 %v6268
    %v6619 = vunpack.c.h.b16 %v6268
    %v6620 = vunpack.c.l.b16 %v6269
    %v6621 = vunpack.c.h.b16 %v6269
    %v6622 = vunpack.c.l.b16 %v6270
    %v6623 = vunpack.c.h.b16 %v6270
    %v6624 = vunpack.c.l.b16 %v6271
    %v6625 = vunpack.c.h.b16 %v6271
    %v6626 = vunpack.c.l.b16 %v6272
    %v6627 = vunpack.c.h.b16 %v6272
    %v6628 = vunpack.c.l.b16 %v6273
    %v6629 = vunpack.c.h.b16 %v6273
    %v6630 = vunpack.c.l.b16 %v6274
    %v6631 = vunpack.c.h.b16 %v6274
    %v6632 = vunpack.c.l.b16 %v6275
    %v6633 = vunpack.c.h.b16 %v6275
    %v6634 = vunpack.c.l.b16 %v6276
    %v6635 = vunpack.c.h.b16 %v6276
    %v6636 = vunpack.c.l.b16 %v6277
    %v6637 = vunpack.c.h.b16 %v6277
    %v6638 = vunpack.c.l.b16 %v6278
    %v6639 = vunpack.c.h.b16 %v6278
    %v6640 = vunpack.c.l.b16 %v6279
    %v6641 = vunpack.c.h.b16 %v6279
    %v6642 = vunpack.c.l.b16 %v6280
    %v6643 = vunpack.c.h.b16 %v6280
    %v6644 = vunpack.c.l.b16 %v6281
    %v6645 = vunpack.c.h.b16 %v6281
    %v6646 = vunpack.c.l.b16 %v6282
    %v6647 = vunpack.c.h.b16 %v6282
    %v6648 = vunpack.c.l.b16 %v6283
    %v6649 = vunpack.c.h.b16 %v6283
    %v6650 = vunpack.c.l.b16 %v6284
    %v6651 = vunpack.c.h.b16 %v6284
    %v6652 = vunpack.c.l.b16 %v6285
    %v6653 = vunpack.c.h.b16 %v6285
    %v6654 = vunpack.c.l.b16 %v6286
    %v6655 = vunpack.c.h.b16 %v6286
    %v6656 = vunpack.c.l.b16 %v6287
    %v6657 = vunpack.c.h.b16 %v6287
    %v6658 = vunpack.c.l.b16 %v6288
    %v6659 = vunpack.c.h.b16 %v6288
    %v6660 = vunpack.c.l.b16 %v6289
    %v6661 = vunpack.c.h.b16 %v6289
    %v6662 = vunpack.c.l.b16 %v6290
    %v6663 = vunpack.c.h.b16 %v6290
    %v6664 = vunpack.c.l.b16 %v6291
    %v6665 = vunpack.c.h.b16 %v6291
    %v6666 = vpack.c.b16 %v6606, %v6602
    %v6667 = vpack.c.b16 %v6607, %v6603
    %v6668 = vpack.c.b16 %v6608, %v6604
    %v6669 = vpack.c.b16 %v6609, %v6605
    %v6670 = vpack.c.b16 %v6614, %v6610
    %v6671 = vpack.c.b16 %v6615, %v6611
    %v6672 = vpack.c.b16 %v6616, %v6612
    %v6673 = vpack.c.b16 %v6617, %v6613
    %v6674 = vpack.c.b16 %v6622, %v6618
    %v6675 = vpack.c.b16 %v6623, %v6619
    %v6676 = vpack.c.b16 %v6624, %v6620
    %v6677 = vpack.c.b16 %v6625, %v6621
    %v6678 = vpack.c.b16 %v6630, %v6626
    %v6679 = vpack.c.b16 %v6631, %v6627
    %v6680 = vpack.c.b16 %v6632, %v6628
    %v6681 = vpack.c.b16 %v6633, %v6629
    %v6682 = vpack.c.b16 %v6638, %v6634
    %v6683 = vpack.c.b16 %v6639, %v6635
    %v6684 = vpack.c.b16 %v6640, %v6636
    %v6685 = vpack.c.b16 %v6641, %v6637
    %v6686 = vpack.c.b16 %v6646, %v6642
    %v6687 = vpack.c.b16 %v6647, %v6643
    %v6688 = vpack.c.b16 %v6648, %v6644
    %v6689 = vpack.c.b16 %v6649, %v6645
    %v6690 = vpack.c.b16 %v6654, %v6650
    %v6691 = vpack.c.b16 %v6655, %v6651
    %v6692 = vpack.c.b16 %v6656, %v6652
    %v6693 = vpack.c.b16 %v6657, %v6653
    %v6694 = vpack.c.b16 %v6662, %v6658
    %v6695 = vpack.c.b16 %v6663, %v6659
    %v6696 = vpack.c.b16 %v6664, %v6660
    %v6697 = vpack.c.b16 %v6665, %v6661
    %6730 = vmatprep.subr.bf16.mxu0 %v6667
    %6731 = vmatpush1.bf16.msra.mxu0 %v6666
    %6732 = vmatprep.subr.bf16.mxu0 %v6671
    %6733 = vmatpush1.bf16.msra.mxu0 %v6670
    %6734 = vmatprep.subr.bf16.mxu0 %v6675
    %6735 = vmatpush1.bf16.msra.mxu0 %v6674
    %6736 = vmatprep.subr.bf16.mxu0 %v6679
    %6737 = vmatpush1.bf16.msra.mxu0 %v6678
    %6738 = vmatprep.subr.bf16.mxu0 %v6683
    %6739 = vmatpush1.bf16.msra.mxu0 %v6682
    %6740 = vmatprep.subr.bf16.mxu0 %v6687
    %6741 = vmatpush1.bf16.msra.mxu0 %v6686
    %6742 = vmatprep.subr.bf16.mxu0 %v6691
    %6743 = vmatpush1.bf16.msra.mxu0 %v6690
    %6744 = vmatprep.subr.bf16.mxu0 %v6695
    %6745 = vmatpush1.bf16.msra.mxu0 %v6694
    %6746 = vmatprep.subr.bf16.mxu0 0
    %6747 = vmatpush1.bf16.msra.mxu0 0
    %6748 = vmatprep.subr.bf16.mxu0 0
    %6749 = vmatpush1.bf16.msra.mxu0 0
    %6750 = vmatprep.subr.bf16.mxu0 0
    %6751 = vmatpush1.bf16.msra.mxu0 0
    %6752 = vmatprep.subr.bf16.mxu0 0
    %6753 = vmatpush1.bf16.msra.mxu0 0
    %6754 = vmatprep.subr.bf16.mxu0 0
    %6755 = vmatpush1.bf16.msra.mxu0 0
    %6756 = vmatprep.subr.bf16.mxu0 0
    %6757 = vmatpush1.bf16.msra.mxu0 0
    %6758 = vmatprep.subr.bf16.mxu0 0
    %6759 = vmatpush1.bf16.msra.mxu0 0
    %6760 = vmatprep.subr.bf16.mxu0 0
    %6761 = vmatpush1.bf16.msra.mxu0 0
    %6762 = vmatprep.mubr.bf16.mxu0 0
    %6763 = vmatmul.mubr.bf16.gmra.mrb[0].mxu0 %v6255
    %v6764 = vpop.f32.mrb[0].mxu0
    %v6765 = vadd.f32 %v6523, %v6764
    %v6766 = vpop.f32.mrb[0].mxu0
    %v6767 = vadd.f32 %v6525, %v6766
    %v6768 = vpop.f32.mrb[0].mxu0
    %v6769 = vpop.f32.mrb[0].mxu0
    %6770 = vdwg.mxu0
    %6771 = vmatprep.subr.bf16.mxu0 %v6669
    %6772 = vmatpush1.bf16.msra.mxu0 %v6668
    %6773 = vmatprep.subr.bf16.mxu0 %v6673
    %6774 = vmatpush1.bf16.msra.mxu0 %v6672
    %6775 = vmatprep.subr.bf16.mxu0 %v6677
    %6776 = vmatpush1.bf16.msra.mxu0 %v6676
    %6777 = vmatprep.subr.bf16.mxu0 %v6681
    %6778 = vmatpush1.bf16.msra.mxu0 %v6680
    %6779 = vmatprep.subr.bf16.mxu0 %v6685
    %6780 = vmatpush1.bf16.msra.mxu0 %v6684
    %6781 = vmatprep.subr.bf16.mxu0 %v6689
    %6782 = vmatpush1.bf16.msra.mxu0 %v6688
    %6783 = vmatprep.subr.bf16.mxu0 %v6693
    %6784 = vmatpush1.bf16.msra.mxu0 %v6692
    %6785 = vmatprep.subr.bf16.mxu0 %v6697
    %6786 = vmatpush1.bf16.msra.mxu0 %v6696
    %6787 = vmatprep.subr.bf16.mxu0 0
    %6788 = vmatpush1.bf16.msra.mxu0 0
    %6789 = vmatprep.subr.bf16.mxu0 0
    %6790 = vmatpush1.bf16.msra.mxu0 0
    %6791 = vmatprep.subr.bf16.mxu0 0
    %6792 = vmatpush1.bf16.msra.mxu0 0
    %6793 = vmatprep.subr.bf16.mxu0 0
    %6794 = vmatpush1.bf16.msra.mxu0 0
    %6795 = vmatprep.subr.bf16.mxu0 0
    %6796 = vmatpush1.bf16.msra.mxu0 0
    %6797 = vmatprep.subr.bf16.mxu0 0
    %6798 = vmatpush1.bf16.msra.mxu0 0
    %6799 = vmatprep.subr.bf16.mxu0 0
    %6800 = vmatpush1.bf16.msra.mxu0 0
    %6801 = vmatprep.subr.bf16.mxu0 0
    %6802 = vmatpush1.bf16.msra.mxu0 0
    %6803 = vmatprep.mubr.bf16.mxu0 0
    %6804 = vmatmul.mubr.bf16.gmra.mrb[0].mxu0 %v6255
    %v6805 = vpop.f32.mrb[0].mxu0
    %v6806 = vadd.f32 %v6564, %v6805
    %v6807 = vpop.f32.mrb[0].mxu0
    %v6808 = vadd.f32 %v6566, %v6807
    %v6809 = vpop.f32.mrb[0].mxu0
    %v6810 = vpop.f32.mrb[0].mxu0
    %6811 = vdwg.mxu0
    %s6812 = scalar_lea.vmem %s25, 512
    %v6813 = vld [vmem:[%s6812] sm:$0xff]
    %v6814 = vld [vmem:[%s6812 + $0x8] sm:$0xff]
    %v6815 = vld [vmem:[%s6812 + $0x10] sm:$0xff]
    %v6816 = vld [vmem:[%s6812 + $0x18] sm:$0xff]
    %v6817 = vld [vmem:[%s6812 + $0x20] sm:$0xff]
    %v6818 = vld [vmem:[%s6812 + $0x28] sm:$0xff]
    %v6819 = vld [vmem:[%s6812 + $0x30] sm:$0xff]
    %v6820 = vld [vmem:[%s6812 + $0x38] sm:$0xff]
    %v6821 = vld [vmem:[%s6812 + $0x40] sm:$0xff]
    %v6822 = vld [vmem:[%s6812 + $0x48] sm:$0xff]
    %v6823 = vld [vmem:[%s6812 + $0x50] sm:$0xff]
    %v6824 = vld [vmem:[%s6812 + $0x58] sm:$0xff]
    %v6825 = vld [vmem:[%s6812 + $0x60] sm:$0xff]
    %v6826 = vld [vmem:[%s6812 + $0x68] sm:$0xff]
    %v6827 = vld [vmem:[%s6812 + $0x70] sm:$0xff]
    %v6828 = vld [vmem:[%s6812 + $0x78] sm:$0xff]
    %v6829 = vld [vmem:[%s6812 + $0x80] sm:$0xff]
    %v6830 = vld [vmem:[%s6812 + $0x88] sm:$0xff]
    %v6831 = vld [vmem:[%s6812 + $0x90] sm:$0xff]
    %v6832 = vld [vmem:[%s6812 + $0x98] sm:$0xff]
    %v6833 = vld [vmem:[%s6812 + $0xa0] sm:$0xff]
    %v6834 = vld [vmem:[%s6812 + $0xa8] sm:$0xff]
    %v6835 = vld [vmem:[%s6812 + $0xb0] sm:$0xff]
    %v6836 = vld [vmem:[%s6812 + $0xb8] sm:$0xff]
    %v6837 = vld [vmem:[%s6812 + $0xc0] sm:$0xff]
    %v6838 = vld [vmem:[%s6812 + $0xc8] sm:$0xff]
    %v6839 = vld [vmem:[%s6812 + $0xd0] sm:$0xff]
    %v6840 = vld [vmem:[%s6812 + $0xd8] sm:$0xff]
    %v6841 = vld [vmem:[%s6812 + $0xe0] sm:$0xff]
    %v6842 = vld [vmem:[%s6812 + $0xe8] sm:$0xff]
    %v6843 = vld [vmem:[%s6812 + $0xf0] sm:$0xff]
    %v6844 = vld [vmem:[%s6812 + $0xf8] sm:$0xff]
    %v6877 = vunpack.c.l.b16 %v6813
    %v6878 = vunpack.c.h.b16 %v6813
    %v6879 = vunpack.c.l.b16 %v6814
    %v6880 = vunpack.c.h.b16 %v6814
    %v6881 = vunpack.c.l.b16 %v6815
    %v6882 = vunpack.c.h.b16 %v6815
    %v6883 = vunpack.c.l.b16 %v6816
    %v6884 = vunpack.c.h.b16 %v6816
    %v6885 = vunpack.c.l.b16 %v6817
    %v6886 = vunpack.c.h.b16 %v6817
    %v6887 = vunpack.c.l.b16 %v6818
    %v6888 = vunpack.c.h.b16 %v6818
    %v6889 = vunpack.c.l.b16 %v6819
    %v6890 = vunpack.c.h.b16 %v6819
    %v6891 = vunpack.c.l.b16 %v6820
    %v6892 = vunpack.c.h.b16 %v6820
    %v6893 = vunpack.c.l.b16 %v6821
    %v6894 = vunpack.c.h.b16 %v6821
    %v6895 = vunpack.c.l.b16 %v6822
    %v6896 = vunpack.c.h.b16 %v6822
    %v6897 = vunpack.c.l.b16 %v6823
    %v6898 = vunpack.c.h.b16 %v6823
    %v6899 = vunpack.c.l.b16 %v6824
    %v6900 = vunpack.c.h.b16 %v6824
    %v6901 = vunpack.c.l.b16 %v6825
    %v6902 = vunpack.c.h.b16 %v6825
    %v6903 = vunpack.c.l.b16 %v6826
    %v6904 = vunpack.c.h.b16 %v6826
    %v6905 = vunpack.c.l.b16 %v6827
    %v6906 = vunpack.c.h.b16 %v6827
    %v6907 = vunpack.c.l.b16 %v6828
    %v6908 = vunpack.c.h.b16 %v6828
    %v6909 = vunpack.c.l.b16 %v6829
    %v6910 = vunpack.c.h.b16 %v6829
    %v6911 = vunpack.c.l.b16 %v6830
    %v6912 = vunpack.c.h.b16 %v6830
    %v6913 = vunpack.c.l.b16 %v6831
    %v6914 = vunpack.c.h.b16 %v6831
    %v6915 = vunpack.c.l.b16 %v6832
    %v6916 = vunpack.c.h.b16 %v6832
    %v6917 = vunpack.c.l.b16 %v6833
    %v6918 = vunpack.c.h.b16 %v6833
    %v6919 = vunpack.c.l.b16 %v6834
    %v6920 = vunpack.c.h.b16 %v6834
    %v6921 = vunpack.c.l.b16 %v6835
    %v6922 = vunpack.c.h.b16 %v6835
    %v6923 = vunpack.c.l.b16 %v6836
    %v6924 = vunpack.c.h.b16 %v6836
    %v6925 = vunpack.c.l.b16 %v6837
    %v6926 = vunpack.c.h.b16 %v6837
    %v6927 = vunpack.c.l.b16 %v6838
    %v6928 = vunpack.c.h.b16 %v6838
    %v6929 = vunpack.c.l.b16 %v6839
    %v6930 = vunpack.c.h.b16 %v6839
    %v6931 = vunpack.c.l.b16 %v6840
    %v6932 = vunpack.c.h.b16 %v6840
    %v6933 = vunpack.c.l.b16 %v6841
    %v6934 = vunpack.c.h.b16 %v6841
    %v6935 = vunpack.c.l.b16 %v6842
    %v6936 = vunpack.c.h.b16 %v6842
    %v6937 = vunpack.c.l.b16 %v6843
    %v6938 = vunpack.c.h.b16 %v6843
    %v6939 = vunpack.c.l.b16 %v6844
    %v6940 = vunpack.c.h.b16 %v6844
    %v6941 = vpack.c.b16 %v6881, %v6877
    %v6942 = vpack.c.b16 %v6882, %v6878
    %v6943 = vpack.c.b16 %v6883, %v6879
    %v6944 = vpack.c.b16 %v6884, %v6880
    %v6945 = vpack.c.b16 %v6889, %v6885
    %v6946 = vpack.c.b16 %v6890, %v6886
    %v6947 = vpack.c.b16 %v6891, %v6887
    %v6948 = vpack.c.b16 %v6892, %v6888
    %v6949 = vpack.c.b16 %v6897, %v6893
    %v6950 = vpack.c.b16 %v6898, %v6894
    %v6951 = vpack.c.b16 %v6899, %v6895
    %v6952 = vpack.c.b16 %v6900, %v6896
    %v6953 = vpack.c.b16 %v6905, %v6901
    %v6954 = vpack.c.b16 %v6906, %v6902
    %v6955 = vpack.c.b16 %v6907, %v6903
    %v6956 = vpack.c.b16 %v6908, %v6904
    %v6957 = vpack.c.b16 %v6913, %v6909
    %v6958 = vpack.c.b16 %v6914, %v6910
    %v6959 = vpack.c.b16 %v6915, %v6911
    %v6960 = vpack.c.b16 %v6916, %v6912
    %v6961 = vpack.c.b16 %v6921, %v6917
    %v6962 = vpack.c.b16 %v6922, %v6918
    %v6963 = vpack.c.b16 %v6923, %v6919
    %v6964 = vpack.c.b16 %v6924, %v6920
    %v6965 = vpack.c.b16 %v6929, %v6925
    %v6966 = vpack.c.b16 %v6930, %v6926
    %v6967 = vpack.c.b16 %v6931, %v6927
    %v6968 = vpack.c.b16 %v6932, %v6928
    %v6969 = vpack.c.b16 %v6937, %v6933
    %v6970 = vpack.c.b16 %v6938, %v6934
    %v6971 = vpack.c.b16 %v6939, %v6935
    %v6972 = vpack.c.b16 %v6940, %v6936
    %7005 = vmatprep.subr.bf16.mxu0 %v6942
    %7006 = vmatpush1.bf16.msra.mxu0 %v6941
    %7007 = vmatprep.subr.bf16.mxu0 %v6946
    %7008 = vmatpush1.bf16.msra.mxu0 %v6945
    %7009 = vmatprep.subr.bf16.mxu0 %v6950
    %7010 = vmatpush1.bf16.msra.mxu0 %v6949
    %7011 = vmatprep.subr.bf16.mxu0 %v6954
    %7012 = vmatpush1.bf16.msra.mxu0 %v6953
    %7013 = vmatprep.subr.bf16.mxu0 %v6958
    %7014 = vmatpush1.bf16.msra.mxu0 %v6957
    %7015 = vmatprep.subr.bf16.mxu0 %v6962
    %7016 = vmatpush1.bf16.msra.mxu0 %v6961
    %7017 = vmatprep.subr.bf16.mxu0 %v6966
    %7018 = vmatpush1.bf16.msra.mxu0 %v6965
    %7019 = vmatprep.subr.bf16.mxu0 %v6970
    %7020 = vmatpush1.bf16.msra.mxu0 %v6969
    %7021 = vmatprep.subr.bf16.mxu0 0
    %7022 = vmatpush1.bf16.msra.mxu0 0
    %7023 = vmatprep.subr.bf16.mxu0 0
    %7024 = vmatpush1.bf16.msra.mxu0 0
    %7025 = vmatprep.subr.bf16.mxu0 0
    %7026 = vmatpush1.bf16.msra.mxu0 0
    %7027 = vmatprep.subr.bf16.mxu0 0
    %7028 = vmatpush1.bf16.msra.mxu0 0
    %7029 = vmatprep.subr.bf16.mxu0 0
    %7030 = vmatpush1.bf16.msra.mxu0 0
    %7031 = vmatprep.subr.bf16.mxu0 0
    %7032 = vmatpush1.bf16.msra.mxu0 0
    %7033 = vmatprep.subr.bf16.mxu0 0
    %7034 = vmatpush1.bf16.msra.mxu0 0
    %7035 = vmatprep.subr.bf16.mxu0 0
    %7036 = vmatpush1.bf16.msra.mxu0 0
    %7037 = vmatprep.mubr.bf16.mxu0 0
    %7038 = vmatmul.mubr.bf16.gmra.mrb[0].mxu0 %v6256
    %v7039 = vpop.f32.mrb[0].mxu0
    %v7040 = vadd.f32 0.0, %v7039
    %v7041 = vpop.f32.mrb[0].mxu0
    %v7042 = vadd.f32 0.0, %v7041
    %v7043 = vpop.f32.mrb[0].mxu0
    %v7044 = vpop.f32.mrb[0].mxu0
    %7045 = vdwg.mxu0
    %7046 = vmatprep.subr.bf16.mxu0 %v6944
    %7047 = vmatpush1.bf16.msra.mxu0 %v6943
    %7048 = vmatprep.subr.bf16.mxu0 %v6948
    %7049 = vmatpush1.bf16.msra.mxu0 %v6947
    %7050 = vmatprep.subr.bf16.mxu0 %v6952
    %7051 = vmatpush1.bf16.msra.mxu0 %v6951
    %7052 = vmatprep.subr.bf16.mxu0 %v6956
    %7053 = vmatpush1.bf16.msra.mxu0 %v6955
    %7054 = vmatprep.subr.bf16.mxu0 %v6960
    %7055 = vmatpush1.bf16.msra.mxu0 %v6959
    %7056 = vmatprep.subr.bf16.mxu0 %v6964
    %7057 = vmatpush1.bf16.msra.mxu0 %v6963
    %7058 = vmatprep.subr.bf16.mxu0 %v6968
    %7059 = vmatpush1.bf16.msra.mxu0 %v6967
    %7060 = vmatprep.subr.bf16.mxu0 %v6972
    %7061 = vmatpush1.bf16.msra.mxu0 %v6971
    %7062 = vmatprep.subr.bf16.mxu0 0
    %7063 = vmatpush1.bf16.msra.mxu0 0
    %7064 = vmatprep.subr.bf16.mxu0 0
    %7065 = vmatpush1.bf16.msra.mxu0 0
    %7066 = vmatprep.subr.bf16.mxu0 0
    %7067 = vmatpush1.bf16.msra.mxu0 0
    %7068 = vmatprep.subr.bf16.mxu0 0
    %7069 = vmatpush1.bf16.msra.mxu0 0
    %7070 = vmatprep.subr.bf16.mxu0 0
    %7071 = vmatpush1.bf16.msra.mxu0 0
    %7072 = vmatprep.subr.bf16.mxu0 0
    %7073 = vmatpush1.bf16.msra.mxu0 0
    %7074 = vmatprep.subr.bf16.mxu0 0
    %7075 = vmatpush1.bf16.msra.mxu0 0
    %7076 = vmatprep.subr.bf16.mxu0 0
    %7077 = vmatpush1.bf16.msra.mxu0 0
    %7078 = vmatprep.mubr.bf16.mxu0 0
    %7079 = vmatmul.mubr.bf16.gmra.mrb[0].mxu0 %v6256
    %v7080 = vpop.f32.mrb[0].mxu0
    %v7081 = vadd.f32 0.0, %v7080
    %v7082 = vpop.f32.mrb[0].mxu0
    %v7083 = vadd.f32 0.0, %v7082
    %v7084 = vpop.f32.mrb[0].mxu0
    %v7085 = vpop.f32.mrb[0].mxu0
    %7086 = vdwg.mxu0
    %v7087 = vadd.f32 %v6765, %v7040
    %v7088 = vadd.f32 %v6767, %v7042
    %v7089 = vadd.f32 %v6806, %v7081
    %v7090 = vadd.f32 %v6808, %v7083
    %s7091 = scalar_lea.vmem %s25, 768
    %v7092 = vld [vmem:[%s7091] sm:$0xff]
    %v7093 = vld [vmem:[%s7091 + $0x8] sm:$0xff]
    %v7094 = vld [vmem:[%s7091 + $0x10] sm:$0xff]
    %v7095 = vld [vmem:[%s7091 + $0x18] sm:$0xff]
    %v7096 = vld [vmem:[%s7091 + $0x20] sm:$0xff]
    %v7097 = vld [vmem:[%s7091 + $0x28] sm:$0xff]
    %v7098 = vld [vmem:[%s7091 + $0x30] sm:$0xff]
    %v7099 = vld [vmem:[%s7091 + $0x38] sm:$0xff]
    %v7100 = vld [vmem:[%s7091 + $0x40] sm:$0xff]
    %v7101 = vld [vmem:[%s7091 + $0x48] sm:$0xff]
    %v7102 = vld [vmem:[%s7091 + $0x50] sm:$0xff]
    %v7103 = vld [vmem:[%s7091 + $0x58] sm:$0xff]
    %v7104 = vld [vmem:[%s7091 + $0x60] sm:$0xff]
    %v7105 = vld [vmem:[%s7091 + $0x68] sm:$0xff]
    %v7106 = vld [vmem:[%s7091 + $0x70] sm:$0xff]
    %v7107 = vld [vmem:[%s7091 + $0x78] sm:$0xff]
    %v7108 = vld [vmem:[%s7091 + $0x80] sm:$0xff]
    %v7109 = vld [vmem:[%s7091 + $0x88] sm:$0xff]
    %v7110 = vld [vmem:[%s7091 + $0x90] sm:$0xff]
    %v7111 = vld [vmem:[%s7091 + $0x98] sm:$0xff]
    %v7112 = vld [vmem:[%s7091 + $0xa0] sm:$0xff]
    %v7113 = vld [vmem:[%s7091 + $0xa8] sm:$0xff]
    %v7114 = vld [vmem:[%s7091 + $0xb0] sm:$0xff]
    %v7115 = vld [vmem:[%s7091 + $0xb8] sm:$0xff]
    %v7116 = vld [vmem:[%s7091 + $0xc0] sm:$0xff]
    %v7117 = vld [vmem:[%s7091 + $0xc8] sm:$0xff]
    %v7118 = vld [vmem:[%s7091 + $0xd0] sm:$0xff]
    %v7119 = vld [vmem:[%s7091 + $0xd8] sm:$0xff]
    %v7120 = vld [vmem:[%s7091 + $0xe0] sm:$0xff]
    %v7121 = vld [vmem:[%s7091 + $0xe8] sm:$0xff]
    %v7122 = vld [vmem:[%s7091 + $0xf0] sm:$0xff]
    %v7123 = vld [vmem:[%s7091 + $0xf8] sm:$0xff]
    %v7125 = vrot.slane %v6256, 4
    %v7159 = vunpack.c.l.b16 %v7092
    %v7160 = vunpack.c.h.b16 %v7092
    %v7161 = vunpack.c.l.b16 %v7093
    %v7162 = vunpack.c.h.b16 %v7093
    %v7163 = vunpack.c.l.b16 %v7094
    %v7164 = vunpack.c.h.b16 %v7094
    %v7165 = vunpack.c.l.b16 %v7095
    %v7166 = vunpack.c.h.b16 %v7095
    %v7167 = vunpack.c.l.b16 %v7096
    %v7168 = vunpack.c.h.b16 %v7096
    %v7169 = vunpack.c.l.b16 %v7097
    %v7170 = vunpack.c.h.b16 %v7097
    %v7171 = vunpack.c.l.b16 %v7098
    %v7172 = vunpack.c.h.b16 %v7098
    %v7173 = vunpack.c.l.b16 %v7099
    %v7174 = vunpack.c.h.b16 %v7099
    %v7175 = vunpack.c.l.b16 %v7100
    %v7176 = vunpack.c.h.b16 %v7100
    %v7177 = vunpack.c.l.b16 %v7101
    %v7178 = vunpack.c.h.b16 %v7101
    %v7179 = vunpack.c.l.b16 %v7102
    %v7180 = vunpack.c.h.b16 %v7102
    %v7181 = vunpack.c.l.b16 %v7103
    %v7182 = vunpack.c.h.b16 %v7103
    %v7183 = vunpack.c.l.b16 %v7104
    %v7184 = vunpack.c.h.b16 %v7104
    %v7185 = vunpack.c.l.b16 %v7105
    %v7186 = vunpack.c.h.b16 %v7105
    %v7187 = vunpack.c.l.b16 %v7106
    %v7188 = vunpack.c.h.b16 %v7106
    %v7189 = vunpack.c.l.b16 %v7107
    %v7190 = vunpack.c.h.b16 %v7107
    %v7191 = vunpack.c.l.b16 %v7108
    %v7192 = vunpack.c.h.b16 %v7108
    %v7193 = vunpack.c.l.b16 %v7109
    %v7194 = vunpack.c.h.b16 %v7109
    %v7195 = vunpack.c.l.b16 %v7110
    %v7196 = vunpack.c.h.b16 %v7110
    %v7197 = vunpack.c.l.b16 %v7111
    %v7198 = vunpack.c.h.b16 %v7111
    %v7199 = vunpack.c.l.b16 %v7112
    %v7200 = vunpack.c.h.b16 %v7112
    %v7201 = vunpack.c.l.b16 %v7113
    %v7202 = vunpack.c.h.b16 %v7113
    %v7203 = vunpack.c.l.b16 %v7114
    %v7204 = vunpack.c.h.b16 %v7114
    %v7205 = vunpack.c.l.b16 %v7115
    %v7206 = vunpack.c.h.b16 %v7115
    %v7207 = vunpack.c.l.b16 %v7116
    %v7208 = vunpack.c.h.b16 %v7116
    %v7209 = vunpack.c.l.b16 %v7117
    %v7210 = vunpack.c.h.b16 %v7117
    %v7211 = vunpack.c.l.b16 %v7118
    %v7212 = vunpack.c.h.b16 %v7118
    %v7213 = vunpack.c.l.b16 %v7119
    %v7214 = vunpack.c.h.b16 %v7119
    %v7215 = vunpack.c.l.b16 %v7120
    %v7216 = vunpack.c.h.b16 %v7120
    %v7217 = vunpack.c.l.b16 %v7121
    %v7218 = vunpack.c.h.b16 %v7121
    %v7219 = vunpack.c.l.b16 %v7122
    %v7220 = vunpack.c.h.b16 %v7122
    %v7221 = vunpack.c.l.b16 %v7123
    %v7222 = vunpack.c.h.b16 %v7123
    %v7223 = vpack.c.b16 %v7163, %v7159
    %v7224 = vpack.c.b16 %v7164, %v7160
    %v7225 = vpack.c.b16 %v7165, %v7161
    %v7226 = vpack.c.b16 %v7166, %v7162
    %v7227 = vpack.c.b16 %v7171, %v7167
    %v7228 = vpack.c.b16 %v7172, %v7168
    %v7229 = vpack.c.b16 %v7173, %v7169
    %v7230 = vpack.c.b16 %v7174, %v7170
    %v7231 = vpack.c.b16 %v7179, %v7175
    %v7232 = vpack.c.b16 %v7180, %v7176
    %v7233 = vpack.c.b16 %v7181, %v7177
    %v7234 = vpack.c.b16 %v7182, %v7178
    %v7235 = vpack.c.b16 %v7187, %v7183
    %v7236 = vpack.c.b16 %v7188, %v7184
    %v7237 = vpack.c.b16 %v7189, %v7185
    %v7238 = vpack.c.b16 %v7190, %v7186
    %v7239 = vpack.c.b16 %v7195, %v7191
    %v7240 = vpack.c.b16 %v7196, %v7192
    %v7241 = vpack.c.b16 %v7197, %v7193
    %v7242 = vpack.c.b16 %v7198, %v7194
    %v7243 = vpack.c.b16 %v7203, %v7199
    %v7244 = vpack.c.b16 %v7204, %v7200
    %v7245 = vpack.c.b16 %v7205, %v7201
    %v7246 = vpack.c.b16 %v7206, %v7202
    %v7247 = vpack.c.b16 %v7211, %v7207
    %v7248 = vpack.c.b16 %v7212, %v7208
    %v7249 = vpack.c.b16 %v7213, %v7209
    %v7250 = vpack.c.b16 %v7214, %v7210
    %v7251 = vpack.c.b16 %v7219, %v7215
    %v7252 = vpack.c.b16 %v7220, %v7216
    %v7253 = vpack.c.b16 %v7221, %v7217
    %v7254 = vpack.c.b16 %v7222, %v7218
    %7287 = vmatprep.subr.bf16.mxu0 %v7224
    %7288 = vmatpush1.bf16.msra.mxu0 %v7223
    %7289 = vmatprep.subr.bf16.mxu0 %v7228
    %7290 = vmatpush1.bf16.msra.mxu0 %v7227
    %7291 = vmatprep.subr.bf16.mxu0 %v7232
    %7292 = vmatpush1.bf16.msra.mxu0 %v7231
    %7293 = vmatprep.subr.bf16.mxu0 %v7236
    %7294 = vmatpush1.bf16.msra.mxu0 %v7235
    %7295 = vmatprep.subr.bf16.mxu0 %v7240
    %7296 = vmatpush1.bf16.msra.mxu0 %v7239
    %7297 = vmatprep.subr.bf16.mxu0 %v7244
    %7298 = vmatpush1.bf16.msra.mxu0 %v7243
    %7299 = vmatprep.subr.bf16.mxu0 %v7248
    %7300 = vmatpush1.bf16.msra.mxu0 %v7247
    %7301 = vmatprep.subr.bf16.mxu0 %v7252
    %7302 = vmatpush1.bf16.msra.mxu0 %v7251
    %7303 = vmatprep.subr.bf16.mxu0 0
    %7304 = vmatpush1.bf16.msra.mxu0 0
    %7305 = vmatprep.subr.bf16.mxu0 0
    %7306 = vmatpush1.bf16.msra.mxu0 0
    %7307 = vmatprep.subr.bf16.mxu0 0
    %7308 = vmatpush1.bf16.msra.mxu0 0
    %7309 = vmatprep.subr.bf16.mxu0 0
    %7310 = vmatpush1.bf16.msra.mxu0 0
    %7311 = vmatprep.subr.bf16.mxu0 0
    %7312 = vmatpush1.bf16.msra.mxu0 0
    %7313 = vmatprep.subr.bf16.mxu0 0
    %7314 = vmatpush1.bf16.msra.mxu0 0
    %7315 = vmatprep.subr.bf16.mxu0 0
    %7316 = vmatpush1.bf16.msra.mxu0 0
    %7317 = vmatprep.subr.bf16.mxu0 0
    %7318 = vmatpush1.bf16.msra.mxu0 0
    %7319 = vmatprep.mubr.bf16.mxu0 0
    %7320 = vmatmul.mubr.bf16.gmra.mrb[0].mxu0 %v7125
    %v7321 = vpop.f32.mrb[0].mxu0
    %v7322 = vadd.f32 0.0, %v7321
    %v7323 = vpop.f32.mrb[0].mxu0
    %v7324 = vadd.f32 0.0, %v7323
    %v7325 = vpop.f32.mrb[0].mxu0
    %v7326 = vpop.f32.mrb[0].mxu0
    %7327 = vdwg.mxu0
    %7328 = vmatprep.subr.bf16.mxu0 %v7226
    %7329 = vmatpush1.bf16.msra.mxu0 %v7225
    %7330 = vmatprep.subr.bf16.mxu0 %v7230
    %7331 = vmatpush1.bf16.msra.mxu0 %v7229
    %7332 = vmatprep.subr.bf16.mxu0 %v7234
    %7333 = vmatpush1.bf16.msra.mxu0 %v7233
    %7334 = vmatprep.subr.bf16.mxu0 %v7238
    %7335 = vmatpush1.bf16.msra.mxu0 %v7237
    %7336 = vmatprep.subr.bf16.mxu0 %v7242
    %7337 = vmatpush1.bf16.msra.mxu0 %v7241
    %7338 = vmatprep.subr.bf16.mxu0 %v7246
    %7339 = vmatpush1.bf16.msra.mxu0 %v7245
    %7340 = vmatprep.subr.bf16.mxu0 %v7250
    %7341 = vmatpush1.bf16.msra.mxu0 %v7249
    %7342 = vmatprep.subr.bf16.mxu0 %v7254
    %7343 = vmatpush1.bf16.msra.mxu0 %v7253
    %7344 = vmatprep.subr.bf16.mxu0 0
    %7345 = vmatpush1.bf16.msra.mxu0 0
    %7346 = vmatprep.subr.bf16.mxu0 0
    %7347 = vmatpush1.bf16.msra.mxu0 0
    %7348 = vmatprep.subr.bf16.mxu0 0
    %7349 = vmatpush1.bf16.msra.mxu0 0
    %7350 = vmatprep.subr.bf16.mxu0 0
    %7351 = vmatpush1.bf16.msra.mxu0 0
    %7352 = vmatprep.subr.bf16.mxu0 0
    %7353 = vmatpush1.bf16.msra.mxu0 0
    %7354 = vmatprep.subr.bf16.mxu0 0
    %7355 = vmatpush1.bf16.msra.mxu0 0
    %7356 = vmatprep.subr.bf16.mxu0 0
    %7357 = vmatpush1.bf16.msra.mxu0 0
    %7358 = vmatprep.subr.bf16.mxu0 0
    %7359 = vmatpush1.bf16.msra.mxu0 0
    %7360 = vmatprep.mubr.bf16.mxu0 0
    %7361 = vmatmul.mubr.bf16.gmra.mrb[0].mxu0 %v7125
    %v7362 = vpop.f32.mrb[0].mxu0
    %v7363 = vadd.f32 0.0, %v7362
    %v7364 = vpop.f32.mrb[0].mxu0
    %v7365 = vadd.f32 0.0, %v7364
    %v7366 = vpop.f32.mrb[0].mxu0
    %v7367 = vpop.f32.mrb[0].mxu0
    %7368 = vdwg.mxu0
    %v7369 = vadd.f32 %v7087, %v7322
    %v7370 = vadd.f32 %v7088, %v7324
    %v7371 = vadd.f32 %v7089, %v7363
    %v7372 = vadd.f32 %v7090, %v7365
    %s7373 = scalar_lea.vmem %s25, 1024
    %v7374 = vld [vmem:[%s7373] sm:$0xff]
    %v7375 = vld [vmem:[%s7373 + $0x8] sm:$0xff]
    %v7376 = vld [vmem:[%s7373 + $0x10] sm:$0xff]
    %v7377 = vld [vmem:[%s7373 + $0x18] sm:$0xff]
    %v7378 = vld [vmem:[%s7373 + $0x20] sm:$0xff]
    %v7379 = vld [vmem:[%s7373 + $0x28] sm:$0xff]
    %v7380 = vld [vmem:[%s7373 + $0x30] sm:$0xff]
    %v7381 = vld [vmem:[%s7373 + $0x38] sm:$0xff]
    %v7382 = vld [vmem:[%s7373 + $0x40] sm:$0xff]
    %v7383 = vld [vmem:[%s7373 + $0x48] sm:$0xff]
    %v7384 = vld [vmem:[%s7373 + $0x50] sm:$0xff]
    %v7385 = vld [vmem:[%s7373 + $0x58] sm:$0xff]
    %v7386 = vld [vmem:[%s7373 + $0x60] sm:$0xff]
    %v7387 = vld [vmem:[%s7373 + $0x68] sm:$0xff]
    %v7388 = vld [vmem:[%s7373 + $0x70] sm:$0xff]
    %v7389 = vld [vmem:[%s7373 + $0x78] sm:$0xff]
    %v7390 = vld [vmem:[%s7373 + $0x80] sm:$0xff]
    %v7391 = vld [vmem:[%s7373 + $0x88] sm:$0xff]
    %v7392 = vld [vmem:[%s7373 + $0x90] sm:$0xff]
    %v7393 = vld [vmem:[%s7373 + $0x98] sm:$0xff]
    %v7394 = vld [vmem:[%s7373 + $0xa0] sm:$0xff]
    %v7395 = vld [vmem:[%s7373 + $0xa8] sm:$0xff]
    %v7396 = vld [vmem:[%s7373 + $0xb0] sm:$0xff]
    %v7397 = vld [vmem:[%s7373 + $0xb8] sm:$0xff]
    %v7398 = vld [vmem:[%s7373 + $0xc0] sm:$0xff]
    %v7399 = vld [vmem:[%s7373 + $0xc8] sm:$0xff]
    %v7400 = vld [vmem:[%s7373 + $0xd0] sm:$0xff]
    %v7401 = vld [vmem:[%s7373 + $0xd8] sm:$0xff]
    %v7402 = vld [vmem:[%s7373 + $0xe0] sm:$0xff]
    %v7403 = vld [vmem:[%s7373 + $0xe8] sm:$0xff]
    %v7404 = vld [vmem:[%s7373 + $0xf0] sm:$0xff]
    %v7405 = vld [vmem:[%s7373 + $0xf8] sm:$0xff]
    %v7438 = vunpack.c.l.b16 %v7374
    %v7439 = vunpack.c.h.b16 %v7374
    %v7440 = vunpack.c.l.b16 %v7375
    %v7441 = vunpack.c.h.b16 %v7375
    %v7442 = vunpack.c.l.b16 %v7376
    %v7443 = vunpack.c.h.b16 %v7376
    %v7444 = vunpack.c.l.b16 %v7377
    %v7445 = vunpack.c.h.b16 %v7377
    %v7446 = vunpack.c.l.b16 %v7378
    %v7447 = vunpack.c.h.b16 %v7378
    %v7448 = vunpack.c.l.b16 %v7379
    %v7449 = vunpack.c.h.b16 %v7379
    %v7450 = vunpack.c.l.b16 %v7380
    %v7451 = vunpack.c.h.b16 %v7380
    %v7452 = vunpack.c.l.b16 %v7381
    %v7453 = vunpack.c.h.b16 %v7381
    %v7454 = vunpack.c.l.b16 %v7382
    %v7455 = vunpack.c.h.b16 %v7382
    %v7456 = vunpack.c.l.b16 %v7383
    %v7457 = vunpack.c.h.b16 %v7383
    %v7458 = vunpack.c.l.b16 %v7384
    %v7459 = vunpack.c.h.b16 %v7384
    %v7460 = vunpack.c.l.b16 %v7385
    %v7461 = vunpack.c.h.b16 %v7385
    %v7462 = vunpack.c.l.b16 %v7386
    %v7463 = vunpack.c.h.b16 %v7386
    %v7464 = vunpack.c.l.b16 %v7387
    %v7465 = vunpack.c.h.b16 %v7387
    %v7466 = vunpack.c.l.b16 %v7388
    %v7467 = vunpack.c.h.b16 %v7388
    %v7468 = vunpack.c.l.b16 %v7389
    %v7469 = vunpack.c.h.b16 %v7389
    %v7470 = vunpack.c.l.b16 %v7390
    %v7471 = vunpack.c.h.b16 %v7390
    %v7472 = vunpack.c.l.b16 %v7391
    %v7473 = vunpack.c.h.b16 %v7391
    %v7474 = vunpack.c.l.b16 %v7392
    %v7475 = vunpack.c.h.b16 %v7392
    %v7476 = vunpack.c.l.b16 %v7393
    %v7477 = vunpack.c.h.b16 %v7393
    %v7478 = vunpack.c.l.b16 %v7394
    %v7479 = vunpack.c.h.b16 %v7394
    %v7480 = vunpack.c.l.b16 %v7395
    %v7481 = vunpack.c.h.b16 %v7395
    %v7482 = vunpack.c.l.b16 %v7396
    %v7483 = vunpack.c.h.b16 %v7396
    %v7484 = vunpack.c.l.b16 %v7397
    %v7485 = vunpack.c.h.b16 %v7397
    %v7486 = vunpack.c.l.b16 %v7398
    %v7487 = vunpack.c.h.b16 %v7398
    %v7488 = vunpack.c.l.b16 %v7399
    %v7489 = vunpack.c.h.b16 %v7399
    %v7490 = vunpack.c.l.b16 %v7400
    %v7491 = vunpack.c.h.b16 %v7400
    %v7492 = vunpack.c.l.b16 %v7401
    %v7493 = vunpack.c.h.b16 %v7401
    %v7494 = vunpack.c.l.b16 %v7402
    %v7495 = vunpack.c.h.b16 %v7402
    %v7496 = vunpack.c.l.b16 %v7403
    %v7497 = vunpack.c.h.b16 %v7403
    %v7498 = vunpack.c.l.b16 %v7404
    %v7499 = vunpack.c.h.b16 %v7404
    %v7500 = vunpack.c.l.b16 %v7405
    %v7501 = vunpack.c.h.b16 %v7405
    %v7502 = vpack.c.b16 %v7442, %v7438
    %v7503 = vpack.c.b16 %v7443, %v7439
    %v7504 = vpack.c.b16 %v7444, %v7440
    %v7505 = vpack.c.b16 %v7445, %v7441
    %v7506 = vpack.c.b16 %v7450, %v7446
    %v7507 = vpack.c.b16 %v7451, %v7447
    %v7508 = vpack.c.b16 %v7452, %v7448
    %v7509 = vpack.c.b16 %v7453, %v7449
    %v7510 = vpack.c.b16 %v7458, %v7454
    %v7511 = vpack.c.b16 %v7459, %v7455
    %v7512 = vpack.c.b16 %v7460, %v7456
    %v7513 = vpack.c.b16 %v7461, %v7457
    %v7514 = vpack.c.b16 %v7466, %v7462
    %v7515 = vpack.c.b16 %v7467, %v7463
    %v7516 = vpack.c.b16 %v7468, %v7464
    %v7517 = vpack.c.b16 %v7469, %v7465
    %v7518 = vpack.c.b16 %v7474, %v7470
    %v7519 = vpack.c.b16 %v7475, %v7471
    %v7520 = vpack.c.b16 %v7476, %v7472
    %v7521 = vpack.c.b16 %v7477, %v7473
    %v7522 = vpack.c.b16 %v7482, %v7478
    %v7523 = vpack.c.b16 %v7483, %v7479
    %v7524 = vpack.c.b16 %v7484, %v7480
    %v7525 = vpack.c.b16 %v7485, %v7481
    %v7526 = vpack.c.b16 %v7490, %v7486
    %v7527 = vpack.c.b16 %v7491, %v7487
    %v7528 = vpack.c.b16 %v7492, %v7488
    %v7529 = vpack.c.b16 %v7493, %v7489
    %v7530 = vpack.c.b16 %v7498, %v7494
    %v7531 = vpack.c.b16 %v7499, %v7495
    %v7532 = vpack.c.b16 %v7500, %v7496
    %v7533 = vpack.c.b16 %v7501, %v7497
    %7566 = vmatprep.subr.bf16.mxu0 %v7503
    %7567 = vmatpush1.bf16.msra.mxu0 %v7502
    %7568 = vmatprep.subr.bf16.mxu0 %v7507
    %7569 = vmatpush1.bf16.msra.mxu0 %v7506
    %7570 = vmatprep.subr.bf16.mxu0 %v7511
    %7571 = vmatpush1.bf16.msra.mxu0 %v7510
    %7572 = vmatprep.subr.bf16.mxu0 %v7515
    %7573 = vmatpush1.bf16.msra.mxu0 %v7514
    %7574 = vmatprep.subr.bf16.mxu0 %v7519
    %7575 = vmatpush1.bf16.msra.mxu0 %v7518
    %7576 = vmatprep.subr.bf16.mxu0 %v7523
    %7577 = vmatpush1.bf16.msra.mxu0 %v7522
    %7578 = vmatprep.subr.bf16.mxu0 %v7527
    %7579 = vmatpush1.bf16.msra.mxu0 %v7526
    %7580 = vmatprep.subr.bf16.mxu0 %v7531
    %7581 = vmatpush1.bf16.msra.mxu0 %v7530
    %7582 = vmatprep.subr.bf16.mxu0 0
    %7583 = vmatpush1.bf16.msra.mxu0 0
    %7584 = vmatprep.subr.bf16.mxu0 0
    %7585 = vmatpush1.bf16.msra.mxu0 0
    %7586 = vmatprep.subr.bf16.mxu0 0
    %7587 = vmatpush1.bf16.msra.mxu0 0
    %7588 = vmatprep.subr.bf16.mxu0 0
    %7589 = vmatpush1.bf16.msra.mxu0 0
    %7590 = vmatprep.subr.bf16.mxu0 0
    %7591 = vmatpush1.bf16.msra.mxu0 0
    %7592 = vmatprep.subr.bf16.mxu0 0
    %7593 = vmatpush1.bf16.msra.mxu0 0
    %7594 = vmatprep.subr.bf16.mxu0 0
    %7595 = vmatpush1.bf16.msra.mxu0 0
    %7596 = vmatprep.subr.bf16.mxu0 0
    %7597 = vmatpush1.bf16.msra.mxu0 0
    %7598 = vmatprep.mubr.bf16.mxu0 0
    %7599 = vmatmul.mubr.bf16.gmra.mrb[0].mxu0 %v6257
    %v7600 = vpop.f32.mrb[0].mxu0
    %v7601 = vadd.f32 0.0, %v7600
    %v7602 = vpop.f32.mrb[0].mxu0
    %v7603 = vadd.f32 0.0, %v7602
    %v7604 = vpop.f32.mrb[0].mxu0
    %v7605 = vpop.f32.mrb[0].mxu0
    %7606 = vdwg.mxu0
    %7607 = vmatprep.subr.bf16.mxu0 %v7505
    %7608 = vmatpush1.bf16.msra.mxu0 %v7504
    %7609 = vmatprep.subr.bf16.mxu0 %v7509
    %7610 = vmatpush1.bf16.msra.mxu0 %v7508
    %7611 = vmatprep.subr.bf16.mxu0 %v7513
    %7612 = vmatpush1.bf16.msra.mxu0 %v7512
    %7613 = vmatprep.subr.bf16.mxu0 %v7517
    %7614 = vmatpush1.bf16.msra.mxu0 %v7516
    %7615 = vmatprep.subr.bf16.mxu0 %v7521
    %7616 = vmatpush1.bf16.msra.mxu0 %v7520
    %7617 = vmatprep.subr.bf16.mxu0 %v7525
    %7618 = vmatpush1.bf16.msra.mxu0 %v7524
    %7619 = vmatprep.subr.bf16.mxu0 %v7529
    %7620 = vmatpush1.bf16.msra.mxu0 %v7528
    %7621 = vmatprep.subr.bf16.mxu0 %v7533
    %7622 = vmatpush1.bf16.msra.mxu0 %v7532
    %7623 = vmatprep.subr.bf16.mxu0 0
    %7624 = vmatpush1.bf16.msra.mxu0 0
    %7625 = vmatprep.subr.bf16.mxu0 0
    %7626 = vmatpush1.bf16.msra.mxu0 0
    %7627 = vmatprep.subr.bf16.mxu0 0
    %7628 = vmatpush1.bf16.msra.mxu0 0
    %7629 = vmatprep.subr.bf16.mxu0 0
    %7630 = vmatpush1.bf16.msra.mxu0 0
    %7631 = vmatprep.subr.bf16.mxu0 0
    %7632 = vmatpush1.bf16.msra.mxu0 0
    %7633 = vmatprep.subr.bf16.mxu0 0
    %7634 = vmatpush1.bf16.msra.mxu0 0
    %7635 = vmatprep.subr.bf16.mxu0 0
    %7636 = vmatpush1.bf16.msra.mxu0 0
    %7637 = vmatprep.subr.bf16.mxu0 0
    %7638 = vmatpush1.bf16.msra.mxu0 0
    %7639 = vmatprep.mubr.bf16.mxu0 0
    %7640 = vmatmul.mubr.bf16.gmra.mrb[0].mxu0 %v6257
    %v7641 = vpop.f32.mrb[0].mxu0
    %v7642 = vadd.f32 0.0, %v7641
    %v7643 = vpop.f32.mrb[0].mxu0
    %v7644 = vadd.f32 0.0, %v7643
    %v7645 = vpop.f32.mrb[0].mxu0
    %v7646 = vpop.f32.mrb[0].mxu0
    %7647 = vdwg.mxu0
    %v7648 = vadd.f32 %v7369, %v7601
    %v7649 = vadd.f32 %v7370, %v7603
    %v7650 = vadd.f32 %v7371, %v7642
    %v7651 = vadd.f32 %v7372, %v7644
    %s7652 = scalar_lea.vmem %s25, 1280
    %v7653 = vld [vmem:[%s7652] sm:$0xff]
    %v7654 = vld [vmem:[%s7652 + $0x8] sm:$0xff]
    %v7655 = vld [vmem:[%s7652 + $0x10] sm:$0xff]
    %v7656 = vld [vmem:[%s7652 + $0x18] sm:$0xff]
    %v7657 = vld [vmem:[%s7652 + $0x20] sm:$0xff]
    %v7658 = vld [vmem:[%s7652 + $0x28] sm:$0xff]
    %v7659 = vld [vmem:[%s7652 + $0x30] sm:$0xff]
    %v7660 = vld [vmem:[%s7652 + $0x38] sm:$0xff]
    %v7661 = vld [vmem:[%s7652 + $0x40] sm:$0xff]
    %v7662 = vld [vmem:[%s7652 + $0x48] sm:$0xff]
    %v7663 = vld [vmem:[%s7652 + $0x50] sm:$0xff]
    %v7664 = vld [vmem:[%s7652 + $0x58] sm:$0xff]
    %v7665 = vld [vmem:[%s7652 + $0x60] sm:$0xff]
    %v7666 = vld [vmem:[%s7652 + $0x68] sm:$0xff]
    %v7667 = vld [vmem:[%s7652 + $0x70] sm:$0xff]
    %v7668 = vld [vmem:[%s7652 + $0x78] sm:$0xff]
    %v7669 = vld [vmem:[%s7652 + $0x80] sm:$0xff]
    %v7670 = vld [vmem:[%s7652 + $0x88] sm:$0xff]
    %v7671 = vld [vmem:[%s7652 + $0x90] sm:$0xff]
    %v7672 = vld [vmem:[%s7652 + $0x98] sm:$0xff]
    %v7673 = vld [vmem:[%s7652 + $0xa0] sm:$0xff]
    %v7674 = vld [vmem:[%s7652 + $0xa8] sm:$0xff]
    %v7675 = vld [vmem:[%s7652 + $0xb0] sm:$0xff]
    %v7676 = vld [vmem:[%s7652 + $0xb8] sm:$0xff]
    %v7677 = vld [vmem:[%s7652 + $0xc0] sm:$0xff]
    %v7678 = vld [vmem:[%s7652 + $0xc8] sm:$0xff]
    %v7679 = vld [vmem:[%s7652 + $0xd0] sm:$0xff]
    %v7680 = vld [vmem:[%s7652 + $0xd8] sm:$0xff]
    %v7681 = vld [vmem:[%s7652 + $0xe0] sm:$0xff]
    %v7682 = vld [vmem:[%s7652 + $0xe8] sm:$0xff]
    %v7683 = vld [vmem:[%s7652 + $0xf0] sm:$0xff]
    %v7684 = vld [vmem:[%s7652 + $0xf8] sm:$0xff]
    %v7686 = vrot.slane %v6257, 4
    %v7720 = vunpack.c.l.b16 %v7653
    %v7721 = vunpack.c.h.b16 %v7653
    %v7722 = vunpack.c.l.b16 %v7654
    %v7723 = vunpack.c.h.b16 %v7654
    %v7724 = vunpack.c.l.b16 %v7655
    %v7725 = vunpack.c.h.b16 %v7655
    %v7726 = vunpack.c.l.b16 %v7656
    %v7727 = vunpack.c.h.b16 %v7656
    %v7728 = vunpack.c.l.b16 %v7657
    %v7729 = vunpack.c.h.b16 %v7657
    %v7730 = vunpack.c.l.b16 %v7658
    %v7731 = vunpack.c.h.b16 %v7658
    %v7732 = vunpack.c.l.b16 %v7659
    %v7733 = vunpack.c.h.b16 %v7659
    %v7734 = vunpack.c.l.b16 %v7660
    %v7735 = vunpack.c.h.b16 %v7660
    %v7736 = vunpack.c.l.b16 %v7661
    %v7737 = vunpack.c.h.b16 %v7661
    %v7738 = vunpack.c.l.b16 %v7662
    %v7739 = vunpack.c.h.b16 %v7662
    %v7740 = vunpack.c.l.b16 %v7663
    %v7741 = vunpack.c.h.b16 %v7663
    %v7742 = vunpack.c.l.b16 %v7664
    %v7743 = vunpack.c.h.b16 %v7664
    %v7744 = vunpack.c.l.b16 %v7665
    %v7745 = vunpack.c.h.b16 %v7665
    %v7746 = vunpack.c.l.b16 %v7666
    %v7747 = vunpack.c.h.b16 %v7666
    %v7748 = vunpack.c.l.b16 %v7667
    %v7749 = vunpack.c.h.b16 %v7667
    %v7750 = vunpack.c.l.b16 %v7668
    %v7751 = vunpack.c.h.b16 %v7668
    %v7752 = vunpack.c.l.b16 %v7669
    %v7753 = vunpack.c.h.b16 %v7669
    %v7754 = vunpack.c.l.b16 %v7670
    %v7755 = vunpack.c.h.b16 %v7670
    %v7756 = vunpack.c.l.b16 %v7671
    %v7757 = vunpack.c.h.b16 %v7671
    %v7758 = vunpack.c.l.b16 %v7672
    %v7759 = vunpack.c.h.b16 %v7672
    %v7760 = vunpack.c.l.b16 %v7673
    %v7761 = vunpack.c.h.b16 %v7673
    %v7762 = vunpack.c.l.b16 %v7674
    %v7763 = vunpack.c.h.b16 %v7674
    %v7764 = vunpack.c.l.b16 %v7675
    %v7765 = vunpack.c.h.b16 %v7675
    %v7766 = vunpack.c.l.b16 %v7676
    %v7767 = vunpack.c.h.b16 %v7676
    %v7768 = vunpack.c.l.b16 %v7677
    %v7769 = vunpack.c.h.b16 %v7677
    %v7770 = vunpack.c.l.b16 %v7678
    %v7771 = vunpack.c.h.b16 %v7678
    %v7772 = vunpack.c.l.b16 %v7679
    %v7773 = vunpack.c.h.b16 %v7679
    %v7774 = vunpack.c.l.b16 %v7680
    %v7775 = vunpack.c.h.b16 %v7680
    %v7776 = vunpack.c.l.b16 %v7681
    %v7777 = vunpack.c.h.b16 %v7681
    %v7778 = vunpack.c.l.b16 %v7682
    %v7779 = vunpack.c.h.b16 %v7682
    %v7780 = vunpack.c.l.b16 %v7683
    %v7781 = vunpack.c.h.b16 %v7683
    %v7782 = vunpack.c.l.b16 %v7684
    %v7783 = vunpack.c.h.b16 %v7684
    %v7784 = vpack.c.b16 %v7724, %v7720
    %v7785 = vpack.c.b16 %v7725, %v7721
    %v7786 = vpack.c.b16 %v7726, %v7722
    %v7787 = vpack.c.b16 %v7727, %v7723
    %v7788 = vpack.c.b16 %v7732, %v7728
    %v7789 = vpack.c.b16 %v7733, %v7729
    %v7790 = vpack.c.b16 %v7734, %v7730
    %v7791 = vpack.c.b16 %v7735, %v7731
    %v7792 = vpack.c.b16 %v7740, %v7736
    %v7793 = vpack.c.b16 %v7741, %v7737
    %v7794 = vpack.c.b16 %v7742, %v7738
    %v7795 = vpack.c.b16 %v7743, %v7739
    %v7796 = vpack.c.b16 %v7748, %v7744
    %v7797 = vpack.c.b16 %v7749, %v7745
    %v7798 = vpack.c.b16 %v7750, %v7746
    %v7799 = vpack.c.b16 %v7751, %v7747
    %v7800 = vpack.c.b16 %v7756, %v7752
    %v7801 = vpack.c.b16 %v7757, %v7753
    %v7802 = vpack.c.b16 %v7758, %v7754
    %v7803 = vpack.c.b16 %v7759, %v7755
    %v7804 = vpack.c.b16 %v7764, %v7760
    %v7805 = vpack.c.b16 %v7765, %v7761
    %v7806 = vpack.c.b16 %v7766, %v7762
    %v7807 = vpack.c.b16 %v7767, %v7763
    %v7808 = vpack.c.b16 %v7772, %v7768
    %v7809 = vpack.c.b16 %v7773, %v7769
    %v7810 = vpack.c.b16 %v7774, %v7770
    %v7811 = vpack.c.b16 %v7775, %v7771
    %v7812 = vpack.c.b16 %v7780, %v7776
    %v7813 = vpack.c.b16 %v7781, %v7777
    %v7814 = vpack.c.b16 %v7782, %v7778
    %v7815 = vpack.c.b16 %v7783, %v7779
    %7848 = vmatprep.subr.bf16.mxu0 %v7785
    %7849 = vmatpush1.bf16.msra.mxu0 %v7784
    %7850 = vmatprep.subr.bf16.mxu0 %v7789
    %7851 = vmatpush1.bf16.msra.mxu0 %v7788
    %7852 = vmatprep.subr.bf16.mxu0 %v7793
    %7853 = vmatpush1.bf16.msra.mxu0 %v7792
    %7854 = vmatprep.subr.bf16.mxu0 %v7797
    %7855 = vmatpush1.bf16.msra.mxu0 %v7796
    %7856 = vmatprep.subr.bf16.mxu0 %v7801
    %7857 = vmatpush1.bf16.msra.mxu0 %v7800
    %7858 = vmatprep.subr.bf16.mxu0 %v7805
    %7859 = vmatpush1.bf16.msra.mxu0 %v7804
    %7860 = vmatprep.subr.bf16.mxu0 %v7809
    %7861 = vmatpush1.bf16.msra.mxu0 %v7808
    %7862 = vmatprep.subr.bf16.mxu0 %v7813
    %7863 = vmatpush1.bf16.msra.mxu0 %v7812
    %7864 = vmatprep.subr.bf16.mxu0 0
    %7865 = vmatpush1.bf16.msra.mxu0 0
    %7866 = vmatprep.subr.bf16.mxu0 0
    %7867 = vmatpush1.bf16.msra.mxu0 0
    %7868 = vmatprep.subr.bf16.mxu0 0
    %7869 = vmatpush1.bf16.msra.mxu0 0
    %7870 = vmatprep.subr.bf16.mxu0 0
    %7871 = vmatpush1.bf16.msra.mxu0 0
    %7872 = vmatprep.subr.bf16.mxu0 0
    %7873 = vmatpush1.bf16.msra.mxu0 0
    %7874 = vmatprep.subr.bf16.mxu0 0
    %7875 = vmatpush1.bf16.msra.mxu0 0
    %7876 = vmatprep.subr.bf16.mxu0 0
    %7877 = vmatpush1.bf16.msra.mxu0 0
    %7878 = vmatprep.subr.bf16.mxu0 0
    %7879 = vmatpush1.bf16.msra.mxu0 0
    %7880 = vmatprep.mubr.bf16.mxu0 0
    %7881 = vmatmul.mubr.bf16.gmra.mrb[0].mxu0 %v7686
    %v7882 = vpop.f32.mrb[0].mxu0
    %v7883 = vadd.f32 0.0, %v7882
    %v7884 = vpop.f32.mrb[0].mxu0
    %v7885 = vadd.f32 0.0, %v7884
    %v7886 = vpop.f32.mrb[0].mxu0
    %v7887 = vpop.f32.mrb[0].mxu0
    %7888 = vdwg.mxu0
    %7889 = vmatprep.subr.bf16.mxu0 %v7787
    %7890 = vmatpush1.bf16.msra.mxu0 %v7786
    %7891 = vmatprep.subr.bf16.mxu0 %v7791
    %7892 = vmatpush1.bf16.msra.mxu0 %v7790
    %7893 = vmatprep.subr.bf16.mxu0 %v7795
    %7894 = vmatpush1.bf16.msra.mxu0 %v7794
    %7895 = vmatprep.subr.bf16.mxu0 %v7799
    %7896 = vmatpush1.bf16.msra.mxu0 %v7798
    %7897 = vmatprep.subr.bf16.mxu0 %v7803
    %7898 = vmatpush1.bf16.msra.mxu0 %v7802
    %7899 = vmatprep.subr.bf16.mxu0 %v7807
    %7900 = vmatpush1.bf16.msra.mxu0 %v7806
    %7901 = vmatprep.subr.bf16.mxu0 %v7811
    %7902 = vmatpush1.bf16.msra.mxu0 %v7810
    %7903 = vmatprep.subr.bf16.mxu0 %v7815
    %7904 = vmatpush1.bf16.msra.mxu0 %v7814
    %7905 = vmatprep.subr.bf16.mxu0 0
    %7906 = vmatpush1.bf16.msra.mxu0 0
    %7907 = vmatprep.subr.bf16.mxu0 0
    %7908 = vmatpush1.bf16.msra.mxu0 0
    %7909 = vmatprep.subr.bf16.mxu0 0
    %7910 = vmatpush1.bf16.msra.mxu0 0
    %7911 = vmatprep.subr.bf16.mxu0 0
    %7912 = vmatpush1.bf16.msra.mxu0 0
    %7913 = vmatprep.subr.bf16.mxu0 0
    %7914 = vmatpush1.bf16.msra.mxu0 0
    %7915 = vmatprep.subr.bf16.mxu0 0
    %7916 = vmatpush1.bf16.msra.mxu0 0
    %7917 = vmatprep.subr.bf16.mxu0 0
    %7918 = vmatpush1.bf16.msra.mxu0 0
    %7919 = vmatprep.subr.bf16.mxu0 0
    %7920 = vmatpush1.bf16.msra.mxu0 0
    %7921 = vmatprep.mubr.bf16.mxu0 0
    %7922 = vmatmul.mubr.bf16.gmra.mrb[0].mxu0 %v7686
    %v7923 = vpop.f32.mrb[0].mxu0
    %v7924 = vadd.f32 0.0, %v7923
    %v7925 = vpop.f32.mrb[0].mxu0
    %v7926 = vadd.f32 0.0, %v7925
    %v7927 = vpop.f32.mrb[0].mxu0
    %v7928 = vpop.f32.mrb[0].mxu0
    %7929 = vdwg.mxu0
    %v7930 = vadd.f32 %v7648, %v7883
    %v7931 = vadd.f32 %v7649, %v7885
    %v7932 = vadd.f32 %v7650, %v7924
    %v7933 = vadd.f32 %v7651, %v7926
    %s7934 = scalar_lea.vmem %s25, 1536
    %v7935 = vld [vmem:[%s7934] sm:$0xff]
    %v7936 = vld [vmem:[%s7934 + $0x8] sm:$0xff]
    %v7937 = vld [vmem:[%s7934 + $0x10] sm:$0xff]
    %v7938 = vld [vmem:[%s7934 + $0x18] sm:$0xff]
    %v7939 = vld [vmem:[%s7934 + $0x20] sm:$0xff]
    %v7940 = vld [vmem:[%s7934 + $0x28] sm:$0xff]
    %v7941 = vld [vmem:[%s7934 + $0x30] sm:$0xff]
    %v7942 = vld [vmem:[%s7934 + $0x38] sm:$0xff]
    %v7943 = vld [vmem:[%s7934 + $0x40] sm:$0xff]
    %v7944 = vld [vmem:[%s7934 + $0x48] sm:$0xff]
    %v7945 = vld [vmem:[%s7934 + $0x50] sm:$0xff]
    %v7946 = vld [vmem:[%s7934 + $0x58] sm:$0xff]
    %v7947 = vld [vmem:[%s7934 + $0x60] sm:$0xff]
    %v7948 = vld [vmem:[%s7934 + $0x68] sm:$0xff]
    %v7949 = vld [vmem:[%s7934 + $0x70] sm:$0xff]
    %v7950 = vld [vmem:[%s7934 + $0x78] sm:$0xff]
    %v7951 = vld [vmem:[%s7934 + $0x80] sm:$0xff]
    %v7952 = vld [vmem:[%s7934 + $0x88] sm:$0xff]
    %v7953 = vld [vmem:[%s7934 + $0x90] sm:$0xff]
    %v7954 = vld [vmem:[%s7934 + $0x98] sm:$0xff]
    %v7955 = vld [vmem:[%s7934 + $0xa0] sm:$0xff]
    %v7956 = vld [vmem:[%s7934 + $0xa8] sm:$0xff]
    %v7957 = vld [vmem:[%s7934 + $0xb0] sm:$0xff]
    %v7958 = vld [vmem:[%s7934 + $0xb8] sm:$0xff]
    %v7959 = vld [vmem:[%s7934 + $0xc0] sm:$0xff]
    %v7960 = vld [vmem:[%s7934 + $0xc8] sm:$0xff]
    %v7961 = vld [vmem:[%s7934 + $0xd0] sm:$0xff]
    %v7962 = vld [vmem:[%s7934 + $0xd8] sm:$0xff]
    %v7963 = vld [vmem:[%s7934 + $0xe0] sm:$0xff]
    %v7964 = vld [vmem:[%s7934 + $0xe8] sm:$0xff]
    %v7965 = vld [vmem:[%s7934 + $0xf0] sm:$0xff]
    %v7966 = vld [vmem:[%s7934 + $0xf8] sm:$0xff]
    %v7999 = vunpack.c.l.b16 %v7935
    %v8000 = vunpack.c.h.b16 %v7935
    %v8001 = vunpack.c.l.b16 %v7936
    %v8002 = vunpack.c.h.b16 %v7936
    %v8003 = vunpack.c.l.b16 %v7937
    %v8004 = vunpack.c.h.b16 %v7937
    %v8005 = vunpack.c.l.b16 %v7938
    %v8006 = vunpack.c.h.b16 %v7938
    %v8007 = vunpack.c.l.b16 %v7939
    %v8008 = vunpack.c.h.b16 %v7939
    %v8009 = vunpack.c.l.b16 %v7940
    %v8010 = vunpack.c.h.b16 %v7940
    %v8011 = vunpack.c.l.b16 %v7941
    %v8012 = vunpack.c.h.b16 %v7941
    %v8013 = vunpack.c.l.b16 %v7942
    %v8014 = vunpack.c.h.b16 %v7942
    %v8015 = vunpack.c.l.b16 %v7943
    %v8016 = vunpack.c.h.b16 %v7943
    %v8017 = vunpack.c.l.b16 %v7944
    %v8018 = vunpack.c.h.b16 %v7944
    %v8019 = vunpack.c.l.b16 %v7945
    %v8020 = vunpack.c.h.b16 %v7945
    %v8021 = vunpack.c.l.b16 %v7946
    %v8022 = vunpack.c.h.b16 %v7946
    %v8023 = vunpack.c.l.b16 %v7947
    %v8024 = vunpack.c.h.b16 %v7947
    %v8025 = vunpack.c.l.b16 %v7948
    %v8026 = vunpack.c.h.b16 %v7948
    %v8027 = vunpack.c.l.b16 %v7949
    %v8028 = vunpack.c.h.b16 %v7949
    %v8029 = vunpack.c.l.b16 %v7950
    %v8030 = vunpack.c.h.b16 %v7950
    %v8031 = vunpack.c.l.b16 %v7951
    %v8032 = vunpack.c.h.b16 %v7951
    %v8033 = vunpack.c.l.b16 %v7952
    %v8034 = vunpack.c.h.b16 %v7952
    %v8035 = vunpack.c.l.b16 %v7953
    %v8036 = vunpack.c.h.b16 %v7953
    %v8037 = vunpack.c.l.b16 %v7954
    %v8038 = vunpack.c.h.b16 %v7954
    %v8039 = vunpack.c.l.b16 %v7955
    %v8040 = vunpack.c.h.b16 %v7955
    %v8041 = vunpack.c.l.b16 %v7956
    %v8042 = vunpack.c.h.b16 %v7956
    %v8043 = vunpack.c.l.b16 %v7957
    %v8044 = vunpack.c.h.b16 %v7957
    %v8045 = vunpack.c.l.b16 %v7958
    %v8046 = vunpack.c.h.b16 %v7958
    %v8047 = vunpack.c.l.b16 %v7959
    %v8048 = vunpack.c.h.b16 %v7959
    %v8049 = vunpack.c.l.b16 %v7960
    %v8050 = vunpack.c.h.b16 %v7960
    %v8051 = vunpack.c.l.b16 %v7961
    %v8052 = vunpack.c.h.b16 %v7961
    %v8053 = vunpack.c.l.b16 %v7962
    %v8054 = vunpack.c.h.b16 %v7962
    %v8055 = vunpack.c.l.b16 %v7963
    %v8056 = vunpack.c.h.b16 %v7963
    %v8057 = vunpack.c.l.b16 %v7964
    %v8058 = vunpack.c.h.b16 %v7964
    %v8059 = vunpack.c.l.b16 %v7965
    %v8060 = vunpack.c.h.b16 %v7965
    %v8061 = vunpack.c.l.b16 %v7966
    %v8062 = vunpack.c.h.b16 %v7966
    %v8063 = vpack.c.b16 %v8003, %v7999
    %v8064 = vpack.c.b16 %v8004, %v8000
    %v8065 = vpack.c.b16 %v8005, %v8001
    %v8066 = vpack.c.b16 %v8006, %v8002
    %v8067 = vpack.c.b16 %v8011, %v8007
    %v8068 = vpack.c.b16 %v8012, %v8008
    %v8069 = vpack.c.b16 %v8013, %v8009
    %v8070 = vpack.c.b16 %v8014, %v8010
    %v8071 = vpack.c.b16 %v8019, %v8015
    %v8072 = vpack.c.b16 %v8020, %v8016
    %v8073 = vpack.c.b16 %v8021, %v8017
    %v8074 = vpack.c.b16 %v8022, %v8018
    %v8075 = vpack.c.b16 %v8027, %v8023
    %v8076 = vpack.c.b16 %v8028, %v8024
    %v8077 = vpack.c.b16 %v8029, %v8025
    %v8078 = vpack.c.b16 %v8030, %v8026
    %v8079 = vpack.c.b16 %v8035, %v8031
    %v8080 = vpack.c.b16 %v8036, %v8032
    %v8081 = vpack.c.b16 %v8037, %v8033
    %v8082 = vpack.c.b16 %v8038, %v8034
    %v8083 = vpack.c.b16 %v8043, %v8039
    %v8084 = vpack.c.b16 %v8044, %v8040
    %v8085 = vpack.c.b16 %v8045, %v8041
    %v8086 = vpack.c.b16 %v8046, %v8042
    %v8087 = vpack.c.b16 %v8051, %v8047
    %v8088 = vpack.c.b16 %v8052, %v8048
    %v8089 = vpack.c.b16 %v8053, %v8049
    %v8090 = vpack.c.b16 %v8054, %v8050
    %v8091 = vpack.c.b16 %v8059, %v8055
    %v8092 = vpack.c.b16 %v8060, %v8056
    %v8093 = vpack.c.b16 %v8061, %v8057
    %v8094 = vpack.c.b16 %v8062, %v8058
    %8127 = vmatprep.subr.bf16.mxu0 %v8064
    %8128 = vmatpush1.bf16.msra.mxu0 %v8063
    %8129 = vmatprep.subr.bf16.mxu0 %v8068
    %8130 = vmatpush1.bf16.msra.mxu0 %v8067
    %8131 = vmatprep.subr.bf16.mxu0 %v8072
    %8132 = vmatpush1.bf16.msra.mxu0 %v8071
    %8133 = vmatprep.subr.bf16.mxu0 %v8076
    %8134 = vmatpush1.bf16.msra.mxu0 %v8075
    %8135 = vmatprep.subr.bf16.mxu0 %v8080
    %8136 = vmatpush1.bf16.msra.mxu0 %v8079
    %8137 = vmatprep.subr.bf16.mxu0 %v8084
    %8138 = vmatpush1.bf16.msra.mxu0 %v8083
    %8139 = vmatprep.subr.bf16.mxu0 %v8088
    %8140 = vmatpush1.bf16.msra.mxu0 %v8087
    %8141 = vmatprep.subr.bf16.mxu0 %v8092
    %8142 = vmatpush1.bf16.msra.mxu0 %v8091
    %8143 = vmatprep.subr.bf16.mxu0 0
    %8144 = vmatpush1.bf16.msra.mxu0 0
    %8145 = vmatprep.subr.bf16.mxu0 0
    %8146 = vmatpush1.bf16.msra.mxu0 0
    %8147 = vmatprep.subr.bf16.mxu0 0
    %8148 = vmatpush1.bf16.msra.mxu0 0
    %8149 = vmatprep.subr.bf16.mxu0 0
    %8150 = vmatpush1.bf16.msra.mxu0 0
    %8151 = vmatprep.subr.bf16.mxu0 0
    %8152 = vmatpush1.bf16.msra.mxu0 0
    %8153 = vmatprep.subr.bf16.mxu0 0
    %8154 = vmatpush1.bf16.msra.mxu0 0
    %8155 = vmatprep.subr.bf16.mxu0 0
    %8156 = vmatpush1.bf16.msra.mxu0 0
    %8157 = vmatprep.subr.bf16.mxu0 0
    %8158 = vmatpush1.bf16.msra.mxu0 0
    %8159 = vmatprep.mubr.bf16.mxu0 0
    %8160 = vmatmul.mubr.bf16.gmra.mrb[0].mxu0 %v6258
    %v8161 = vpop.f32.mrb[0].mxu0
    %v8162 = vadd.f32 0.0, %v8161
    %v8163 = vpop.f32.mrb[0].mxu0
    %v8164 = vadd.f32 0.0, %v8163
    %v8165 = vpop.f32.mrb[0].mxu0
    %v8166 = vpop.f32.mrb[0].mxu0
    %8167 = vdwg.mxu0
    %8168 = vmatprep.subr.bf16.mxu0 %v8066
    %8169 = vmatpush1.bf16.msra.mxu0 %v8065
    %8170 = vmatprep.subr.bf16.mxu0 %v8070
    %8171 = vmatpush1.bf16.msra.mxu0 %v8069
    %8172 = vmatprep.subr.bf16.mxu0 %v8074
    %8173 = vmatpush1.bf16.msra.mxu0 %v8073
    %8174 = vmatprep.subr.bf16.mxu0 %v8078
    %8175 = vmatpush1.bf16.msra.mxu0 %v8077
    %8176 = vmatprep.subr.bf16.mxu0 %v8082
    %8177 = vmatpush1.bf16.msra.mxu0 %v8081
    %8178 = vmatprep.subr.bf16.mxu0 %v8086
    %8179 = vmatpush1.bf16.msra.mxu0 %v8085
    %8180 = vmatprep.subr.bf16.mxu0 %v8090
    %8181 = vmatpush1.bf16.msra.mxu0 %v8089
    %8182 = vmatprep.subr.bf16.mxu0 %v8094
    %8183 = vmatpush1.bf16.msra.mxu0 %v8093
    %8184 = vmatprep.subr.bf16.mxu0 0
    %8185 = vmatpush1.bf16.msra.mxu0 0
    %8186 = vmatprep.subr.bf16.mxu0 0
    %8187 = vmatpush1.bf16.msra.mxu0 0
    %8188 = vmatprep.subr.bf16.mxu0 0
    %8189 = vmatpush1.bf16.msra.mxu0 0
    %8190 = vmatprep.subr.bf16.mxu0 0
    %8191 = vmatpush1.bf16.msra.mxu0 0
    %8192 = vmatprep.subr.bf16.mxu0 0
    %8193 = vmatpush1.bf16.msra.mxu0 0
    %8194 = vmatprep.subr.bf16.mxu0 0
    %8195 = vmatpush1.bf16.msra.mxu0 0
    %8196 = vmatprep.subr.bf16.mxu0 0
    %8197 = vmatpush1.bf16.msra.mxu0 0
    %8198 = vmatprep.subr.bf16.mxu0 0
    %8199 = vmatpush1.bf16.msra.mxu0 0
    %8200 = vmatprep.mubr.bf16.mxu0 0
    %8201 = vmatmul.mubr.bf16.gmra.mrb[0].mxu0 %v6258
    %v8202 = vpop.f32.mrb[0].mxu0
    %v8203 = vadd.f32 0.0, %v8202
    %v8204 = vpop.f32.mrb[0].mxu0
    %v8205 = vadd.f32 0.0, %v8204
    %v8206 = vpop.f32.mrb[0].mxu0
    %v8207 = vpop.f32.mrb[0].mxu0
    %8208 = vdwg.mxu0
    %v8209 = vadd.f32 %v7930, %v8162
    %v8210 = vadd.f32 %v7931, %v8164
    %v8211 = vadd.f32 %v7932, %v8203
    %v8212 = vadd.f32 %v7933, %v8205
    %s8213 = scalar_lea.vmem %s25, 1792
    %v8214 = vld [vmem:[%s8213] sm:$0xff]
    %v8215 = vld [vmem:[%s8213 + $0x8] sm:$0xff]
    %v8216 = vld [vmem:[%s8213 + $0x10] sm:$0xff]
    %v8217 = vld [vmem:[%s8213 + $0x18] sm:$0xff]
    %v8218 = vld [vmem:[%s8213 + $0x20] sm:$0xff]
    %v8219 = vld [vmem:[%s8213 + $0x28] sm:$0xff]
    %v8220 = vld [vmem:[%s8213 + $0x30] sm:$0xff]
    %v8221 = vld [vmem:[%s8213 + $0x38] sm:$0xff]
    %v8222 = vld [vmem:[%s8213 + $0x40] sm:$0xff]
    %v8223 = vld [vmem:[%s8213 + $0x48] sm:$0xff]
    %v8224 = vld [vmem:[%s8213 + $0x50] sm:$0xff]
    %v8225 = vld [vmem:[%s8213 + $0x58] sm:$0xff]
    %v8226 = vld [vmem:[%s8213 + $0x60] sm:$0xff]
    %v8227 = vld [vmem:[%s8213 + $0x68] sm:$0xff]
    %v8228 = vld [vmem:[%s8213 + $0x70] sm:$0xff]
    %v8229 = vld [vmem:[%s8213 + $0x78] sm:$0xff]
    %v8230 = vld [vmem:[%s8213 + $0x80] sm:$0xff]
    %v8231 = vld [vmem:[%s8213 + $0x88] sm:$0xff]
    %v8232 = vld [vmem:[%s8213 + $0x90] sm:$0xff]
    %v8233 = vld [vmem:[%s8213 + $0x98] sm:$0xff]
    %v8234 = vld [vmem:[%s8213 + $0xa0] sm:$0xff]
    %v8235 = vld [vmem:[%s8213 + $0xa8] sm:$0xff]
    %v8236 = vld [vmem:[%s8213 + $0xb0] sm:$0xff]
    %v8237 = vld [vmem:[%s8213 + $0xb8] sm:$0xff]
    %v8238 = vld [vmem:[%s8213 + $0xc0] sm:$0xff]
    %v8239 = vld [vmem:[%s8213 + $0xc8] sm:$0xff]
    %v8240 = vld [vmem:[%s8213 + $0xd0] sm:$0xff]
    %v8241 = vld [vmem:[%s8213 + $0xd8] sm:$0xff]
    %v8242 = vld [vmem:[%s8213 + $0xe0] sm:$0xff]
    %v8243 = vld [vmem:[%s8213 + $0xe8] sm:$0xff]
    %v8244 = vld [vmem:[%s8213 + $0xf0] sm:$0xff]
    %v8245 = vld [vmem:[%s8213 + $0xf8] sm:$0xff]
    %v8247 = vrot.slane %v6258, 4
    %v8281 = vunpack.c.l.b16 %v8214
    %v8282 = vunpack.c.h.b16 %v8214
    %v8283 = vunpack.c.l.b16 %v8215
    %v8284 = vunpack.c.h.b16 %v8215
    %v8285 = vunpack.c.l.b16 %v8216
    %v8286 = vunpack.c.h.b16 %v8216
    %v8287 = vunpack.c.l.b16 %v8217
    %v8288 = vunpack.c.h.b16 %v8217
    %v8289 = vunpack.c.l.b16 %v8218
    %v8290 = vunpack.c.h.b16 %v8218
    %v8291 = vunpack.c.l.b16 %v8219
    %v8292 = vunpack.c.h.b16 %v8219
    %v8293 = vunpack.c.l.b16 %v8220
    %v8294 = vunpack.c.h.b16 %v8220
    %v8295 = vunpack.c.l.b16 %v8221
    %v8296 = vunpack.c.h.b16 %v8221
    %v8297 = vunpack.c.l.b16 %v8222
    %v8298 = vunpack.c.h.b16 %v8222
    %v8299 = vunpack.c.l.b16 %v8223
    %v8300 = vunpack.c.h.b16 %v8223
    %v8301 = vunpack.c.l.b16 %v8224
    %v8302 = vunpack.c.h.b16 %v8224
    %v8303 = vunpack.c.l.b16 %v8225
    %v8304 = vunpack.c.h.b16 %v8225
    %v8305 = vunpack.c.l.b16 %v8226
    %v8306 = vunpack.c.h.b16 %v8226
    %v8307 = vunpack.c.l.b16 %v8227
    %v8308 = vunpack.c.h.b16 %v8227
    %v8309 = vunpack.c.l.b16 %v8228
    %v8310 = vunpack.c.h.b16 %v8228
    %v8311 = vunpack.c.l.b16 %v8229
    %v8312 = vunpack.c.h.b16 %v8229
    %v8313 = vunpack.c.l.b16 %v8230
    %v8314 = vunpack.c.h.b16 %v8230
    %v8315 = vunpack.c.l.b16 %v8231
    %v8316 = vunpack.c.h.b16 %v8231
    %v8317 = vunpack.c.l.b16 %v8232
    %v8318 = vunpack.c.h.b16 %v8232
    %v8319 = vunpack.c.l.b16 %v8233
    %v8320 = vunpack.c.h.b16 %v8233
    %v8321 = vunpack.c.l.b16 %v8234
    %v8322 = vunpack.c.h.b16 %v8234
    %v8323 = vunpack.c.l.b16 %v8235
    %v8324 = vunpack.c.h.b16 %v8235
    %v8325 = vunpack.c.l.b16 %v8236
    %v8326 = vunpack.c.h.b16 %v8236
    %v8327 = vunpack.c.l.b16 %v8237
    %v8328 = vunpack.c.h.b16 %v8237
    %v8329 = vunpack.c.l.b16 %v8238
    %v8330 = vunpack.c.h.b16 %v8238
    %v8331 = vunpack.c.l.b16 %v8239
    %v8332 = vunpack.c.h.b16 %v8239
    %v8333 = vunpack.c.l.b16 %v8240
    %v8334 = vunpack.c.h.b16 %v8240
    %v8335 = vunpack.c.l.b16 %v8241
    %v8336 = vunpack.c.h.b16 %v8241
    %v8337 = vunpack.c.l.b16 %v8242
    %v8338 = vunpack.c.h.b16 %v8242
    %v8339 = vunpack.c.l.b16 %v8243
    %v8340 = vunpack.c.h.b16 %v8243
    %v8341 = vunpack.c.l.b16 %v8244
    %v8342 = vunpack.c.h.b16 %v8244
    %v8343 = vunpack.c.l.b16 %v8245
    %v8344 = vunpack.c.h.b16 %v8245
    %v8345 = vpack.c.b16 %v8285, %v8281
    %v8346 = vpack.c.b16 %v8286, %v8282
    %v8347 = vpack.c.b16 %v8287, %v8283
    %v8348 = vpack.c.b16 %v8288, %v8284
    %v8349 = vpack.c.b16 %v8293, %v8289
    %v8350 = vpack.c.b16 %v8294, %v8290
    %v8351 = vpack.c.b16 %v8295, %v8291
    %v8352 = vpack.c.b16 %v8296, %v8292
    %v8353 = vpack.c.b16 %v8301, %v8297
    %v8354 = vpack.c.b16 %v8302, %v8298
    %v8355 = vpack.c.b16 %v8303, %v8299
    %v8356 = vpack.c.b16 %v8304, %v8300
    %v8357 = vpack.c.b16 %v8309, %v8305
    %v8358 = vpack.c.b16 %v8310, %v8306
    %v8359 = vpack.c.b16 %v8311, %v8307
    %v8360 = vpack.c.b16 %v8312, %v8308
    %v8361 = vpack.c.b16 %v8317, %v8313
    %v8362 = vpack.c.b16 %v8318, %v8314
    %v8363 = vpack.c.b16 %v8319, %v8315
    %v8364 = vpack.c.b16 %v8320, %v8316
    %v8365 = vpack.c.b16 %v8325, %v8321
    %v8366 = vpack.c.b16 %v8326, %v8322
    %v8367 = vpack.c.b16 %v8327, %v8323
    %v8368 = vpack.c.b16 %v8328, %v8324
    %v8369 = vpack.c.b16 %v8333, %v8329
    %v8370 = vpack.c.b16 %v8334, %v8330
    %v8371 = vpack.c.b16 %v8335, %v8331
    %v8372 = vpack.c.b16 %v8336, %v8332
    %v8373 = vpack.c.b16 %v8341, %v8337
    %v8374 = vpack.c.b16 %v8342, %v8338
    %v8375 = vpack.c.b16 %v8343, %v8339
    %v8376 = vpack.c.b16 %v8344, %v8340
    %8409 = vmatprep.subr.bf16.mxu0 %v8346
    %8410 = vmatpush1.bf16.msra.mxu0 %v8345
    %8411 = vmatprep.subr.bf16.mxu0 %v8350
    %8412 = vmatpush1.bf16.msra.mxu0 %v8349
    %8413 = vmatprep.subr.bf16.mxu0 %v8354
    %8414 = vmatpush1.bf16.msra.mxu0 %v8353
    %8415 = vmatprep.subr.bf16.mxu0 %v8358
    %8416 = vmatpush1.bf16.msra.mxu0 %v8357
    %8417 = vmatprep.subr.bf16.mxu0 %v8362
    %8418 = vmatpush1.bf16.msra.mxu0 %v8361
    %8419 = vmatprep.subr.bf16.mxu0 %v8366
    %8420 = vmatpush1.bf16.msra.mxu0 %v8365
    %8421 = vmatprep.subr.bf16.mxu0 %v8370
    %8422 = vmatpush1.bf16.msra.mxu0 %v8369
    %8423 = vmatprep.subr.bf16.mxu0 %v8374
    %8424 = vmatpush1.bf16.msra.mxu0 %v8373
    %8425 = vmatprep.subr.bf16.mxu0 0
    %8426 = vmatpush1.bf16.msra.mxu0 0
    %8427 = vmatprep.subr.bf16.mxu0 0
    %8428 = vmatpush1.bf16.msra.mxu0 0
    %8429 = vmatprep.subr.bf16.mxu0 0
    %8430 = vmatpush1.bf16.msra.mxu0 0
    %8431 = vmatprep.subr.bf16.mxu0 0
    %8432 = vmatpush1.bf16.msra.mxu0 0
    %8433 = vmatprep.subr.bf16.mxu0 0
    %8434 = vmatpush1.bf16.msra.mxu0 0
    %8435 = vmatprep.subr.bf16.mxu0 0
    %8436 = vmatpush1.bf16.msra.mxu0 0
    %8437 = vmatprep.subr.bf16.mxu0 0
    %8438 = vmatpush1.bf16.msra.mxu0 0
    %8439 = vmatprep.subr.bf16.mxu0 0
    %8440 = vmatpush1.bf16.msra.mxu0 0
    %8441 = vmatprep.mubr.bf16.mxu0 0
    %8442 = vmatmul.mubr.bf16.gmra.mrb[0].mxu0 %v8247
    %v8443 = vpop.f32.mrb[0].mxu0
    %v8444 = vadd.f32 0.0, %v8443
    %v8445 = vpop.f32.mrb[0].mxu0
    %v8446 = vadd.f32 0.0, %v8445
    %v8447 = vpop.f32.mrb[0].mxu0
    %v8448 = vpop.f32.mrb[0].mxu0
    %8449 = vdwg.mxu0
    %8450 = vmatprep.subr.bf16.mxu0 %v8348
    %8451 = vmatpush1.bf16.msra.mxu0 %v8347
    %8452 = vmatprep.subr.bf16.mxu0 %v8352
    %8453 = vmatpush1.bf16.msra.mxu0 %v8351
    %8454 = vmatprep.subr.bf16.mxu0 %v8356
    %8455 = vmatpush1.bf16.msra.mxu0 %v8355
    %8456 = vmatprep.subr.bf16.mxu0 %v8360
    %8457 = vmatpush1.bf16.msra.mxu0 %v8359
    %8458 = vmatprep.subr.bf16.mxu0 %v8364
    %8459 = vmatpush1.bf16.msra.mxu0 %v8363
    %8460 = vmatprep.subr.bf16.mxu0 %v8368
    %8461 = vmatpush1.bf16.msra.mxu0 %v8367
    %8462 = vmatprep.subr.bf16.mxu0 %v8372
    %8463 = vmatpush1.bf16.msra.mxu0 %v8371
    %8464 = vmatprep.subr.bf16.mxu0 %v8376
    %8465 = vmatpush1.bf16.msra.mxu0 %v8375
    %8466 = vmatprep.subr.bf16.mxu0 0
    %8467 = vmatpush1.bf16.msra.mxu0 0
    %8468 = vmatprep.subr.bf16.mxu0 0
    %8469 = vmatpush1.bf16.msra.mxu0 0
    %8470 = vmatprep.subr.bf16.mxu0 0
    %8471 = vmatpush1.bf16.msra.mxu0 0
    %8472 = vmatprep.subr.bf16.mxu0 0
    %8473 = vmatpush1.bf16.msra.mxu0 0
    %8474 = vmatprep.subr.bf16.mxu0 0
    %8475 = vmatpush1.bf16.msra.mxu0 0
    %8476 = vmatprep.subr.bf16.mxu0 0
    %8477 = vmatpush1.bf16.msra.mxu0 0
    %8478 = vmatprep.subr.bf16.mxu0 0
    %8479 = vmatpush1.bf16.msra.mxu0 0
    %8480 = vmatprep.subr.bf16.mxu0 0
    %8481 = vmatpush1.bf16.msra.mxu0 0
    %8482 = vmatprep.mubr.bf16.mxu0 0
    %8483 = vmatmul.mubr.bf16.gmra.mrb[0].mxu0 %v8247
    %v8484 = vpop.f32.mrb[0].mxu0
    %v8485 = vadd.f32 0.0, %v8484
    %v8486 = vpop.f32.mrb[0].mxu0
    %v8487 = vadd.f32 0.0, %v8486
    %v8488 = vpop.f32.mrb[0].mxu0
    %v8489 = vpop.f32.mrb[0].mxu0
    %8490 = vdwg.mxu0
    %v8491 = vadd.f32 %v8209, %v8444
    %v8492 = vadd.f32 %v8210, %v8446
    %v8493 = vadd.f32 %v8211, %v8485
    %v8494 = vadd.f32 %v8212, %v8487
    %s8495 = scalar_lea.vmem %s25, 2048
    %v8496 = vld [vmem:[%s8495] sm:$0xff]
    %v8497 = vld [vmem:[%s8495 + $0x8] sm:$0xff]
    %v8498 = vld [vmem:[%s8495 + $0x10] sm:$0xff]
    %v8499 = vld [vmem:[%s8495 + $0x18] sm:$0xff]
    %v8500 = vld [vmem:[%s8495 + $0x20] sm:$0xff]
    %v8501 = vld [vmem:[%s8495 + $0x28] sm:$0xff]
    %v8502 = vld [vmem:[%s8495 + $0x30] sm:$0xff]
    %v8503 = vld [vmem:[%s8495 + $0x38] sm:$0xff]
    %v8504 = vld [vmem:[%s8495 + $0x40] sm:$0xff]
    %v8505 = vld [vmem:[%s8495 + $0x48] sm:$0xff]
    %v8506 = vld [vmem:[%s8495 + $0x50] sm:$0xff]
    %v8507 = vld [vmem:[%s8495 + $0x58] sm:$0xff]
    %v8508 = vld [vmem:[%s8495 + $0x60] sm:$0xff]
    %v8509 = vld [vmem:[%s8495 + $0x68] sm:$0xff]
    %v8510 = vld [vmem:[%s8495 + $0x70] sm:$0xff]
    %v8511 = vld [vmem:[%s8495 + $0x78] sm:$0xff]
    %v8512 = vld [vmem:[%s8495 + $0x80] sm:$0xff]
    %v8513 = vld [vmem:[%s8495 + $0x88] sm:$0xff]
    %v8514 = vld [vmem:[%s8495 + $0x90] sm:$0xff]
    %v8515 = vld [vmem:[%s8495 + $0x98] sm:$0xff]
    %v8516 = vld [vmem:[%s8495 + $0xa0] sm:$0xff]
    %v8517 = vld [vmem:[%s8495 + $0xa8] sm:$0xff]
    %v8518 = vld [vmem:[%s8495 + $0xb0] sm:$0xff]
    %v8519 = vld [vmem:[%s8495 + $0xb8] sm:$0xff]
    %v8520 = vld [vmem:[%s8495 + $0xc0] sm:$0xff]
    %v8521 = vld [vmem:[%s8495 + $0xc8] sm:$0xff]
    %v8522 = vld [vmem:[%s8495 + $0xd0] sm:$0xff]
    %v8523 = vld [vmem:[%s8495 + $0xd8] sm:$0xff]
    %v8524 = vld [vmem:[%s8495 + $0xe0] sm:$0xff]
    %v8525 = vld [vmem:[%s8495 + $0xe8] sm:$0xff]
    %v8526 = vld [vmem:[%s8495 + $0xf0] sm:$0xff]
    %v8527 = vld [vmem:[%s8495 + $0xf8] sm:$0xff]
    %v8560 = vunpack.c.l.b16 %v8496
    %v8561 = vunpack.c.h.b16 %v8496
    %v8562 = vunpack.c.l.b16 %v8497
    %v8563 = vunpack.c.h.b16 %v8497
    %v8564 = vunpack.c.l.b16 %v8498
    %v8565 = vunpack.c.h.b16 %v8498
    %v8566 = vunpack.c.l.b16 %v8499
    %v8567 = vunpack.c.h.b16 %v8499
    %v8568 = vunpack.c.l.b16 %v8500
    %v8569 = vunpack.c.h.b16 %v8500
    %v8570 = vunpack.c.l.b16 %v8501
    %v8571 = vunpack.c.h.b16 %v8501
    %v8572 = vunpack.c.l.b16 %v8502
    %v8573 = vunpack.c.h.b16 %v8502
    %v8574 = vunpack.c.l.b16 %v8503
    %v8575 = vunpack.c.h.b16 %v8503
    %v8576 = vunpack.c.l.b16 %v8504
    %v8577 = vunpack.c.h.b16 %v8504
    %v8578 = vunpack.c.l.b16 %v8505
    %v8579 = vunpack.c.h.b16 %v8505
    %v8580 = vunpack.c.l.b16 %v8506
    %v8581 = vunpack.c.h.b16 %v8506
    %v8582 = vunpack.c.l.b16 %v8507
    %v8583 = vunpack.c.h.b16 %v8507
    %v8584 = vunpack.c.l.b16 %v8508
    %v8585 = vunpack.c.h.b16 %v8508
    %v8586 = vunpack.c.l.b16 %v8509
    %v8587 = vunpack.c.h.b16 %v8509
    %v8588 = vunpack.c.l.b16 %v8510
    %v8589 = vunpack.c.h.b16 %v8510
    %v8590 = vunpack.c.l.b16 %v8511
    %v8591 = vunpack.c.h.b16 %v8511
    %v8592 = vunpack.c.l.b16 %v8512
    %v8593 = vunpack.c.h.b16 %v8512
    %v8594 = vunpack.c.l.b16 %v8513
    %v8595 = vunpack.c.h.b16 %v8513
    %v8596 = vunpack.c.l.b16 %v8514
    %v8597 = vunpack.c.h.b16 %v8514
    %v8598 = vunpack.c.l.b16 %v8515
    %v8599 = vunpack.c.h.b16 %v8515
    %v8600 = vunpack.c.l.b16 %v8516
    %v8601 = vunpack.c.h.b16 %v8516
    %v8602 = vunpack.c.l.b16 %v8517
    %v8603 = vunpack.c.h.b16 %v8517
    %v8604 = vunpack.c.l.b16 %v8518
    %v8605 = vunpack.c.h.b16 %v8518
    %v8606 = vunpack.c.l.b16 %v8519
    %v8607 = vunpack.c.h.b16 %v8519
    %v8608 = vunpack.c.l.b16 %v8520
    %v8609 = vunpack.c.h.b16 %v8520
    %v8610 = vunpack.c.l.b16 %v8521
    %v8611 = vunpack.c.h.b16 %v8521
    %v8612 = vunpack.c.l.b16 %v8522
    %v8613 = vunpack.c.h.b16 %v8522
    %v8614 = vunpack.c.l.b16 %v8523
    %v8615 = vunpack.c.h.b16 %v8523
    %v8616 = vunpack.c.l.b16 %v8524
    %v8617 = vunpack.c.h.b16 %v8524
    %v8618 = vunpack.c.l.b16 %v8525
    %v8619 = vunpack.c.h.b16 %v8525
    %v8620 = vunpack.c.l.b16 %v8526
    %v8621 = vunpack.c.h.b16 %v8526
    %v8622 = vunpack.c.l.b16 %v8527
    %v8623 = vunpack.c.h.b16 %v8527
    %v8624 = vpack.c.b16 %v8564, %v8560
    %v8625 = vpack.c.b16 %v8565, %v8561
    %v8626 = vpack.c.b16 %v8566, %v8562
    %v8627 = vpack.c.b16 %v8567, %v8563
    %v8628 = vpack.c.b16 %v8572, %v8568
    %v8629 = vpack.c.b16 %v8573, %v8569
    %v8630 = vpack.c.b16 %v8574, %v8570
    %v8631 = vpack.c.b16 %v8575, %v8571
    %v8632 = vpack.c.b16 %v8580, %v8576
    %v8633 = vpack.c.b16 %v8581, %v8577
    %v8634 = vpack.c.b16 %v8582, %v8578
    %v8635 = vpack.c.b16 %v8583, %v8579
    %v8636 = vpack.c.b16 %v8588, %v8584
    %v8637 = vpack.c.b16 %v8589, %v8585
    %v8638 = vpack.c.b16 %v8590, %v8586
    %v8639 = vpack.c.b16 %v8591, %v8587
    %v8640 = vpack.c.b16 %v8596, %v8592
    %v8641 = vpack.c.b16 %v8597, %v8593
    %v8642 = vpack.c.b16 %v8598, %v8594
    %v8643 = vpack.c.b16 %v8599, %v8595
    %v8644 = vpack.c.b16 %v8604, %v8600
    %v8645 = vpack.c.b16 %v8605, %v8601
    %v8646 = vpack.c.b16 %v8606, %v8602
    %v8647 = vpack.c.b16 %v8607, %v8603
    %v8648 = vpack.c.b16 %v8612, %v8608
    %v8649 = vpack.c.b16 %v8613, %v8609
    %v8650 = vpack.c.b16 %v8614, %v8610
    %v8651 = vpack.c.b16 %v8615, %v8611
    %v8652 = vpack.c.b16 %v8620, %v8616
    %v8653 = vpack.c.b16 %v8621, %v8617
    %v8654 = vpack.c.b16 %v8622, %v8618
    %v8655 = vpack.c.b16 %v8623, %v8619
    %8688 = vmatprep.subr.bf16.mxu0 %v8625
    %8689 = vmatpush1.bf16.msra.mxu0 %v8624
    %8690 = vmatprep.subr.bf16.mxu0 %v8629
    %8691 = vmatpush1.bf16.msra.mxu0 %v8628
    %8692 = vmatprep.subr.bf16.mxu0 %v8633
    %8693 = vmatpush1.bf16.msra.mxu0 %v8632
    %8694 = vmatprep.subr.bf16.mxu0 %v8637
    %8695 = vmatpush1.bf16.msra.mxu0 %v8636
    %8696 = vmatprep.subr.bf16.mxu0 %v8641
    %8697 = vmatpush1.bf16.msra.mxu0 %v8640
    %8698 = vmatprep.subr.bf16.mxu0 %v8645
    %8699 = vmatpush1.bf16.msra.mxu0 %v8644
    %8700 = vmatprep.subr.bf16.mxu0 %v8649
    %8701 = vmatpush1.bf16.msra.mxu0 %v8648
    %8702 = vmatprep.subr.bf16.mxu0 %v8653
    %8703 = vmatpush1.bf16.msra.mxu0 %v8652
    %8704 = vmatprep.subr.bf16.mxu0 0
    %8705 = vmatpush1.bf16.msra.mxu0 0
    %8706 = vmatprep.subr.bf16.mxu0 0
    %8707 = vmatpush1.bf16.msra.mxu0 0
    %8708 = vmatprep.subr.bf16.mxu0 0
    %8709 = vmatpush1.bf16.msra.mxu0 0
    %8710 = vmatprep.subr.bf16.mxu0 0
    %8711 = vmatpush1.bf16.msra.mxu0 0
    %8712 = vmatprep.subr.bf16.mxu0 0
    %8713 = vmatpush1.bf16.msra.mxu0 0
    %8714 = vmatprep.subr.bf16.mxu0 0
    %8715 = vmatpush1.bf16.msra.mxu0 0
    %8716 = vmatprep.subr.bf16.mxu0 0
    %8717 = vmatpush1.bf16.msra.mxu0 0
    %8718 = vmatprep.subr.bf16.mxu0 0
    %8719 = vmatpush1.bf16.msra.mxu0 0
    %8720 = vmatprep.mubr.bf16.mxu0 0
    %8721 = vmatmul.mubr.bf16.gmra.mrb[0].mxu0 %v6259
    %v8722 = vpop.f32.mrb[0].mxu0
    %v8723 = vadd.f32 0.0, %v8722
    %v8724 = vpop.f32.mrb[0].mxu0
    %v8725 = vadd.f32 0.0, %v8724
    %v8726 = vpop.f32.mrb[0].mxu0
    %v8727 = vpop.f32.mrb[0].mxu0
    %8728 = vdwg.mxu0
    %8729 = vmatprep.subr.bf16.mxu0 %v8627
    %8730 = vmatpush1.bf16.msra.mxu0 %v8626
    %8731 = vmatprep.subr.bf16.mxu0 %v8631
    %8732 = vmatpush1.bf16.msra.mxu0 %v8630
    %8733 = vmatprep.subr.bf16.mxu0 %v8635
    %8734 = vmatpush1.bf16.msra.mxu0 %v8634
    %8735 = vmatprep.subr.bf16.mxu0 %v8639
    %8736 = vmatpush1.bf16.msra.mxu0 %v8638
    %8737 = vmatprep.subr.bf16.mxu0 %v8643
    %8738 = vmatpush1.bf16.msra.mxu0 %v8642
    %8739 = vmatprep.subr.bf16.mxu0 %v8647
    %8740 = vmatpush1.bf16.msra.mxu0 %v8646
    %8741 = vmatprep.subr.bf16.mxu0 %v8651
    %8742 = vmatpush1.bf16.msra.mxu0 %v8650
    %8743 = vmatprep.subr.bf16.mxu0 %v8655
    %8744 = vmatpush1.bf16.msra.mxu0 %v8654
    %8745 = vmatprep.subr.bf16.mxu0 0
    %8746 = vmatpush1.bf16.msra.mxu0 0
    %8747 = vmatprep.subr.bf16.mxu0 0
    %8748 = vmatpush1.bf16.msra.mxu0 0
    %8749 = vmatprep.subr.bf16.mxu0 0
    %8750 = vmatpush1.bf16.msra.mxu0 0
    %8751 = vmatprep.subr.bf16.mxu0 0
    %8752 = vmatpush1.bf16.msra.mxu0 0
    %8753 = vmatprep.subr.bf16.mxu0 0
    %8754 = vmatpush1.bf16.msra.mxu0 0
    %8755 = vmatprep.subr.bf16.mxu0 0
    %8756 = vmatpush1.bf16.msra.mxu0 0
    %8757 = vmatprep.subr.bf16.mxu0 0
    %8758 = vmatpush1.bf16.msra.mxu0 0
    %8759 = vmatprep.subr.bf16.mxu0 0
    %8760 = vmatpush1.bf16.msra.mxu0 0
    %8761 = vmatprep.mubr.bf16.mxu0 0
    %8762 = vmatmul.mubr.bf16.gmra.mrb[0].mxu0 %v6259
    %v8763 = vpop.f32.mrb[0].mxu0
    %v8764 = vadd.f32 0.0, %v8763
    %v8765 = vpop.f32.mrb[0].mxu0
    %v8766 = vadd.f32 0.0, %v8765
    %v8767 = vpop.f32.mrb[0].mxu0
    %v8768 = vpop.f32.mrb[0].mxu0
    %8769 = vdwg.mxu0
    %v8770 = vadd.f32 %v8491, %v8723
    %v8771 = vadd.f32 %v8492, %v8725
    %v8772 = vadd.f32 %v8493, %v8764
    %v8773 = vadd.f32 %v8494, %v8766
    %v8774 = vld [vmem:[#allocation16] sm:$0xff]
    %v8775 = vld [vmem:[#allocation16 + $0x8] sm:$0xff]
    %v8776 = vld [vmem:[#allocation16 + $0x10] sm:$0xff]
    %v8777 = vld [vmem:[#allocation16 + $0x18] sm:$0xff]
    %v8778 = vadd.f32 %v8770, %v8774
    %v8779 = vadd.f32 %v8771, %v8775
    %v8780 = vadd.f32 %v8772, %v8776
    %v8781 = vadd.f32 %v8773, %v8777
    %v8782 = vtanh.pop %v8778
    %v8783 = vtanh.pop %v8779
    %v8784 = vtanh.pop %v8780
    %v8785 = vtanh.pop %v8781
    %v8790 = vcombine.low %v8782, %v8783
    %v8791 = vcombine.low %v8784, %v8785
    %8794 = vst [vmem:[%s27] sm:$0xff] %v8790
    %8795 = vst [vmem:[%s27 + $0x8] sm:$0xff] %v8791
    // Predicated region
    $region150: #{vae_forward.1} parent=1 // pred_check
      _
    $region151: #{vae_forward.1} parent=1 // pred_check_branch
      %8797 = sbr.rel (0) target = $region153
    $region152: #{vae_forward.1} parent=1 // pred_region
      _
    $region153: #{vae_forward.1} parent=1 // pred_fallthru
      _
    // Predicated region
    $region154: #{vae_forward.1} parent=1 // pred_check
      _
    $region155: #{vae_forward.1} parent=1 // pred_check_branch
      %8799 = sbr.rel (0) target = $region157
    $region156: #{vae_forward.1} parent=1 // pred_region
      _
    $region157: #{vae_forward.1} parent=1 // pred_fallthru
      _
    // Predicated region
    $region158: #{vae_forward.1} parent=1 // pred_check
      _
    $region159: #{vae_forward.1} parent=1 // pred_check_branch
      %8801 = sbr.rel (0) target = $region161
    $region160: #{vae_forward.1} parent=1 // pred_region
      _
    $region161: #{vae_forward.1} parent=1 // pred_fallthru
      _
    // Predicated region
    $region162: #{vae_forward.1} parent=1 // pred_check
      _
    $region163: #{vae_forward.1} parent=1 // pred_check_branch
      %8803 = sbr.rel (0) target = $region165
    $region164: #{vae_forward.1} parent=1 // pred_region
      _
    $region165: #{vae_forward.1} parent=1 // pred_fallthru
      _
    %8804 = vsyncpa [#allocation3], 1
    %8805 = vsyncpa [#allocation5], 1
    %8806 = vsyncpa [#allocation8], 1
    %8807 = vsyncpa [#allocation11], 1
    %8808 = vsyncpa [#allocation14], 1
    %8809 = vsyncpa [#allocation17], 1

</llo_original>
